<compile_context>
chip_gen: v7x
topology: tpu7x:2x2x1
jax: 0.10.0
libtpu: 0.0.40
codegen_flags: <defaults>
</compile_context>

<pallas_src>
import functools

import jax
import jax.numpy as jnp
from jax import lax
from jax.experimental import pallas as pl
from jax.experimental.pallas import tpu as pltpu

NEG_SLOPE = 0.2  # LeakyReLU negative slope used by eqnr-style ConvBlocks


def _leaky(x):
    return jnp.where(x >= 0, x, NEG_SLOPE * x)


# ----------------------------------------------------------------------------
# Kernel 1: fused (LeakyReLU + 1x1 conv) x3 over pixel rows, as chained matmuls.
# Rows are (B*H*W, Cin); weights (Cin,256),(256,512),(512,1024) in bf16; f32 accumulation.
# The final LeakyReLU is the pre-activation of the following ConvBlock3d, applied once here
# (LeakyReLU(0)=0, so zero-padding the activated volume afterwards stays exact).
# ----------------------------------------------------------------------------
def _proj1x1_kernel(x_ref, w1_ref, b1_ref, w2_ref, b2_ref, w3_ref, b3_ref, o_ref):
    h = _leaky(x_ref[...].astype(jnp.float32))
    h = jnp.dot(h.astype(jnp.bfloat16), w1_ref[...],
                preferred_element_type=jnp.float32) + b1_ref[...]
    h = _leaky(h)
    h = jnp.dot(h.astype(jnp.bfloat16), w2_ref[...],
                preferred_element_type=jnp.float32) + b2_ref[...]
    h = _leaky(h)
    h = jnp.dot(h.astype(jnp.bfloat16), w3_ref[...],
                preferred_element_type=jnp.float32) + b3_ref[...]
    h = _leaky(h)  # pre-activation of ConvBlock3d, moved here (one pass over the data)
    o_ref[...] = h.astype(o_ref.dtype)


def proj1x1(x2d, w1, b1, w2, b2, w3, b3, *, tm=256):
    n, cin = x2d.shape
    n_pad = pl.cdiv(n, tm) * tm
    if n_pad != n:
        x2d = jnp.pad(x2d, ((0, n_pad - n), (0, 0)))
    c_out = w3.shape[1]
    # NOTE: Cin=4 first layer is a tiny K=4 matmul; it is negligible next to the K=256/512
    # layers, so it is left on the MXU rather than re-laid-out.
    out = pl.pallas_call(
        _proj1x1_kernel,
        out_shape=jax.ShapeDtypeStruct((n_pad, c_out), jnp.bfloat16),
        grid_spec=pltpu.PrefetchScalarGridSpec(
            num_scalar_prefetch=0,
            grid=(n_pad // tm,),
            in_specs=[
                pl.BlockSpec((tm, cin), lambda i: (i, 0)),
                pl.BlockSpec(w1.shape, lambda i: (0, 0)),
                pl.BlockSpec(b1.shape, lambda i: (0, 0)),
                pl.BlockSpec(w2.shape, lambda i: (0, 0)),
                pl.BlockSpec(b2.shape, lambda i: (0, 0)),
                pl.BlockSpec(w3.shape, lambda i: (0, 0)),
                pl.BlockSpec(b3.shape, lambda i: (0, 0)),
            ],
            out_specs=pl.BlockSpec((tm, c_out), lambda i: (i, 0)),
        ),
        compiler_params=pltpu.CompilerParams(dimension_semantics=("parallel",)),
    )(x2d, w1, b1, w2, b2, w3, b3)
    return out[:n]


# ----------------------------------------------------------------------------
# Kernel 2: 3x3x3 Conv3d (padding=1) on an already-activated, zero-padded NDHWC volume.
# Grid = (batch, depth-tile).  The padded volume stays in HBM (memory_space=pl.ANY); each
# step manually DMAs a (TD+2)-slice depth window into a double-buffered VMEM scratch and
# prefetches the next window of the same batch element while computing the current one.
# Compute: im2col over the 27 taps -> one (TD*H*W, 27*C) @ (27*C, COUT) matmul (f32 accum).
# Output block is lane-dense: (TD, H, W*COUT) with W*COUT a multiple of 128.
# ----------------------------------------------------------------------------
def _conv3d_kernel(vol_ref, w_ref, b_ref, o_ref, buf, sem, *, TD, H, W, C, COUT):
    b = pl.program_id(0)
    t = pl.program_id(1)
    T = pl.num_programs(1)
    slot = t % 2

    def start_fetch(tile_idx, s):
        pltpu.make_async_copy(
            vol_ref.at[b, pl.ds(tile_idx * TD, TD + 2)], buf.at[s], sem.at[s]
        ).start()

    # Prime the pipeline at the first depth tile of this batch element.
    @pl.when(t == 0)
    def _():
        start_fetch(t, slot)

    # Wait for the current depth window.
    pltpu.make_async_copy(
        vol_ref.at[b, pl.ds(t * TD, TD + 2)], buf.at[slot], sem.at[slot]
    ).wait()

    # Prefetch the next depth window of the same batch element (overlaps with compute).
    @pl.when(t + 1 < T)
    def _():
        start_fetch(t + 1, 1 - slot)

    win = buf.at[slot]  # (TD+2, H+2, W+2, C) bf16, already activated + zero-padded
    taps = []
    for kd in range(3):
        for kh in range(3):
            for kw in range(3):
                taps.append(win[kd:kd + TD, kh:kh + H, kw:kw + W, :])
    patch = jnp.concatenate(taps, axis=-1).reshape(TD * H * W, 27 * C)
    acc = jnp.dot(patch, w_ref[...], preferred_element_type=jnp.float32)
    acc = acc + b_ref[...]
    o_ref[...] = acc.reshape(TD, H, W * COUT).astype(o_ref.dtype)


def conv3d_3x3x3(vol, w3d_flat, b3d, *, td=8):
    # vol: (B, D, H, W, C) bf16 channels-last, activation already applied.
    # w3d_flat: (27*C, COUT) bf16 (flattened kd,kh,kw,ci order); b3d: (1, COUT) f32.
    B, D, H, W, C = vol.shape
    COUT = w3d_flat.shape[-1]
    td = min(td, D)
    while td > 1 and (D % td != 0 or td * H * W > 4096):
        td -= 1
    T = D // td

    # TODO(synk): the depth/spatial zero-pad materializes one extra HBM copy of the volume;
    # it could be fused into the producing transpose or replaced by in-kernel boundary masks.
    vol_p = jnp.pad(vol, ((0, 0), (1, 1), (1, 1), (1, 1), (0, 0)))

    kernel = functools.partial(_conv3d_kernel, TD=td, H=H, W=W, C=C, COUT=COUT)
    out = pl.pallas_call(
        kernel,
        out_shape=jax.ShapeDtypeStruct((B, D, H, W * COUT), jnp.float32),
        grid_spec=pltpu.PrefetchScalarGridSpec(
            num_scalar_prefetch=0,
            grid=(B, T),
            in_specs=[
                pl.BlockSpec(memory_space=pl.ANY),                 # padded volume stays in HBM
                pl.BlockSpec((27 * C, COUT), lambda b, t: (0, 0)),  # resident weights
                pl.BlockSpec((1, COUT), lambda b, t: (0, 0)),       # resident bias
            ],
            out_specs=pl.BlockSpec((None, td, H, W * COUT), lambda b, t: (b, t, 0, 0)),
            scratch_shapes=[
                pltpu.VMEM((2, td + 2, H + 2, W + 2, C), vol.dtype),  # double-buffered window
                pltpu.SemaphoreType.DMA((2,)),
            ],
        ),
        compiler_params=pltpu.CompilerParams(
            # depth axis is "arbitrary" on purpose: the manual double-buffer prefetch chain
            # requires the depth tiles of one batch element to run in order on one core.
            dimension_semantics=("parallel", "arbitrary"),
            vmem_limit_bytes=48 * 1024 * 1024,
        ),
    )(vol_p, w3d_flat, b3d)
    return out.reshape(B, D, H, W, COUT)


# ----------------------------------------------------------------------------
# Full module wrapper
# ----------------------------------------------------------------------------
def init_params(key, in_channels, out_channels):
    ks = jax.random.split(key, 8)

    def w(k, shape, fan_in):
        return jax.random.normal(k, shape, jnp.float32) / jnp.sqrt(float(fan_in))

    return {
        "w1": w(ks[0], (in_channels, 256), in_channels),
        "b1": w(ks[1], (1, 256), 256),
        "w2": w(ks[2], (256, 512), 256),
        "b2": w(ks[3], (1, 512), 512),
        "w3": w(ks[4], (512, 1024), 512),
        "b3": w(ks[5], (1, 1024), 1024),
        "w3d": w(ks[6], (3, 3, 3, out_channels, out_channels), 27 * out_channels),
        "b3d": w(ks[7], (1, out_channels), out_channels),
    }


def project_2d_to_3d(x_nchw, params, out_channels):
    B, Cin, H, W = x_nchw.shape
    bf = jnp.bfloat16
    assert 1024 % out_channels == 0
    D = 1024 // out_channels

    # NCHW -> rows of channels-last pixels (bf16 MXU inputs, f32 accumulation in-kernel)
    x2d = jnp.transpose(x_nchw, (0, 2, 3, 1)).reshape(B * H * W, Cin).astype(bf)
    feat = proj1x1(
        x2d,
        params["w1"].astype(bf), params["b1"],
        params["w2"].astype(bf), params["b2"],
        params["w3"].astype(bf), params["b3"],
    )  # (B*H*W, 1024) bf16, LeakyReLU already applied

    # Rearrange 'b (c d) h w -> b c d h w' (channel index k = c*D + d), then NDHWC
    vol = jnp.transpose(feat.reshape(B, H, W, out_channels, D), (0, 4, 1, 2, 3))

    w3d_flat = params["w3d"].reshape(27 * out_channels, out_channels).astype(bf)
    out = conv3d_3x3x3(vol, w3d_flat, params["b3d"])  # (B, D, H, W, COUT) f32

    # Back to PyTorch NCDHW
    return jnp.transpose(out, (0, 4, 1, 2, 3))  # (B, Cout, D, H, W)


# Pure-JAX reference with the same bf16-input / f32-accumulate math, for correctness check.
def ref_forward(x_nchw, p, out_channels):
    bf = jnp.bfloat16
    B, Cin, H, W = x_nchw.shape
    x = jnp.transpose(x_nchw, (0, 2, 3, 1)).reshape(B * H * W, Cin).astype(bf)
    w1, w2, w3 = p["w1"].astype(bf), p["w2"].astype(bf), p["w3"].astype(bf)

    h = _leaky(x.astype(jnp.float32))
    h = jnp.dot(h.astype(bf), w1, preferred_element_type=jnp.float32) + p["b1"]
    h = _leaky(h)
    h = jnp.dot(h.astype(bf), w2, preferred_element_type=jnp.float32) + p["b2"]
    h = _leaky(h)
    h = jnp.dot(h.astype(bf), w3, preferred_element_type=jnp.float32) + p["b3"]
    h = _leaky(h).astype(bf)  # pre-activation of ConvBlock3d

    D = 1024 // out_channels
    vol = jnp.transpose(h.reshape(B, H, W, out_channels, D), (0, 4, 1, 2, 3))
    out = lax.conv_general_dilated(
        vol, p["w3d"].astype(bf), window_strides=(1, 1, 1), padding="SAME",
        dimension_numbers=("NDHWC", "DHWIO", "NDHWC"),
        preferred_element_type=jnp.float32) + p["b3d"]
    return jnp.transpose(out, (0, 4, 1, 2, 3))


if __name__ == "__main__":
    IN_CHANNELS = 4
    OUT_CHANNELS = 32
    B, H, W = 2, 16, 16

    key = jax.random.PRNGKey(0)
    k_x, k_p = jax.random.split(key)
    x = jax.random.normal(k_x, (B, IN_CHANNELS, H, W), jnp.float32)
    params = init_params(k_p, IN_CHANNELS, OUT_CHANNELS)

    out = jax.block_until_ready(project_2d_to_3d(x, params, OUT_CHANNELS))
    assert out.shape == (B, OUT_CHANNELS, 1024 // OUT_CHANNELS, H, W), out.shape

    ref = jax.block_until_ready(ref_forward(x, params, OUT_CHANNELS))
    err = float(jnp.max(jnp.abs(out - ref)))
    assert jnp.allclose(out, ref, atol=3e-3, rtol=3e-3), err

    print("KERNEL_OK")
</pallas_src>

<mosaic_0001>
module attributes {stable_mosaic.version = 11 : i64} {
  func.func @_proj1x1_kernel(%arg0: i32, %arg1: memref<256x4xbf16, #tpu.memory_space<vmem>>, %arg2: memref<4x256xbf16, #tpu.memory_space<vmem>>, %arg3: memref<1x256xf32, #tpu.memory_space<vmem>>, %arg4: memref<256x512xbf16, #tpu.memory_space<vmem>>, %arg5: memref<1x512xf32, #tpu.memory_space<vmem>>, %arg6: memref<512x1024xbf16, #tpu.memory_space<vmem>>, %arg7: memref<1x1024xf32, #tpu.memory_space<vmem>>, %arg8: memref<256x1024xbf16, #tpu.memory_space<vmem>>) attributes {dimension_semantics = [#tpu.dimension_semantics<parallel>], iteration_bounds = array<i64: 2>, scalar_prefetch = 0 : i64, scratch_operands = 0 : i64, tpu.core_type = #tpu.core_type<tc>, window_params = [{transform_indices = @transform_0, window_bounds = array<i64: 256, 4>}, {pipeline_mode = #tpu.pipeline_mode<synchronous>, transform_indices = @transform_1, window_bounds = array<i64: 4, 256>}, {pipeline_mode = #tpu.pipeline_mode<synchronous>, transform_indices = @transform_2, window_bounds = array<i64: 1, 256>}, {pipeline_mode = #tpu.pipeline_mode<synchronous>, transform_indices = @transform_3, window_bounds = array<i64: 256, 512>}, {pipeline_mode = #tpu.pipeline_mode<synchronous>, transform_indices = @transform_4, window_bounds = array<i64: 1, 512>}, {pipeline_mode = #tpu.pipeline_mode<synchronous>, transform_indices = @transform_5, window_bounds = array<i64: 512, 1024>}, {pipeline_mode = #tpu.pipeline_mode<synchronous>, transform_indices = @transform_6, window_bounds = array<i64: 1, 1024>}, {transform_indices = @transform_7, window_bounds = array<i64: 256, 1024>}]} {
    %c0 = arith.constant 0 : index
    %c0_0 = arith.constant 0 : index
    %0 = vector.load %arg1[%c0, %c0_0] : memref<256x4xbf16, #tpu.memory_space<vmem>>, vector<256x4xbf16>
    %1 = arith.extf %0 : vector<256x4xbf16> to vector<256x4xf32>
    %cst = arith.constant 0.000000e+00 : f32
    %2 = vector.broadcast %cst : f32 to vector<256x4xf32>
    %3 = arith.cmpf oge, %1, %2 : vector<256x4xf32>
    %cst_1 = arith.constant 2.000000e-01 : f32
    %4 = vector.broadcast %cst_1 : f32 to vector<256x4xf32>
    %5 = arith.mulf %4, %1 : vector<256x4xf32>
    %6 = arith.select %3, %1, %5 : vector<256x4xi1>, vector<256x4xf32>
    %7 = arith.truncf %6 : vector<256x4xf32> to vector<256x4xbf16>
    %c0_2 = arith.constant 0 : index
    %c0_3 = arith.constant 0 : index
    %8 = vector.load %arg2[%c0_2, %c0_3] : memref<4x256xbf16, #tpu.memory_space<vmem>>, vector<4x256xbf16>
    %cst_4 = arith.constant dense<0.000000e+00> : vector<256x256xf32>
    %9 = tpu.matmul %7, %8, %cst_4 {dimension_numbers = #tpu.dot_dimension_numbers<[1], [0], [0], [1], [0, 0, 1, 1], [], []>} : vector<256x4xbf16>, vector<4x256xbf16>, vector<256x256xf32> -> vector<256x256xf32>
    %c0_5 = arith.constant 0 : index
    %c0_6 = arith.constant 0 : index
    %10 = vector.load %arg3[%c0_5, %c0_6] : memref<1x256xf32, #tpu.memory_space<vmem>>, vector<1x256xf32>
    %11 = vector.broadcast %10 : vector<1x256xf32> to vector<256x256xf32>
    %12 = arith.addf %9, %11 : vector<256x256xf32>
    %cst_7 = arith.constant 0.000000e+00 : f32
    %13 = vector.broadcast %cst_7 : f32 to vector<256x256xf32>
    %14 = arith.cmpf oge, %12, %13 : vector<256x256xf32>
    %cst_8 = arith.constant 2.000000e-01 : f32
    %15 = vector.broadcast %cst_8 : f32 to vector<256x256xf32>
    %16 = arith.mulf %15, %12 : vector<256x256xf32>
    %17 = arith.select %14, %12, %16 : vector<256x256xi1>, vector<256x256xf32>
    %18 = arith.truncf %17 : vector<256x256xf32> to vector<256x256xbf16>
    %c0_9 = arith.constant 0 : index
    %c0_10 = arith.constant 0 : index
    %19 = vector.load %arg4[%c0_9, %c0_10] : memref<256x512xbf16, #tpu.memory_space<vmem>>, vector<256x512xbf16>
    %cst_11 = arith.constant dense<0.000000e+00> : vector<256x512xf32>
    %20 = tpu.matmul %18, %19, %cst_11 {dimension_numbers = #tpu.dot_dimension_numbers<[1], [0], [0], [1], [0, 0, 1, 1], [], []>} : vector<256x256xbf16>, vector<256x512xbf16>, vector<256x512xf32> -> vector<256x512xf32>
    %c0_12 = arith.constant 0 : index
    %c0_13 = arith.constant 0 : index
    %21 = vector.load %arg5[%c0_12, %c0_13] : memref<1x512xf32, #tpu.memory_space<vmem>>, vector<1x512xf32>
    %22 = vector.broadcast %21 : vector<1x512xf32> to vector<256x512xf32>
    %23 = arith.addf %20, %22 : vector<256x512xf32>
    %cst_14 = arith.constant 0.000000e+00 : f32
    %24 = vector.broadcast %cst_14 : f32 to vector<256x512xf32>
    %25 = arith.cmpf oge, %23, %24 : vector<256x512xf32>
    %cst_15 = arith.constant 2.000000e-01 : f32
    %26 = vector.broadcast %cst_15 : f32 to vector<256x512xf32>
    %27 = arith.mulf %26, %23 : vector<256x512xf32>
    %28 = arith.select %25, %23, %27 : vector<256x512xi1>, vector<256x512xf32>
    %29 = arith.truncf %28 : vector<256x512xf32> to vector<256x512xbf16>
    %c0_16 = arith.constant 0 : index
    %c0_17 = arith.constant 0 : index
    %30 = vector.load %arg6[%c0_16, %c0_17] : memref<512x1024xbf16, #tpu.memory_space<vmem>>, vector<512x1024xbf16>
    %cst_18 = arith.constant dense<0.000000e+00> : vector<256x1024xf32>
    %31 = tpu.matmul %29, %30, %cst_18 {dimension_numbers = #tpu.dot_dimension_numbers<[1], [0], [0], [1], [0, 0, 1, 1], [], []>} : vector<256x512xbf16>, vector<512x1024xbf16>, vector<256x1024xf32> -> vector<256x1024xf32>
    %c0_19 = arith.constant 0 : index
    %c0_20 = arith.constant 0 : index
    %32 = vector.load %arg7[%c0_19, %c0_20] : memref<1x1024xf32, #tpu.memory_space<vmem>>, vector<1x1024xf32>
    %33 = vector.broadcast %32 : vector<1x1024xf32> to vector<256x1024xf32>
    %34 = arith.addf %31, %33 : vector<256x1024xf32>
    %cst_21 = arith.constant 0.000000e+00 : f32
    %35 = vector.broadcast %cst_21 : f32 to vector<256x1024xf32>
    %36 = arith.cmpf oge, %34, %35 : vector<256x1024xf32>
    %cst_22 = arith.constant 2.000000e-01 : f32
    %37 = vector.broadcast %cst_22 : f32 to vector<256x1024xf32>
    %38 = arith.mulf %37, %34 : vector<256x1024xf32>
    %39 = arith.select %36, %34, %38 : vector<256x1024xi1>, vector<256x1024xf32>
    %40 = arith.truncf %39 : vector<256x1024xf32> to vector<256x1024xbf16>
    %c0_23 = arith.constant 0 : index
    %c0_24 = arith.constant 0 : index
    %41 = vector.load %arg8[%c0_23, %c0_24] : memref<256x1024xbf16, #tpu.memory_space<vmem>>, vector<256x1024xbf16>
    tpu.vector_store %arg8[%c0_23, %c0_24], %40 {strides = array<i32>} : memref<256x1024xbf16, #tpu.memory_space<vmem>>, vector<256x1024xbf16>,
    return
  }
  func.func @transform_0(%arg0: i32) -> (i32, i32) {
    %c0_i32 = arith.constant 0 : i32
    %c0_i32_0 = arith.constant 0 : i32
    return %arg0, %c0_i32 : i32, i32
  }
  func.func @transform_1(%arg0: i32) -> (i32, i32) {
    %c0_i32 = arith.constant 0 : i32
    %c0_i32_0 = arith.constant 0 : i32
    %c0_i32_1 = arith.constant 0 : i32
    return %c0_i32, %c0_i32_0 : i32, i32
  }
  func.func @transform_2(%arg0: i32) -> (i32, i32) {
    %c0_i32 = arith.constant 0 : i32
    %c0_i32_0 = arith.constant 0 : i32
    %c0_i32_1 = arith.constant 0 : i32
    return %c0_i32, %c0_i32_0 : i32, i32
  }
  func.func @transform_3(%arg0: i32) -> (i32, i32) {
    %c0_i32 = arith.constant 0 : i32
    %c0_i32_0 = arith.constant 0 : i32
    %c0_i32_1 = arith.constant 0 : i32
    return %c0_i32, %c0_i32_0 : i32, i32
  }
  func.func @transform_4(%arg0: i32) -> (i32, i32) {
    %c0_i32 = arith.constant 0 : i32
    %c0_i32_0 = arith.constant 0 : i32
    %c0_i32_1 = arith.constant 0 : i32
    return %c0_i32, %c0_i32_0 : i32, i32
  }
  func.func @transform_5(%arg0: i32) -> (i32, i32) {
    %c0_i32 = arith.constant 0 : i32
    %c0_i32_0 = arith.constant 0 : i32
    %c0_i32_1 = arith.constant 0 : i32
    return %c0_i32, %c0_i32_0 : i32, i32
  }
  func.func @transform_6(%arg0: i32) -> (i32, i32) {
    %c0_i32 = arith.constant 0 : i32
    %c0_i32_0 = arith.constant 0 : i32
    %c0_i32_1 = arith.constant 0 : i32
    return %c0_i32, %c0_i32_0 : i32, i32
  }
  func.func @transform_7(%arg0: i32) -> (i32, i32) {
    %c0_i32 = arith.constant 0 : i32
    %c0_i32_0 = arith.constant 0 : i32
    return %arg0, %c0_i32 : i32, i32
  }
}

</mosaic_0001>

<llo_original>
// kernel: tpu_custom_call.1
$region0: #{tpu_custom_call.1}
  #allocation0 [shape = 'u32[]', space=smem, size = 0x4, offset = 0x4, fixed_abs, tag = 'smem constant byte address 0x4 - core index']
  #allocation1 [shape = 'u32[144,128]{1,0:T(1,128)}', space=vmem, size = 0x12000, scoped, tag = 'internal scratch']
  %s0 = inlined_call_operand.vmem [shape: bf16[512,4], index: 0, kind: input, shape index: {}]
  %s1 = inlined_call_operand.vmem [shape: bf16[4,256], index: 1, kind: input, shape index: {}]
  %s2 = inlined_call_operand.vmem [shape: f32[1,256], index: 2, kind: input, shape index: {}]
  %s3 = inlined_call_operand.hbm [shape: bf16[256,512], index: 3, kind: input, shape index: {}]
  %s4 = inlined_call_operand.vmem [shape: f32[1,512], index: 4, kind: input, shape index: {}]
  %s5 = inlined_call_operand.hbm [shape: bf16[512,1024], index: 5, kind: input, shape index: {}]
  %s6 = inlined_call_operand.vmem [shape: f32[1,1024], index: 6, kind: input, shape index: {}]
  %s7 = inlined_call_operand.hbm [shape: bf16[512,1024], index: 7, kind: output, shape index: {}]
  %s8 = sld [smem:[#allocation0]]
  $region69: #{tpu_custom_call.1} parent=0
    _
  %s10 = ssub.s32 1, %s8
  %s11 = scalar_select 0, %s10, %s8
  $region1: #{tpu_custom_call.1} parent=0
    #allocation2 [shape = 'u8[262144]{0}', space=vmem, size = 0x40000, scoped, tag = 'input window, operand 3, single buffered']
    #allocation3 [shape = 's32[2]{0}', space=sflag, size = 0x8, scoped, tag = 'scoped memory for tpu_custom_call.1']
    #allocation4 [shape = 's32[2]{0}', space=sflag, size = 0x8, scoped, tag = 'scoped memory for tpu_custom_call.1']
    #allocation5 [shape = 'u8[1048576]{0}', space=vmem, size = 0x100000, scoped, tag = 'input window, operand 5, single buffered']
    #allocation6 [shape = 's32[1]{0}', space=sflag, size = 0x4, scoped, tag = 'scoped memory for tpu_custom_call.1']
    #allocation7 [shape = 'u8[1048576]{0}', space=vmem, size = 0x100000, scoped, tag = 'output window, operand 0']
    %12 = vsyncpa [#allocation3], 0
    %13 = vsyncpa [#allocation6], 0
    %14 = vsyncpa [#allocation4], 0
    %s15 = scalar_lea.sflag [#allocation4], 1
    %16 = vsyncpa %s15, 0
    loop: start=0, step=1, limit=4
    $region2: #{tpu_custom_call.1} parent=1 // loop_pre_header
      _
    $region3: #{tpu_custom_call.1} parent=1 // loop_header
      %s18 = sphi 0, %s22
      %p19 = scmp.ge.s32.totalorder %s18, 4
      %s28 = sphi 0, %s30
      %s31 = sphi 0, %s28
      %s32 = sphi 0, %s31
      %s48 = sphi 0, %s32
      %s52 = sphi 0, %s52
      %s54 = sphi 0, %s52
      %s55 = sphi 0, %s54
      %s69 = sphi 0, %s55
      %s73 = sphi 0, %s73
      %s75 = sphi 0, %s73
      %s76 = sphi 0, %s75
      %s90 = sphi 0, %s76
      %s94 = sphi 0, %s94
      %s96 = sphi 0, %s94
      %s97 = sphi 0, %s96
      %s111 = sphi 0, %s97
      %s115 = sphi 0, %s115
      %s117 = sphi 0, %s115
      %s118 = sphi 0, %s117
      %s132 = sphi 0, %s118
      %s136 = sphi 0, %s136
      %s138 = sphi 0, %s136
      %s139 = sphi 0, %s138
      %s153 = sphi 0, %s139
      %s157 = sphi 0, %s157
      %s159 = sphi 0, %s157
      %s160 = sphi 0, %s159
      %s174 = sphi 0, %s160
      %s180 = sphi 0, %s182
      %s183 = sphi 0, %s180
      %s184 = sphi 0, %s183
      %s200 = sphi 0, %s184
    $region4: #{tpu_custom_call.1} parent=1 // loop_header_branch
      %21 = sbr.rel (%p19) target = $region8
    $region5: #{tpu_custom_call.1} parent=1 // loop_body
      %s23 = ssub.s32 %s18, 1
      %s24 = ssub.s32 %s18, 2
      %s25 = sadd.s32 %s18, 1
      %s26 = ssub.s32 %s18, %s25
      %p27 = scmp.eq.s32.totalorder %s26, 0
      %s29 = sadd.s32 %s28, 1
      %s30 = scalar_select %p27, %s28, %s29
      %p33 = pneg %p27
      %p34 = scmp.eq.s32.totalorder %s18, 1
      %p35 = por %p33, %p34
      %p36 = scmp.ne.s32.totalorder %s28, %s31
      %p37 = scmp.eq.s32.totalorder %s18, 0
      %p38 = por %p36, %p37
      %p39 = scmp.ne.s32.totalorder %s28, %s31
      %p40 = scmp.eq.s32.totalorder %s23, 1
      %p41 = por %p39, %p40
      %p42 = scmp.ne.s32.totalorder %s31, %s32
      %p43 = scmp.eq.s32.totalorder %s23, 0
      %p44 = por %p42, %p43
      %p45 = scmp.ne.s32.totalorder %s31, %s32
      %p46 = scmp.eq.s32.totalorder %s24, 1
      %p47 = por %p45, %p46
      %p49 = scmp.ne.s32.totalorder %s32, %s48
      %p50 = scmp.eq.s32.totalorder %s24, 0
      %p51 = por %p49, %p50
      %s53 = sadd.s32 %s52, 1
      %p56 = scmp.eq.s32.totalorder %s18, 1
      %p57 = scmp.ne.s32.totalorder %s52, %s54
      %p58 = scmp.eq.s32.totalorder %s18, 0
      %p59 = por %p57, %p58
      %p60 = scmp.ne.s32.totalorder %s52, %s54
      %p61 = scmp.eq.s32.totalorder %s23, 1
      %p62 = por %p60, %p61
      %p63 = scmp.ne.s32.totalorder %s54, %s55
      %p64 = scmp.eq.s32.totalorder %s23, 0
      %p65 = por %p63, %p64
      %p66 = scmp.ne.s32.totalorder %s54, %s55
      %p67 = scmp.eq.s32.totalorder %s24, 1
      %p68 = por %p66, %p67
      %p70 = scmp.ne.s32.totalorder %s55, %s69
      %p71 = scmp.eq.s32.totalorder %s24, 0
      %p72 = por %p70, %p71
      %s74 = sadd.s32 %s73, 1
      %p77 = scmp.eq.s32.totalorder %s18, 1
      %p78 = scmp.ne.s32.totalorder %s73, %s75
      %p79 = scmp.eq.s32.totalorder %s18, 0
      %p80 = por %p78, %p79
      %p81 = scmp.ne.s32.totalorder %s73, %s75
      %p82 = scmp.eq.s32.totalorder %s23, 1
      %p83 = por %p81, %p82
      %p84 = scmp.ne.s32.totalorder %s75, %s76
      %p85 = scmp.eq.s32.totalorder %s23, 0
      %p86 = por %p84, %p85
      %p87 = scmp.ne.s32.totalorder %s75, %s76
      %p88 = scmp.eq.s32.totalorder %s24, 1
      %p89 = por %p87, %p88
      %p91 = scmp.ne.s32.totalorder %s76, %s90
      %p92 = scmp.eq.s32.totalorder %s24, 0
      %p93 = por %p91, %p92
      %s95 = sadd.s32 %s94, 1
      %p98 = scmp.eq.s32.totalorder %s18, 1
      %p99 = scmp.ne.s32.totalorder %s94, %s96
      %p100 = scmp.eq.s32.totalorder %s18, 0
      %p101 = por %p99, %p100
      %p102 = scmp.ne.s32.totalorder %s94, %s96
      %p103 = scmp.eq.s32.totalorder %s23, 1
      %p104 = por %p102, %p103
      %p105 = scmp.ne.s32.totalorder %s96, %s97
      %p106 = scmp.eq.s32.totalorder %s23, 0
      %p107 = por %p105, %p106
      %p108 = scmp.ne.s32.totalorder %s96, %s97
      %p109 = scmp.eq.s32.totalorder %s24, 1
      %p110 = por %p108, %p109
      %p112 = scmp.ne.s32.totalorder %s97, %s111
      %p113 = scmp.eq.s32.totalorder %s24, 0
      %p114 = por %p112, %p113
      %s116 = sadd.s32 %s115, 1
      %p119 = scmp.eq.s32.totalorder %s18, 1
      %p120 = scmp.ne.s32.totalorder %s115, %s117
      %p121 = scmp.eq.s32.totalorder %s18, 0
      %p122 = por %p120, %p121
      %p123 = scmp.ne.s32.totalorder %s115, %s117
      %p124 = scmp.eq.s32.totalorder %s23, 1
      %p125 = por %p123, %p124
      %p126 = scmp.ne.s32.totalorder %s117, %s118
      %p127 = scmp.eq.s32.totalorder %s23, 0
      %p128 = por %p126, %p127
      %p129 = scmp.ne.s32.totalorder %s117, %s118
      %p130 = scmp.eq.s32.totalorder %s24, 1
      %p131 = por %p129, %p130
      %p133 = scmp.ne.s32.totalorder %s118, %s132
      %p134 = scmp.eq.s32.totalorder %s24, 0
      %p135 = por %p133, %p134
      %s137 = sadd.s32 %s136, 1
      %p140 = scmp.eq.s32.totalorder %s18, 1
      %p141 = scmp.ne.s32.totalorder %s136, %s138
      %p142 = scmp.eq.s32.totalorder %s18, 0
      %p143 = por %p141, %p142
      %p144 = scmp.ne.s32.totalorder %s136, %s138
      %p145 = scmp.eq.s32.totalorder %s23, 1
      %p146 = por %p144, %p145
      %p147 = scmp.ne.s32.totalorder %s138, %s139
      %p148 = scmp.eq.s32.totalorder %s23, 0
      %p149 = por %p147, %p148
      %p150 = scmp.ne.s32.totalorder %s138, %s139
      %p151 = scmp.eq.s32.totalorder %s24, 1
      %p152 = por %p150, %p151
      %p154 = scmp.ne.s32.totalorder %s139, %s153
      %p155 = scmp.eq.s32.totalorder %s24, 0
      %p156 = por %p154, %p155
      %s158 = sadd.s32 %s157, 1
      %p161 = scmp.eq.s32.totalorder %s18, 1
      %p162 = scmp.ne.s32.totalorder %s157, %s159
      %p163 = scmp.eq.s32.totalorder %s18, 0
      %p164 = por %p162, %p163
      %p165 = scmp.ne.s32.totalorder %s157, %s159
      %p166 = scmp.eq.s32.totalorder %s23, 1
      %p167 = por %p165, %p166
      %p168 = scmp.ne.s32.totalorder %s159, %s160
      %p169 = scmp.eq.s32.totalorder %s23, 0
      %p170 = por %p168, %p169
      %p171 = scmp.ne.s32.totalorder %s159, %s160
      %p172 = scmp.eq.s32.totalorder %s24, 1
      %p173 = por %p171, %p172
      %p175 = scmp.ne.s32.totalorder %s160, %s174
      %p176 = scmp.eq.s32.totalorder %s24, 0
      %p177 = por %p175, %p176
      %s178 = ssub.s32 %s18, %s25
      %p179 = scmp.eq.s32.totalorder %s178, 0
      %s181 = sadd.s32 %s180, 1
      %s182 = scalar_select %p179, %s180, %s181
      %p185 = pneg %p179
      %p186 = scmp.eq.s32.totalorder %s18, 1
      %p187 = por %p185, %p186
      %p188 = scmp.ne.s32.totalorder %s180, %s183
      %p189 = scmp.eq.s32.totalorder %s18, 0
      %p190 = por %p188, %p189
      %p191 = scmp.ne.s32.totalorder %s180, %s183
      %p192 = scmp.eq.s32.totalorder %s23, 1
      %p193 = por %p191, %p192
      %p194 = scmp.ne.s32.totalorder %s183, %s184
      %p195 = scmp.eq.s32.totalorder %s23, 0
      %p196 = por %p194, %p195
      %p197 = scmp.ne.s32.totalorder %s183, %s184
      %p198 = scmp.eq.s32.totalorder %s24, 1
      %p199 = por %p197, %p198
      %p201 = scmp.ne.s32.totalorder %s184, %s200
      %p202 = scmp.eq.s32.totalorder %s24, 0
      %p203 = por %p201, %p202
      %p204 = scmp.le.s32.totalorder 1, %s18
      %p205 = scmp.lt.s32.totalorder %s18, 3
      %p206 = pnand %p204, %p205
      %p207 = pneg %p206
      // Predicated region
      $region9: #{tpu_custom_call.1} parent=5 // pred_check
        _
      $region10: #{tpu_custom_call.1} parent=5 // pred_check_branch
        %209 = sbr.rel (%p206) target = $region12
      $region11: #{tpu_custom_call.1} parent=5 // pred_region
        %s210 = ssub.s32 %s18, 1
        // Predicated region
        $region13: #{tpu_custom_call.1} parent=11 // pred_check
          %p211 = pneg %p65
        $region14: #{tpu_custom_call.1} parent=11 // pred_check_branch
          %213 = sbr.rel (%p211) target = $region16
        $region15: #{tpu_custom_call.1} parent=11 // pred_region
          _
        $region16: #{tpu_custom_call.1} parent=11 // pred_fallthru
          _
        // Predicated region
        $region17: #{tpu_custom_call.1} parent=11 // pred_check
          %p214 = pneg %p86
        $region18: #{tpu_custom_call.1} parent=11 // pred_check_branch
          %216 = sbr.rel (%p214) target = $region20
        $region19: #{tpu_custom_call.1} parent=11 // pred_region
          _
        $region20: #{tpu_custom_call.1} parent=11 // pred_fallthru
          _
        // Predicated region
        $region21: #{tpu_custom_call.1} parent=11 // pred_check
          %p217 = pneg %p107
        $region22: #{tpu_custom_call.1} parent=11 // pred_check_branch
          %219 = sbr.rel (%p217) target = $region24
        $region23: #{tpu_custom_call.1} parent=11 // pred_region
          %s221 = ssub.s32 8192, 8192
          %222 = vsyncadd [#allocation3], %s221
          %s223 = sshll.u32 [#allocation2], 4
          %s224 = int_to_ptr.vmem [resolvable:$true] %s223
          %229 = dma.hbm_to_vmem [thread:$0]  %s3, 8192, %s224, [#allocation3], 256, 256, 16
        $region24: #{tpu_custom_call.1} parent=11 // pred_fallthru
          _
        // Predicated region
        $region25: #{tpu_custom_call.1} parent=11 // pred_check
          %p230 = pneg %p128
        $region26: #{tpu_custom_call.1} parent=11 // pred_check_branch
          %232 = sbr.rel (%p230) target = $region28
        $region27: #{tpu_custom_call.1} parent=11 // pred_region
          _
        $region28: #{tpu_custom_call.1} parent=11 // pred_fallthru
          _
        // Predicated region
        $region29: #{tpu_custom_call.1} parent=11 // pred_check
          %p233 = pneg %p149
        $region30: #{tpu_custom_call.1} parent=11 // pred_check_branch
          %235 = sbr.rel (%p233) target = $region32
        $region31: #{tpu_custom_call.1} parent=11 // pred_region
          %s237 = ssub.s32 32768, 32768
          %238 = vsyncadd [#allocation6], %s237
          %s239 = sshll.u32 [#allocation5], 4
          %s240 = int_to_ptr.vmem [resolvable:$true] %s239
          %245 = dma.hbm_to_vmem [thread:$0]  %s5, 32768, %s240, [#allocation6], 512, 512, 32
        $region32: #{tpu_custom_call.1} parent=11 // pred_fallthru
          _
        // Predicated region
        $region33: #{tpu_custom_call.1} parent=11 // pred_check
          %p246 = pneg %p170
        $region34: #{tpu_custom_call.1} parent=11 // pred_check_branch
          %248 = sbr.rel (%p246) target = $region36
        $region35: #{tpu_custom_call.1} parent=11 // pred_region
          _
        $region36: #{tpu_custom_call.1} parent=11 // pred_fallthru
          _
      $region12: #{tpu_custom_call.1} parent=5 // pred_fallthru
        _
      %p249 = scmp.lt.s32.totalorder %s18, 2
      // Predicated region
      $region37: #{tpu_custom_call.1} parent=5 // pred_check
        %p250 = pneg %p249
      $region38: #{tpu_custom_call.1} parent=5 // pred_check_branch
        %252 = sbr.rel (%p250) target = $region40
      $region39: #{tpu_custom_call.1} parent=5 // pred_region
        // Predicated region
        $region41: #{tpu_custom_call.1} parent=39 // pred_check
          %p253 = pneg %p38
        $region42: #{tpu_custom_call.1} parent=39 // pred_check_branch
          %255 = sbr.rel (%p253) target = $region44
        $region43: #{tpu_custom_call.1} parent=39 // pred_region
          %s256 = smul.u32 32, %s18
          %p257 = scmp.lt.s32.totalorder %s256, 63
          %s258 = scalar_select %p257, %s256, 63
          %s259 = smul.addr %s258, 4
          %s260 = scalar_lea.vmem %s0, %s259
          %s261 = smul.u32 32, %s18
        $region44: #{tpu_custom_call.1} parent=39 // pred_fallthru
          _
      $region40: #{tpu_custom_call.1} parent=5 // pred_fallthru
        _
      %p262 = scmp.le.s32.totalorder 1, %s18
      %p263 = scmp.lt.s32.totalorder %s18, 3
      %p264 = pnand %p262, %p263
      %p265 = pneg %p264
      // Predicated region
      $region45: #{tpu_custom_call.1} parent=5 // pred_check
        _
      $region46: #{tpu_custom_call.1} parent=5 // pred_check_branch
        %267 = sbr.rel (%p264) target = $region48
      $region47: #{tpu_custom_call.1} parent=5 // pred_region
        %s268 = ssub.s32 %s18, 1
        // Predicated region
        $region49: #{tpu_custom_call.1} parent=47 // pred_check
          %p269 = pneg %p107
        $region50: #{tpu_custom_call.1} parent=47 // pred_check_branch
          %271 = sbr.rel (%p269) target = $region52
        $region51: #{tpu_custom_call.1} parent=47 // pred_region
          %272 = dma.done [#allocation3], 8192
        $region52: #{tpu_custom_call.1} parent=47 // pred_fallthru
          _
        // Predicated region
        $region53: #{tpu_custom_call.1} parent=47 // pred_check
          %p273 = pneg %p149
        $region54: #{tpu_custom_call.1} parent=47 // pred_check_branch
          %275 = sbr.rel (%p273) target = $region56
        $region55: #{tpu_custom_call.1} parent=47 // pred_region
          %276 = dma.done [#allocation6], 32768
        $region56: #{tpu_custom_call.1} parent=47 // pred_fallthru
          _
        %s277 = smul.u32 32, %s23
        %p278 = scmp.lt.s32.totalorder %s277, 63
        %s279 = scalar_select %p278, %s277, 63
        %s280 = smul.addr %s279, 4
        %s281 = scalar_lea.vmem %s0, %s280
        %p282 = pneg %p44
        %p283 = pneg %p41
        %p284 = pneg %p65
        %p285 = pneg %p62
        %p286 = pneg %p86
        %p287 = pneg %p83
        %p288 = pneg %p107
        %p289 = pneg %p104
        %p290 = pneg %p128
        %p291 = pneg %p125
        %p292 = pneg %p149
        %p293 = pneg %p146
        %p294 = pneg %p170
        %p295 = pneg %p167
        %p296 = pneg %p196
        %p297 = pneg %p193
        %s298 = sand.u32 %s183, 1
        %s299 = scalar_lea.sflag [#allocation4], %s298
        %s300 = sand.u32 %s183, 1
        %s301 = smul.addr %s300, 1024
        %s302 = scalar_lea.vmem [#allocation7], %s301
        %s303 = smul.u32 32, %s23
        %p304 = scmp.lt.s32.totalorder %s303, 63
        %s305 = scalar_select %p304, %s303, 63
        %s306 = smul.addr %s305, 4
        %s307 = scalar_lea.vmem %s0, %s306
        %s308 = smul.u32 32, %s23
        %s309 = smul.u32 32, %s23
        %v311 = vld [vmem:[%s307] sm:$0xf]
        %v312 = vld [vmem:[%s307 + $0x4] sm:$0xf]
        %v313 = vld [vmem:[%s307 + $0x8] sm:$0xf]
        %v314 = vld [vmem:[%s307 + $0xc] sm:$0xf]
        %v315 = vld [vmem:[%s307 + $0x10] sm:$0xf]
        %v316 = vld [vmem:[%s307 + $0x14] sm:$0xf]
        %v317 = vld [vmem:[%s307 + $0x18] sm:$0xf]
        %v318 = vld [vmem:[%s307 + $0x1c] sm:$0xf]
        %v319 = vld [vmem:[%s307 + $0x20] sm:$0xf]
        %v320 = vld [vmem:[%s307 + $0x24] sm:$0xf]
        %v321 = vld [vmem:[%s307 + $0x28] sm:$0xf]
        %v322 = vld [vmem:[%s307 + $0x2c] sm:$0xf]
        %v323 = vld [vmem:[%s307 + $0x30] sm:$0xf]
        %v324 = vld [vmem:[%s307 + $0x34] sm:$0xf]
        %v325 = vld [vmem:[%s307 + $0x38] sm:$0xf]
        %v326 = vld [vmem:[%s307 + $0x3c] sm:$0xf]
        %v327 = vld [vmem:[%s307 + $0x40] sm:$0xf]
        %v328 = vld [vmem:[%s307 + $0x44] sm:$0xf]
        %v329 = vld [vmem:[%s307 + $0x48] sm:$0xf]
        %v330 = vld [vmem:[%s307 + $0x4c] sm:$0xf]
        %v331 = vld [vmem:[%s307 + $0x50] sm:$0xf]
        %v332 = vld [vmem:[%s307 + $0x54] sm:$0xf]
        %v333 = vld [vmem:[%s307 + $0x58] sm:$0xf]
        %v334 = vld [vmem:[%s307 + $0x5c] sm:$0xf]
        %v335 = vld [vmem:[%s307 + $0x60] sm:$0xf]
        %v336 = vld [vmem:[%s307 + $0x64] sm:$0xf]
        %v337 = vld [vmem:[%s307 + $0x68] sm:$0xf]
        %v338 = vld [vmem:[%s307 + $0x6c] sm:$0xf]
        %v339 = vld [vmem:[%s307 + $0x70] sm:$0xf]
        %v340 = vld [vmem:[%s307 + $0x74] sm:$0xf]
        %v341 = vld [vmem:[%s307 + $0x78] sm:$0xf]
        %v342 = vld [vmem:[%s307 + $0x7c] sm:$0xf]
        %v343 = vunpack.c.l.bf16 %v311
        %v344 = vunpack.c.l.bf16 %v312
        %v345 = vunpack.c.l.bf16 %v313
        %v346 = vunpack.c.l.bf16 %v314
        %v347 = vunpack.c.l.bf16 %v315
        %v348 = vunpack.c.l.bf16 %v316
        %v349 = vunpack.c.l.bf16 %v317
        %v350 = vunpack.c.l.bf16 %v318
        %v351 = vunpack.c.l.bf16 %v319
        %v352 = vunpack.c.l.bf16 %v320
        %v353 = vunpack.c.l.bf16 %v321
        %v354 = vunpack.c.l.bf16 %v322
        %v355 = vunpack.c.l.bf16 %v323
        %v356 = vunpack.c.l.bf16 %v324
        %v357 = vunpack.c.l.bf16 %v325
        %v358 = vunpack.c.l.bf16 %v326
        %v359 = vunpack.c.l.bf16 %v327
        %v360 = vunpack.c.l.bf16 %v328
        %v361 = vunpack.c.l.bf16 %v329
        %v362 = vunpack.c.l.bf16 %v330
        %v363 = vunpack.c.l.bf16 %v331
        %v364 = vunpack.c.l.bf16 %v332
        %v365 = vunpack.c.l.bf16 %v333
        %v366 = vunpack.c.l.bf16 %v334
        %v367 = vunpack.c.l.bf16 %v335
        %v368 = vunpack.c.l.bf16 %v336
        %v369 = vunpack.c.l.bf16 %v337
        %v370 = vunpack.c.l.bf16 %v338
        %v371 = vunpack.c.l.bf16 %v339
        %v372 = vunpack.c.l.bf16 %v340
        %v373 = vunpack.c.l.bf16 %v341
        %v374 = vunpack.c.l.bf16 %v342
        %vm375 = vcmp.ge.f32.partialorder %v343, 0.0
        %vm376 = vcmp.ge.f32.partialorder %v344, 0.0
        %vm377 = vcmp.ge.f32.partialorder %v345, 0.0
        %vm378 = vcmp.ge.f32.partialorder %v346, 0.0
        %vm379 = vcmp.ge.f32.partialorder %v347, 0.0
        %vm380 = vcmp.ge.f32.partialorder %v348, 0.0
        %vm381 = vcmp.ge.f32.partialorder %v349, 0.0
        %vm382 = vcmp.ge.f32.partialorder %v350, 0.0
        %vm383 = vcmp.ge.f32.partialorder %v351, 0.0
        %vm384 = vcmp.ge.f32.partialorder %v352, 0.0
        %vm385 = vcmp.ge.f32.partialorder %v353, 0.0
        %vm386 = vcmp.ge.f32.partialorder %v354, 0.0
        %vm387 = vcmp.ge.f32.partialorder %v355, 0.0
        %vm388 = vcmp.ge.f32.partialorder %v356, 0.0
        %vm389 = vcmp.ge.f32.partialorder %v357, 0.0
        %vm390 = vcmp.ge.f32.partialorder %v358, 0.0
        %vm391 = vcmp.ge.f32.partialorder %v359, 0.0
        %vm392 = vcmp.ge.f32.partialorder %v360, 0.0
        %vm393 = vcmp.ge.f32.partialorder %v361, 0.0
        %vm394 = vcmp.ge.f32.partialorder %v362, 0.0
        %vm395 = vcmp.ge.f32.partialorder %v363, 0.0
        %vm396 = vcmp.ge.f32.partialorder %v364, 0.0
        %vm397 = vcmp.ge.f32.partialorder %v365, 0.0
        %vm398 = vcmp.ge.f32.partialorder %v366, 0.0
        %vm399 = vcmp.ge.f32.partialorder %v367, 0.0
        %vm400 = vcmp.ge.f32.partialorder %v368, 0.0
        %vm401 = vcmp.ge.f32.partialorder %v369, 0.0
        %vm402 = vcmp.ge.f32.partialorder %v370, 0.0
        %vm403 = vcmp.ge.f32.partialorder %v371, 0.0
        %vm404 = vcmp.ge.f32.partialorder %v372, 0.0
        %vm405 = vcmp.ge.f32.partialorder %v373, 0.0
        %vm406 = vcmp.ge.f32.partialorder %v374, 0.0
        %v407 = vmul.f32 %v343, 0.2
        %v408 = vmul.f32 %v344, 0.2
        %v409 = vmul.f32 %v345, 0.2
        %v410 = vmul.f32 %v346, 0.2
        %v411 = vmul.f32 %v347, 0.2
        %v412 = vmul.f32 %v348, 0.2
        %v413 = vmul.f32 %v349, 0.2
        %v414 = vmul.f32 %v350, 0.2
        %v415 = vmul.f32 %v351, 0.2
        %v416 = vmul.f32 %v352, 0.2
        %v417 = vmul.f32 %v353, 0.2
        %v418 = vmul.f32 %v354, 0.2
        %v419 = vmul.f32 %v355, 0.2
        %v420 = vmul.f32 %v356, 0.2
        %v421 = vmul.f32 %v357, 0.2
        %v422 = vmul.f32 %v358, 0.2
        %v423 = vmul.f32 %v359, 0.2
        %v424 = vmul.f32 %v360, 0.2
        %v425 = vmul.f32 %v361, 0.2
        %v426 = vmul.f32 %v362, 0.2
        %v427 = vmul.f32 %v363, 0.2
        %v428 = vmul.f32 %v364, 0.2
        %v429 = vmul.f32 %v365, 0.2
        %v430 = vmul.f32 %v366, 0.2
        %v431 = vmul.f32 %v367, 0.2
        %v432 = vmul.f32 %v368, 0.2
        %v433 = vmul.f32 %v369, 0.2
        %v434 = vmul.f32 %v370, 0.2
        %v435 = vmul.f32 %v371, 0.2
        %v436 = vmul.f32 %v372, 0.2
        %v437 = vmul.f32 %v373, 0.2
        %v438 = vmul.f32 %v374, 0.2
        %v439 = vsel %vm375, %v343, %v407
        %v440 = vsel %vm376, %v344, %v408
        %v441 = vsel %vm377, %v345, %v409
        %v442 = vsel %vm378, %v346, %v410
        %v443 = vsel %vm379, %v347, %v411
        %v444 = vsel %vm380, %v348, %v412
        %v445 = vsel %vm381, %v349, %v413
        %v446 = vsel %vm382, %v350, %v414
        %v447 = vsel %vm383, %v351, %v415
        %v448 = vsel %vm384, %v352, %v416
        %v449 = vsel %vm385, %v353, %v417
        %v450 = vsel %vm386, %v354, %v418
        %v451 = vsel %vm387, %v355, %v419
        %v452 = vsel %vm388, %v356, %v420
        %v453 = vsel %vm389, %v357, %v421
        %v454 = vsel %vm390, %v358, %v422
        %v455 = vsel %vm391, %v359, %v423
        %v456 = vsel %vm392, %v360, %v424
        %v457 = vsel %vm393, %v361, %v425
        %v458 = vsel %vm394, %v362, %v426
        %v459 = vsel %vm395, %v363, %v427
        %v460 = vsel %vm396, %v364, %v428
        %v461 = vsel %vm397, %v365, %v429
        %v462 = vsel %vm398, %v366, %v430
        %v463 = vsel %vm399, %v367, %v431
        %v464 = vsel %vm400, %v368, %v432
        %v465 = vsel %vm401, %v369, %v433
        %v466 = vsel %vm402, %v370, %v434
        %v467 = vsel %vm403, %v371, %v435
        %v468 = vsel %vm404, %v372, %v436
        %v469 = vsel %vm405, %v373, %v437
        %v470 = vsel %vm406, %v374, %v438
        %v471 = vpack.c.bf16 %v440, %v439
        %v472 = vpack.c.bf16 %v442, %v441
        %v473 = vpack.c.bf16 %v444, %v443
        %v474 = vpack.c.bf16 %v446, %v445
        %v475 = vpack.c.bf16 %v448, %v447
        %v476 = vpack.c.bf16 %v450, %v449
        %v477 = vpack.c.bf16 %v452, %v451
        %v478 = vpack.c.bf16 %v454, %v453
        %v479 = vpack.c.bf16 %v456, %v455
        %v480 = vpack.c.bf16 %v458, %v457
        %v481 = vpack.c.bf16 %v460, %v459
        %v482 = vpack.c.bf16 %v462, %v461
        %v483 = vpack.c.bf16 %v464, %v463
        %v484 = vpack.c.bf16 %v466, %v465
        %v485 = vpack.c.bf16 %v468, %v467
        %v486 = vpack.c.bf16 %v470, %v469
        %v487 = vld [vmem:[%s1] sm:$0xf]
        %v488 = vld [vmem:[%s2] sm:$0x3]
        %v490 = vlaneseq
        %v491 = vshrl.u32 %v490, 7
        %v492 = vsub.s32 0, %v491
        %v493 = vrot.slane %v488, %v492
        %v494 = vlaneseq
        %v495 = vshrl.u32 %v494, 7
        %v496 = vsub.s32 1, %v495
        %v497 = vrot.slane %v488, %v496
        %v502 = vunpack.c.l.s4 1983009808
        %v503 = vunpack.c.0.s8 %v502
        %v504 = vlaneseq
        %v505 = vshrl.u32 %v504, 7
        %v506 = vsub.s32 %v503, %v505
        %v507 = vrot.slane %v487, %v506
        %v508 = vcombine.high %v507, %v507
        %vm509 = vcmask 31744
        %v511 = vsel %vm509, %v471, 0
        %v514 = vsel %vm509, %v472, 0
        %v517 = vsel %vm509, %v473, 0
        %v520 = vsel %vm509, %v474, 0
        %v523 = vsel %vm509, %v475, 0
        %v526 = vsel %vm509, %v476, 0
        %v529 = vsel %vm509, %v477, 0
        %v532 = vsel %vm509, %v478, 0
        %v535 = vsel %vm509, %v479, 0
        %v538 = vsel %vm509, %v480, 0
        %v541 = vsel %vm509, %v481, 0
        %v544 = vsel %vm509, %v482, 0
        %v547 = vsel %vm509, %v483, 0
        %v550 = vsel %vm509, %v484, 0
        %v553 = vsel %vm509, %v485, 0
        %v556 = vsel %vm509, %v486, 0
        %vm558 = vcmask 1041408
        %v560 = vsel %vm558, %v507, 0
        %v563 = vsel %vm558, %v508, 0
        %565 = vmatprep.subr.bf16.mxu0 %v563
        %566 = vmatpush1.bf16.msra.mxu0 %v560
        %567 = vmatprep.subr.bf16.mxu0 0
        %568 = vmatpush1.bf16.msra.mxu0 0
        %569 = vmatprep.subr.bf16.mxu0 0
        %570 = vmatpush1.bf16.msra.mxu0 0
        %571 = vmatprep.subr.bf16.mxu0 0
        %572 = vmatpush1.bf16.msra.mxu0 0
        %573 = vmatprep.subr.bf16.mxu0 0
        %574 = vmatpush1.bf16.msra.mxu0 0
        %575 = vmatprep.subr.bf16.mxu0 0
        %576 = vmatpush1.bf16.msra.mxu0 0
        %577 = vmatprep.subr.bf16.mxu0 0
        %578 = vmatpush1.bf16.msra.mxu0 0
        %579 = vmatprep.subr.bf16.mxu0 0
        %580 = vmatpush1.bf16.msra.mxu0 0
        %581 = vmatprep.subr.bf16.mxu0 0
        %582 = vmatpush1.bf16.msra.mxu0 0
        %583 = vmatprep.subr.bf16.mxu0 0
        %584 = vmatpush1.bf16.msra.mxu0 0
        %585 = vmatprep.subr.bf16.mxu0 0
        %586 = vmatpush1.bf16.msra.mxu0 0
        %587 = vmatprep.subr.bf16.mxu0 0
        %588 = vmatpush1.bf16.msra.mxu0 0
        %589 = vmatprep.subr.bf16.mxu0 0
        %590 = vmatpush1.bf16.msra.mxu0 0
        %591 = vmatprep.subr.bf16.mxu0 0
        %592 = vmatpush1.bf16.msra.mxu0 0
        %593 = vmatprep.subr.bf16.mxu0 0
        %594 = vmatpush1.bf16.msra.mxu0 0
        %595 = vmatprep.subr.bf16.mxu0 0
        %596 = vmatpush1.bf16.msra.mxu0 0
        %597 = vmatprep.mubr.bf16.mxu0 0
        %598 = vmatmul.mubr.bf16.gmra.mrb[0].mxu0 %v511
        %v599 = vpop.f32.mrb[0].mxu0
        %v600 = vadd.f32 %v493, %v599
        %v601 = vpop.f32.mrb[0].mxu0
        %v602 = vadd.f32 %v497, %v601
        %v603 = vpop.f32.mrb[0].mxu0
        %v604 = vadd.f32 %v493, %v603
        %v605 = vpop.f32.mrb[0].mxu0
        %v606 = vadd.f32 %v497, %v605
        %607 = vmatprep.mubr.bf16.mxu0 0
        %608 = vmatmul.mubr.bf16.gmra.mrb[0].mxu0 %v514
        %v609 = vpop.f32.mrb[0].mxu0
        %v610 = vadd.f32 %v493, %v609
        %v611 = vpop.f32.mrb[0].mxu0
        %v612 = vadd.f32 %v497, %v611
        %v613 = vpop.f32.mrb[0].mxu0
        %v614 = vadd.f32 %v493, %v613
        %v615 = vpop.f32.mrb[0].mxu0
        %v616 = vadd.f32 %v497, %v615
        %617 = vmatprep.mubr.bf16.mxu0 0
        %618 = vmatmul.mubr.bf16.gmra.mrb[0].mxu0 %v517
        %v619 = vpop.f32.mrb[0].mxu0
        %v620 = vadd.f32 %v493, %v619
        %v621 = vpop.f32.mrb[0].mxu0
        %v622 = vadd.f32 %v497, %v621
        %v623 = vpop.f32.mrb[0].mxu0
        %v624 = vadd.f32 %v493, %v623
        %v625 = vpop.f32.mrb[0].mxu0
        %v626 = vadd.f32 %v497, %v625
        %627 = vmatprep.mubr.bf16.mxu0 0
        %628 = vmatmul.mubr.bf16.gmra.mrb[0].mxu0 %v520
        %v629 = vpop.f32.mrb[0].mxu0
        %v630 = vadd.f32 %v493, %v629
        %v631 = vpop.f32.mrb[0].mxu0
        %v632 = vadd.f32 %v497, %v631
        %v633 = vpop.f32.mrb[0].mxu0
        %v634 = vadd.f32 %v493, %v633
        %v635 = vpop.f32.mrb[0].mxu0
        %v636 = vadd.f32 %v497, %v635
        %637 = vmatprep.mubr.bf16.mxu0 0
        %638 = vmatmul.mubr.bf16.gmra.mrb[0].mxu0 %v523
        %v639 = vpop.f32.mrb[0].mxu0
        %v640 = vadd.f32 %v493, %v639
        %v641 = vpop.f32.mrb[0].mxu0
        %v642 = vadd.f32 %v497, %v641
        %v643 = vpop.f32.mrb[0].mxu0
        %v644 = vadd.f32 %v493, %v643
        %v645 = vpop.f32.mrb[0].mxu0
        %v646 = vadd.f32 %v497, %v645
        %647 = vmatprep.mubr.bf16.mxu0 0
        %648 = vmatmul.mubr.bf16.gmra.mrb[0].mxu0 %v526
        %v649 = vpop.f32.mrb[0].mxu0
        %v650 = vadd.f32 %v493, %v649
        %v651 = vpop.f32.mrb[0].mxu0
        %v652 = vadd.f32 %v497, %v651
        %v653 = vpop.f32.mrb[0].mxu0
        %v654 = vadd.f32 %v493, %v653
        %v655 = vpop.f32.mrb[0].mxu0
        %v656 = vadd.f32 %v497, %v655
        %657 = vmatprep.mubr.bf16.mxu0 0
        %658 = vmatmul.mubr.bf16.gmra.mrb[0].mxu0 %v529
        %v659 = vpop.f32.mrb[0].mxu0
        %v660 = vadd.f32 %v493, %v659
        %v661 = vpop.f32.mrb[0].mxu0
        %v662 = vadd.f32 %v497, %v661
        %v663 = vpop.f32.mrb[0].mxu0
        %v664 = vadd.f32 %v493, %v663
        %v665 = vpop.f32.mrb[0].mxu0
        %v666 = vadd.f32 %v497, %v665
        %667 = vmatprep.mubr.bf16.mxu0 0
        %668 = vmatmul.mubr.bf16.gmra.mrb[0].mxu0 %v532
        %v669 = vpop.f32.mrb[0].mxu0
        %v670 = vadd.f32 %v493, %v669
        %v671 = vpop.f32.mrb[0].mxu0
        %v672 = vadd.f32 %v497, %v671
        %v673 = vpop.f32.mrb[0].mxu0
        %v674 = vadd.f32 %v493, %v673
        %v675 = vpop.f32.mrb[0].mxu0
        %v676 = vadd.f32 %v497, %v675
        %677 = vmatprep.mubr.bf16.mxu0 0
        %678 = vmatmul.mubr.bf16.gmra.mrb[0].mxu0 %v535
        %v679 = vpop.f32.mrb[0].mxu0
        %v680 = vadd.f32 %v493, %v679
        %v681 = vpop.f32.mrb[0].mxu0
        %v682 = vadd.f32 %v497, %v681
        %v683 = vpop.f32.mrb[0].mxu0
        %v684 = vadd.f32 %v493, %v683
        %v685 = vpop.f32.mrb[0].mxu0
        %v686 = vadd.f32 %v497, %v685
        %687 = vmatprep.mubr.bf16.mxu0 0
        %688 = vmatmul.mubr.bf16.gmra.mrb[0].mxu0 %v538
        %v689 = vpop.f32.mrb[0].mxu0
        %v690 = vadd.f32 %v493, %v689
        %v691 = vpop.f32.mrb[0].mxu0
        %v692 = vadd.f32 %v497, %v691
        %v693 = vpop.f32.mrb[0].mxu0
        %v694 = vadd.f32 %v493, %v693
        %v695 = vpop.f32.mrb[0].mxu0
        %v696 = vadd.f32 %v497, %v695
        %697 = vmatprep.mubr.bf16.mxu0 0
        %698 = vmatmul.mubr.bf16.gmra.mrb[0].mxu0 %v541
        %v699 = vpop.f32.mrb[0].mxu0
        %v700 = vadd.f32 %v493, %v699
        %v701 = vpop.f32.mrb[0].mxu0
        %v702 = vadd.f32 %v497, %v701
        %v703 = vpop.f32.mrb[0].mxu0
        %v704 = vadd.f32 %v493, %v703
        %v705 = vpop.f32.mrb[0].mxu0
        %v706 = vadd.f32 %v497, %v705
        %707 = vmatprep.mubr.bf16.mxu0 0
        %708 = vmatmul.mubr.bf16.gmra.mrb[0].mxu0 %v544
        %v709 = vpop.f32.mrb[0].mxu0
        %v710 = vadd.f32 %v493, %v709
        %v711 = vpop.f32.mrb[0].mxu0
        %v712 = vadd.f32 %v497, %v711
        %v713 = vpop.f32.mrb[0].mxu0
        %v714 = vadd.f32 %v493, %v713
        %v715 = vpop.f32.mrb[0].mxu0
        %v716 = vadd.f32 %v497, %v715
        %717 = vmatprep.mubr.bf16.mxu0 0
        %718 = vmatmul.mubr.bf16.gmra.mrb[0].mxu0 %v547
        %v719 = vpop.f32.mrb[0].mxu0
        %v720 = vadd.f32 %v493, %v719
        %v721 = vpop.f32.mrb[0].mxu0
        %v722 = vadd.f32 %v497, %v721
        %v723 = vpop.f32.mrb[0].mxu0
        %v724 = vadd.f32 %v493, %v723
        %v725 = vpop.f32.mrb[0].mxu0
        %v726 = vadd.f32 %v497, %v725
        %727 = vmatprep.mubr.bf16.mxu0 0
        %728 = vmatmul.mubr.bf16.gmra.mrb[0].mxu0 %v550
        %v729 = vpop.f32.mrb[0].mxu0
        %v730 = vadd.f32 %v493, %v729
        %v731 = vpop.f32.mrb[0].mxu0
        %v732 = vadd.f32 %v497, %v731
        %v733 = vpop.f32.mrb[0].mxu0
        %v734 = vadd.f32 %v493, %v733
        %v735 = vpop.f32.mrb[0].mxu0
        %v736 = vadd.f32 %v497, %v735
        %737 = vmatprep.mubr.bf16.mxu0 0
        %738 = vmatmul.mubr.bf16.gmra.mrb[0].mxu0 %v553
        %v739 = vpop.f32.mrb[0].mxu0
        %v740 = vadd.f32 %v493, %v739
        %v741 = vpop.f32.mrb[0].mxu0
        %v742 = vadd.f32 %v497, %v741
        %v743 = vpop.f32.mrb[0].mxu0
        %v744 = vadd.f32 %v493, %v743
        %v745 = vpop.f32.mrb[0].mxu0
        %v746 = vadd.f32 %v497, %v745
        %747 = vmatprep.mubr.bf16.mxu0 0
        %748 = vmatmul.mubr.bf16.gmra.mrb[0].mxu0 %v556
        %v749 = vpop.f32.mrb[0].mxu0
        %v750 = vadd.f32 %v493, %v749
        %v751 = vpop.f32.mrb[0].mxu0
        %v752 = vadd.f32 %v497, %v751
        %v753 = vpop.f32.mrb[0].mxu0
        %v754 = vadd.f32 %v493, %v753
        %v755 = vpop.f32.mrb[0].mxu0
        %v756 = vadd.f32 %v497, %v755
        %757 = vdwg.mxu0
        %vm758 = vcmp.ge.f32.partialorder %v600, 0.0
        %vm759 = vcmp.ge.f32.partialorder %v602, 0.0
        %vm760 = vcmp.ge.f32.partialorder %v604, 0.0
        %vm761 = vcmp.ge.f32.partialorder %v606, 0.0
        %vm762 = vcmp.ge.f32.partialorder %v610, 0.0
        %vm763 = vcmp.ge.f32.partialorder %v612, 0.0
        %vm764 = vcmp.ge.f32.partialorder %v614, 0.0
        %vm765 = vcmp.ge.f32.partialorder %v616, 0.0
        %vm766 = vcmp.ge.f32.partialorder %v620, 0.0
        %vm767 = vcmp.ge.f32.partialorder %v622, 0.0
        %vm768 = vcmp.ge.f32.partialorder %v624, 0.0
        %vm769 = vcmp.ge.f32.partialorder %v626, 0.0
        %vm770 = vcmp.ge.f32.partialorder %v630, 0.0
        %vm771 = vcmp.ge.f32.partialorder %v632, 0.0
        %vm772 = vcmp.ge.f32.partialorder %v634, 0.0
        %vm773 = vcmp.ge.f32.partialorder %v636, 0.0
        %vm774 = vcmp.ge.f32.partialorder %v640, 0.0
        %vm775 = vcmp.ge.f32.partialorder %v642, 0.0
        %vm776 = vcmp.ge.f32.partialorder %v644, 0.0
        %vm777 = vcmp.ge.f32.partialorder %v646, 0.0
        %vm778 = vcmp.ge.f32.partialorder %v650, 0.0
        %vm779 = vcmp.ge.f32.partialorder %v652, 0.0
        %vm780 = vcmp.ge.f32.partialorder %v654, 0.0
        %vm781 = vcmp.ge.f32.partialorder %v656, 0.0
        %vm782 = vcmp.ge.f32.partialorder %v660, 0.0
        %vm783 = vcmp.ge.f32.partialorder %v662, 0.0
        %vm784 = vcmp.ge.f32.partialorder %v664, 0.0
        %vm785 = vcmp.ge.f32.partialorder %v666, 0.0
        %vm786 = vcmp.ge.f32.partialorder %v670, 0.0
        %vm787 = vcmp.ge.f32.partialorder %v672, 0.0
        %vm788 = vcmp.ge.f32.partialorder %v674, 0.0
        %vm789 = vcmp.ge.f32.partialorder %v676, 0.0
        %vm790 = vcmp.ge.f32.partialorder %v680, 0.0
        %vm791 = vcmp.ge.f32.partialorder %v682, 0.0
        %vm792 = vcmp.ge.f32.partialorder %v684, 0.0
        %vm793 = vcmp.ge.f32.partialorder %v686, 0.0
        %vm794 = vcmp.ge.f32.partialorder %v690, 0.0
        %vm795 = vcmp.ge.f32.partialorder %v692, 0.0
        %vm796 = vcmp.ge.f32.partialorder %v694, 0.0
        %vm797 = vcmp.ge.f32.partialorder %v696, 0.0
        %vm798 = vcmp.ge.f32.partialorder %v700, 0.0
        %vm799 = vcmp.ge.f32.partialorder %v702, 0.0
        %vm800 = vcmp.ge.f32.partialorder %v704, 0.0
        %vm801 = vcmp.ge.f32.partialorder %v706, 0.0
        %vm802 = vcmp.ge.f32.partialorder %v710, 0.0
        %vm803 = vcmp.ge.f32.partialorder %v712, 0.0
        %vm804 = vcmp.ge.f32.partialorder %v714, 0.0
        %vm805 = vcmp.ge.f32.partialorder %v716, 0.0
        %vm806 = vcmp.ge.f32.partialorder %v720, 0.0
        %vm807 = vcmp.ge.f32.partialorder %v722, 0.0
        %vm808 = vcmp.ge.f32.partialorder %v724, 0.0
        %vm809 = vcmp.ge.f32.partialorder %v726, 0.0
        %vm810 = vcmp.ge.f32.partialorder %v730, 0.0
        %vm811 = vcmp.ge.f32.partialorder %v732, 0.0
        %vm812 = vcmp.ge.f32.partialorder %v734, 0.0
        %vm813 = vcmp.ge.f32.partialorder %v736, 0.0
        %vm814 = vcmp.ge.f32.partialorder %v740, 0.0
        %vm815 = vcmp.ge.f32.partialorder %v742, 0.0
        %vm816 = vcmp.ge.f32.partialorder %v744, 0.0
        %vm817 = vcmp.ge.f32.partialorder %v746, 0.0
        %vm818 = vcmp.ge.f32.partialorder %v750, 0.0
        %vm819 = vcmp.ge.f32.partialorder %v752, 0.0
        %vm820 = vcmp.ge.f32.partialorder %v754, 0.0
        %vm821 = vcmp.ge.f32.partialorder %v756, 0.0
        %v822 = vmul.f32 %v600, 0.2
        %v823 = vmul.f32 %v602, 0.2
        %v824 = vmul.f32 %v604, 0.2
        %v825 = vmul.f32 %v606, 0.2
        %v826 = vmul.f32 %v610, 0.2
        %v827 = vmul.f32 %v612, 0.2
        %v828 = vmul.f32 %v614, 0.2
        %v829 = vmul.f32 %v616, 0.2
        %v830 = vmul.f32 %v620, 0.2
        %v831 = vmul.f32 %v622, 0.2
        %v832 = vmul.f32 %v624, 0.2
        %v833 = vmul.f32 %v626, 0.2
        %v834 = vmul.f32 %v630, 0.2
        %v835 = vmul.f32 %v632, 0.2
        %v836 = vmul.f32 %v634, 0.2
        %v837 = vmul.f32 %v636, 0.2
        %v838 = vmul.f32 %v640, 0.2
        %v839 = vmul.f32 %v642, 0.2
        %v840 = vmul.f32 %v644, 0.2
        %v841 = vmul.f32 %v646, 0.2
        %v842 = vmul.f32 %v650, 0.2
        %v843 = vmul.f32 %v652, 0.2
        %v844 = vmul.f32 %v654, 0.2
        %v845 = vmul.f32 %v656, 0.2
        %v846 = vmul.f32 %v660, 0.2
        %v847 = vmul.f32 %v662, 0.2
        %v848 = vmul.f32 %v664, 0.2
        %v849 = vmul.f32 %v666, 0.2
        %v850 = vmul.f32 %v670, 0.2
        %v851 = vmul.f32 %v672, 0.2
        %v852 = vmul.f32 %v674, 0.2
        %v853 = vmul.f32 %v676, 0.2
        %v854 = vmul.f32 %v680, 0.2
        %v855 = vmul.f32 %v682, 0.2
        %v856 = vmul.f32 %v684, 0.2
        %v857 = vmul.f32 %v686, 0.2
        %v858 = vmul.f32 %v690, 0.2
        %v859 = vmul.f32 %v692, 0.2
        %v860 = vmul.f32 %v694, 0.2
        %v861 = vmul.f32 %v696, 0.2
        %v862 = vmul.f32 %v700, 0.2
        %v863 = vmul.f32 %v702, 0.2
        %v864 = vmul.f32 %v704, 0.2
        %v865 = vmul.f32 %v706, 0.2
        %v866 = vmul.f32 %v710, 0.2
        %v867 = vmul.f32 %v712, 0.2
        %v868 = vmul.f32 %v714, 0.2
        %v869 = vmul.f32 %v716, 0.2
        %v870 = vmul.f32 %v720, 0.2
        %v871 = vmul.f32 %v722, 0.2
        %v872 = vmul.f32 %v724, 0.2
        %v873 = vmul.f32 %v726, 0.2
        %v874 = vmul.f32 %v730, 0.2
        %v875 = vmul.f32 %v732, 0.2
        %v876 = vmul.f32 %v734, 0.2
        %v877 = vmul.f32 %v736, 0.2
        %v878 = vmul.f32 %v740, 0.2
        %v879 = vmul.f32 %v742, 0.2
        %v880 = vmul.f32 %v744, 0.2
        %v881 = vmul.f32 %v746, 0.2
        %v882 = vmul.f32 %v750, 0.2
        %v883 = vmul.f32 %v752, 0.2
        %v884 = vmul.f32 %v754, 0.2
        %v885 = vmul.f32 %v756, 0.2
        %v886 = vsel %vm758, %v600, %v822
        %v887 = vsel %vm759, %v602, %v823
        %v888 = vsel %vm760, %v604, %v824
        %v889 = vsel %vm761, %v606, %v825
        %v890 = vsel %vm762, %v610, %v826
        %v891 = vsel %vm763, %v612, %v827
        %v892 = vsel %vm764, %v614, %v828
        %v893 = vsel %vm765, %v616, %v829
        %v894 = vsel %vm766, %v620, %v830
        %v895 = vsel %vm767, %v622, %v831
        %v896 = vsel %vm768, %v624, %v832
        %v897 = vsel %vm769, %v626, %v833
        %v898 = vsel %vm770, %v630, %v834
        %v899 = vsel %vm771, %v632, %v835
        %v900 = vsel %vm772, %v634, %v836
        %v901 = vsel %vm773, %v636, %v837
        %v902 = vsel %vm774, %v640, %v838
        %v903 = vsel %vm775, %v642, %v839
        %v904 = vsel %vm776, %v644, %v840
        %v905 = vsel %vm777, %v646, %v841
        %v906 = vsel %vm778, %v650, %v842
        %v907 = vsel %vm779, %v652, %v843
        %v908 = vsel %vm780, %v654, %v844
        %v909 = vsel %vm781, %v656, %v845
        %v910 = vsel %vm782, %v660, %v846
        %v911 = vsel %vm783, %v662, %v847
        %v912 = vsel %vm784, %v664, %v848
        %v913 = vsel %vm785, %v666, %v849
        %v914 = vsel %vm786, %v670, %v850
        %v915 = vsel %vm787, %v672, %v851
        %v916 = vsel %vm788, %v674, %v852
        %v917 = vsel %vm789, %v676, %v853
        %v918 = vsel %vm790, %v680, %v854
        %v919 = vsel %vm791, %v682, %v855
        %v920 = vsel %vm792, %v684, %v856
        %v921 = vsel %vm793, %v686, %v857
        %v922 = vsel %vm794, %v690, %v858
        %v923 = vsel %vm795, %v692, %v859
        %v924 = vsel %vm796, %v694, %v860
        %v925 = vsel %vm797, %v696, %v861
        %v926 = vsel %vm798, %v700, %v862
        %v927 = vsel %vm799, %v702, %v863
        %v928 = vsel %vm800, %v704, %v864
        %v929 = vsel %vm801, %v706, %v865
        %v930 = vsel %vm802, %v710, %v866
        %v931 = vsel %vm803, %v712, %v867
        %v932 = vsel %vm804, %v714, %v868
        %v933 = vsel %vm805, %v716, %v869
        %v934 = vsel %vm806, %v720, %v870
        %v935 = vsel %vm807, %v722, %v871
        %v936 = vsel %vm808, %v724, %v872
        %v937 = vsel %vm809, %v726, %v873
        %v938 = vsel %vm810, %v730, %v874
        %v939 = vsel %vm811, %v732, %v875
        %v940 = vsel %vm812, %v734, %v876
        %v941 = vsel %vm813, %v736, %v877
        %v942 = vsel %vm814, %v740, %v878
        %v943 = vsel %vm815, %v742, %v879
        %v944 = vsel %vm816, %v744, %v880
        %v945 = vsel %vm817, %v746, %v881
        %v946 = vsel %vm818, %v750, %v882
        %v947 = vsel %vm819, %v752, %v883
        %v948 = vsel %vm820, %v754, %v884
        %v949 = vsel %vm821, %v756, %v885
        %v950 = vpack.c.bf16 %v888, %v886
        %v951 = vpack.c.bf16 %v889, %v887
        %v952 = vpack.c.bf16 %v892, %v890
        %v953 = vpack.c.bf16 %v893, %v891
        %v954 = vpack.c.bf16 %v896, %v894
        %v955 = vpack.c.bf16 %v897, %v895
        %v956 = vpack.c.bf16 %v900, %v898
        %v957 = vpack.c.bf16 %v901, %v899
        %v958 = vpack.c.bf16 %v904, %v902
        %v959 = vpack.c.bf16 %v905, %v903
        %v960 = vpack.c.bf16 %v908, %v906
        %v961 = vpack.c.bf16 %v909, %v907
        %v962 = vpack.c.bf16 %v912, %v910
        %v963 = vpack.c.bf16 %v913, %v911
        %v964 = vpack.c.bf16 %v916, %v914
        %v965 = vpack.c.bf16 %v917, %v915
        %v966 = vpack.c.bf16 %v920, %v918
        %v967 = vpack.c.bf16 %v921, %v919
        %v968 = vpack.c.bf16 %v924, %v922
        %v969 = vpack.c.bf16 %v925, %v923
        %v970 = vpack.c.bf16 %v928, %v926
        %v971 = vpack.c.bf16 %v929, %v927
        %v972 = vpack.c.bf16 %v932, %v930
        %v973 = vpack.c.bf16 %v933, %v931
        %v974 = vpack.c.bf16 %v936, %v934
        %v975 = vpack.c.bf16 %v937, %v935
        %v976 = vpack.c.bf16 %v940, %v938
        %v977 = vpack.c.bf16 %v941, %v939
        %v978 = vpack.c.bf16 %v944, %v942
        %v979 = vpack.c.bf16 %v945, %v943
        %v980 = vpack.c.bf16 %v948, %v946
        %v981 = vpack.c.bf16 %v949, %v947
        %v982 = vld [vmem:[#allocation2] sm:$0xff]
        %v983 = vld [vmem:[#allocation2 + $0x8] sm:$0xff]
        %v984 = vld [vmem:[#allocation2 + $0x10] sm:$0xff]
        %v985 = vld [vmem:[#allocation2 + $0x18] sm:$0xff]
        %v986 = vld [vmem:[#allocation2 + $0x20] sm:$0xff]
        %v987 = vld [vmem:[#allocation2 + $0x28] sm:$0xff]
        %v988 = vld [vmem:[#allocation2 + $0x30] sm:$0xff]
        %v989 = vld [vmem:[#allocation2 + $0x38] sm:$0xff]
        %v990 = vld [vmem:[#allocation2 + $0x40] sm:$0xff]
        %v991 = vld [vmem:[#allocation2 + $0x48] sm:$0xff]
        %v992 = vld [vmem:[#allocation2 + $0x50] sm:$0xff]
        %v993 = vld [vmem:[#allocation2 + $0x58] sm:$0xff]
        %v994 = vld [vmem:[#allocation2 + $0x60] sm:$0xff]
        %v995 = vld [vmem:[#allocation2 + $0x68] sm:$0xff]
        %v996 = vld [vmem:[#allocation2 + $0x70] sm:$0xff]
        %v997 = vld [vmem:[#allocation2 + $0x78] sm:$0xff]
        %v998 = vld [vmem:[#allocation2 + $0x80] sm:$0xff]
        %v999 = vld [vmem:[#allocation2 + $0x88] sm:$0xff]
        %v1000 = vld [vmem:[#allocation2 + $0x90] sm:$0xff]
        %v1001 = vld [vmem:[#allocation2 + $0x98] sm:$0xff]
        %v1002 = vld [vmem:[#allocation2 + $0xa0] sm:$0xff]
        %v1003 = vld [vmem:[#allocation2 + $0xa8] sm:$0xff]
        %v1004 = vld [vmem:[#allocation2 + $0xb0] sm:$0xff]
        %v1005 = vld [vmem:[#allocation2 + $0xb8] sm:$0xff]
        %v1006 = vld [vmem:[#allocation2 + $0xc0] sm:$0xff]
        %v1007 = vld [vmem:[#allocation2 + $0xc8] sm:$0xff]
        %v1008 = vld [vmem:[#allocation2 + $0xd0] sm:$0xff]
        %v1009 = vld [vmem:[#allocation2 + $0xd8] sm:$0xff]
        %v1010 = vld [vmem:[#allocation2 + $0xe0] sm:$0xff]
        %v1011 = vld [vmem:[#allocation2 + $0xe8] sm:$0xff]
        %v1012 = vld [vmem:[#allocation2 + $0xf0] sm:$0xff]
        %v1013 = vld [vmem:[#allocation2 + $0xf8] sm:$0xff]
        %v1014 = vld [vmem:[#allocation2 + $0x100] sm:$0xff]
        %v1015 = vld [vmem:[#allocation2 + $0x108] sm:$0xff]
        %v1016 = vld [vmem:[#allocation2 + $0x110] sm:$0xff]
        %v1017 = vld [vmem:[#allocation2 + $0x118] sm:$0xff]
        %v1018 = vld [vmem:[#allocation2 + $0x120] sm:$0xff]
        %v1019 = vld [vmem:[#allocation2 + $0x128] sm:$0xff]
        %v1020 = vld [vmem:[#allocation2 + $0x130] sm:$0xff]
        %v1021 = vld [vmem:[#allocation2 + $0x138] sm:$0xff]
        %v1022 = vld [vmem:[#allocation2 + $0x140] sm:$0xff]
        %v1023 = vld [vmem:[#allocation2 + $0x148] sm:$0xff]
        %v1024 = vld [vmem:[#allocation2 + $0x150] sm:$0xff]
        %v1025 = vld [vmem:[#allocation2 + $0x158] sm:$0xff]
        %v1026 = vld [vmem:[#allocation2 + $0x160] sm:$0xff]
        %v1027 = vld [vmem:[#allocation2 + $0x168] sm:$0xff]
        %v1028 = vld [vmem:[#allocation2 + $0x170] sm:$0xff]
        %v1029 = vld [vmem:[#allocation2 + $0x178] sm:$0xff]
        %v1030 = vld [vmem:[#allocation2 + $0x180] sm:$0xff]
        %v1031 = vld [vmem:[#allocation2 + $0x188] sm:$0xff]
        %v1032 = vld [vmem:[#allocation2 + $0x190] sm:$0xff]
        %v1033 = vld [vmem:[#allocation2 + $0x198] sm:$0xff]
        %v1034 = vld [vmem:[#allocation2 + $0x1a0] sm:$0xff]
        %v1035 = vld [vmem:[#allocation2 + $0x1a8] sm:$0xff]
        %v1036 = vld [vmem:[#allocation2 + $0x1b0] sm:$0xff]
        %v1037 = vld [vmem:[#allocation2 + $0x1b8] sm:$0xff]
        %v1038 = vld [vmem:[#allocation2 + $0x1c0] sm:$0xff]
        %v1039 = vld [vmem:[#allocation2 + $0x1c8] sm:$0xff]
        %v1040 = vld [vmem:[#allocation2 + $0x1d0] sm:$0xff]
        %v1041 = vld [vmem:[#allocation2 + $0x1d8] sm:$0xff]
        %v1042 = vld [vmem:[#allocation2 + $0x1e0] sm:$0xff]
        %v1043 = vld [vmem:[#allocation2 + $0x1e8] sm:$0xff]
        %v1044 = vld [vmem:[#allocation2 + $0x1f0] sm:$0xff]
        %v1045 = vld [vmem:[#allocation2 + $0x1f8] sm:$0xff]
        %v1046 = vld [vmem:[%s4] sm:$0xf]
        %v1048 = vlaneseq
        %v1049 = vshrl.u32 %v1048, 7
        %v1050 = vsub.s32 0, %v1049
        %v1051 = vrot.slane %v1046, %v1050
        %v1052 = vlaneseq
        %v1053 = vshrl.u32 %v1052, 7
        %v1054 = vsub.s32 1, %v1053
        %v1055 = vrot.slane %v1046, %v1054
        %v1056 = vlaneseq
        %v1057 = vshrl.u32 %v1056, 7
        %v1058 = vsub.s32 2, %v1057
        %v1059 = vrot.slane %v1046, %v1058
        %v1060 = vlaneseq
        %v1061 = vshrl.u32 %v1060, 7
        %v1062 = vsub.s32 3, %v1061
        %v1063 = vrot.slane %v1046, %v1062
        %v1132 = vunpack.c.l.b16 %v982
        %v1133 = vunpack.c.h.b16 %v982
        %v1134 = vunpack.c.l.b16 %v983
        %v1135 = vunpack.c.h.b16 %v983
        %v1136 = vunpack.c.l.b16 %v984
        %v1137 = vunpack.c.h.b16 %v984
        %v1138 = vunpack.c.l.b16 %v985
        %v1139 = vunpack.c.h.b16 %v985
        %v1140 = vunpack.c.l.b16 %v986
        %v1141 = vunpack.c.h.b16 %v986
        %v1142 = vunpack.c.l.b16 %v987
        %v1143 = vunpack.c.h.b16 %v987
        %v1144 = vunpack.c.l.b16 %v988
        %v1145 = vunpack.c.h.b16 %v988
        %v1146 = vunpack.c.l.b16 %v989
        %v1147 = vunpack.c.h.b16 %v989
        %v1148 = vunpack.c.l.b16 %v990
        %v1149 = vunpack.c.h.b16 %v990
        %v1150 = vunpack.c.l.b16 %v991
        %v1151 = vunpack.c.h.b16 %v991
        %v1152 = vunpack.c.l.b16 %v992
        %v1153 = vunpack.c.h.b16 %v992
        %v1154 = vunpack.c.l.b16 %v993
        %v1155 = vunpack.c.h.b16 %v993
        %v1156 = vunpack.c.l.b16 %v994
        %v1157 = vunpack.c.h.b16 %v994
        %v1158 = vunpack.c.l.b16 %v995
        %v1159 = vunpack.c.h.b16 %v995
        %v1160 = vunpack.c.l.b16 %v996
        %v1161 = vunpack.c.h.b16 %v996
        %v1162 = vunpack.c.l.b16 %v997
        %v1163 = vunpack.c.h.b16 %v997
        %v1164 = vunpack.c.l.b16 %v998
        %v1165 = vunpack.c.h.b16 %v998
        %v1166 = vunpack.c.l.b16 %v999
        %v1167 = vunpack.c.h.b16 %v999
        %v1168 = vunpack.c.l.b16 %v1000
        %v1169 = vunpack.c.h.b16 %v1000
        %v1170 = vunpack.c.l.b16 %v1001
        %v1171 = vunpack.c.h.b16 %v1001
        %v1172 = vunpack.c.l.b16 %v1002
        %v1173 = vunpack.c.h.b16 %v1002
        %v1174 = vunpack.c.l.b16 %v1003
        %v1175 = vunpack.c.h.b16 %v1003
        %v1176 = vunpack.c.l.b16 %v1004
        %v1177 = vunpack.c.h.b16 %v1004
        %v1178 = vunpack.c.l.b16 %v1005
        %v1179 = vunpack.c.h.b16 %v1005
        %v1180 = vunpack.c.l.b16 %v1006
        %v1181 = vunpack.c.h.b16 %v1006
        %v1182 = vunpack.c.l.b16 %v1007
        %v1183 = vunpack.c.h.b16 %v1007
        %v1184 = vunpack.c.l.b16 %v1008
        %v1185 = vunpack.c.h.b16 %v1008
        %v1186 = vunpack.c.l.b16 %v1009
        %v1187 = vunpack.c.h.b16 %v1009
        %v1188 = vunpack.c.l.b16 %v1010
        %v1189 = vunpack.c.h.b16 %v1010
        %v1190 = vunpack.c.l.b16 %v1011
        %v1191 = vunpack.c.h.b16 %v1011
        %v1192 = vunpack.c.l.b16 %v1012
        %v1193 = vunpack.c.h.b16 %v1012
        %v1194 = vunpack.c.l.b16 %v1013
        %v1195 = vunpack.c.h.b16 %v1013
        %v1196 = vunpack.c.l.b16 %v1014
        %v1197 = vunpack.c.h.b16 %v1014
        %v1198 = vunpack.c.l.b16 %v1015
        %v1199 = vunpack.c.h.b16 %v1015
        %v1200 = vunpack.c.l.b16 %v1016
        %v1201 = vunpack.c.h.b16 %v1016
        %v1202 = vunpack.c.l.b16 %v1017
        %v1203 = vunpack.c.h.b16 %v1017
        %v1204 = vunpack.c.l.b16 %v1018
        %v1205 = vunpack.c.h.b16 %v1018
        %v1206 = vunpack.c.l.b16 %v1019
        %v1207 = vunpack.c.h.b16 %v1019
        %v1208 = vunpack.c.l.b16 %v1020
        %v1209 = vunpack.c.h.b16 %v1020
        %v1210 = vunpack.c.l.b16 %v1021
        %v1211 = vunpack.c.h.b16 %v1021
        %v1212 = vunpack.c.l.b16 %v1022
        %v1213 = vunpack.c.h.b16 %v1022
        %v1214 = vunpack.c.l.b16 %v1023
        %v1215 = vunpack.c.h.b16 %v1023
        %v1216 = vunpack.c.l.b16 %v1024
        %v1217 = vunpack.c.h.b16 %v1024
        %v1218 = vunpack.c.l.b16 %v1025
        %v1219 = vunpack.c.h.b16 %v1025
        %v1220 = vunpack.c.l.b16 %v1026
        %v1221 = vunpack.c.h.b16 %v1026
        %v1222 = vunpack.c.l.b16 %v1027
        %v1223 = vunpack.c.h.b16 %v1027
        %v1224 = vunpack.c.l.b16 %v1028
        %v1225 = vunpack.c.h.b16 %v1028
        %v1226 = vunpack.c.l.b16 %v1029
        %v1227 = vunpack.c.h.b16 %v1029
        %v1228 = vunpack.c.l.b16 %v1030
        %v1229 = vunpack.c.h.b16 %v1030
        %v1230 = vunpack.c.l.b16 %v1031
        %v1231 = vunpack.c.h.b16 %v1031
        %v1232 = vunpack.c.l.b16 %v1032
        %v1233 = vunpack.c.h.b16 %v1032
        %v1234 = vunpack.c.l.b16 %v1033
        %v1235 = vunpack.c.h.b16 %v1033
        %v1236 = vunpack.c.l.b16 %v1034
        %v1237 = vunpack.c.h.b16 %v1034
        %v1238 = vunpack.c.l.b16 %v1035
        %v1239 = vunpack.c.h.b16 %v1035
        %v1240 = vunpack.c.l.b16 %v1036
        %v1241 = vunpack.c.h.b16 %v1036
        %v1242 = vunpack.c.l.b16 %v1037
        %v1243 = vunpack.c.h.b16 %v1037
        %v1244 = vunpack.c.l.b16 %v1038
        %v1245 = vunpack.c.h.b16 %v1038
        %v1246 = vunpack.c.l.b16 %v1039
        %v1247 = vunpack.c.h.b16 %v1039
        %v1248 = vunpack.c.l.b16 %v1040
        %v1249 = vunpack.c.h.b16 %v1040
        %v1250 = vunpack.c.l.b16 %v1041
        %v1251 = vunpack.c.h.b16 %v1041
        %v1252 = vunpack.c.l.b16 %v1042
        %v1253 = vunpack.c.h.b16 %v1042
        %v1254 = vunpack.c.l.b16 %v1043
        %v1255 = vunpack.c.h.b16 %v1043
        %v1256 = vunpack.c.l.b16 %v1044
        %v1257 = vunpack.c.h.b16 %v1044
        %v1258 = vunpack.c.l.b16 %v1045
        %v1259 = vunpack.c.h.b16 %v1045
        %v1260 = vpack.c.b16 %v1136, %v1132
        %v1261 = vpack.c.b16 %v1137, %v1133
        %v1262 = vpack.c.b16 %v1138, %v1134
        %v1263 = vpack.c.b16 %v1139, %v1135
        %v1264 = vpack.c.b16 %v1144, %v1140
        %v1265 = vpack.c.b16 %v1145, %v1141
        %v1266 = vpack.c.b16 %v1146, %v1142
        %v1267 = vpack.c.b16 %v1147, %v1143
        %v1268 = vpack.c.b16 %v1152, %v1148
        %v1269 = vpack.c.b16 %v1153, %v1149
        %v1270 = vpack.c.b16 %v1154, %v1150
        %v1271 = vpack.c.b16 %v1155, %v1151
        %v1272 = vpack.c.b16 %v1160, %v1156
        %v1273 = vpack.c.b16 %v1161, %v1157
        %v1274 = vpack.c.b16 %v1162, %v1158
        %v1275 = vpack.c.b16 %v1163, %v1159
        %v1276 = vpack.c.b16 %v1168, %v1164
        %v1277 = vpack.c.b16 %v1169, %v1165
        %v1278 = vpack.c.b16 %v1170, %v1166
        %v1279 = vpack.c.b16 %v1171, %v1167
        %v1280 = vpack.c.b16 %v1176, %v1172
        %v1281 = vpack.c.b16 %v1177, %v1173
        %v1282 = vpack.c.b16 %v1178, %v1174
        %v1283 = vpack.c.b16 %v1179, %v1175
        %v1284 = vpack.c.b16 %v1184, %v1180
        %v1285 = vpack.c.b16 %v1185, %v1181
        %v1286 = vpack.c.b16 %v1186, %v1182
        %v1287 = vpack.c.b16 %v1187, %v1183
        %v1288 = vpack.c.b16 %v1192, %v1188
        %v1289 = vpack.c.b16 %v1193, %v1189
        %v1290 = vpack.c.b16 %v1194, %v1190
        %v1291 = vpack.c.b16 %v1195, %v1191
        %v1292 = vpack.c.b16 %v1200, %v1196
        %v1293 = vpack.c.b16 %v1201, %v1197
        %v1294 = vpack.c.b16 %v1202, %v1198
        %v1295 = vpack.c.b16 %v1203, %v1199
        %v1296 = vpack.c.b16 %v1208, %v1204
        %v1297 = vpack.c.b16 %v1209, %v1205
        %v1298 = vpack.c.b16 %v1210, %v1206
        %v1299 = vpack.c.b16 %v1211, %v1207
        %v1300 = vpack.c.b16 %v1216, %v1212
        %v1301 = vpack.c.b16 %v1217, %v1213
        %v1302 = vpack.c.b16 %v1218, %v1214
        %v1303 = vpack.c.b16 %v1219, %v1215
        %v1304 = vpack.c.b16 %v1224, %v1220
        %v1305 = vpack.c.b16 %v1225, %v1221
        %v1306 = vpack.c.b16 %v1226, %v1222
        %v1307 = vpack.c.b16 %v1227, %v1223
        %v1308 = vpack.c.b16 %v1232, %v1228
        %v1309 = vpack.c.b16 %v1233, %v1229
        %v1310 = vpack.c.b16 %v1234, %v1230
        %v1311 = vpack.c.b16 %v1235, %v1231
        %v1312 = vpack.c.b16 %v1240, %v1236
        %v1313 = vpack.c.b16 %v1241, %v1237
        %v1314 = vpack.c.b16 %v1242, %v1238
        %v1315 = vpack.c.b16 %v1243, %v1239
        %v1316 = vpack.c.b16 %v1248, %v1244
        %v1317 = vpack.c.b16 %v1249, %v1245
        %v1318 = vpack.c.b16 %v1250, %v1246
        %v1319 = vpack.c.b16 %v1251, %v1247
        %v1320 = vpack.c.b16 %v1256, %v1252
        %v1321 = vpack.c.b16 %v1257, %v1253
        %v1322 = vpack.c.b16 %v1258, %v1254
        %v1323 = vpack.c.b16 %v1259, %v1255
        %1388 = vmatprep.subr.bf16.mxu0 %v1261
        %1389 = vmatpush1.bf16.msra.mxu0 %v1260
        %1390 = vmatprep.subr.bf16.mxu0 %v1265
        %1391 = vmatpush1.bf16.msra.mxu0 %v1264
        %1392 = vmatprep.subr.bf16.mxu0 %v1269
        %1393 = vmatpush1.bf16.msra.mxu0 %v1268
        %1394 = vmatprep.subr.bf16.mxu0 %v1273
        %1395 = vmatpush1.bf16.msra.mxu0 %v1272
        %1396 = vmatprep.subr.bf16.mxu0 %v1277
        %1397 = vmatpush1.bf16.msra.mxu0 %v1276
        %1398 = vmatprep.subr.bf16.mxu0 %v1281
        %1399 = vmatpush1.bf16.msra.mxu0 %v1280
        %1400 = vmatprep.subr.bf16.mxu0 %v1285
        %1401 = vmatpush1.bf16.msra.mxu0 %v1284
        %1402 = vmatprep.subr.bf16.mxu0 %v1289
        %1403 = vmatpush1.bf16.msra.mxu0 %v1288
        %1404 = vmatprep.subr.bf16.mxu0 %v1293
        %1405 = vmatpush1.bf16.msra.mxu0 %v1292
        %1406 = vmatprep.subr.bf16.mxu0 %v1297
        %1407 = vmatpush1.bf16.msra.mxu0 %v1296
        %1408 = vmatprep.subr.bf16.mxu0 %v1301
        %1409 = vmatpush1.bf16.msra.mxu0 %v1300
        %1410 = vmatprep.subr.bf16.mxu0 %v1305
        %1411 = vmatpush1.bf16.msra.mxu0 %v1304
        %1412 = vmatprep.subr.bf16.mxu0 %v1309
        %1413 = vmatpush1.bf16.msra.mxu0 %v1308
        %1414 = vmatprep.subr.bf16.mxu0 %v1313
        %1415 = vmatpush1.bf16.msra.mxu0 %v1312
        %1416 = vmatprep.subr.bf16.mxu0 %v1317
        %1417 = vmatpush1.bf16.msra.mxu0 %v1316
        %1418 = vmatprep.subr.bf16.mxu0 %v1321
        %1419 = vmatpush1.bf16.msra.mxu0 %v1320
        %1420 = vmatprep.mubr.bf16.mxu0 %v951
        %1421 = vmatmul.mubr.bf16.gmra.mrb[0].mxu0 %v950
        %v1422 = vpop.f32.mrb[0].mxu0
        %v1423 = vadd.f32 %v1051, %v1422
        %v1424 = vpop.f32.mrb[0].mxu0
        %v1425 = vadd.f32 %v1055, %v1424
        %v1426 = vpop.f32.mrb[0].mxu0
        %v1427 = vadd.f32 %v1051, %v1426
        %v1428 = vpop.f32.mrb[0].mxu0
        %v1429 = vadd.f32 %v1055, %v1428
        %1430 = vmatprep.mubr.bf16.mxu0 %v953
        %1431 = vmatmul.mubr.bf16.gmra.mrb[0].mxu0 %v952
        %v1432 = vpop.f32.mrb[0].mxu0
        %v1433 = vadd.f32 %v1051, %v1432
        %v1434 = vpop.f32.mrb[0].mxu0
        %v1435 = vadd.f32 %v1055, %v1434
        %v1436 = vpop.f32.mrb[0].mxu0
        %v1437 = vadd.f32 %v1051, %v1436
        %v1438 = vpop.f32.mrb[0].mxu0
        %v1439 = vadd.f32 %v1055, %v1438
        %1440 = vmatprep.mubr.bf16.mxu0 %v955
        %1441 = vmatmul.mubr.bf16.gmra.mrb[0].mxu0 %v954
        %v1442 = vpop.f32.mrb[0].mxu0
        %v1443 = vadd.f32 %v1051, %v1442
        %v1444 = vpop.f32.mrb[0].mxu0
        %v1445 = vadd.f32 %v1055, %v1444
        %v1446 = vpop.f32.mrb[0].mxu0
        %v1447 = vadd.f32 %v1051, %v1446
        %v1448 = vpop.f32.mrb[0].mxu0
        %v1449 = vadd.f32 %v1055, %v1448
        %1450 = vmatprep.mubr.bf16.mxu0 %v957
        %1451 = vmatmul.mubr.bf16.gmra.mrb[0].mxu0 %v956
        %v1452 = vpop.f32.mrb[0].mxu0
        %v1453 = vadd.f32 %v1051, %v1452
        %v1454 = vpop.f32.mrb[0].mxu0
        %v1455 = vadd.f32 %v1055, %v1454
        %v1456 = vpop.f32.mrb[0].mxu0
        %v1457 = vadd.f32 %v1051, %v1456
        %v1458 = vpop.f32.mrb[0].mxu0
        %v1459 = vadd.f32 %v1055, %v1458
        %1460 = vmatprep.mubr.bf16.mxu0 %v959
        %1461 = vmatmul.mubr.bf16.gmra.mrb[0].mxu0 %v958
        %v1462 = vpop.f32.mrb[0].mxu0
        %v1463 = vadd.f32 %v1051, %v1462
        %v1464 = vpop.f32.mrb[0].mxu0
        %v1465 = vadd.f32 %v1055, %v1464
        %v1466 = vpop.f32.mrb[0].mxu0
        %v1467 = vadd.f32 %v1051, %v1466
        %v1468 = vpop.f32.mrb[0].mxu0
        %v1469 = vadd.f32 %v1055, %v1468
        %1470 = vmatprep.mubr.bf16.mxu0 %v961
        %1471 = vmatmul.mubr.bf16.gmra.mrb[0].mxu0 %v960
        %v1472 = vpop.f32.mrb[0].mxu0
        %v1473 = vadd.f32 %v1051, %v1472
        %v1474 = vpop.f32.mrb[0].mxu0
        %v1475 = vadd.f32 %v1055, %v1474
        %v1476 = vpop.f32.mrb[0].mxu0
        %v1477 = vadd.f32 %v1051, %v1476
        %v1478 = vpop.f32.mrb[0].mxu0
        %v1479 = vadd.f32 %v1055, %v1478
        %1480 = vmatprep.mubr.bf16.mxu0 %v963
        %1481 = vmatmul.mubr.bf16.gmra.mrb[0].mxu0 %v962
        %v1482 = vpop.f32.mrb[0].mxu0
        %v1483 = vadd.f32 %v1051, %v1482
        %v1484 = vpop.f32.mrb[0].mxu0
        %v1485 = vadd.f32 %v1055, %v1484
        %v1486 = vpop.f32.mrb[0].mxu0
        %v1487 = vadd.f32 %v1051, %v1486
        %v1488 = vpop.f32.mrb[0].mxu0
        %v1489 = vadd.f32 %v1055, %v1488
        %1490 = vmatprep.mubr.bf16.mxu0 %v965
        %1491 = vmatmul.mubr.bf16.gmra.mrb[0].mxu0 %v964
        %v1492 = vpop.f32.mrb[0].mxu0
        %v1493 = vadd.f32 %v1051, %v1492
        %v1494 = vpop.f32.mrb[0].mxu0
        %v1495 = vadd.f32 %v1055, %v1494
        %v1496 = vpop.f32.mrb[0].mxu0
        %v1497 = vadd.f32 %v1051, %v1496
        %v1498 = vpop.f32.mrb[0].mxu0
        %v1499 = vadd.f32 %v1055, %v1498
        %1500 = vmatprep.mubr.bf16.mxu0 %v967
        %1501 = vmatmul.mubr.bf16.gmra.mrb[0].mxu0 %v966
        %v1502 = vpop.f32.mrb[0].mxu0
        %v1503 = vadd.f32 %v1051, %v1502
        %v1504 = vpop.f32.mrb[0].mxu0
        %v1505 = vadd.f32 %v1055, %v1504
        %v1506 = vpop.f32.mrb[0].mxu0
        %v1507 = vadd.f32 %v1051, %v1506
        %v1508 = vpop.f32.mrb[0].mxu0
        %v1509 = vadd.f32 %v1055, %v1508
        %1510 = vmatprep.mubr.bf16.mxu0 %v969
        %1511 = vmatmul.mubr.bf16.gmra.mrb[0].mxu0 %v968
        %v1512 = vpop.f32.mrb[0].mxu0
        %v1513 = vadd.f32 %v1051, %v1512
        %v1514 = vpop.f32.mrb[0].mxu0
        %v1515 = vadd.f32 %v1055, %v1514
        %v1516 = vpop.f32.mrb[0].mxu0
        %v1517 = vadd.f32 %v1051, %v1516
        %v1518 = vpop.f32.mrb[0].mxu0
        %v1519 = vadd.f32 %v1055, %v1518
        %1520 = vmatprep.mubr.bf16.mxu0 %v971
        %1521 = vmatmul.mubr.bf16.gmra.mrb[0].mxu0 %v970
        %v1522 = vpop.f32.mrb[0].mxu0
        %v1523 = vadd.f32 %v1051, %v1522
        %v1524 = vpop.f32.mrb[0].mxu0
        %v1525 = vadd.f32 %v1055, %v1524
        %v1526 = vpop.f32.mrb[0].mxu0
        %v1527 = vadd.f32 %v1051, %v1526
        %v1528 = vpop.f32.mrb[0].mxu0
        %v1529 = vadd.f32 %v1055, %v1528
        %1530 = vmatprep.mubr.bf16.mxu0 %v973
        %1531 = vmatmul.mubr.bf16.gmra.mrb[0].mxu0 %v972
        %v1532 = vpop.f32.mrb[0].mxu0
        %v1533 = vadd.f32 %v1051, %v1532
        %v1534 = vpop.f32.mrb[0].mxu0
        %v1535 = vadd.f32 %v1055, %v1534
        %v1536 = vpop.f32.mrb[0].mxu0
        %v1537 = vadd.f32 %v1051, %v1536
        %v1538 = vpop.f32.mrb[0].mxu0
        %v1539 = vadd.f32 %v1055, %v1538
        %1540 = vmatprep.mubr.bf16.mxu0 %v975
        %1541 = vmatmul.mubr.bf16.gmra.mrb[0].mxu0 %v974
        %v1542 = vpop.f32.mrb[0].mxu0
        %v1543 = vadd.f32 %v1051, %v1542
        %v1544 = vpop.f32.mrb[0].mxu0
        %v1545 = vadd.f32 %v1055, %v1544
        %v1546 = vpop.f32.mrb[0].mxu0
        %v1547 = vadd.f32 %v1051, %v1546
        %v1548 = vpop.f32.mrb[0].mxu0
        %v1549 = vadd.f32 %v1055, %v1548
        %1550 = vmatprep.mubr.bf16.mxu0 %v977
        %1551 = vmatmul.mubr.bf16.gmra.mrb[0].mxu0 %v976
        %v1552 = vpop.f32.mrb[0].mxu0
        %v1553 = vadd.f32 %v1051, %v1552
        %v1554 = vpop.f32.mrb[0].mxu0
        %v1555 = vadd.f32 %v1055, %v1554
        %v1556 = vpop.f32.mrb[0].mxu0
        %v1557 = vadd.f32 %v1051, %v1556
        %v1558 = vpop.f32.mrb[0].mxu0
        %v1559 = vadd.f32 %v1055, %v1558
        %1560 = vmatprep.mubr.bf16.mxu0 %v979
        %1561 = vmatmul.mubr.bf16.gmra.mrb[0].mxu0 %v978
        %v1562 = vpop.f32.mrb[0].mxu0
        %v1563 = vadd.f32 %v1051, %v1562
        %v1564 = vpop.f32.mrb[0].mxu0
        %v1565 = vadd.f32 %v1055, %v1564
        %v1566 = vpop.f32.mrb[0].mxu0
        %v1567 = vadd.f32 %v1051, %v1566
        %v1568 = vpop.f32.mrb[0].mxu0
        %v1569 = vadd.f32 %v1055, %v1568
        %1570 = vmatprep.mubr.bf16.mxu0 %v981
        %1571 = vmatmul.mubr.bf16.gmra.mrb[0].mxu0 %v980
        %v1572 = vpop.f32.mrb[0].mxu0
        %v1573 = vadd.f32 %v1051, %v1572
        %v1574 = vpop.f32.mrb[0].mxu0
        %v1575 = vadd.f32 %v1055, %v1574
        %v1576 = vpop.f32.mrb[0].mxu0
        %v1577 = vadd.f32 %v1051, %v1576
        %v1578 = vpop.f32.mrb[0].mxu0
        %v1579 = vadd.f32 %v1055, %v1578
        %1580 = vdwg.mxu0
        %1581 = vmatprep.subr.bf16.mxu0 %v1263
        %1582 = vmatpush1.bf16.msra.mxu0 %v1262
        %1583 = vmatprep.subr.bf16.mxu0 %v1267
        %1584 = vmatpush1.bf16.msra.mxu0 %v1266
        %1585 = vmatprep.subr.bf16.mxu0 %v1271
        %1586 = vmatpush1.bf16.msra.mxu0 %v1270
        %1587 = vmatprep.subr.bf16.mxu0 %v1275
        %1588 = vmatpush1.bf16.msra.mxu0 %v1274
        %1589 = vmatprep.subr.bf16.mxu0 %v1279
        %1590 = vmatpush1.bf16.msra.mxu0 %v1278
        %1591 = vmatprep.subr.bf16.mxu0 %v1283
        %1592 = vmatpush1.bf16.msra.mxu0 %v1282
        %1593 = vmatprep.subr.bf16.mxu0 %v1287
        %1594 = vmatpush1.bf16.msra.mxu0 %v1286
        %1595 = vmatprep.subr.bf16.mxu0 %v1291
        %1596 = vmatpush1.bf16.msra.mxu0 %v1290
        %1597 = vmatprep.subr.bf16.mxu0 %v1295
        %1598 = vmatpush1.bf16.msra.mxu0 %v1294
        %1599 = vmatprep.subr.bf16.mxu0 %v1299
        %1600 = vmatpush1.bf16.msra.mxu0 %v1298
        %1601 = vmatprep.subr.bf16.mxu0 %v1303
        %1602 = vmatpush1.bf16.msra.mxu0 %v1302
        %1603 = vmatprep.subr.bf16.mxu0 %v1307
        %1604 = vmatpush1.bf16.msra.mxu0 %v1306
        %1605 = vmatprep.subr.bf16.mxu0 %v1311
        %1606 = vmatpush1.bf16.msra.mxu0 %v1310
        %1607 = vmatprep.subr.bf16.mxu0 %v1315
        %1608 = vmatpush1.bf16.msra.mxu0 %v1314
        %1609 = vmatprep.subr.bf16.mxu0 %v1319
        %1610 = vmatpush1.bf16.msra.mxu0 %v1318
        %1611 = vmatprep.subr.bf16.mxu0 %v1323
        %1612 = vmatpush1.bf16.msra.mxu0 %v1322
        %1613 = vmatprep.mubr.bf16.mxu0 %v951
        %1614 = vmatmul.mubr.bf16.gmra.mrb[0].mxu0 %v950
        %v1615 = vpop.f32.mrb[0].mxu0
        %v1616 = vadd.f32 %v1059, %v1615
        %v1617 = vpop.f32.mrb[0].mxu0
        %v1618 = vadd.f32 %v1063, %v1617
        %v1619 = vpop.f32.mrb[0].mxu0
        %v1620 = vadd.f32 %v1059, %v1619
        %v1621 = vpop.f32.mrb[0].mxu0
        %v1622 = vadd.f32 %v1063, %v1621
        %1623 = vmatprep.mubr.bf16.mxu0 %v953
        %1624 = vmatmul.mubr.bf16.gmra.mrb[0].mxu0 %v952
        %v1625 = vpop.f32.mrb[0].mxu0
        %v1626 = vadd.f32 %v1059, %v1625
        %v1627 = vpop.f32.mrb[0].mxu0
        %v1628 = vadd.f32 %v1063, %v1627
        %v1629 = vpop.f32.mrb[0].mxu0
        %v1630 = vadd.f32 %v1059, %v1629
        %v1631 = vpop.f32.mrb[0].mxu0
        %v1632 = vadd.f32 %v1063, %v1631
        %1633 = vmatprep.mubr.bf16.mxu0 %v955
        %1634 = vmatmul.mubr.bf16.gmra.mrb[0].mxu0 %v954
        %v1635 = vpop.f32.mrb[0].mxu0
        %v1636 = vadd.f32 %v1059, %v1635
        %v1637 = vpop.f32.mrb[0].mxu0
        %v1638 = vadd.f32 %v1063, %v1637
        %v1639 = vpop.f32.mrb[0].mxu0
        %v1640 = vadd.f32 %v1059, %v1639
        %v1641 = vpop.f32.mrb[0].mxu0
        %v1642 = vadd.f32 %v1063, %v1641
        %1643 = vmatprep.mubr.bf16.mxu0 %v957
        %1644 = vmatmul.mubr.bf16.gmra.mrb[0].mxu0 %v956
        %v1645 = vpop.f32.mrb[0].mxu0
        %v1646 = vadd.f32 %v1059, %v1645
        %v1647 = vpop.f32.mrb[0].mxu0
        %v1648 = vadd.f32 %v1063, %v1647
        %v1649 = vpop.f32.mrb[0].mxu0
        %v1650 = vadd.f32 %v1059, %v1649
        %v1651 = vpop.f32.mrb[0].mxu0
        %v1652 = vadd.f32 %v1063, %v1651
        %1653 = vmatprep.mubr.bf16.mxu0 %v959
        %1654 = vmatmul.mubr.bf16.gmra.mrb[0].mxu0 %v958
        %v1655 = vpop.f32.mrb[0].mxu0
        %v1656 = vadd.f32 %v1059, %v1655
        %v1657 = vpop.f32.mrb[0].mxu0
        %v1658 = vadd.f32 %v1063, %v1657
        %v1659 = vpop.f32.mrb[0].mxu0
        %v1660 = vadd.f32 %v1059, %v1659
        %v1661 = vpop.f32.mrb[0].mxu0
        %v1662 = vadd.f32 %v1063, %v1661
        %1663 = vmatprep.mubr.bf16.mxu0 %v961
        %1664 = vmatmul.mubr.bf16.gmra.mrb[0].mxu0 %v960
        %v1665 = vpop.f32.mrb[0].mxu0
        %v1666 = vadd.f32 %v1059, %v1665
        %v1667 = vpop.f32.mrb[0].mxu0
        %v1668 = vadd.f32 %v1063, %v1667
        %v1669 = vpop.f32.mrb[0].mxu0
        %v1670 = vadd.f32 %v1059, %v1669
        %v1671 = vpop.f32.mrb[0].mxu0
        %v1672 = vadd.f32 %v1063, %v1671
        %1673 = vmatprep.mubr.bf16.mxu0 %v963
        %1674 = vmatmul.mubr.bf16.gmra.mrb[0].mxu0 %v962
        %v1675 = vpop.f32.mrb[0].mxu0
        %v1676 = vadd.f32 %v1059, %v1675
        %v1677 = vpop.f32.mrb[0].mxu0
        %v1678 = vadd.f32 %v1063, %v1677
        %v1679 = vpop.f32.mrb[0].mxu0
        %v1680 = vadd.f32 %v1059, %v1679
        %v1681 = vpop.f32.mrb[0].mxu0
        %v1682 = vadd.f32 %v1063, %v1681
        %1683 = vmatprep.mubr.bf16.mxu0 %v965
        %1684 = vmatmul.mubr.bf16.gmra.mrb[0].mxu0 %v964
        %v1685 = vpop.f32.mrb[0].mxu0
        %v1686 = vadd.f32 %v1059, %v1685
        %v1687 = vpop.f32.mrb[0].mxu0
        %v1688 = vadd.f32 %v1063, %v1687
        %v1689 = vpop.f32.mrb[0].mxu0
        %v1690 = vadd.f32 %v1059, %v1689
        %v1691 = vpop.f32.mrb[0].mxu0
        %v1692 = vadd.f32 %v1063, %v1691
        %1693 = vmatprep.mubr.bf16.mxu0 %v967
        %1694 = vmatmul.mubr.bf16.gmra.mrb[0].mxu0 %v966
        %v1695 = vpop.f32.mrb[0].mxu0
        %v1696 = vadd.f32 %v1059, %v1695
        %v1697 = vpop.f32.mrb[0].mxu0
        %v1698 = vadd.f32 %v1063, %v1697
        %v1699 = vpop.f32.mrb[0].mxu0
        %v1700 = vadd.f32 %v1059, %v1699
        %v1701 = vpop.f32.mrb[0].mxu0
        %v1702 = vadd.f32 %v1063, %v1701
        %1703 = vmatprep.mubr.bf16.mxu0 %v969
        %1704 = vmatmul.mubr.bf16.gmra.mrb[0].mxu0 %v968
        %v1705 = vpop.f32.mrb[0].mxu0
        %v1706 = vadd.f32 %v1059, %v1705
        %v1707 = vpop.f32.mrb[0].mxu0
        %v1708 = vadd.f32 %v1063, %v1707
        %v1709 = vpop.f32.mrb[0].mxu0
        %v1710 = vadd.f32 %v1059, %v1709
        %v1711 = vpop.f32.mrb[0].mxu0
        %v1712 = vadd.f32 %v1063, %v1711
        %1713 = vmatprep.mubr.bf16.mxu0 %v971
        %1714 = vmatmul.mubr.bf16.gmra.mrb[0].mxu0 %v970
        %v1715 = vpop.f32.mrb[0].mxu0
        %v1716 = vadd.f32 %v1059, %v1715
        %v1717 = vpop.f32.mrb[0].mxu0
        %v1718 = vadd.f32 %v1063, %v1717
        %v1719 = vpop.f32.mrb[0].mxu0
        %v1720 = vadd.f32 %v1059, %v1719
        %v1721 = vpop.f32.mrb[0].mxu0
        %v1722 = vadd.f32 %v1063, %v1721
        %1723 = vmatprep.mubr.bf16.mxu0 %v973
        %1724 = vmatmul.mubr.bf16.gmra.mrb[0].mxu0 %v972
        %v1725 = vpop.f32.mrb[0].mxu0
        %v1726 = vadd.f32 %v1059, %v1725
        %v1727 = vpop.f32.mrb[0].mxu0
        %v1728 = vadd.f32 %v1063, %v1727
        %v1729 = vpop.f32.mrb[0].mxu0
        %v1730 = vadd.f32 %v1059, %v1729
        %v1731 = vpop.f32.mrb[0].mxu0
        %v1732 = vadd.f32 %v1063, %v1731
        %1733 = vmatprep.mubr.bf16.mxu0 %v975
        %1734 = vmatmul.mubr.bf16.gmra.mrb[0].mxu0 %v974
        %v1735 = vpop.f32.mrb[0].mxu0
        %v1736 = vadd.f32 %v1059, %v1735
        %v1737 = vpop.f32.mrb[0].mxu0
        %v1738 = vadd.f32 %v1063, %v1737
        %v1739 = vpop.f32.mrb[0].mxu0
        %v1740 = vadd.f32 %v1059, %v1739
        %v1741 = vpop.f32.mrb[0].mxu0
        %v1742 = vadd.f32 %v1063, %v1741
        %1743 = vmatprep.mubr.bf16.mxu0 %v977
        %1744 = vmatmul.mubr.bf16.gmra.mrb[0].mxu0 %v976
        %v1745 = vpop.f32.mrb[0].mxu0
        %v1746 = vadd.f32 %v1059, %v1745
        %v1747 = vpop.f32.mrb[0].mxu0
        %v1748 = vadd.f32 %v1063, %v1747
        %v1749 = vpop.f32.mrb[0].mxu0
        %v1750 = vadd.f32 %v1059, %v1749
        %v1751 = vpop.f32.mrb[0].mxu0
        %v1752 = vadd.f32 %v1063, %v1751
        %1753 = vmatprep.mubr.bf16.mxu0 %v979
        %1754 = vmatmul.mubr.bf16.gmra.mrb[0].mxu0 %v978
        %v1755 = vpop.f32.mrb[0].mxu0
        %v1756 = vadd.f32 %v1059, %v1755
        %v1757 = vpop.f32.mrb[0].mxu0
        %v1758 = vadd.f32 %v1063, %v1757
        %v1759 = vpop.f32.mrb[0].mxu0
        %v1760 = vadd.f32 %v1059, %v1759
        %v1761 = vpop.f32.mrb[0].mxu0
        %v1762 = vadd.f32 %v1063, %v1761
        %1763 = vmatprep.mubr.bf16.mxu0 %v981
        %1764 = vmatmul.mubr.bf16.gmra.mrb[0].mxu0 %v980
        %v1765 = vpop.f32.mrb[0].mxu0
        %v1766 = vadd.f32 %v1059, %v1765
        %v1767 = vpop.f32.mrb[0].mxu0
        %v1768 = vadd.f32 %v1063, %v1767
        %v1769 = vpop.f32.mrb[0].mxu0
        %v1770 = vadd.f32 %v1059, %v1769
        %v1771 = vpop.f32.mrb[0].mxu0
        %v1772 = vadd.f32 %v1063, %v1771
        %1773 = vdwg.mxu0
        %vm1774 = vcmp.ge.f32.partialorder %v1423, 0.0
        %vm1775 = vcmp.ge.f32.partialorder %v1425, 0.0
        %vm1776 = vcmp.ge.f32.partialorder %v1616, 0.0
        %vm1777 = vcmp.ge.f32.partialorder %v1618, 0.0
        %vm1778 = vcmp.ge.f32.partialorder %v1427, 0.0
        %vm1779 = vcmp.ge.f32.partialorder %v1429, 0.0
        %vm1780 = vcmp.ge.f32.partialorder %v1620, 0.0
        %vm1781 = vcmp.ge.f32.partialorder %v1622, 0.0
        %vm1782 = vcmp.ge.f32.partialorder %v1433, 0.0
        %vm1783 = vcmp.ge.f32.partialorder %v1435, 0.0
        %vm1784 = vcmp.ge.f32.partialorder %v1626, 0.0
        %vm1785 = vcmp.ge.f32.partialorder %v1628, 0.0
        %vm1786 = vcmp.ge.f32.partialorder %v1437, 0.0
        %vm1787 = vcmp.ge.f32.partialorder %v1439, 0.0
        %vm1788 = vcmp.ge.f32.partialorder %v1630, 0.0
        %vm1789 = vcmp.ge.f32.partialorder %v1632, 0.0
        %vm1790 = vcmp.ge.f32.partialorder %v1443, 0.0
        %vm1791 = vcmp.ge.f32.partialorder %v1445, 0.0
        %vm1792 = vcmp.ge.f32.partialorder %v1636, 0.0
        %vm1793 = vcmp.ge.f32.partialorder %v1638, 0.0
        %vm1794 = vcmp.ge.f32.partialorder %v1447, 0.0
        %vm1795 = vcmp.ge.f32.partialorder %v1449, 0.0
        %vm1796 = vcmp.ge.f32.partialorder %v1640, 0.0
        %vm1797 = vcmp.ge.f32.partialorder %v1642, 0.0
        %vm1798 = vcmp.ge.f32.partialorder %v1453, 0.0
        %vm1799 = vcmp.ge.f32.partialorder %v1455, 0.0
        %vm1800 = vcmp.ge.f32.partialorder %v1646, 0.0
        %vm1801 = vcmp.ge.f32.partialorder %v1648, 0.0
        %vm1802 = vcmp.ge.f32.partialorder %v1457, 0.0
        %vm1803 = vcmp.ge.f32.partialorder %v1459, 0.0
        %vm1804 = vcmp.ge.f32.partialorder %v1650, 0.0
        %vm1805 = vcmp.ge.f32.partialorder %v1652, 0.0
        %vm1806 = vcmp.ge.f32.partialorder %v1463, 0.0
        %vm1807 = vcmp.ge.f32.partialorder %v1465, 0.0
        %vm1808 = vcmp.ge.f32.partialorder %v1656, 0.0
        %vm1809 = vcmp.ge.f32.partialorder %v1658, 0.0
        %vm1810 = vcmp.ge.f32.partialorder %v1467, 0.0
        %vm1811 = vcmp.ge.f32.partialorder %v1469, 0.0
        %vm1812 = vcmp.ge.f32.partialorder %v1660, 0.0
        %vm1813 = vcmp.ge.f32.partialorder %v1662, 0.0
        %vm1814 = vcmp.ge.f32.partialorder %v1473, 0.0
        %vm1815 = vcmp.ge.f32.partialorder %v1475, 0.0
        %vm1816 = vcmp.ge.f32.partialorder %v1666, 0.0
        %vm1817 = vcmp.ge.f32.partialorder %v1668, 0.0
        %vm1818 = vcmp.ge.f32.partialorder %v1477, 0.0
        %vm1819 = vcmp.ge.f32.partialorder %v1479, 0.0
        %vm1820 = vcmp.ge.f32.partialorder %v1670, 0.0
        %vm1821 = vcmp.ge.f32.partialorder %v1672, 0.0
        %vm1822 = vcmp.ge.f32.partialorder %v1483, 0.0
        %vm1823 = vcmp.ge.f32.partialorder %v1485, 0.0
        %vm1824 = vcmp.ge.f32.partialorder %v1676, 0.0
        %vm1825 = vcmp.ge.f32.partialorder %v1678, 0.0
        %vm1826 = vcmp.ge.f32.partialorder %v1487, 0.0
        %vm1827 = vcmp.ge.f32.partialorder %v1489, 0.0
        %vm1828 = vcmp.ge.f32.partialorder %v1680, 0.0
        %vm1829 = vcmp.ge.f32.partialorder %v1682, 0.0
        %vm1830 = vcmp.ge.f32.partialorder %v1493, 0.0
        %vm1831 = vcmp.ge.f32.partialorder %v1495, 0.0
        %vm1832 = vcmp.ge.f32.partialorder %v1686, 0.0
        %vm1833 = vcmp.ge.f32.partialorder %v1688, 0.0
        %vm1834 = vcmp.ge.f32.partialorder %v1497, 0.0
        %vm1835 = vcmp.ge.f32.partialorder %v1499, 0.0
        %vm1836 = vcmp.ge.f32.partialorder %v1690, 0.0
        %vm1837 = vcmp.ge.f32.partialorder %v1692, 0.0
        %vm1838 = vcmp.ge.f32.partialorder %v1503, 0.0
        %vm1839 = vcmp.ge.f32.partialorder %v1505, 0.0
        %vm1840 = vcmp.ge.f32.partialorder %v1696, 0.0
        %vm1841 = vcmp.ge.f32.partialorder %v1698, 0.0
        %vm1842 = vcmp.ge.f32.partialorder %v1507, 0.0
        %vm1843 = vcmp.ge.f32.partialorder %v1509, 0.0
        %vm1844 = vcmp.ge.f32.partialorder %v1700, 0.0
        %vm1845 = vcmp.ge.f32.partialorder %v1702, 0.0
        %vm1846 = vcmp.ge.f32.partialorder %v1513, 0.0
        %vm1847 = vcmp.ge.f32.partialorder %v1515, 0.0
        %vm1848 = vcmp.ge.f32.partialorder %v1706, 0.0
        %vm1849 = vcmp.ge.f32.partialorder %v1708, 0.0
        %vm1850 = vcmp.ge.f32.partialorder %v1517, 0.0
        %vm1851 = vcmp.ge.f32.partialorder %v1519, 0.0
        %vm1852 = vcmp.ge.f32.partialorder %v1710, 0.0
        %vm1853 = vcmp.ge.f32.partialorder %v1712, 0.0
        %vm1854 = vcmp.ge.f32.partialorder %v1523, 0.0
        %vm1855 = vcmp.ge.f32.partialorder %v1525, 0.0
        %vm1856 = vcmp.ge.f32.partialorder %v1716, 0.0
        %vm1857 = vcmp.ge.f32.partialorder %v1718, 0.0
        %vm1858 = vcmp.ge.f32.partialorder %v1527, 0.0
        %vm1859 = vcmp.ge.f32.partialorder %v1529, 0.0
        %vm1860 = vcmp.ge.f32.partialorder %v1720, 0.0
        %vm1861 = vcmp.ge.f32.partialorder %v1722, 0.0
        %vm1862 = vcmp.ge.f32.partialorder %v1533, 0.0
        %vm1863 = vcmp.ge.f32.partialorder %v1535, 0.0
        %vm1864 = vcmp.ge.f32.partialorder %v1726, 0.0
        %vm1865 = vcmp.ge.f32.partialorder %v1728, 0.0
        %vm1866 = vcmp.ge.f32.partialorder %v1537, 0.0
        %vm1867 = vcmp.ge.f32.partialorder %v1539, 0.0
        %vm1868 = vcmp.ge.f32.partialorder %v1730, 0.0
        %vm1869 = vcmp.ge.f32.partialorder %v1732, 0.0
        %vm1870 = vcmp.ge.f32.partialorder %v1543, 0.0
        %vm1871 = vcmp.ge.f32.partialorder %v1545, 0.0
        %vm1872 = vcmp.ge.f32.partialorder %v1736, 0.0
        %vm1873 = vcmp.ge.f32.partialorder %v1738, 0.0
        %vm1874 = vcmp.ge.f32.partialorder %v1547, 0.0
        %vm1875 = vcmp.ge.f32.partialorder %v1549, 0.0
        %vm1876 = vcmp.ge.f32.partialorder %v1740, 0.0
        %vm1877 = vcmp.ge.f32.partialorder %v1742, 0.0
        %vm1878 = vcmp.ge.f32.partialorder %v1553, 0.0
        %vm1879 = vcmp.ge.f32.partialorder %v1555, 0.0
        %vm1880 = vcmp.ge.f32.partialorder %v1746, 0.0
        %vm1881 = vcmp.ge.f32.partialorder %v1748, 0.0
        %vm1882 = vcmp.ge.f32.partialorder %v1557, 0.0
        %vm1883 = vcmp.ge.f32.partialorder %v1559, 0.0
        %vm1884 = vcmp.ge.f32.partialorder %v1750, 0.0
        %vm1885 = vcmp.ge.f32.partialorder %v1752, 0.0
        %vm1886 = vcmp.ge.f32.partialorder %v1563, 0.0
        %vm1887 = vcmp.ge.f32.partialorder %v1565, 0.0
        %vm1888 = vcmp.ge.f32.partialorder %v1756, 0.0
        %vm1889 = vcmp.ge.f32.partialorder %v1758, 0.0
        %vm1890 = vcmp.ge.f32.partialorder %v1567, 0.0
        %vm1891 = vcmp.ge.f32.partialorder %v1569, 0.0
        %vm1892 = vcmp.ge.f32.partialorder %v1760, 0.0
        %vm1893 = vcmp.ge.f32.partialorder %v1762, 0.0
        %vm1894 = vcmp.ge.f32.partialorder %v1573, 0.0
        %vm1895 = vcmp.ge.f32.partialorder %v1575, 0.0
        %vm1896 = vcmp.ge.f32.partialorder %v1766, 0.0
        %vm1897 = vcmp.ge.f32.partialorder %v1768, 0.0
        %vm1898 = vcmp.ge.f32.partialorder %v1577, 0.0
        %vm1899 = vcmp.ge.f32.partialorder %v1579, 0.0
        %vm1900 = vcmp.ge.f32.partialorder %v1770, 0.0
        %vm1901 = vcmp.ge.f32.partialorder %v1772, 0.0
        %v1902 = vmul.f32 %v1423, 0.2
        %v1903 = vmul.f32 %v1425, 0.2
        %v1904 = vmul.f32 %v1616, 0.2
        %v1905 = vmul.f32 %v1618, 0.2
        %v1906 = vmul.f32 %v1427, 0.2
        %v1907 = vmul.f32 %v1429, 0.2
        %v1908 = vmul.f32 %v1620, 0.2
        %v1909 = vmul.f32 %v1622, 0.2
        %v1910 = vmul.f32 %v1433, 0.2
        %v1911 = vmul.f32 %v1435, 0.2
        %v1912 = vmul.f32 %v1626, 0.2
        %v1913 = vmul.f32 %v1628, 0.2
        %v1914 = vmul.f32 %v1437, 0.2
        %v1915 = vmul.f32 %v1439, 0.2
        %v1916 = vmul.f32 %v1630, 0.2
        %v1917 = vmul.f32 %v1632, 0.2
        %v1918 = vmul.f32 %v1443, 0.2
        %v1919 = vmul.f32 %v1445, 0.2
        %v1920 = vmul.f32 %v1636, 0.2
        %v1921 = vmul.f32 %v1638, 0.2
        %v1922 = vmul.f32 %v1447, 0.2
        %v1923 = vmul.f32 %v1449, 0.2
        %v1924 = vmul.f32 %v1640, 0.2
        %v1925 = vmul.f32 %v1642, 0.2
        %v1926 = vmul.f32 %v1453, 0.2
        %v1927 = vmul.f32 %v1455, 0.2
        %v1928 = vmul.f32 %v1646, 0.2
        %v1929 = vmul.f32 %v1648, 0.2
        %v1930 = vmul.f32 %v1457, 0.2
        %v1931 = vmul.f32 %v1459, 0.2
        %v1932 = vmul.f32 %v1650, 0.2
        %v1933 = vmul.f32 %v1652, 0.2
        %v1934 = vmul.f32 %v1463, 0.2
        %v1935 = vmul.f32 %v1465, 0.2
        %v1936 = vmul.f32 %v1656, 0.2
        %v1937 = vmul.f32 %v1658, 0.2
        %v1938 = vmul.f32 %v1467, 0.2
        %v1939 = vmul.f32 %v1469, 0.2
        %v1940 = vmul.f32 %v1660, 0.2
        %v1941 = vmul.f32 %v1662, 0.2
        %v1942 = vmul.f32 %v1473, 0.2
        %v1943 = vmul.f32 %v1475, 0.2
        %v1944 = vmul.f32 %v1666, 0.2
        %v1945 = vmul.f32 %v1668, 0.2
        %v1946 = vmul.f32 %v1477, 0.2
        %v1947 = vmul.f32 %v1479, 0.2
        %v1948 = vmul.f32 %v1670, 0.2
        %v1949 = vmul.f32 %v1672, 0.2
        %v1950 = vmul.f32 %v1483, 0.2
        %v1951 = vmul.f32 %v1485, 0.2
        %v1952 = vmul.f32 %v1676, 0.2
        %v1953 = vmul.f32 %v1678, 0.2
        %v1954 = vmul.f32 %v1487, 0.2
        %v1955 = vmul.f32 %v1489, 0.2
        %v1956 = vmul.f32 %v1680, 0.2
        %v1957 = vmul.f32 %v1682, 0.2
        %v1958 = vmul.f32 %v1493, 0.2
        %v1959 = vmul.f32 %v1495, 0.2
        %v1960 = vmul.f32 %v1686, 0.2
        %v1961 = vmul.f32 %v1688, 0.2
        %v1962 = vmul.f32 %v1497, 0.2
        %v1963 = vmul.f32 %v1499, 0.2
        %v1964 = vmul.f32 %v1690, 0.2
        %v1965 = vmul.f32 %v1692, 0.2
        %v1966 = vmul.f32 %v1503, 0.2
        %v1967 = vmul.f32 %v1505, 0.2
        %v1968 = vmul.f32 %v1696, 0.2
        %v1969 = vmul.f32 %v1698, 0.2
        %v1970 = vmul.f32 %v1507, 0.2
        %v1971 = vmul.f32 %v1509, 0.2
        %v1972 = vmul.f32 %v1700, 0.2
        %v1973 = vmul.f32 %v1702, 0.2
        %v1974 = vmul.f32 %v1513, 0.2
        %v1975 = vmul.f32 %v1515, 0.2
        %v1976 = vmul.f32 %v1706, 0.2
        %v1977 = vmul.f32 %v1708, 0.2
        %v1978 = vmul.f32 %v1517, 0.2
        %v1979 = vmul.f32 %v1519, 0.2
        %v1980 = vmul.f32 %v1710, 0.2
        %v1981 = vmul.f32 %v1712, 0.2
        %v1982 = vmul.f32 %v1523, 0.2
        %v1983 = vmul.f32 %v1525, 0.2
        %v1984 = vmul.f32 %v1716, 0.2
        %v1985 = vmul.f32 %v1718, 0.2
        %v1986 = vmul.f32 %v1527, 0.2
        %v1987 = vmul.f32 %v1529, 0.2
        %v1988 = vmul.f32 %v1720, 0.2
        %v1989 = vmul.f32 %v1722, 0.2
        %v1990 = vmul.f32 %v1533, 0.2
        %v1991 = vmul.f32 %v1535, 0.2
        %v1992 = vmul.f32 %v1726, 0.2
        %v1993 = vmul.f32 %v1728, 0.2
        %v1994 = vmul.f32 %v1537, 0.2
        %v1995 = vmul.f32 %v1539, 0.2
        %v1996 = vmul.f32 %v1730, 0.2
        %v1997 = vmul.f32 %v1732, 0.2
        %v1998 = vmul.f32 %v1543, 0.2
        %v1999 = vmul.f32 %v1545, 0.2
        %v2000 = vmul.f32 %v1736, 0.2
        %v2001 = vmul.f32 %v1738, 0.2
        %v2002 = vmul.f32 %v1547, 0.2
        %v2003 = vmul.f32 %v1549, 0.2
        %v2004 = vmul.f32 %v1740, 0.2
        %v2005 = vmul.f32 %v1742, 0.2
        %v2006 = vmul.f32 %v1553, 0.2
        %v2007 = vmul.f32 %v1555, 0.2
        %v2008 = vmul.f32 %v1746, 0.2
        %v2009 = vmul.f32 %v1748, 0.2
        %v2010 = vmul.f32 %v1557, 0.2
        %v2011 = vmul.f32 %v1559, 0.2
        %v2012 = vmul.f32 %v1750, 0.2
        %v2013 = vmul.f32 %v1752, 0.2
        %v2014 = vmul.f32 %v1563, 0.2
        %v2015 = vmul.f32 %v1565, 0.2
        %v2016 = vmul.f32 %v1756, 0.2
        %v2017 = vmul.f32 %v1758, 0.2
        %v2018 = vmul.f32 %v1567, 0.2
        %v2019 = vmul.f32 %v1569, 0.2
        %v2020 = vmul.f32 %v1760, 0.2
        %v2021 = vmul.f32 %v1762, 0.2
        %v2022 = vmul.f32 %v1573, 0.2
        %v2023 = vmul.f32 %v1575, 0.2
        %v2024 = vmul.f32 %v1766, 0.2
        %v2025 = vmul.f32 %v1768, 0.2
        %v2026 = vmul.f32 %v1577, 0.2
        %v2027 = vmul.f32 %v1579, 0.2
        %v2028 = vmul.f32 %v1770, 0.2
        %v2029 = vmul.f32 %v1772, 0.2
        %v2030 = vsel %vm1774, %v1423, %v1902
        %v2031 = vsel %vm1775, %v1425, %v1903
        %v2032 = vsel %vm1776, %v1616, %v1904
        %v2033 = vsel %vm1777, %v1618, %v1905
        %v2034 = vsel %vm1778, %v1427, %v1906
        %v2035 = vsel %vm1779, %v1429, %v1907
        %v2036 = vsel %vm1780, %v1620, %v1908
        %v2037 = vsel %vm1781, %v1622, %v1909
        %v2038 = vsel %vm1782, %v1433, %v1910
        %v2039 = vsel %vm1783, %v1435, %v1911
        %v2040 = vsel %vm1784, %v1626, %v1912
        %v2041 = vsel %vm1785, %v1628, %v1913
        %v2042 = vsel %vm1786, %v1437, %v1914
        %v2043 = vsel %vm1787, %v1439, %v1915
        %v2044 = vsel %vm1788, %v1630, %v1916
        %v2045 = vsel %vm1789, %v1632, %v1917
        %v2046 = vsel %vm1790, %v1443, %v1918
        %v2047 = vsel %vm1791, %v1445, %v1919
        %v2048 = vsel %vm1792, %v1636, %v1920
        %v2049 = vsel %vm1793, %v1638, %v1921
        %v2050 = vsel %vm1794, %v1447, %v1922
        %v2051 = vsel %vm1795, %v1449, %v1923
        %v2052 = vsel %vm1796, %v1640, %v1924
        %v2053 = vsel %vm1797, %v1642, %v1925
        %v2054 = vsel %vm1798, %v1453, %v1926
        %v2055 = vsel %vm1799, %v1455, %v1927
        %v2056 = vsel %vm1800, %v1646, %v1928
        %v2057 = vsel %vm1801, %v1648, %v1929
        %v2058 = vsel %vm1802, %v1457, %v1930
        %v2059 = vsel %vm1803, %v1459, %v1931
        %v2060 = vsel %vm1804, %v1650, %v1932
        %v2061 = vsel %vm1805, %v1652, %v1933
        %v2062 = vsel %vm1806, %v1463, %v1934
        %v2063 = vsel %vm1807, %v1465, %v1935
        %v2064 = vsel %vm1808, %v1656, %v1936
        %v2065 = vsel %vm1809, %v1658, %v1937
        %v2066 = vsel %vm1810, %v1467, %v1938
        %v2067 = vsel %vm1811, %v1469, %v1939
        %v2068 = vsel %vm1812, %v1660, %v1940
        %v2069 = vsel %vm1813, %v1662, %v1941
        %v2070 = vsel %vm1814, %v1473, %v1942
        %v2071 = vsel %vm1815, %v1475, %v1943
        %v2072 = vsel %vm1816, %v1666, %v1944
        %v2073 = vsel %vm1817, %v1668, %v1945
        %v2074 = vsel %vm1818, %v1477, %v1946
        %v2075 = vsel %vm1819, %v1479, %v1947
        %v2076 = vsel %vm1820, %v1670, %v1948
        %v2077 = vsel %vm1821, %v1672, %v1949
        %v2078 = vsel %vm1822, %v1483, %v1950
        %v2079 = vsel %vm1823, %v1485, %v1951
        %v2080 = vsel %vm1824, %v1676, %v1952
        %v2081 = vsel %vm1825, %v1678, %v1953
        %v2082 = vsel %vm1826, %v1487, %v1954
        %v2083 = vsel %vm1827, %v1489, %v1955
        %v2084 = vsel %vm1828, %v1680, %v1956
        %v2085 = vsel %vm1829, %v1682, %v1957
        %v2086 = vsel %vm1830, %v1493, %v1958
        %v2087 = vsel %vm1831, %v1495, %v1959
        %v2088 = vsel %vm1832, %v1686, %v1960
        %v2089 = vsel %vm1833, %v1688, %v1961
        %v2090 = vsel %vm1834, %v1497, %v1962
        %v2091 = vsel %vm1835, %v1499, %v1963
        %v2092 = vsel %vm1836, %v1690, %v1964
        %v2093 = vsel %vm1837, %v1692, %v1965
        %v2094 = vsel %vm1838, %v1503, %v1966
        %v2095 = vsel %vm1839, %v1505, %v1967
        %v2096 = vsel %vm1840, %v1696, %v1968
        %v2097 = vsel %vm1841, %v1698, %v1969
        %v2098 = vsel %vm1842, %v1507, %v1970
        %v2099 = vsel %vm1843, %v1509, %v1971
        %v2100 = vsel %vm1844, %v1700, %v1972
        %v2101 = vsel %vm1845, %v1702, %v1973
        %v2102 = vsel %vm1846, %v1513, %v1974
        %v2103 = vsel %vm1847, %v1515, %v1975
        %v2104 = vsel %vm1848, %v1706, %v1976
        %v2105 = vsel %vm1849, %v1708, %v1977
        %v2106 = vsel %vm1850, %v1517, %v1978
        %v2107 = vsel %vm1851, %v1519, %v1979
        %v2108 = vsel %vm1852, %v1710, %v1980
        %v2109 = vsel %vm1853, %v1712, %v1981
        %v2110 = vsel %vm1854, %v1523, %v1982
        %v2111 = vsel %vm1855, %v1525, %v1983
        %v2112 = vsel %vm1856, %v1716, %v1984
        %v2113 = vsel %vm1857, %v1718, %v1985
        %v2114 = vsel %vm1858, %v1527, %v1986
        %v2115 = vsel %vm1859, %v1529, %v1987
        %v2116 = vsel %vm1860, %v1720, %v1988
        %v2117 = vsel %vm1861, %v1722, %v1989
        %v2118 = vsel %vm1862, %v1533, %v1990
        %v2119 = vsel %vm1863, %v1535, %v1991
        %v2120 = vsel %vm1864, %v1726, %v1992
        %v2121 = vsel %vm1865, %v1728, %v1993
        %v2122 = vsel %vm1866, %v1537, %v1994
        %v2123 = vsel %vm1867, %v1539, %v1995
        %v2124 = vsel %vm1868, %v1730, %v1996
        %v2125 = vsel %vm1869, %v1732, %v1997
        %v2126 = vsel %vm1870, %v1543, %v1998
        %v2127 = vsel %vm1871, %v1545, %v1999
        %v2128 = vsel %vm1872, %v1736, %v2000
        %v2129 = vsel %vm1873, %v1738, %v2001
        %v2130 = vsel %vm1874, %v1547, %v2002
        %v2131 = vsel %vm1875, %v1549, %v2003
        %v2132 = vsel %vm1876, %v1740, %v2004
        %v2133 = vsel %vm1877, %v1742, %v2005
        %v2134 = vsel %vm1878, %v1553, %v2006
        %v2135 = vsel %vm1879, %v1555, %v2007
        %v2136 = vsel %vm1880, %v1746, %v2008
        %v2137 = vsel %vm1881, %v1748, %v2009
        %v2138 = vsel %vm1882, %v1557, %v2010
        %v2139 = vsel %vm1883, %v1559, %v2011
        %v2140 = vsel %vm1884, %v1750, %v2012
        %v2141 = vsel %vm1885, %v1752, %v2013
        %v2142 = vsel %vm1886, %v1563, %v2014
        %v2143 = vsel %vm1887, %v1565, %v2015
        %v2144 = vsel %vm1888, %v1756, %v2016
        %v2145 = vsel %vm1889, %v1758, %v2017
        %v2146 = vsel %vm1890, %v1567, %v2018
        %v2147 = vsel %vm1891, %v1569, %v2019
        %v2148 = vsel %vm1892, %v1760, %v2020
        %v2149 = vsel %vm1893, %v1762, %v2021
        %v2150 = vsel %vm1894, %v1573, %v2022
        %v2151 = vsel %vm1895, %v1575, %v2023
        %v2152 = vsel %vm1896, %v1766, %v2024
        %v2153 = vsel %vm1897, %v1768, %v2025
        %v2154 = vsel %vm1898, %v1577, %v2026
        %v2155 = vsel %vm1899, %v1579, %v2027
        %v2156 = vsel %vm1900, %v1770, %v2028
        %v2157 = vsel %vm1901, %v1772, %v2029
        %v2158 = vpack.c.bf16 %v2034, %v2030
        %v2159 = vpack.c.bf16 %v2035, %v2031
        %v2160 = vpack.c.bf16 %v2036, %v2032
        %v2161 = vpack.c.bf16 %v2037, %v2033
        %v2162 = vpack.c.bf16 %v2042, %v2038
        %v2163 = vpack.c.bf16 %v2043, %v2039
        %v2164 = vpack.c.bf16 %v2044, %v2040
        %v2165 = vpack.c.bf16 %v2045, %v2041
        %v2166 = vpack.c.bf16 %v2050, %v2046
        %v2167 = vpack.c.bf16 %v2051, %v2047
        %v2168 = vpack.c.bf16 %v2052, %v2048
        %v2169 = vpack.c.bf16 %v2053, %v2049
        %v2170 = vpack.c.bf16 %v2058, %v2054
        %v2171 = vpack.c.bf16 %v2059, %v2055
        %v2172 = vpack.c.bf16 %v2060, %v2056
        %v2173 = vpack.c.bf16 %v2061, %v2057
        %v2174 = vpack.c.bf16 %v2066, %v2062
        %v2175 = vpack.c.bf16 %v2067, %v2063
        %v2176 = vpack.c.bf16 %v2068, %v2064
        %v2177 = vpack.c.bf16 %v2069, %v2065
        %v2178 = vpack.c.bf16 %v2074, %v2070
        %v2179 = vpack.c.bf16 %v2075, %v2071
        %v2180 = vpack.c.bf16 %v2076, %v2072
        %v2181 = vpack.c.bf16 %v2077, %v2073
        %v2182 = vpack.c.bf16 %v2082, %v2078
        %v2183 = vpack.c.bf16 %v2083, %v2079
        %v2184 = vpack.c.bf16 %v2084, %v2080
        %v2185 = vpack.c.bf16 %v2085, %v2081
        %v2186 = vpack.c.bf16 %v2090, %v2086
        %v2187 = vpack.c.bf16 %v2091, %v2087
        %v2188 = vpack.c.bf16 %v2092, %v2088
        %v2189 = vpack.c.bf16 %v2093, %v2089
        %v2190 = vpack.c.bf16 %v2098, %v2094
        %v2191 = vpack.c.bf16 %v2099, %v2095
        %v2192 = vpack.c.bf16 %v2100, %v2096
        %v2193 = vpack.c.bf16 %v2101, %v2097
        %v2194 = vpack.c.bf16 %v2106, %v2102
        %v2195 = vpack.c.bf16 %v2107, %v2103
        %v2196 = vpack.c.bf16 %v2108, %v2104
        %v2197 = vpack.c.bf16 %v2109, %v2105
        %v2198 = vpack.c.bf16 %v2114, %v2110
        %v2199 = vpack.c.bf16 %v2115, %v2111
        %v2200 = vpack.c.bf16 %v2116, %v2112
        %v2201 = vpack.c.bf16 %v2117, %v2113
        %v2202 = vpack.c.bf16 %v2122, %v2118
        %v2203 = vpack.c.bf16 %v2123, %v2119
        %v2204 = vpack.c.bf16 %v2124, %v2120
        %v2205 = vpack.c.bf16 %v2125, %v2121
        %v2206 = vpack.c.bf16 %v2130, %v2126
        %v2207 = vpack.c.bf16 %v2131, %v2127
        %v2208 = vpack.c.bf16 %v2132, %v2128
        %v2209 = vpack.c.bf16 %v2133, %v2129
        %v2210 = vpack.c.bf16 %v2138, %v2134
        %v2211 = vpack.c.bf16 %v2139, %v2135
        %v2212 = vpack.c.bf16 %v2140, %v2136
        %v2213 = vpack.c.bf16 %v2141, %v2137
        %v2214 = vpack.c.bf16 %v2146, %v2142
        %v2215 = vpack.c.bf16 %v2147, %v2143
        %v2216 = vpack.c.bf16 %v2148, %v2144
        %v2217 = vpack.c.bf16 %v2149, %v2145
        %v2218 = vpack.c.bf16 %v2154, %v2150
        %v2219 = vpack.c.bf16 %v2155, %v2151
        %v2220 = vpack.c.bf16 %v2156, %v2152
        %v2221 = vpack.c.bf16 %v2157, %v2153
        %v2222 = vld [vmem:[#allocation5] sm:$0xff]
        %v2223 = vld [vmem:[#allocation5 + $0x8] sm:$0xff]
        %v2224 = vld [vmem:[#allocation5 + $0x10] sm:$0xff]
        %v2225 = vld [vmem:[#allocation5 + $0x18] sm:$0xff]
        %v2226 = vld [vmem:[#allocation5 + $0x20] sm:$0xff]
        %v2227 = vld [vmem:[#allocation5 + $0x28] sm:$0xff]
        %v2228 = vld [vmem:[#allocation5 + $0x30] sm:$0xff]
        %v2229 = vld [vmem:[#allocation5 + $0x38] sm:$0xff]
        %v2230 = vld [vmem:[#allocation5 + $0x40] sm:$0xff]
        %v2231 = vld [vmem:[#allocation5 + $0x48] sm:$0xff]
        %v2232 = vld [vmem:[#allocation5 + $0x50] sm:$0xff]
        %v2233 = vld [vmem:[#allocation5 + $0x58] sm:$0xff]
        %v2234 = vld [vmem:[#allocation5 + $0x60] sm:$0xff]
        %v2235 = vld [vmem:[#allocation5 + $0x68] sm:$0xff]
        %v2236 = vld [vmem:[#allocation5 + $0x70] sm:$0xff]
        %v2237 = vld [vmem:[#allocation5 + $0x78] sm:$0xff]
        %v2238 = vld [vmem:[#allocation5 + $0x80] sm:$0xff]
        %v2239 = vld [vmem:[#allocation5 + $0x88] sm:$0xff]
        %v2240 = vld [vmem:[#allocation5 + $0x90] sm:$0xff]
        %v2241 = vld [vmem:[#allocation5 + $0x98] sm:$0xff]
        %v2242 = vld [vmem:[#allocation5 + $0xa0] sm:$0xff]
        %v2243 = vld [vmem:[#allocation5 + $0xa8] sm:$0xff]
        %v2244 = vld [vmem:[#allocation5 + $0xb0] sm:$0xff]
        %v2245 = vld [vmem:[#allocation5 + $0xb8] sm:$0xff]
        %v2246 = vld [vmem:[#allocation5 + $0xc0] sm:$0xff]
        %v2247 = vld [vmem:[#allocation5 + $0xc8] sm:$0xff]
        %v2248 = vld [vmem:[#allocation5 + $0xd0] sm:$0xff]
        %v2249 = vld [vmem:[#allocation5 + $0xd8] sm:$0xff]
        %v2250 = vld [vmem:[#allocation5 + $0xe0] sm:$0xff]
        %v2251 = vld [vmem:[#allocation5 + $0xe8] sm:$0xff]
        %v2252 = vld [vmem:[#allocation5 + $0xf0] sm:$0xff]
        %v2253 = vld [vmem:[#allocation5 + $0xf8] sm:$0xff]
        %v2254 = vld [vmem:[#allocation5 + $0x100] sm:$0xff]
        %v2255 = vld [vmem:[#allocation5 + $0x108] sm:$0xff]
        %v2256 = vld [vmem:[#allocation5 + $0x110] sm:$0xff]
        %v2257 = vld [vmem:[#allocation5 + $0x118] sm:$0xff]
        %v2258 = vld [vmem:[#allocation5 + $0x120] sm:$0xff]
        %v2259 = vld [vmem:[#allocation5 + $0x128] sm:$0xff]
        %v2260 = vld [vmem:[#allocation5 + $0x130] sm:$0xff]
        %v2261 = vld [vmem:[#allocation5 + $0x138] sm:$0xff]
        %v2262 = vld [vmem:[#allocation5 + $0x140] sm:$0xff]
        %v2263 = vld [vmem:[#allocation5 + $0x148] sm:$0xff]
        %v2264 = vld [vmem:[#allocation5 + $0x150] sm:$0xff]
        %v2265 = vld [vmem:[#allocation5 + $0x158] sm:$0xff]
        %v2266 = vld [vmem:[#allocation5 + $0x160] sm:$0xff]
        %v2267 = vld [vmem:[#allocation5 + $0x168] sm:$0xff]
        %v2268 = vld [vmem:[#allocation5 + $0x170] sm:$0xff]
        %v2269 = vld [vmem:[#allocation5 + $0x178] sm:$0xff]
        %v2270 = vld [vmem:[#allocation5 + $0x180] sm:$0xff]
        %v2271 = vld [vmem:[#allocation5 + $0x188] sm:$0xff]
        %v2272 = vld [vmem:[#allocation5 + $0x190] sm:$0xff]
        %v2273 = vld [vmem:[#allocation5 + $0x198] sm:$0xff]
        %v2274 = vld [vmem:[#allocation5 + $0x1a0] sm:$0xff]
        %v2275 = vld [vmem:[#allocation5 + $0x1a8] sm:$0xff]
        %v2276 = vld [vmem:[#allocation5 + $0x1b0] sm:$0xff]
        %v2277 = vld [vmem:[#allocation5 + $0x1b8] sm:$0xff]
        %v2278 = vld [vmem:[#allocation5 + $0x1c0] sm:$0xff]
        %v2279 = vld [vmem:[#allocation5 + $0x1c8] sm:$0xff]
        %v2280 = vld [vmem:[#allocation5 + $0x1d0] sm:$0xff]
        %v2281 = vld [vmem:[#allocation5 + $0x1d8] sm:$0xff]
        %v2282 = vld [vmem:[#allocation5 + $0x1e0] sm:$0xff]
        %v2283 = vld [vmem:[#allocation5 + $0x1e8] sm:$0xff]
        %v2284 = vld [vmem:[#allocation5 + $0x1f0] sm:$0xff]
        %v2285 = vld [vmem:[#allocation5 + $0x1f8] sm:$0xff]
        %v2286 = vld [vmem:[#allocation5 + $0x200] sm:$0xff]
        %v2287 = vld [vmem:[#allocation5 + $0x208] sm:$0xff]
        %v2288 = vld [vmem:[#allocation5 + $0x210] sm:$0xff]
        %v2289 = vld [vmem:[#allocation5 + $0x218] sm:$0xff]
        %v2290 = vld [vmem:[#allocation5 + $0x220] sm:$0xff]
        %v2291 = vld [vmem:[#allocation5 + $0x228] sm:$0xff]
        %v2292 = vld [vmem:[#allocation5 + $0x230] sm:$0xff]
        %v2293 = vld [vmem:[#allocation5 + $0x238] sm:$0xff]
        %v2294 = vld [vmem:[#allocation5 + $0x240] sm:$0xff]
        %v2295 = vld [vmem:[#allocation5 + $0x248] sm:$0xff]
        %v2296 = vld [vmem:[#allocation5 + $0x250] sm:$0xff]
        %v2297 = vld [vmem:[#allocation5 + $0x258] sm:$0xff]
        %v2298 = vld [vmem:[#allocation5 + $0x260] sm:$0xff]
        %v2299 = vld [vmem:[#allocation5 + $0x268] sm:$0xff]
        %v2300 = vld [vmem:[#allocation5 + $0x270] sm:$0xff]
        %v2301 = vld [vmem:[#allocation5 + $0x278] sm:$0xff]
        %v2302 = vld [vmem:[#allocation5 + $0x280] sm:$0xff]
        %v2303 = vld [vmem:[#allocation5 + $0x288] sm:$0xff]
        %v2304 = vld [vmem:[#allocation5 + $0x290] sm:$0xff]
        %v2305 = vld [vmem:[#allocation5 + $0x298] sm:$0xff]
        %v2306 = vld [vmem:[#allocation5 + $0x2a0] sm:$0xff]
        %v2307 = vld [vmem:[#allocation5 + $0x2a8] sm:$0xff]
        %v2308 = vld [vmem:[#allocation5 + $0x2b0] sm:$0xff]
        %v2309 = vld [vmem:[#allocation5 + $0x2b8] sm:$0xff]
        %v2310 = vld [vmem:[#allocation5 + $0x2c0] sm:$0xff]
        %v2311 = vld [vmem:[#allocation5 + $0x2c8] sm:$0xff]
        %v2312 = vld [vmem:[#allocation5 + $0x2d0] sm:$0xff]
        %v2313 = vld [vmem:[#allocation5 + $0x2d8] sm:$0xff]
        %v2314 = vld [vmem:[#allocation5 + $0x2e0] sm:$0xff]
        %v2315 = vld [vmem:[#allocation5 + $0x2e8] sm:$0xff]
        %v2316 = vld [vmem:[#allocation5 + $0x2f0] sm:$0xff]
        %v2317 = vld [vmem:[#allocation5 + $0x2f8] sm:$0xff]
        %v2318 = vld [vmem:[#allocation5 + $0x300] sm:$0xff]
        %v2319 = vld [vmem:[#allocation5 + $0x308] sm:$0xff]
        %v2320 = vld [vmem:[#allocation5 + $0x310] sm:$0xff]
        %v2321 = vld [vmem:[#allocation5 + $0x318] sm:$0xff]
        %v2322 = vld [vmem:[#allocation5 + $0x320] sm:$0xff]
        %v2323 = vld [vmem:[#allocation5 + $0x328] sm:$0xff]
        %v2324 = vld [vmem:[#allocation5 + $0x330] sm:$0xff]
        %v2325 = vld [vmem:[#allocation5 + $0x338] sm:$0xff]
        %v2326 = vld [vmem:[#allocation5 + $0x340] sm:$0xff]
        %v2327 = vld [vmem:[#allocation5 + $0x348] sm:$0xff]
        %v2328 = vld [vmem:[#allocation5 + $0x350] sm:$0xff]
        %v2329 = vld [vmem:[#allocation5 + $0x358] sm:$0xff]
        %v2330 = vld [vmem:[#allocation5 + $0x360] sm:$0xff]
        %v2331 = vld [vmem:[#allocation5 + $0x368] sm:$0xff]
        %v2332 = vld [vmem:[#allocation5 + $0x370] sm:$0xff]
        %v2333 = vld [vmem:[#allocation5 + $0x378] sm:$0xff]
        %v2334 = vld [vmem:[#allocation5 + $0x380] sm:$0xff]
        %v2335 = vld [vmem:[#allocation5 + $0x388] sm:$0xff]
        %v2336 = vld [vmem:[#allocation5 + $0x390] sm:$0xff]
        %v2337 = vld [vmem:[#allocation5 + $0x398] sm:$0xff]
        %v2338 = vld [vmem:[#allocation5 + $0x3a0] sm:$0xff]
        %v2339 = vld [vmem:[#allocation5 + $0x3a8] sm:$0xff]
        %v2340 = vld [vmem:[#allocation5 + $0x3b0] sm:$0xff]
        %v2341 = vld [vmem:[#allocation5 + $0x3b8] sm:$0xff]
        %v2342 = vld [vmem:[#allocation5 + $0x3c0] sm:$0xff]
        %v2343 = vld [vmem:[#allocation5 + $0x3c8] sm:$0xff]
        %v2344 = vld [vmem:[#allocation5 + $0x3d0] sm:$0xff]
        %v2345 = vld [vmem:[#allocation5 + $0x3d8] sm:$0xff]
        %v2346 = vld [vmem:[#allocation5 + $0x3e0] sm:$0xff]
        %v2347 = vld [vmem:[#allocation5 + $0x3e8] sm:$0xff]
        %v2348 = vld [vmem:[#allocation5 + $0x3f0] sm:$0xff]
        %v2349 = vld [vmem:[#allocation5 + $0x3f8] sm:$0xff]
        %v2350 = vld [vmem:[#allocation5 + $0x400] sm:$0xff]
        %v2351 = vld [vmem:[#allocation5 + $0x408] sm:$0xff]
        %v2352 = vld [vmem:[#allocation5 + $0x410] sm:$0xff]
        %v2353 = vld [vmem:[#allocation5 + $0x418] sm:$0xff]
        %v2354 = vld [vmem:[#allocation5 + $0x420] sm:$0xff]
        %v2355 = vld [vmem:[#allocation5 + $0x428] sm:$0xff]
        %v2356 = vld [vmem:[#allocation5 + $0x430] sm:$0xff]
        %v2357 = vld [vmem:[#allocation5 + $0x438] sm:$0xff]
        %v2358 = vld [vmem:[#allocation5 + $0x440] sm:$0xff]
        %v2359 = vld [vmem:[#allocation5 + $0x448] sm:$0xff]
        %v2360 = vld [vmem:[#allocation5 + $0x450] sm:$0xff]
        %v2361 = vld [vmem:[#allocation5 + $0x458] sm:$0xff]
        %v2362 = vld [vmem:[#allocation5 + $0x460] sm:$0xff]
        %v2363 = vld [vmem:[#allocation5 + $0x468] sm:$0xff]
        %v2364 = vld [vmem:[#allocation5 + $0x470] sm:$0xff]
        %v2365 = vld [vmem:[#allocation5 + $0x478] sm:$0xff]
        %v2366 = vld [vmem:[#allocation5 + $0x480] sm:$0xff]
        %v2367 = vld [vmem:[#allocation5 + $0x488] sm:$0xff]
        %v2368 = vld [vmem:[#allocation5 + $0x490] sm:$0xff]
        %v2369 = vld [vmem:[#allocation5 + $0x498] sm:$0xff]
        %v2370 = vld [vmem:[#allocation5 + $0x4a0] sm:$0xff]
        %v2371 = vld [vmem:[#allocation5 + $0x4a8] sm:$0xff]
        %v2372 = vld [vmem:[#allocation5 + $0x4b0] sm:$0xff]
        %v2373 = vld [vmem:[#allocation5 + $0x4b8] sm:$0xff]
        %v2374 = vld [vmem:[#allocation5 + $0x4c0] sm:$0xff]
        %v2375 = vld [vmem:[#allocation5 + $0x4c8] sm:$0xff]
        %v2376 = vld [vmem:[#allocation5 + $0x4d0] sm:$0xff]
        %v2377 = vld [vmem:[#allocation5 + $0x4d8] sm:$0xff]
        %v2378 = vld [vmem:[#allocation5 + $0x4e0] sm:$0xff]
        %v2379 = vld [vmem:[#allocation5 + $0x4e8] sm:$0xff]
        %v2380 = vld [vmem:[#allocation5 + $0x4f0] sm:$0xff]
        %v2381 = vld [vmem:[#allocation5 + $0x4f8] sm:$0xff]
        %v2382 = vld [vmem:[#allocation5 + $0x500] sm:$0xff]
        %v2383 = vld [vmem:[#allocation5 + $0x508] sm:$0xff]
        %v2384 = vld [vmem:[#allocation5 + $0x510] sm:$0xff]
        %v2385 = vld [vmem:[#allocation5 + $0x518] sm:$0xff]
        %v2386 = vld [vmem:[#allocation5 + $0x520] sm:$0xff]
        %v2387 = vld [vmem:[#allocation5 + $0x528] sm:$0xff]
        %v2388 = vld [vmem:[#allocation5 + $0x530] sm:$0xff]
        %v2389 = vld [vmem:[#allocation5 + $0x538] sm:$0xff]
        %v2390 = vld [vmem:[#allocation5 + $0x540] sm:$0xff]
        %v2391 = vld [vmem:[#allocation5 + $0x548] sm:$0xff]
        %v2392 = vld [vmem:[#allocation5 + $0x550] sm:$0xff]
        %v2393 = vld [vmem:[#allocation5 + $0x558] sm:$0xff]
        %v2394 = vld [vmem:[#allocation5 + $0x560] sm:$0xff]
        %v2395 = vld [vmem:[#allocation5 + $0x568] sm:$0xff]
        %v2396 = vld [vmem:[#allocation5 + $0x570] sm:$0xff]
        %v2397 = vld [vmem:[#allocation5 + $0x578] sm:$0xff]
        %v2398 = vld [vmem:[#allocation5 + $0x580] sm:$0xff]
        %v2399 = vld [vmem:[#allocation5 + $0x588] sm:$0xff]
        %v2400 = vld [vmem:[#allocation5 + $0x590] sm:$0xff]
        %v2401 = vld [vmem:[#allocation5 + $0x598] sm:$0xff]
        %v2402 = vld [vmem:[#allocation5 + $0x5a0] sm:$0xff]
        %v2403 = vld [vmem:[#allocation5 + $0x5a8] sm:$0xff]
        %v2404 = vld [vmem:[#allocation5 + $0x5b0] sm:$0xff]
        %v2405 = vld [vmem:[#allocation5 + $0x5b8] sm:$0xff]
        %v2406 = vld [vmem:[#allocation5 + $0x5c0] sm:$0xff]
        %v2407 = vld [vmem:[#allocation5 + $0x5c8] sm:$0xff]
        %v2408 = vld [vmem:[#allocation5 + $0x5d0] sm:$0xff]
        %v2409 = vld [vmem:[#allocation5 + $0x5d8] sm:$0xff]
        %v2410 = vld [vmem:[#allocation5 + $0x5e0] sm:$0xff]
        %v2411 = vld [vmem:[#allocation5 + $0x5e8] sm:$0xff]
        %v2412 = vld [vmem:[#allocation5 + $0x5f0] sm:$0xff]
        %v2413 = vld [vmem:[#allocation5 + $0x5f8] sm:$0xff]
        %v2414 = vld [vmem:[#allocation5 + $0x600] sm:$0xff]
        %v2415 = vld [vmem:[#allocation5 + $0x608] sm:$0xff]
        %v2416 = vld [vmem:[#allocation5 + $0x610] sm:$0xff]
        %v2417 = vld [vmem:[#allocation5 + $0x618] sm:$0xff]
        %v2418 = vld [vmem:[#allocation5 + $0x620] sm:$0xff]
        %v2419 = vld [vmem:[#allocation5 + $0x628] sm:$0xff]
        %v2420 = vld [vmem:[#allocation5 + $0x630] sm:$0xff]
        %v2421 = vld [vmem:[#allocation5 + $0x638] sm:$0xff]
        %v2422 = vld [vmem:[#allocation5 + $0x640] sm:$0xff]
        %v2423 = vld [vmem:[#allocation5 + $0x648] sm:$0xff]
        %v2424 = vld [vmem:[#allocation5 + $0x650] sm:$0xff]
        %v2425 = vld [vmem:[#allocation5 + $0x658] sm:$0xff]
        %v2426 = vld [vmem:[#allocation5 + $0x660] sm:$0xff]
        %v2427 = vld [vmem:[#allocation5 + $0x668] sm:$0xff]
        %v2428 = vld [vmem:[#allocation5 + $0x670] sm:$0xff]
        %v2429 = vld [vmem:[#allocation5 + $0x678] sm:$0xff]
        %v2430 = vld [vmem:[#allocation5 + $0x680] sm:$0xff]
        %v2431 = vld [vmem:[#allocation5 + $0x688] sm:$0xff]
        %v2432 = vld [vmem:[#allocation5 + $0x690] sm:$0xff]
        %v2433 = vld [vmem:[#allocation5 + $0x698] sm:$0xff]
        %v2434 = vld [vmem:[#allocation5 + $0x6a0] sm:$0xff]
        %v2435 = vld [vmem:[#allocation5 + $0x6a8] sm:$0xff]
        %v2436 = vld [vmem:[#allocation5 + $0x6b0] sm:$0xff]
        %v2437 = vld [vmem:[#allocation5 + $0x6b8] sm:$0xff]
        %v2438 = vld [vmem:[#allocation5 + $0x6c0] sm:$0xff]
        %v2439 = vld [vmem:[#allocation5 + $0x6c8] sm:$0xff]
        %v2440 = vld [vmem:[#allocation5 + $0x6d0] sm:$0xff]
        %v2441 = vld [vmem:[#allocation5 + $0x6d8] sm:$0xff]
        %v2442 = vld [vmem:[#allocation5 + $0x6e0] sm:$0xff]
        %v2443 = vld [vmem:[#allocation5 + $0x6e8] sm:$0xff]
        %v2444 = vld [vmem:[#allocation5 + $0x6f0] sm:$0xff]
        %v2445 = vld [vmem:[#allocation5 + $0x6f8] sm:$0xff]
        %v2446 = vld [vmem:[#allocation5 + $0x700] sm:$0xff]
        %v2447 = vld [vmem:[#allocation5 + $0x708] sm:$0xff]
        %v2448 = vld [vmem:[#allocation5 + $0x710] sm:$0xff]
        %v2449 = vld [vmem:[#allocation5 + $0x718] sm:$0xff]
        %v2450 = vld [vmem:[#allocation5 + $0x720] sm:$0xff]
        %v2451 = vld [vmem:[#allocation5 + $0x728] sm:$0xff]
        %v2452 = vld [vmem:[#allocation5 + $0x730] sm:$0xff]
        %v2453 = vld [vmem:[#allocation5 + $0x738] sm:$0xff]
        %v2454 = vld [vmem:[#allocation5 + $0x740] sm:$0xff]
        %v2455 = vld [vmem:[#allocation5 + $0x748] sm:$0xff]
        %v2456 = vld [vmem:[#allocation5 + $0x750] sm:$0xff]
        %v2457 = vld [vmem:[#allocation5 + $0x758] sm:$0xff]
        %v2458 = vld [vmem:[#allocation5 + $0x760] sm:$0xff]
        %v2459 = vld [vmem:[#allocation5 + $0x768] sm:$0xff]
        %v2460 = vld [vmem:[#allocation5 + $0x770] sm:$0xff]
        %v2461 = vld [vmem:[#allocation5 + $0x778] sm:$0xff]
        %v2462 = vld [vmem:[#allocation5 + $0x780] sm:$0xff]
        %v2463 = vld [vmem:[#allocation5 + $0x788] sm:$0xff]
        %v2464 = vld [vmem:[#allocation5 + $0x790] sm:$0xff]
        %v2465 = vld [vmem:[#allocation5 + $0x798] sm:$0xff]
        %v2466 = vld [vmem:[#allocation5 + $0x7a0] sm:$0xff]
        %v2467 = vld [vmem:[#allocation5 + $0x7a8] sm:$0xff]
        %v2468 = vld [vmem:[#allocation5 + $0x7b0] sm:$0xff]
        %v2469 = vld [vmem:[#allocation5 + $0x7b8] sm:$0xff]
        %v2470 = vld [vmem:[#allocation5 + $0x7c0] sm:$0xff]
        %v2471 = vld [vmem:[#allocation5 + $0x7c8] sm:$0xff]
        %v2472 = vld [vmem:[#allocation5 + $0x7d0] sm:$0xff]
        %v2473 = vld [vmem:[#allocation5 + $0x7d8] sm:$0xff]
        %v2474 = vld [vmem:[#allocation5 + $0x7e0] sm:$0xff]
        %v2475 = vld [vmem:[#allocation5 + $0x7e8] sm:$0xff]
        %v2476 = vld [vmem:[#allocation5 + $0x7f0] sm:$0xff]
        %v2477 = vld [vmem:[#allocation5 + $0x7f8] sm:$0xff]
        %v2478 = vld [vmem:[%s6] sm:$0xff]
        %v2480 = vlaneseq
        %v2481 = vshrl.u32 %v2480, 7
        %v2482 = vsub.s32 0, %v2481
        %v2483 = vrot.slane %v2478, %v2482
        %v2484 = vlaneseq
        %v2485 = vshrl.u32 %v2484, 7
        %v2486 = vsub.s32 1, %v2485
        %v2487 = vrot.slane %v2478, %v2486
        %v2488 = vlaneseq
        %v2489 = vshrl.u32 %v2488, 7
        %v2490 = vsub.s32 2, %v2489
        %v2491 = vrot.slane %v2478, %v2490
        %v2492 = vlaneseq
        %v2493 = vshrl.u32 %v2492, 7
        %v2494 = vsub.s32 3, %v2493
        %v2495 = vrot.slane %v2478, %v2494
        %v2496 = vlaneseq
        %v2497 = vshrl.u32 %v2496, 7
        %v2498 = vsub.s32 4, %v2497
        %v2499 = vrot.slane %v2478, %v2498
        %v2500 = vlaneseq
        %v2501 = vshrl.u32 %v2500, 7
        %v2502 = vsub.s32 5, %v2501
        %v2503 = vrot.slane %v2478, %v2502
        %v2504 = vlaneseq
        %v2505 = vshrl.u32 %v2504, 7
        %v2506 = vsub.s32 6, %v2505
        %v2507 = vrot.slane %v2478, %v2506
        %v2508 = vlaneseq
        %v2509 = vshrl.u32 %v2508, 7
        %v2510 = vsub.s32 7, %v2509
        %v2511 = vrot.slane %v2478, %v2510
        %v2776 = vunpack.c.l.b16 %v2222
        %v2777 = vunpack.c.h.b16 %v2222
        %v2778 = vunpack.c.l.b16 %v2223
        %v2779 = vunpack.c.h.b16 %v2223
        %v2780 = vunpack.c.l.b16 %v2224
        %v2781 = vunpack.c.h.b16 %v2224
        %v2782 = vunpack.c.l.b16 %v2225
        %v2783 = vunpack.c.h.b16 %v2225
        %v2784 = vunpack.c.l.b16 %v2226
        %v2785 = vunpack.c.h.b16 %v2226
        %v2786 = vunpack.c.l.b16 %v2227
        %v2787 = vunpack.c.h.b16 %v2227
        %v2788 = vunpack.c.l.b16 %v2228
        %v2789 = vunpack.c.h.b16 %v2228
        %v2790 = vunpack.c.l.b16 %v2229
        %v2791 = vunpack.c.h.b16 %v2229
        %v2792 = vunpack.c.l.b16 %v2230
        %v2793 = vunpack.c.h.b16 %v2230
        %v2794 = vunpack.c.l.b16 %v2231
        %v2795 = vunpack.c.h.b16 %v2231
        %v2796 = vunpack.c.l.b16 %v2232
        %v2797 = vunpack.c.h.b16 %v2232
        %v2798 = vunpack.c.l.b16 %v2233
        %v2799 = vunpack.c.h.b16 %v2233
        %v2800 = vunpack.c.l.b16 %v2234
        %v2801 = vunpack.c.h.b16 %v2234
        %v2802 = vunpack.c.l.b16 %v2235
        %v2803 = vunpack.c.h.b16 %v2235
        %v2804 = vunpack.c.l.b16 %v2236
        %v2805 = vunpack.c.h.b16 %v2236
        %v2806 = vunpack.c.l.b16 %v2237
        %v2807 = vunpack.c.h.b16 %v2237
        %v2808 = vunpack.c.l.b16 %v2238
        %v2809 = vunpack.c.h.b16 %v2238
        %v2810 = vunpack.c.l.b16 %v2239
        %v2811 = vunpack.c.h.b16 %v2239
        %v2812 = vunpack.c.l.b16 %v2240
        %v2813 = vunpack.c.h.b16 %v2240
        %v2814 = vunpack.c.l.b16 %v2241
        %v2815 = vunpack.c.h.b16 %v2241
        %v2816 = vunpack.c.l.b16 %v2242
        %v2817 = vunpack.c.h.b16 %v2242
        %v2818 = vunpack.c.l.b16 %v2243
        %v2819 = vunpack.c.h.b16 %v2243
        %v2820 = vunpack.c.l.b16 %v2244
        %v2821 = vunpack.c.h.b16 %v2244
        %v2822 = vunpack.c.l.b16 %v2245
        %v2823 = vunpack.c.h.b16 %v2245
        %v2824 = vunpack.c.l.b16 %v2246
        %v2825 = vunpack.c.h.b16 %v2246
        %v2826 = vunpack.c.l.b16 %v2247
        %v2827 = vunpack.c.h.b16 %v2247
        %v2828 = vunpack.c.l.b16 %v2248
        %v2829 = vunpack.c.h.b16 %v2248
        %v2830 = vunpack.c.l.b16 %v2249
        %v2831 = vunpack.c.h.b16 %v2249
        %v2832 = vunpack.c.l.b16 %v2250
        %v2833 = vunpack.c.h.b16 %v2250
        %v2834 = vunpack.c.l.b16 %v2251
        %v2835 = vunpack.c.h.b16 %v2251
        %v2836 = vunpack.c.l.b16 %v2252
        %v2837 = vunpack.c.h.b16 %v2252
        %v2838 = vunpack.c.l.b16 %v2253
        %v2839 = vunpack.c.h.b16 %v2253
        %v2840 = vunpack.c.l.b16 %v2254
        %v2841 = vunpack.c.h.b16 %v2254
        %v2842 = vunpack.c.l.b16 %v2255
        %v2843 = vunpack.c.h.b16 %v2255
        %v2844 = vunpack.c.l.b16 %v2256
        %v2845 = vunpack.c.h.b16 %v2256
        %v2846 = vunpack.c.l.b16 %v2257
        %v2847 = vunpack.c.h.b16 %v2257
        %v2848 = vunpack.c.l.b16 %v2258
        %v2849 = vunpack.c.h.b16 %v2258
        %v2850 = vunpack.c.l.b16 %v2259
        %v2851 = vunpack.c.h.b16 %v2259
        %v2852 = vunpack.c.l.b16 %v2260
        %v2853 = vunpack.c.h.b16 %v2260
        %v2854 = vunpack.c.l.b16 %v2261
        %v2855 = vunpack.c.h.b16 %v2261
        %v2856 = vunpack.c.l.b16 %v2262
        %v2857 = vunpack.c.h.b16 %v2262
        %v2858 = vunpack.c.l.b16 %v2263
        %v2859 = vunpack.c.h.b16 %v2263
        %v2860 = vunpack.c.l.b16 %v2264
        %v2861 = vunpack.c.h.b16 %v2264
        %v2862 = vunpack.c.l.b16 %v2265
        %v2863 = vunpack.c.h.b16 %v2265
        %v2864 = vunpack.c.l.b16 %v2266
        %v2865 = vunpack.c.h.b16 %v2266
        %v2866 = vunpack.c.l.b16 %v2267
        %v2867 = vunpack.c.h.b16 %v2267
        %v2868 = vunpack.c.l.b16 %v2268
        %v2869 = vunpack.c.h.b16 %v2268
        %v2870 = vunpack.c.l.b16 %v2269
        %v2871 = vunpack.c.h.b16 %v2269
        %v2872 = vunpack.c.l.b16 %v2270
        %v2873 = vunpack.c.h.b16 %v2270
        %v2874 = vunpack.c.l.b16 %v2271
        %v2875 = vunpack.c.h.b16 %v2271
        %v2876 = vunpack.c.l.b16 %v2272
        %v2877 = vunpack.c.h.b16 %v2272
        %v2878 = vunpack.c.l.b16 %v2273
        %v2879 = vunpack.c.h.b16 %v2273
        %v2880 = vunpack.c.l.b16 %v2274
        %v2881 = vunpack.c.h.b16 %v2274
        %v2882 = vunpack.c.l.b16 %v2275
        %v2883 = vunpack.c.h.b16 %v2275
        %v2884 = vunpack.c.l.b16 %v2276
        %v2885 = vunpack.c.h.b16 %v2276
        %v2886 = vunpack.c.l.b16 %v2277
        %v2887 = vunpack.c.h.b16 %v2277
        %v2888 = vunpack.c.l.b16 %v2278
        %v2889 = vunpack.c.h.b16 %v2278
        %v2890 = vunpack.c.l.b16 %v2279
        %v2891 = vunpack.c.h.b16 %v2279
        %v2892 = vunpack.c.l.b16 %v2280
        %v2893 = vunpack.c.h.b16 %v2280
        %v2894 = vunpack.c.l.b16 %v2281
        %v2895 = vunpack.c.h.b16 %v2281
        %v2896 = vunpack.c.l.b16 %v2282
        %v2897 = vunpack.c.h.b16 %v2282
        %v2898 = vunpack.c.l.b16 %v2283
        %v2899 = vunpack.c.h.b16 %v2283
        %v2900 = vunpack.c.l.b16 %v2284
        %v2901 = vunpack.c.h.b16 %v2284
        %v2902 = vunpack.c.l.b16 %v2285
        %v2903 = vunpack.c.h.b16 %v2285
        %v2904 = vunpack.c.l.b16 %v2286
        %v2905 = vunpack.c.h.b16 %v2286
        %v2906 = vunpack.c.l.b16 %v2287
        %v2907 = vunpack.c.h.b16 %v2287
        %v2908 = vunpack.c.l.b16 %v2288
        %v2909 = vunpack.c.h.b16 %v2288
        %v2910 = vunpack.c.l.b16 %v2289
        %v2911 = vunpack.c.h.b16 %v2289
        %v2912 = vunpack.c.l.b16 %v2290
        %v2913 = vunpack.c.h.b16 %v2290
        %v2914 = vunpack.c.l.b16 %v2291
        %v2915 = vunpack.c.h.b16 %v2291
        %v2916 = vunpack.c.l.b16 %v2292
        %v2917 = vunpack.c.h.b16 %v2292
        %v2918 = vunpack.c.l.b16 %v2293
        %v2919 = vunpack.c.h.b16 %v2293
        %v2920 = vunpack.c.l.b16 %v2294
        %v2921 = vunpack.c.h.b16 %v2294
        %v2922 = vunpack.c.l.b16 %v2295
        %v2923 = vunpack.c.h.b16 %v2295
        %v2924 = vunpack.c.l.b16 %v2296
        %v2925 = vunpack.c.h.b16 %v2296
        %v2926 = vunpack.c.l.b16 %v2297
        %v2927 = vunpack.c.h.b16 %v2297
        %v2928 = vunpack.c.l.b16 %v2298
        %v2929 = vunpack.c.h.b16 %v2298
        %v2930 = vunpack.c.l.b16 %v2299
        %v2931 = vunpack.c.h.b16 %v2299
        %v2932 = vunpack.c.l.b16 %v2300
        %v2933 = vunpack.c.h.b16 %v2300
        %v2934 = vunpack.c.l.b16 %v2301
        %v2935 = vunpack.c.h.b16 %v2301
        %v2936 = vunpack.c.l.b16 %v2302
        %v2937 = vunpack.c.h.b16 %v2302
        %v2938 = vunpack.c.l.b16 %v2303
        %v2939 = vunpack.c.h.b16 %v2303
        %v2940 = vunpack.c.l.b16 %v2304
        %v2941 = vunpack.c.h.b16 %v2304
        %v2942 = vunpack.c.l.b16 %v2305
        %v2943 = vunpack.c.h.b16 %v2305
        %v2944 = vunpack.c.l.b16 %v2306
        %v2945 = vunpack.c.h.b16 %v2306
        %v2946 = vunpack.c.l.b16 %v2307
        %v2947 = vunpack.c.h.b16 %v2307
        %v2948 = vunpack.c.l.b16 %v2308
        %v2949 = vunpack.c.h.b16 %v2308
        %v2950 = vunpack.c.l.b16 %v2309
        %v2951 = vunpack.c.h.b16 %v2309
        %v2952 = vunpack.c.l.b16 %v2310
        %v2953 = vunpack.c.h.b16 %v2310
        %v2954 = vunpack.c.l.b16 %v2311
        %v2955 = vunpack.c.h.b16 %v2311
        %v2956 = vunpack.c.l.b16 %v2312
        %v2957 = vunpack.c.h.b16 %v2312
        %v2958 = vunpack.c.l.b16 %v2313
        %v2959 = vunpack.c.h.b16 %v2313
        %v2960 = vunpack.c.l.b16 %v2314
        %v2961 = vunpack.c.h.b16 %v2314
        %v2962 = vunpack.c.l.b16 %v2315
        %v2963 = vunpack.c.h.b16 %v2315
        %v2964 = vunpack.c.l.b16 %v2316
        %v2965 = vunpack.c.h.b16 %v2316
        %v2966 = vunpack.c.l.b16 %v2317
        %v2967 = vunpack.c.h.b16 %v2317
        %v2968 = vunpack.c.l.b16 %v2318
        %v2969 = vunpack.c.h.b16 %v2318
        %v2970 = vunpack.c.l.b16 %v2319
        %v2971 = vunpack.c.h.b16 %v2319
        %v2972 = vunpack.c.l.b16 %v2320
        %v2973 = vunpack.c.h.b16 %v2320
        %v2974 = vunpack.c.l.b16 %v2321
        %v2975 = vunpack.c.h.b16 %v2321
        %v2976 = vunpack.c.l.b16 %v2322
        %v2977 = vunpack.c.h.b16 %v2322
        %v2978 = vunpack.c.l.b16 %v2323
        %v2979 = vunpack.c.h.b16 %v2323
        %v2980 = vunpack.c.l.b16 %v2324
        %v2981 = vunpack.c.h.b16 %v2324
        %v2982 = vunpack.c.l.b16 %v2325
        %v2983 = vunpack.c.h.b16 %v2325
        %v2984 = vunpack.c.l.b16 %v2326
        %v2985 = vunpack.c.h.b16 %v2326
        %v2986 = vunpack.c.l.b16 %v2327
        %v2987 = vunpack.c.h.b16 %v2327
        %v2988 = vunpack.c.l.b16 %v2328
        %v2989 = vunpack.c.h.b16 %v2328
        %v2990 = vunpack.c.l.b16 %v2329
        %v2991 = vunpack.c.h.b16 %v2329
        %v2992 = vunpack.c.l.b16 %v2330
        %v2993 = vunpack.c.h.b16 %v2330
        %v2994 = vunpack.c.l.b16 %v2331
        %v2995 = vunpack.c.h.b16 %v2331
        %v2996 = vunpack.c.l.b16 %v2332
        %v2997 = vunpack.c.h.b16 %v2332
        %v2998 = vunpack.c.l.b16 %v2333
        %v2999 = vunpack.c.h.b16 %v2333
        %v3000 = vunpack.c.l.b16 %v2334
        %v3001 = vunpack.c.h.b16 %v2334
        %v3002 = vunpack.c.l.b16 %v2335
        %v3003 = vunpack.c.h.b16 %v2335
        %v3004 = vunpack.c.l.b16 %v2336
        %v3005 = vunpack.c.h.b16 %v2336
        %v3006 = vunpack.c.l.b16 %v2337
        %v3007 = vunpack.c.h.b16 %v2337
        %v3008 = vunpack.c.l.b16 %v2338
        %v3009 = vunpack.c.h.b16 %v2338
        %v3010 = vunpack.c.l.b16 %v2339
        %v3011 = vunpack.c.h.b16 %v2339
        %v3012 = vunpack.c.l.b16 %v2340
        %v3013 = vunpack.c.h.b16 %v2340
        %v3014 = vunpack.c.l.b16 %v2341
        %v3015 = vunpack.c.h.b16 %v2341
        %v3016 = vunpack.c.l.b16 %v2342
        %v3017 = vunpack.c.h.b16 %v2342
        %v3018 = vunpack.c.l.b16 %v2343
        %v3019 = vunpack.c.h.b16 %v2343
        %v3020 = vunpack.c.l.b16 %v2344
        %v3021 = vunpack.c.h.b16 %v2344
        %v3022 = vunpack.c.l.b16 %v2345
        %v3023 = vunpack.c.h.b16 %v2345
        %v3024 = vunpack.c.l.b16 %v2346
        %v3025 = vunpack.c.h.b16 %v2346
        %v3026 = vunpack.c.l.b16 %v2347
        %v3027 = vunpack.c.h.b16 %v2347
        %v3028 = vunpack.c.l.b16 %v2348
        %v3029 = vunpack.c.h.b16 %v2348
        %v3030 = vunpack.c.l.b16 %v2349
        %v3031 = vunpack.c.h.b16 %v2349
        %v3032 = vunpack.c.l.b16 %v2350
        %v3033 = vunpack.c.h.b16 %v2350
        %v3034 = vunpack.c.l.b16 %v2351
        %v3035 = vunpack.c.h.b16 %v2351
        %v3036 = vunpack.c.l.b16 %v2352
        %v3037 = vunpack.c.h.b16 %v2352
        %v3038 = vunpack.c.l.b16 %v2353
        %v3039 = vunpack.c.h.b16 %v2353
        %v3040 = vunpack.c.l.b16 %v2354
        %v3041 = vunpack.c.h.b16 %v2354
        %v3042 = vunpack.c.l.b16 %v2355
        %v3043 = vunpack.c.h.b16 %v2355
        %v3044 = vunpack.c.l.b16 %v2356
        %v3045 = vunpack.c.h.b16 %v2356
        %v3046 = vunpack.c.l.b16 %v2357
        %v3047 = vunpack.c.h.b16 %v2357
        %v3048 = vunpack.c.l.b16 %v2358
        %v3049 = vunpack.c.h.b16 %v2358
        %v3050 = vunpack.c.l.b16 %v2359
        %v3051 = vunpack.c.h.b16 %v2359
        %v3052 = vunpack.c.l.b16 %v2360
        %v3053 = vunpack.c.h.b16 %v2360
        %v3054 = vunpack.c.l.b16 %v2361
        %v3055 = vunpack.c.h.b16 %v2361
        %v3056 = vunpack.c.l.b16 %v2362
        %v3057 = vunpack.c.h.b16 %v2362
        %v3058 = vunpack.c.l.b16 %v2363
        %v3059 = vunpack.c.h.b16 %v2363
        %v3060 = vunpack.c.l.b16 %v2364
        %v3061 = vunpack.c.h.b16 %v2364
        %v3062 = vunpack.c.l.b16 %v2365
        %v3063 = vunpack.c.h.b16 %v2365
        %v3064 = vunpack.c.l.b16 %v2366
        %v3065 = vunpack.c.h.b16 %v2366
        %v3066 = vunpack.c.l.b16 %v2367
        %v3067 = vunpack.c.h.b16 %v2367
        %v3068 = vunpack.c.l.b16 %v2368
        %v3069 = vunpack.c.h.b16 %v2368
        %v3070 = vunpack.c.l.b16 %v2369
        %v3071 = vunpack.c.h.b16 %v2369
        %v3072 = vunpack.c.l.b16 %v2370
        %v3073 = vunpack.c.h.b16 %v2370
        %v3074 = vunpack.c.l.b16 %v2371
        %v3075 = vunpack.c.h.b16 %v2371
        %v3076 = vunpack.c.l.b16 %v2372
        %v3077 = vunpack.c.h.b16 %v2372
        %v3078 = vunpack.c.l.b16 %v2373
        %v3079 = vunpack.c.h.b16 %v2373
        %v3080 = vunpack.c.l.b16 %v2374
        %v3081 = vunpack.c.h.b16 %v2374
        %v3082 = vunpack.c.l.b16 %v2375
        %v3083 = vunpack.c.h.b16 %v2375
        %v3084 = vunpack.c.l.b16 %v2376
        %v3085 = vunpack.c.h.b16 %v2376
        %v3086 = vunpack.c.l.b16 %v2377
        %v3087 = vunpack.c.h.b16 %v2377
        %v3088 = vunpack.c.l.b16 %v2378
        %v3089 = vunpack.c.h.b16 %v2378
        %v3090 = vunpack.c.l.b16 %v2379
        %v3091 = vunpack.c.h.b16 %v2379
        %v3092 = vunpack.c.l.b16 %v2380
        %v3093 = vunpack.c.h.b16 %v2380
        %v3094 = vunpack.c.l.b16 %v2381
        %v3095 = vunpack.c.h.b16 %v2381
        %v3096 = vunpack.c.l.b16 %v2382
        %v3097 = vunpack.c.h.b16 %v2382
        %v3098 = vunpack.c.l.b16 %v2383
        %v3099 = vunpack.c.h.b16 %v2383
        %v3100 = vunpack.c.l.b16 %v2384
        %v3101 = vunpack.c.h.b16 %v2384
        %v3102 = vunpack.c.l.b16 %v2385
        %v3103 = vunpack.c.h.b16 %v2385
        %v3104 = vunpack.c.l.b16 %v2386
        %v3105 = vunpack.c.h.b16 %v2386
        %v3106 = vunpack.c.l.b16 %v2387
        %v3107 = vunpack.c.h.b16 %v2387
        %v3108 = vunpack.c.l.b16 %v2388
        %v3109 = vunpack.c.h.b16 %v2388
        %v3110 = vunpack.c.l.b16 %v2389
        %v3111 = vunpack.c.h.b16 %v2389
        %v3112 = vunpack.c.l.b16 %v2390
        %v3113 = vunpack.c.h.b16 %v2390
        %v3114 = vunpack.c.l.b16 %v2391
        %v3115 = vunpack.c.h.b16 %v2391
        %v3116 = vunpack.c.l.b16 %v2392
        %v3117 = vunpack.c.h.b16 %v2392
        %v3118 = vunpack.c.l.b16 %v2393
        %v3119 = vunpack.c.h.b16 %v2393
        %v3120 = vunpack.c.l.b16 %v2394
        %v3121 = vunpack.c.h.b16 %v2394
        %v3122 = vunpack.c.l.b16 %v2395
        %v3123 = vunpack.c.h.b16 %v2395
        %v3124 = vunpack.c.l.b16 %v2396
        %v3125 = vunpack.c.h.b16 %v2396
        %v3126 = vunpack.c.l.b16 %v2397
        %v3127 = vunpack.c.h.b16 %v2397
        %v3128 = vunpack.c.l.b16 %v2398
        %v3129 = vunpack.c.h.b16 %v2398
        %v3130 = vunpack.c.l.b16 %v2399
        %v3131 = vunpack.c.h.b16 %v2399
        %v3132 = vunpack.c.l.b16 %v2400
        %v3133 = vunpack.c.h.b16 %v2400
        %v3134 = vunpack.c.l.b16 %v2401
        %v3135 = vunpack.c.h.b16 %v2401
        %v3136 = vunpack.c.l.b16 %v2402
        %v3137 = vunpack.c.h.b16 %v2402
        %v3138 = vunpack.c.l.b16 %v2403
        %v3139 = vunpack.c.h.b16 %v2403
        %v3140 = vunpack.c.l.b16 %v2404
        %v3141 = vunpack.c.h.b16 %v2404
        %v3142 = vunpack.c.l.b16 %v2405
        %v3143 = vunpack.c.h.b16 %v2405
        %v3144 = vunpack.c.l.b16 %v2406
        %v3145 = vunpack.c.h.b16 %v2406
        %v3146 = vunpack.c.l.b16 %v2407
        %v3147 = vunpack.c.h.b16 %v2407
        %v3148 = vunpack.c.l.b16 %v2408
        %v3149 = vunpack.c.h.b16 %v2408
        %v3150 = vunpack.c.l.b16 %v2409
        %v3151 = vunpack.c.h.b16 %v2409
        %v3152 = vunpack.c.l.b16 %v2410
        %v3153 = vunpack.c.h.b16 %v2410
        %v3154 = vunpack.c.l.b16 %v2411
        %v3155 = vunpack.c.h.b16 %v2411
        %v3156 = vunpack.c.l.b16 %v2412
        %v3157 = vunpack.c.h.b16 %v2412
        %v3158 = vunpack.c.l.b16 %v2413
        %v3159 = vunpack.c.h.b16 %v2413
        %v3160 = vunpack.c.l.b16 %v2414
        %v3161 = vunpack.c.h.b16 %v2414
        %v3162 = vunpack.c.l.b16 %v2415
        %v3163 = vunpack.c.h.b16 %v2415
        %v3164 = vunpack.c.l.b16 %v2416
        %v3165 = vunpack.c.h.b16 %v2416
        %v3166 = vunpack.c.l.b16 %v2417
        %v3167 = vunpack.c.h.b16 %v2417
        %v3168 = vunpack.c.l.b16 %v2418
        %v3169 = vunpack.c.h.b16 %v2418
        %v3170 = vunpack.c.l.b16 %v2419
        %v3171 = vunpack.c.h.b16 %v2419
        %v3172 = vunpack.c.l.b16 %v2420
        %v3173 = vunpack.c.h.b16 %v2420
        %v3174 = vunpack.c.l.b16 %v2421
        %v3175 = vunpack.c.h.b16 %v2421
        %v3176 = vunpack.c.l.b16 %v2422
        %v3177 = vunpack.c.h.b16 %v2422
        %v3178 = vunpack.c.l.b16 %v2423
        %v3179 = vunpack.c.h.b16 %v2423
        %v3180 = vunpack.c.l.b16 %v2424
        %v3181 = vunpack.c.h.b16 %v2424
        %v3182 = vunpack.c.l.b16 %v2425
        %v3183 = vunpack.c.h.b16 %v2425
        %v3184 = vunpack.c.l.b16 %v2426
        %v3185 = vunpack.c.h.b16 %v2426
        %v3186 = vunpack.c.l.b16 %v2427
        %v3187 = vunpack.c.h.b16 %v2427
        %v3188 = vunpack.c.l.b16 %v2428
        %v3189 = vunpack.c.h.b16 %v2428
        %v3190 = vunpack.c.l.b16 %v2429
        %v3191 = vunpack.c.h.b16 %v2429
        %v3192 = vunpack.c.l.b16 %v2430
        %v3193 = vunpack.c.h.b16 %v2430
        %v3194 = vunpack.c.l.b16 %v2431
        %v3195 = vunpack.c.h.b16 %v2431
        %v3196 = vunpack.c.l.b16 %v2432
        %v3197 = vunpack.c.h.b16 %v2432
        %v3198 = vunpack.c.l.b16 %v2433
        %v3199 = vunpack.c.h.b16 %v2433
        %v3200 = vunpack.c.l.b16 %v2434
        %v3201 = vunpack.c.h.b16 %v2434
        %v3202 = vunpack.c.l.b16 %v2435
        %v3203 = vunpack.c.h.b16 %v2435
        %v3204 = vunpack.c.l.b16 %v2436
        %v3205 = vunpack.c.h.b16 %v2436
        %v3206 = vunpack.c.l.b16 %v2437
        %v3207 = vunpack.c.h.b16 %v2437
        %v3208 = vunpack.c.l.b16 %v2438
        %v3209 = vunpack.c.h.b16 %v2438
        %v3210 = vunpack.c.l.b16 %v2439
        %v3211 = vunpack.c.h.b16 %v2439
        %v3212 = vunpack.c.l.b16 %v2440
        %v3213 = vunpack.c.h.b16 %v2440
        %v3214 = vunpack.c.l.b16 %v2441
        %v3215 = vunpack.c.h.b16 %v2441
        %v3216 = vunpack.c.l.b16 %v2442
        %v3217 = vunpack.c.h.b16 %v2442
        %v3218 = vunpack.c.l.b16 %v2443
        %v3219 = vunpack.c.h.b16 %v2443
        %v3220 = vunpack.c.l.b16 %v2444
        %v3221 = vunpack.c.h.b16 %v2444
        %v3222 = vunpack.c.l.b16 %v2445
        %v3223 = vunpack.c.h.b16 %v2445
        %v3224 = vunpack.c.l.b16 %v2446
        %v3225 = vunpack.c.h.b16 %v2446
        %v3226 = vunpack.c.l.b16 %v2447
        %v3227 = vunpack.c.h.b16 %v2447
        %v3228 = vunpack.c.l.b16 %v2448
        %v3229 = vunpack.c.h.b16 %v2448
        %v3230 = vunpack.c.l.b16 %v2449
        %v3231 = vunpack.c.h.b16 %v2449
        %v3232 = vunpack.c.l.b16 %v2450
        %v3233 = vunpack.c.h.b16 %v2450
        %v3234 = vunpack.c.l.b16 %v2451
        %v3235 = vunpack.c.h.b16 %v2451
        %v3236 = vunpack.c.l.b16 %v2452
        %v3237 = vunpack.c.h.b16 %v2452
        %v3238 = vunpack.c.l.b16 %v2453
        %v3239 = vunpack.c.h.b16 %v2453
        %v3240 = vunpack.c.l.b16 %v2454
        %v3241 = vunpack.c.h.b16 %v2454
        %v3242 = vunpack.c.l.b16 %v2455
        %v3243 = vunpack.c.h.b16 %v2455
        %v3244 = vunpack.c.l.b16 %v2456
        %v3245 = vunpack.c.h.b16 %v2456
        %v3246 = vunpack.c.l.b16 %v2457
        %v3247 = vunpack.c.h.b16 %v2457
        %v3248 = vunpack.c.l.b16 %v2458
        %v3249 = vunpack.c.h.b16 %v2458
        %v3250 = vunpack.c.l.b16 %v2459
        %v3251 = vunpack.c.h.b16 %v2459
        %v3252 = vunpack.c.l.b16 %v2460
        %v3253 = vunpack.c.h.b16 %v2460
        %v3254 = vunpack.c.l.b16 %v2461
        %v3255 = vunpack.c.h.b16 %v2461
        %v3256 = vunpack.c.l.b16 %v2462
        %v3257 = vunpack.c.h.b16 %v2462
        %v3258 = vunpack.c.l.b16 %v2463
        %v3259 = vunpack.c.h.b16 %v2463
        %v3260 = vunpack.c.l.b16 %v2464
        %v3261 = vunpack.c.h.b16 %v2464
        %v3262 = vunpack.c.l.b16 %v2465
        %v3263 = vunpack.c.h.b16 %v2465
        %v3264 = vunpack.c.l.b16 %v2466
        %v3265 = vunpack.c.h.b16 %v2466
        %v3266 = vunpack.c.l.b16 %v2467
        %v3267 = vunpack.c.h.b16 %v2467
        %v3268 = vunpack.c.l.b16 %v2468
        %v3269 = vunpack.c.h.b16 %v2468
        %v3270 = vunpack.c.l.b16 %v2469
        %v3271 = vunpack.c.h.b16 %v2469
        %v3272 = vunpack.c.l.b16 %v2470
        %v3273 = vunpack.c.h.b16 %v2470
        %v3274 = vunpack.c.l.b16 %v2471
        %v3275 = vunpack.c.h.b16 %v2471
        %v3276 = vunpack.c.l.b16 %v2472
        %v3277 = vunpack.c.h.b16 %v2472
        %v3278 = vunpack.c.l.b16 %v2473
        %v3279 = vunpack.c.h.b16 %v2473
        %v3280 = vunpack.c.l.b16 %v2474
        %v3281 = vunpack.c.h.b16 %v2474
        %v3282 = vunpack.c.l.b16 %v2475
        %v3283 = vunpack.c.h.b16 %v2475
        %v3284 = vunpack.c.l.b16 %v2476
        %v3285 = vunpack.c.h.b16 %v2476
        %v3286 = vunpack.c.l.b16 %v2477
        %v3287 = vunpack.c.h.b16 %v2477
        %v3288 = vpack.c.b16 %v2784, %v2776
        %v3289 = vpack.c.b16 %v2785, %v2777
        %v3290 = vpack.c.b16 %v2786, %v2778
        %v3291 = vpack.c.b16 %v2787, %v2779
        %v3292 = vpack.c.b16 %v2788, %v2780
        %v3293 = vpack.c.b16 %v2789, %v2781
        %v3294 = vpack.c.b16 %v2790, %v2782
        %v3295 = vpack.c.b16 %v2791, %v2783
        %v3296 = vpack.c.b16 %v2800, %v2792
        %v3297 = vpack.c.b16 %v2801, %v2793
        %v3298 = vpack.c.b16 %v2802, %v2794
        %v3299 = vpack.c.b16 %v2803, %v2795
        %v3300 = vpack.c.b16 %v2804, %v2796
        %v3301 = vpack.c.b16 %v2805, %v2797
        %v3302 = vpack.c.b16 %v2806, %v2798
        %v3303 = vpack.c.b16 %v2807, %v2799
        %v3304 = vpack.c.b16 %v2816, %v2808
        %v3305 = vpack.c.b16 %v2817, %v2809
        %v3306 = vpack.c.b16 %v2818, %v2810
        %v3307 = vpack.c.b16 %v2819, %v2811
        %v3308 = vpack.c.b16 %v2820, %v2812
        %v3309 = vpack.c.b16 %v2821, %v2813
        %v3310 = vpack.c.b16 %v2822, %v2814
        %v3311 = vpack.c.b16 %v2823, %v2815
        %v3312 = vpack.c.b16 %v2832, %v2824
        %v3313 = vpack.c.b16 %v2833, %v2825
        %v3314 = vpack.c.b16 %v2834, %v2826
        %v3315 = vpack.c.b16 %v2835, %v2827
        %v3316 = vpack.c.b16 %v2836, %v2828
        %v3317 = vpack.c.b16 %v2837, %v2829
        %v3318 = vpack.c.b16 %v2838, %v2830
        %v3319 = vpack.c.b16 %v2839, %v2831
        %v3320 = vpack.c.b16 %v2848, %v2840
        %v3321 = vpack.c.b16 %v2849, %v2841
        %v3322 = vpack.c.b16 %v2850, %v2842
        %v3323 = vpack.c.b16 %v2851, %v2843
        %v3324 = vpack.c.b16 %v2852, %v2844
        %v3325 = vpack.c.b16 %v2853, %v2845
        %v3326 = vpack.c.b16 %v2854, %v2846
        %v3327 = vpack.c.b16 %v2855, %v2847
        %v3328 = vpack.c.b16 %v2864, %v2856
        %v3329 = vpack.c.b16 %v2865, %v2857
        %v3330 = vpack.c.b16 %v2866, %v2858
        %v3331 = vpack.c.b16 %v2867, %v2859
        %v3332 = vpack.c.b16 %v2868, %v2860
        %v3333 = vpack.c.b16 %v2869, %v2861
        %v3334 = vpack.c.b16 %v2870, %v2862
        %v3335 = vpack.c.b16 %v2871, %v2863
        %v3336 = vpack.c.b16 %v2880, %v2872
        %v3337 = vpack.c.b16 %v2881, %v2873
        %v3338 = vpack.c.b16 %v2882, %v2874
        %v3339 = vpack.c.b16 %v2883, %v2875
        %v3340 = vpack.c.b16 %v2884, %v2876
        %v3341 = vpack.c.b16 %v2885, %v2877
        %v3342 = vpack.c.b16 %v2886, %v2878
        %v3343 = vpack.c.b16 %v2887, %v2879
        %v3344 = vpack.c.b16 %v2896, %v2888
        %v3345 = vpack.c.b16 %v2897, %v2889
        %v3346 = vpack.c.b16 %v2898, %v2890
        %v3347 = vpack.c.b16 %v2899, %v2891
        %v3348 = vpack.c.b16 %v2900, %v2892
        %v3349 = vpack.c.b16 %v2901, %v2893
        %v3350 = vpack.c.b16 %v2902, %v2894
        %v3351 = vpack.c.b16 %v2903, %v2895
        %v3352 = vpack.c.b16 %v2912, %v2904
        %v3353 = vpack.c.b16 %v2913, %v2905
        %v3354 = vpack.c.b16 %v2914, %v2906
        %v3355 = vpack.c.b16 %v2915, %v2907
        %v3356 = vpack.c.b16 %v2916, %v2908
        %v3357 = vpack.c.b16 %v2917, %v2909
        %v3358 = vpack.c.b16 %v2918, %v2910
        %v3359 = vpack.c.b16 %v2919, %v2911
        %v3360 = vpack.c.b16 %v2928, %v2920
        %v3361 = vpack.c.b16 %v2929, %v2921
        %v3362 = vpack.c.b16 %v2930, %v2922
        %v3363 = vpack.c.b16 %v2931, %v2923
        %v3364 = vpack.c.b16 %v2932, %v2924
        %v3365 = vpack.c.b16 %v2933, %v2925
        %v3366 = vpack.c.b16 %v2934, %v2926
        %v3367 = vpack.c.b16 %v2935, %v2927
        %v3368 = vpack.c.b16 %v2944, %v2936
        %v3369 = vpack.c.b16 %v2945, %v2937
        %v3370 = vpack.c.b16 %v2946, %v2938
        %v3371 = vpack.c.b16 %v2947, %v2939
        %v3372 = vpack.c.b16 %v2948, %v2940
        %v3373 = vpack.c.b16 %v2949, %v2941
        %v3374 = vpack.c.b16 %v2950, %v2942
        %v3375 = vpack.c.b16 %v2951, %v2943
        %v3376 = vpack.c.b16 %v2960, %v2952
        %v3377 = vpack.c.b16 %v2961, %v2953
        %v3378 = vpack.c.b16 %v2962, %v2954
        %v3379 = vpack.c.b16 %v2963, %v2955
        %v3380 = vpack.c.b16 %v2964, %v2956
        %v3381 = vpack.c.b16 %v2965, %v2957
        %v3382 = vpack.c.b16 %v2966, %v2958
        %v3383 = vpack.c.b16 %v2967, %v2959
        %v3384 = vpack.c.b16 %v2976, %v2968
        %v3385 = vpack.c.b16 %v2977, %v2969
        %v3386 = vpack.c.b16 %v2978, %v2970
        %v3387 = vpack.c.b16 %v2979, %v2971
        %v3388 = vpack.c.b16 %v2980, %v2972
        %v3389 = vpack.c.b16 %v2981, %v2973
        %v3390 = vpack.c.b16 %v2982, %v2974
        %v3391 = vpack.c.b16 %v2983, %v2975
        %v3392 = vpack.c.b16 %v2992, %v2984
        %v3393 = vpack.c.b16 %v2993, %v2985
        %v3394 = vpack.c.b16 %v2994, %v2986
        %v3395 = vpack.c.b16 %v2995, %v2987
        %v3396 = vpack.c.b16 %v2996, %v2988
        %v3397 = vpack.c.b16 %v2997, %v2989
        %v3398 = vpack.c.b16 %v2998, %v2990
        %v3399 = vpack.c.b16 %v2999, %v2991
        %v3400 = vpack.c.b16 %v3008, %v3000
        %v3401 = vpack.c.b16 %v3009, %v3001
        %v3402 = vpack.c.b16 %v3010, %v3002
        %v3403 = vpack.c.b16 %v3011, %v3003
        %v3404 = vpack.c.b16 %v3012, %v3004
        %v3405 = vpack.c.b16 %v3013, %v3005
        %v3406 = vpack.c.b16 %v3014, %v3006
        %v3407 = vpack.c.b16 %v3015, %v3007
        %v3408 = vpack.c.b16 %v3024, %v3016
        %v3409 = vpack.c.b16 %v3025, %v3017
        %v3410 = vpack.c.b16 %v3026, %v3018
        %v3411 = vpack.c.b16 %v3027, %v3019
        %v3412 = vpack.c.b16 %v3028, %v3020
        %v3413 = vpack.c.b16 %v3029, %v3021
        %v3414 = vpack.c.b16 %v3030, %v3022
        %v3415 = vpack.c.b16 %v3031, %v3023
        %v3416 = vpack.c.b16 %v3040, %v3032
        %v3417 = vpack.c.b16 %v3041, %v3033
        %v3418 = vpack.c.b16 %v3042, %v3034
        %v3419 = vpack.c.b16 %v3043, %v3035
        %v3420 = vpack.c.b16 %v3044, %v3036
        %v3421 = vpack.c.b16 %v3045, %v3037
        %v3422 = vpack.c.b16 %v3046, %v3038
        %v3423 = vpack.c.b16 %v3047, %v3039
        %v3424 = vpack.c.b16 %v3056, %v3048
        %v3425 = vpack.c.b16 %v3057, %v3049
        %v3426 = vpack.c.b16 %v3058, %v3050
        %v3427 = vpack.c.b16 %v3059, %v3051
        %v3428 = vpack.c.b16 %v3060, %v3052
        %v3429 = vpack.c.b16 %v3061, %v3053
        %v3430 = vpack.c.b16 %v3062, %v3054
        %v3431 = vpack.c.b16 %v3063, %v3055
        %v3432 = vpack.c.b16 %v3072, %v3064
        %v3433 = vpack.c.b16 %v3073, %v3065
        %v3434 = vpack.c.b16 %v3074, %v3066
        %v3435 = vpack.c.b16 %v3075, %v3067
        %v3436 = vpack.c.b16 %v3076, %v3068
        %v3437 = vpack.c.b16 %v3077, %v3069
        %v3438 = vpack.c.b16 %v3078, %v3070
        %v3439 = vpack.c.b16 %v3079, %v3071
        %v3440 = vpack.c.b16 %v3088, %v3080
        %v3441 = vpack.c.b16 %v3089, %v3081
        %v3442 = vpack.c.b16 %v3090, %v3082
        %v3443 = vpack.c.b16 %v3091, %v3083
        %v3444 = vpack.c.b16 %v3092, %v3084
        %v3445 = vpack.c.b16 %v3093, %v3085
        %v3446 = vpack.c.b16 %v3094, %v3086
        %v3447 = vpack.c.b16 %v3095, %v3087
        %v3448 = vpack.c.b16 %v3104, %v3096
        %v3449 = vpack.c.b16 %v3105, %v3097
        %v3450 = vpack.c.b16 %v3106, %v3098
        %v3451 = vpack.c.b16 %v3107, %v3099
        %v3452 = vpack.c.b16 %v3108, %v3100
        %v3453 = vpack.c.b16 %v3109, %v3101
        %v3454 = vpack.c.b16 %v3110, %v3102
        %v3455 = vpack.c.b16 %v3111, %v3103
        %v3456 = vpack.c.b16 %v3120, %v3112
        %v3457 = vpack.c.b16 %v3121, %v3113
        %v3458 = vpack.c.b16 %v3122, %v3114
        %v3459 = vpack.c.b16 %v3123, %v3115
        %v3460 = vpack.c.b16 %v3124, %v3116
        %v3461 = vpack.c.b16 %v3125, %v3117
        %v3462 = vpack.c.b16 %v3126, %v3118
        %v3463 = vpack.c.b16 %v3127, %v3119
        %v3464 = vpack.c.b16 %v3136, %v3128
        %v3465 = vpack.c.b16 %v3137, %v3129
        %v3466 = vpack.c.b16 %v3138, %v3130
        %v3467 = vpack.c.b16 %v3139, %v3131
        %v3468 = vpack.c.b16 %v3140, %v3132
        %v3469 = vpack.c.b16 %v3141, %v3133
        %v3470 = vpack.c.b16 %v3142, %v3134
        %v3471 = vpack.c.b16 %v3143, %v3135
        %v3472 = vpack.c.b16 %v3152, %v3144
        %v3473 = vpack.c.b16 %v3153, %v3145
        %v3474 = vpack.c.b16 %v3154, %v3146
        %v3475 = vpack.c.b16 %v3155, %v3147
        %v3476 = vpack.c.b16 %v3156, %v3148
        %v3477 = vpack.c.b16 %v3157, %v3149
        %v3478 = vpack.c.b16 %v3158, %v3150
        %v3479 = vpack.c.b16 %v3159, %v3151
        %v3480 = vpack.c.b16 %v3168, %v3160
        %v3481 = vpack.c.b16 %v3169, %v3161
        %v3482 = vpack.c.b16 %v3170, %v3162
        %v3483 = vpack.c.b16 %v3171, %v3163
        %v3484 = vpack.c.b16 %v3172, %v3164
        %v3485 = vpack.c.b16 %v3173, %v3165
        %v3486 = vpack.c.b16 %v3174, %v3166
        %v3487 = vpack.c.b16 %v3175, %v3167
        %v3488 = vpack.c.b16 %v3184, %v3176
        %v3489 = vpack.c.b16 %v3185, %v3177
        %v3490 = vpack.c.b16 %v3186, %v3178
        %v3491 = vpack.c.b16 %v3187, %v3179
        %v3492 = vpack.c.b16 %v3188, %v3180
        %v3493 = vpack.c.b16 %v3189, %v3181
        %v3494 = vpack.c.b16 %v3190, %v3182
        %v3495 = vpack.c.b16 %v3191, %v3183
        %v3496 = vpack.c.b16 %v3200, %v3192
        %v3497 = vpack.c.b16 %v3201, %v3193
        %v3498 = vpack.c.b16 %v3202, %v3194
        %v3499 = vpack.c.b16 %v3203, %v3195
        %v3500 = vpack.c.b16 %v3204, %v3196
        %v3501 = vpack.c.b16 %v3205, %v3197
        %v3502 = vpack.c.b16 %v3206, %v3198
        %v3503 = vpack.c.b16 %v3207, %v3199
        %v3504 = vpack.c.b16 %v3216, %v3208
        %v3505 = vpack.c.b16 %v3217, %v3209
        %v3506 = vpack.c.b16 %v3218, %v3210
        %v3507 = vpack.c.b16 %v3219, %v3211
        %v3508 = vpack.c.b16 %v3220, %v3212
        %v3509 = vpack.c.b16 %v3221, %v3213
        %v3510 = vpack.c.b16 %v3222, %v3214
        %v3511 = vpack.c.b16 %v3223, %v3215
        %v3512 = vpack.c.b16 %v3232, %v3224
        %v3513 = vpack.c.b16 %v3233, %v3225
        %v3514 = vpack.c.b16 %v3234, %v3226
        %v3515 = vpack.c.b16 %v3235, %v3227
        %v3516 = vpack.c.b16 %v3236, %v3228
        %v3517 = vpack.c.b16 %v3237, %v3229
        %v3518 = vpack.c.b16 %v3238, %v3230
        %v3519 = vpack.c.b16 %v3239, %v3231
        %v3520 = vpack.c.b16 %v3248, %v3240
        %v3521 = vpack.c.b16 %v3249, %v3241
        %v3522 = vpack.c.b16 %v3250, %v3242
        %v3523 = vpack.c.b16 %v3251, %v3243
        %v3524 = vpack.c.b16 %v3252, %v3244
        %v3525 = vpack.c.b16 %v3253, %v3245
        %v3526 = vpack.c.b16 %v3254, %v3246
        %v3527 = vpack.c.b16 %v3255, %v3247
        %v3528 = vpack.c.b16 %v3264, %v3256
        %v3529 = vpack.c.b16 %v3265, %v3257
        %v3530 = vpack.c.b16 %v3266, %v3258
        %v3531 = vpack.c.b16 %v3267, %v3259
        %v3532 = vpack.c.b16 %v3268, %v3260
        %v3533 = vpack.c.b16 %v3269, %v3261
        %v3534 = vpack.c.b16 %v3270, %v3262
        %v3535 = vpack.c.b16 %v3271, %v3263
        %v3536 = vpack.c.b16 %v3280, %v3272
        %v3537 = vpack.c.b16 %v3281, %v3273
        %v3538 = vpack.c.b16 %v3282, %v3274
        %v3539 = vpack.c.b16 %v3283, %v3275
        %v3540 = vpack.c.b16 %v3284, %v3276
        %v3541 = vpack.c.b16 %v3285, %v3277
        %v3542 = vpack.c.b16 %v3286, %v3278
        %v3543 = vpack.c.b16 %v3287, %v3279
        %3800 = vmatprep.subr.bf16.mxu0 %v3289
        %3801 = vmatpush1.bf16.msra.mxu0 %v3288
        %3802 = vmatprep.subr.bf16.mxu0 %v3297
        %3803 = vmatpush1.bf16.msra.mxu0 %v3296
        %3804 = vmatprep.subr.bf16.mxu0 %v3305
        %3805 = vmatpush1.bf16.msra.mxu0 %v3304
        %3806 = vmatprep.subr.bf16.mxu0 %v3313
        %3807 = vmatpush1.bf16.msra.mxu0 %v3312
        %3808 = vmatprep.subr.bf16.mxu0 %v3321
        %3809 = vmatpush1.bf16.msra.mxu0 %v3320
        %3810 = vmatprep.subr.bf16.mxu0 %v3329
        %3811 = vmatpush1.bf16.msra.mxu0 %v3328
        %3812 = vmatprep.subr.bf16.mxu0 %v3337
        %3813 = vmatpush1.bf16.msra.mxu0 %v3336
        %3814 = vmatprep.subr.bf16.mxu0 %v3345
        %3815 = vmatpush1.bf16.msra.mxu0 %v3344
        %3816 = vmatprep.subr.bf16.mxu0 %v3353
        %3817 = vmatpush1.bf16.msra.mxu0 %v3352
        %3818 = vmatprep.subr.bf16.mxu0 %v3361
        %3819 = vmatpush1.bf16.msra.mxu0 %v3360
        %3820 = vmatprep.subr.bf16.mxu0 %v3369
        %3821 = vmatpush1.bf16.msra.mxu0 %v3368
        %3822 = vmatprep.subr.bf16.mxu0 %v3377
        %3823 = vmatpush1.bf16.msra.mxu0 %v3376
        %3824 = vmatprep.subr.bf16.mxu0 %v3385
        %3825 = vmatpush1.bf16.msra.mxu0 %v3384
        %3826 = vmatprep.subr.bf16.mxu0 %v3393
        %3827 = vmatpush1.bf16.msra.mxu0 %v3392
        %3828 = vmatprep.subr.bf16.mxu0 %v3401
        %3829 = vmatpush1.bf16.msra.mxu0 %v3400
        %3830 = vmatprep.subr.bf16.mxu0 %v3409
        %3831 = vmatpush1.bf16.msra.mxu0 %v3408
        %3832 = vmatprep.mubr.bf16.mxu0 %v2159
        %3833 = vmatmul.mubr.bf16.gmra.mrb[0].mxu0 %v2158
        %v3834 = vpop.f32.mrb[0].mxu0
        %v3835 = vadd.f32 %v2483, %v3834
        %v3836 = vpop.f32.mrb[0].mxu0
        %v3837 = vadd.f32 %v2487, %v3836
        %v3838 = vpop.f32.mrb[0].mxu0
        %v3839 = vadd.f32 %v2483, %v3838
        %v3840 = vpop.f32.mrb[0].mxu0
        %v3841 = vadd.f32 %v2487, %v3840
        %3842 = vmatprep.mubr.bf16.mxu0 %v2163
        %3843 = vmatmul.mubr.bf16.gmra.mrb[0].mxu0 %v2162
        %v3844 = vpop.f32.mrb[0].mxu0
        %v3845 = vadd.f32 %v2483, %v3844
        %v3846 = vpop.f32.mrb[0].mxu0
        %v3847 = vadd.f32 %v2487, %v3846
        %v3848 = vpop.f32.mrb[0].mxu0
        %v3849 = vadd.f32 %v2483, %v3848
        %v3850 = vpop.f32.mrb[0].mxu0
        %v3851 = vadd.f32 %v2487, %v3850
        %3852 = vmatprep.mubr.bf16.mxu0 %v2167
        %3853 = vmatmul.mubr.bf16.gmra.mrb[0].mxu0 %v2166
        %v3854 = vpop.f32.mrb[0].mxu0
        %v3855 = vadd.f32 %v2483, %v3854
        %v3856 = vpop.f32.mrb[0].mxu0
        %v3857 = vadd.f32 %v2487, %v3856
        %v3858 = vpop.f32.mrb[0].mxu0
        %v3859 = vadd.f32 %v2483, %v3858
        %v3860 = vpop.f32.mrb[0].mxu0
        %v3861 = vadd.f32 %v2487, %v3860
        %3862 = vmatprep.mubr.bf16.mxu0 %v2171
        %3863 = vmatmul.mubr.bf16.gmra.mrb[0].mxu0 %v2170
        %v3864 = vpop.f32.mrb[0].mxu0
        %v3865 = vadd.f32 %v2483, %v3864
        %v3866 = vpop.f32.mrb[0].mxu0
        %v3867 = vadd.f32 %v2487, %v3866
        %v3868 = vpop.f32.mrb[0].mxu0
        %v3869 = vadd.f32 %v2483, %v3868
        %v3870 = vpop.f32.mrb[0].mxu0
        %v3871 = vadd.f32 %v2487, %v3870
        %3872 = vmatprep.mubr.bf16.mxu0 %v2175
        %3873 = vmatmul.mubr.bf16.gmra.mrb[0].mxu0 %v2174
        %v3874 = vpop.f32.mrb[0].mxu0
        %v3875 = vadd.f32 %v2483, %v3874
        %v3876 = vpop.f32.mrb[0].mxu0
        %v3877 = vadd.f32 %v2487, %v3876
        %v3878 = vpop.f32.mrb[0].mxu0
        %v3879 = vadd.f32 %v2483, %v3878
        %v3880 = vpop.f32.mrb[0].mxu0
        %v3881 = vadd.f32 %v2487, %v3880
        %3882 = vmatprep.mubr.bf16.mxu0 %v2179
        %3883 = vmatmul.mubr.bf16.gmra.mrb[0].mxu0 %v2178
        %v3884 = vpop.f32.mrb[0].mxu0
        %v3885 = vadd.f32 %v2483, %v3884
        %v3886 = vpop.f32.mrb[0].mxu0
        %v3887 = vadd.f32 %v2487, %v3886
        %v3888 = vpop.f32.mrb[0].mxu0
        %v3889 = vadd.f32 %v2483, %v3888
        %v3890 = vpop.f32.mrb[0].mxu0
        %v3891 = vadd.f32 %v2487, %v3890
        %3892 = vmatprep.mubr.bf16.mxu0 %v2183
        %3893 = vmatmul.mubr.bf16.gmra.mrb[0].mxu0 %v2182
        %v3894 = vpop.f32.mrb[0].mxu0
        %v3895 = vadd.f32 %v2483, %v3894
        %v3896 = vpop.f32.mrb[0].mxu0
        %v3897 = vadd.f32 %v2487, %v3896
        %v3898 = vpop.f32.mrb[0].mxu0
        %v3899 = vadd.f32 %v2483, %v3898
        %v3900 = vpop.f32.mrb[0].mxu0
        %v3901 = vadd.f32 %v2487, %v3900
        %3902 = vmatprep.mubr.bf16.mxu0 %v2187
        %3903 = vmatmul.mubr.bf16.gmra.mrb[0].mxu0 %v2186
        %v3904 = vpop.f32.mrb[0].mxu0
        %v3905 = vadd.f32 %v2483, %v3904
        %v3906 = vpop.f32.mrb[0].mxu0
        %v3907 = vadd.f32 %v2487, %v3906
        %v3908 = vpop.f32.mrb[0].mxu0
        %v3909 = vadd.f32 %v2483, %v3908
        %v3910 = vpop.f32.mrb[0].mxu0
        %v3911 = vadd.f32 %v2487, %v3910
        %3912 = vmatprep.mubr.bf16.mxu0 %v2191
        %3913 = vmatmul.mubr.bf16.gmra.mrb[0].mxu0 %v2190
        %v3914 = vpop.f32.mrb[0].mxu0
        %v3915 = vadd.f32 %v2483, %v3914
        %v3916 = vpop.f32.mrb[0].mxu0
        %v3917 = vadd.f32 %v2487, %v3916
        %v3918 = vpop.f32.mrb[0].mxu0
        %v3919 = vadd.f32 %v2483, %v3918
        %v3920 = vpop.f32.mrb[0].mxu0
        %v3921 = vadd.f32 %v2487, %v3920
        %3922 = vmatprep.mubr.bf16.mxu0 %v2195
        %3923 = vmatmul.mubr.bf16.gmra.mrb[0].mxu0 %v2194
        %v3924 = vpop.f32.mrb[0].mxu0
        %v3925 = vadd.f32 %v2483, %v3924
        %v3926 = vpop.f32.mrb[0].mxu0
        %v3927 = vadd.f32 %v2487, %v3926
        %v3928 = vpop.f32.mrb[0].mxu0
        %v3929 = vadd.f32 %v2483, %v3928
        %v3930 = vpop.f32.mrb[0].mxu0
        %v3931 = vadd.f32 %v2487, %v3930
        %3932 = vmatprep.mubr.bf16.mxu0 %v2199
        %3933 = vmatmul.mubr.bf16.gmra.mrb[0].mxu0 %v2198
        %v3934 = vpop.f32.mrb[0].mxu0
        %v3935 = vadd.f32 %v2483, %v3934
        %v3936 = vpop.f32.mrb[0].mxu0
        %v3937 = vadd.f32 %v2487, %v3936
        %v3938 = vpop.f32.mrb[0].mxu0
        %v3939 = vadd.f32 %v2483, %v3938
        %v3940 = vpop.f32.mrb[0].mxu0
        %v3941 = vadd.f32 %v2487, %v3940
        %3942 = vmatprep.mubr.bf16.mxu0 %v2203
        %3943 = vmatmul.mubr.bf16.gmra.mrb[0].mxu0 %v2202
        %v3944 = vpop.f32.mrb[0].mxu0
        %v3945 = vadd.f32 %v2483, %v3944
        %v3946 = vpop.f32.mrb[0].mxu0
        %v3947 = vadd.f32 %v2487, %v3946
        %v3948 = vpop.f32.mrb[0].mxu0
        %v3949 = vadd.f32 %v2483, %v3948
        %v3950 = vpop.f32.mrb[0].mxu0
        %v3951 = vadd.f32 %v2487, %v3950
        %3952 = vmatprep.mubr.bf16.mxu0 %v2207
        %3953 = vmatmul.mubr.bf16.gmra.mrb[0].mxu0 %v2206
        %v3954 = vpop.f32.mrb[0].mxu0
        %v3955 = vadd.f32 %v2483, %v3954
        %v3956 = vpop.f32.mrb[0].mxu0
        %v3957 = vadd.f32 %v2487, %v3956
        %v3958 = vpop.f32.mrb[0].mxu0
        %v3959 = vadd.f32 %v2483, %v3958
        %v3960 = vpop.f32.mrb[0].mxu0
        %v3961 = vadd.f32 %v2487, %v3960
        %3962 = vmatprep.mubr.bf16.mxu0 %v2211
        %3963 = vmatmul.mubr.bf16.gmra.mrb[0].mxu0 %v2210
        %v3964 = vpop.f32.mrb[0].mxu0
        %v3965 = vadd.f32 %v2483, %v3964
        %v3966 = vpop.f32.mrb[0].mxu0
        %v3967 = vadd.f32 %v2487, %v3966
        %v3968 = vpop.f32.mrb[0].mxu0
        %v3969 = vadd.f32 %v2483, %v3968
        %v3970 = vpop.f32.mrb[0].mxu0
        %v3971 = vadd.f32 %v2487, %v3970
        %3972 = vmatprep.mubr.bf16.mxu0 %v2215
        %3973 = vmatmul.mubr.bf16.gmra.mrb[0].mxu0 %v2214
        %v3974 = vpop.f32.mrb[0].mxu0
        %v3975 = vadd.f32 %v2483, %v3974
        %v3976 = vpop.f32.mrb[0].mxu0
        %v3977 = vadd.f32 %v2487, %v3976
        %v3978 = vpop.f32.mrb[0].mxu0
        %v3979 = vadd.f32 %v2483, %v3978
        %v3980 = vpop.f32.mrb[0].mxu0
        %v3981 = vadd.f32 %v2487, %v3980
        %3982 = vmatprep.mubr.bf16.mxu0 %v2219
        %3983 = vmatmul.mubr.bf16.gmra.mrb[0].mxu0 %v2218
        %v3984 = vpop.f32.mrb[0].mxu0
        %v3985 = vadd.f32 %v2483, %v3984
        %v3986 = vpop.f32.mrb[0].mxu0
        %v3987 = vadd.f32 %v2487, %v3986
        %v3988 = vpop.f32.mrb[0].mxu0
        %v3989 = vadd.f32 %v2483, %v3988
        %v3990 = vpop.f32.mrb[0].mxu0
        %v3991 = vadd.f32 %v2487, %v3990
        %3992 = vdwg.mxu0
        %3993 = vmatprep.subr.bf16.mxu0 %v3417
        %3994 = vmatpush1.bf16.msra.mxu0 %v3416
        %3995 = vmatprep.subr.bf16.mxu0 %v3425
        %3996 = vmatpush1.bf16.msra.mxu0 %v3424
        %3997 = vmatprep.subr.bf16.mxu0 %v3433
        %3998 = vmatpush1.bf16.msra.mxu0 %v3432
        %3999 = vmatprep.subr.bf16.mxu0 %v3441
        %4000 = vmatpush1.bf16.msra.mxu0 %v3440
        %4001 = vmatprep.subr.bf16.mxu0 %v3449
        %4002 = vmatpush1.bf16.msra.mxu0 %v3448
        %4003 = vmatprep.subr.bf16.mxu0 %v3457
        %4004 = vmatpush1.bf16.msra.mxu0 %v3456
        %4005 = vmatprep.subr.bf16.mxu0 %v3465
        %4006 = vmatpush1.bf16.msra.mxu0 %v3464
        %4007 = vmatprep.subr.bf16.mxu0 %v3473
        %4008 = vmatpush1.bf16.msra.mxu0 %v3472
        %4009 = vmatprep.subr.bf16.mxu0 %v3481
        %4010 = vmatpush1.bf16.msra.mxu0 %v3480
        %4011 = vmatprep.subr.bf16.mxu0 %v3489
        %4012 = vmatpush1.bf16.msra.mxu0 %v3488
        %4013 = vmatprep.subr.bf16.mxu0 %v3497
        %4014 = vmatpush1.bf16.msra.mxu0 %v3496
        %4015 = vmatprep.subr.bf16.mxu0 %v3505
        %4016 = vmatpush1.bf16.msra.mxu0 %v3504
        %4017 = vmatprep.subr.bf16.mxu0 %v3513
        %4018 = vmatpush1.bf16.msra.mxu0 %v3512
        %4019 = vmatprep.subr.bf16.mxu0 %v3521
        %4020 = vmatpush1.bf16.msra.mxu0 %v3520
        %4021 = vmatprep.subr.bf16.mxu0 %v3529
        %4022 = vmatpush1.bf16.msra.mxu0 %v3528
        %4023 = vmatprep.subr.bf16.mxu0 %v3537
        %4024 = vmatpush1.bf16.msra.mxu0 %v3536
        %4025 = vmatprep.mubr.bf16.mxu0 %v2161
        %4026 = vmatmul.mubr.bf16.gmra.mrb[0].mxu0 %v2160
        %v4027 = vpop.f32.mrb[0].mxu0
        %v4028 = vadd.f32 %v3835, %v4027
        %v4029 = vpop.f32.mrb[0].mxu0
        %v4030 = vadd.f32 %v3837, %v4029
        %v4031 = vpop.f32.mrb[0].mxu0
        %v4032 = vadd.f32 %v3839, %v4031
        %v4033 = vpop.f32.mrb[0].mxu0
        %v4034 = vadd.f32 %v3841, %v4033
        %4035 = vmatprep.mubr.bf16.mxu0 %v2165
        %4036 = vmatmul.mubr.bf16.gmra.mrb[0].mxu0 %v2164
        %v4037 = vpop.f32.mrb[0].mxu0
        %v4038 = vadd.f32 %v3845, %v4037
        %v4039 = vpop.f32.mrb[0].mxu0
        %v4040 = vadd.f32 %v3847, %v4039
        %v4041 = vpop.f32.mrb[0].mxu0
        %v4042 = vadd.f32 %v3849, %v4041
        %v4043 = vpop.f32.mrb[0].mxu0
        %v4044 = vadd.f32 %v3851, %v4043
        %4045 = vmatprep.mubr.bf16.mxu0 %v2169
        %4046 = vmatmul.mubr.bf16.gmra.mrb[0].mxu0 %v2168
        %v4047 = vpop.f32.mrb[0].mxu0
        %v4048 = vadd.f32 %v3855, %v4047
        %v4049 = vpop.f32.mrb[0].mxu0
        %v4050 = vadd.f32 %v3857, %v4049
        %v4051 = vpop.f32.mrb[0].mxu0
        %v4052 = vadd.f32 %v3859, %v4051
        %v4053 = vpop.f32.mrb[0].mxu0
        %v4054 = vadd.f32 %v3861, %v4053
        %4055 = vmatprep.mubr.bf16.mxu0 %v2173
        %4056 = vmatmul.mubr.bf16.gmra.mrb[0].mxu0 %v2172
        %v4057 = vpop.f32.mrb[0].mxu0
        %v4058 = vadd.f32 %v3865, %v4057
        %v4059 = vpop.f32.mrb[0].mxu0
        %v4060 = vadd.f32 %v3867, %v4059
        %v4061 = vpop.f32.mrb[0].mxu0
        %v4062 = vadd.f32 %v3869, %v4061
        %v4063 = vpop.f32.mrb[0].mxu0
        %v4064 = vadd.f32 %v3871, %v4063
        %4065 = vmatprep.mubr.bf16.mxu0 %v2177
        %4066 = vmatmul.mubr.bf16.gmra.mrb[0].mxu0 %v2176
        %v4067 = vpop.f32.mrb[0].mxu0
        %v4068 = vadd.f32 %v3875, %v4067
        %v4069 = vpop.f32.mrb[0].mxu0
        %v4070 = vadd.f32 %v3877, %v4069
        %v4071 = vpop.f32.mrb[0].mxu0
        %v4072 = vadd.f32 %v3879, %v4071
        %v4073 = vpop.f32.mrb[0].mxu0
        %v4074 = vadd.f32 %v3881, %v4073
        %4075 = vmatprep.mubr.bf16.mxu0 %v2181
        %4076 = vmatmul.mubr.bf16.gmra.mrb[0].mxu0 %v2180
        %v4077 = vpop.f32.mrb[0].mxu0
        %v4078 = vadd.f32 %v3885, %v4077
        %v4079 = vpop.f32.mrb[0].mxu0
        %v4080 = vadd.f32 %v3887, %v4079
        %v4081 = vpop.f32.mrb[0].mxu0
        %v4082 = vadd.f32 %v3889, %v4081
        %v4083 = vpop.f32.mrb[0].mxu0
        %v4084 = vadd.f32 %v3891, %v4083
        %4085 = vmatprep.mubr.bf16.mxu0 %v2185
        %4086 = vmatmul.mubr.bf16.gmra.mrb[0].mxu0 %v2184
        %v4087 = vpop.f32.mrb[0].mxu0
        %v4088 = vadd.f32 %v3895, %v4087
        %v4089 = vpop.f32.mrb[0].mxu0
        %v4090 = vadd.f32 %v3897, %v4089
        %v4091 = vpop.f32.mrb[0].mxu0
        %v4092 = vadd.f32 %v3899, %v4091
        %v4093 = vpop.f32.mrb[0].mxu0
        %v4094 = vadd.f32 %v3901, %v4093
        %4095 = vmatprep.mubr.bf16.mxu0 %v2189
        %4096 = vmatmul.mubr.bf16.gmra.mrb[0].mxu0 %v2188
        %v4097 = vpop.f32.mrb[0].mxu0
        %v4098 = vadd.f32 %v3905, %v4097
        %v4099 = vpop.f32.mrb[0].mxu0
        %v4100 = vadd.f32 %v3907, %v4099
        %v4101 = vpop.f32.mrb[0].mxu0
        %v4102 = vadd.f32 %v3909, %v4101
        %v4103 = vpop.f32.mrb[0].mxu0
        %v4104 = vadd.f32 %v3911, %v4103
        %4105 = vmatprep.mubr.bf16.mxu0 %v2193
        %4106 = vmatmul.mubr.bf16.gmra.mrb[0].mxu0 %v2192
        %v4107 = vpop.f32.mrb[0].mxu0
        %v4108 = vadd.f32 %v3915, %v4107
        %v4109 = vpop.f32.mrb[0].mxu0
        %v4110 = vadd.f32 %v3917, %v4109
        %v4111 = vpop.f32.mrb[0].mxu0
        %v4112 = vadd.f32 %v3919, %v4111
        %v4113 = vpop.f32.mrb[0].mxu0
        %v4114 = vadd.f32 %v3921, %v4113
        %4115 = vmatprep.mubr.bf16.mxu0 %v2197
        %4116 = vmatmul.mubr.bf16.gmra.mrb[0].mxu0 %v2196
        %v4117 = vpop.f32.mrb[0].mxu0
        %v4118 = vadd.f32 %v3925, %v4117
        %v4119 = vpop.f32.mrb[0].mxu0
        %v4120 = vadd.f32 %v3927, %v4119
        %v4121 = vpop.f32.mrb[0].mxu0
        %v4122 = vadd.f32 %v3929, %v4121
        %v4123 = vpop.f32.mrb[0].mxu0
        %v4124 = vadd.f32 %v3931, %v4123
        %4125 = vmatprep.mubr.bf16.mxu0 %v2201
        %4126 = vmatmul.mubr.bf16.gmra.mrb[0].mxu0 %v2200
        %v4127 = vpop.f32.mrb[0].mxu0
        %v4128 = vadd.f32 %v3935, %v4127
        %v4129 = vpop.f32.mrb[0].mxu0
        %v4130 = vadd.f32 %v3937, %v4129
        %v4131 = vpop.f32.mrb[0].mxu0
        %v4132 = vadd.f32 %v3939, %v4131
        %v4133 = vpop.f32.mrb[0].mxu0
        %v4134 = vadd.f32 %v3941, %v4133
        %4135 = vmatprep.mubr.bf16.mxu0 %v2205
        %4136 = vmatmul.mubr.bf16.gmra.mrb[0].mxu0 %v2204
        %v4137 = vpop.f32.mrb[0].mxu0
        %v4138 = vadd.f32 %v3945, %v4137
        %v4139 = vpop.f32.mrb[0].mxu0
        %v4140 = vadd.f32 %v3947, %v4139
        %v4141 = vpop.f32.mrb[0].mxu0
        %v4142 = vadd.f32 %v3949, %v4141
        %v4143 = vpop.f32.mrb[0].mxu0
        %v4144 = vadd.f32 %v3951, %v4143
        %4145 = vmatprep.mubr.bf16.mxu0 %v2209
        %4146 = vmatmul.mubr.bf16.gmra.mrb[0].mxu0 %v2208
        %v4147 = vpop.f32.mrb[0].mxu0
        %v4148 = vadd.f32 %v3955, %v4147
        %v4149 = vpop.f32.mrb[0].mxu0
        %v4150 = vadd.f32 %v3957, %v4149
        %v4151 = vpop.f32.mrb[0].mxu0
        %v4152 = vadd.f32 %v3959, %v4151
        %v4153 = vpop.f32.mrb[0].mxu0
        %v4154 = vadd.f32 %v3961, %v4153
        %4155 = vmatprep.mubr.bf16.mxu0 %v2213
        %4156 = vmatmul.mubr.bf16.gmra.mrb[0].mxu0 %v2212
        %v4157 = vpop.f32.mrb[0].mxu0
        %v4158 = vadd.f32 %v3965, %v4157
        %v4159 = vpop.f32.mrb[0].mxu0
        %v4160 = vadd.f32 %v3967, %v4159
        %v4161 = vpop.f32.mrb[0].mxu0
        %v4162 = vadd.f32 %v3969, %v4161
        %v4163 = vpop.f32.mrb[0].mxu0
        %v4164 = vadd.f32 %v3971, %v4163
        %4165 = vmatprep.mubr.bf16.mxu0 %v2217
        %4166 = vmatmul.mubr.bf16.gmra.mrb[0].mxu0 %v2216
        %v4167 = vpop.f32.mrb[0].mxu0
        %v4168 = vadd.f32 %v3975, %v4167
        %v4169 = vpop.f32.mrb[0].mxu0
        %v4170 = vadd.f32 %v3977, %v4169
        %v4171 = vpop.f32.mrb[0].mxu0
        %v4172 = vadd.f32 %v3979, %v4171
        %v4173 = vpop.f32.mrb[0].mxu0
        %v4174 = vadd.f32 %v3981, %v4173
        %4175 = vmatprep.mubr.bf16.mxu0 %v2221
        %4176 = vmatmul.mubr.bf16.gmra.mrb[0].mxu0 %v2220
        %v4177 = vpop.f32.mrb[0].mxu0
        %v4178 = vadd.f32 %v3985, %v4177
        %v4179 = vpop.f32.mrb[0].mxu0
        %v4180 = vadd.f32 %v3987, %v4179
        %v4181 = vpop.f32.mrb[0].mxu0
        %v4182 = vadd.f32 %v3989, %v4181
        %v4183 = vpop.f32.mrb[0].mxu0
        %v4184 = vadd.f32 %v3991, %v4183
        %4185 = vdwg.mxu0
        %4186 = vmatprep.subr.bf16.mxu0 %v3291
        %4187 = vmatpush1.bf16.msra.mxu0 %v3290
        %4188 = vmatprep.subr.bf16.mxu0 %v3299
        %4189 = vmatpush1.bf16.msra.mxu0 %v3298
        %4190 = vmatprep.subr.bf16.mxu0 %v3307
        %4191 = vmatpush1.bf16.msra.mxu0 %v3306
        %4192 = vmatprep.subr.bf16.mxu0 %v3315
        %4193 = vmatpush1.bf16.msra.mxu0 %v3314
        %4194 = vmatprep.subr.bf16.mxu0 %v3323
        %4195 = vmatpush1.bf16.msra.mxu0 %v3322
        %4196 = vmatprep.subr.bf16.mxu0 %v3331
        %4197 = vmatpush1.bf16.msra.mxu0 %v3330
        %4198 = vmatprep.subr.bf16.mxu0 %v3339
        %4199 = vmatpush1.bf16.msra.mxu0 %v3338
        %4200 = vmatprep.subr.bf16.mxu0 %v3347
        %4201 = vmatpush1.bf16.msra.mxu0 %v3346
        %4202 = vmatprep.subr.bf16.mxu0 %v3355
        %4203 = vmatpush1.bf16.msra.mxu0 %v3354
        %4204 = vmatprep.subr.bf16.mxu0 %v3363
        %4205 = vmatpush1.bf16.msra.mxu0 %v3362
        %4206 = vmatprep.subr.bf16.mxu0 %v3371
        %4207 = vmatpush1.bf16.msra.mxu0 %v3370
        %4208 = vmatprep.subr.bf16.mxu0 %v3379
        %4209 = vmatpush1.bf16.msra.mxu0 %v3378
        %4210 = vmatprep.subr.bf16.mxu0 %v3387
        %4211 = vmatpush1.bf16.msra.mxu0 %v3386
        %4212 = vmatprep.subr.bf16.mxu0 %v3395
        %4213 = vmatpush1.bf16.msra.mxu0 %v3394
        %4214 = vmatprep.subr.bf16.mxu0 %v3403
        %4215 = vmatpush1.bf16.msra.mxu0 %v3402
        %4216 = vmatprep.subr.bf16.mxu0 %v3411
        %4217 = vmatpush1.bf16.msra.mxu0 %v3410
        %4218 = vmatprep.mubr.bf16.mxu0 %v2159
        %4219 = vmatmul.mubr.bf16.gmra.mrb[0].mxu0 %v2158
        %v4220 = vpop.f32.mrb[0].mxu0
        %v4221 = vadd.f32 %v2491, %v4220
        %v4222 = vpop.f32.mrb[0].mxu0
        %v4223 = vadd.f32 %v2495, %v4222
        %v4224 = vpop.f32.mrb[0].mxu0
        %v4225 = vadd.f32 %v2491, %v4224
        %v4226 = vpop.f32.mrb[0].mxu0
        %v4227 = vadd.f32 %v2495, %v4226
        %4228 = vmatprep.mubr.bf16.mxu0 %v2163
        %4229 = vmatmul.mubr.bf16.gmra.mrb[0].mxu0 %v2162
        %v4230 = vpop.f32.mrb[0].mxu0
        %v4231 = vadd.f32 %v2491, %v4230
        %v4232 = vpop.f32.mrb[0].mxu0
        %v4233 = vadd.f32 %v2495, %v4232
        %v4234 = vpop.f32.mrb[0].mxu0
        %v4235 = vadd.f32 %v2491, %v4234
        %v4236 = vpop.f32.mrb[0].mxu0
        %v4237 = vadd.f32 %v2495, %v4236
        %4238 = vmatprep.mubr.bf16.mxu0 %v2167
        %4239 = vmatmul.mubr.bf16.gmra.mrb[0].mxu0 %v2166
        %v4240 = vpop.f32.mrb[0].mxu0
        %v4241 = vadd.f32 %v2491, %v4240
        %v4242 = vpop.f32.mrb[0].mxu0
        %v4243 = vadd.f32 %v2495, %v4242
        %v4244 = vpop.f32.mrb[0].mxu0
        %v4245 = vadd.f32 %v2491, %v4244
        %v4246 = vpop.f32.mrb[0].mxu0
        %v4247 = vadd.f32 %v2495, %v4246
        %4248 = vmatprep.mubr.bf16.mxu0 %v2171
        %4249 = vmatmul.mubr.bf16.gmra.mrb[0].mxu0 %v2170
        %v4250 = vpop.f32.mrb[0].mxu0
        %v4251 = vadd.f32 %v2491, %v4250
        %v4252 = vpop.f32.mrb[0].mxu0
        %v4253 = vadd.f32 %v2495, %v4252
        %v4254 = vpop.f32.mrb[0].mxu0
        %v4255 = vadd.f32 %v2491, %v4254
        %v4256 = vpop.f32.mrb[0].mxu0
        %v4257 = vadd.f32 %v2495, %v4256
        %4258 = vmatprep.mubr.bf16.mxu0 %v2175
        %4259 = vmatmul.mubr.bf16.gmra.mrb[0].mxu0 %v2174
        %v4260 = vpop.f32.mrb[0].mxu0
        %v4261 = vadd.f32 %v2491, %v4260
        %v4262 = vpop.f32.mrb[0].mxu0
        %v4263 = vadd.f32 %v2495, %v4262
        %v4264 = vpop.f32.mrb[0].mxu0
        %v4265 = vadd.f32 %v2491, %v4264
        %v4266 = vpop.f32.mrb[0].mxu0
        %v4267 = vadd.f32 %v2495, %v4266
        %4268 = vmatprep.mubr.bf16.mxu0 %v2179
        %4269 = vmatmul.mubr.bf16.gmra.mrb[0].mxu0 %v2178
        %v4270 = vpop.f32.mrb[0].mxu0
        %v4271 = vadd.f32 %v2491, %v4270
        %v4272 = vpop.f32.mrb[0].mxu0
        %v4273 = vadd.f32 %v2495, %v4272
        %v4274 = vpop.f32.mrb[0].mxu0
        %v4275 = vadd.f32 %v2491, %v4274
        %v4276 = vpop.f32.mrb[0].mxu0
        %v4277 = vadd.f32 %v2495, %v4276
        %4278 = vmatprep.mubr.bf16.mxu0 %v2183
        %4279 = vmatmul.mubr.bf16.gmra.mrb[0].mxu0 %v2182
        %v4280 = vpop.f32.mrb[0].mxu0
        %v4281 = vadd.f32 %v2491, %v4280
        %v4282 = vpop.f32.mrb[0].mxu0
        %v4283 = vadd.f32 %v2495, %v4282
        %v4284 = vpop.f32.mrb[0].mxu0
        %v4285 = vadd.f32 %v2491, %v4284
        %v4286 = vpop.f32.mrb[0].mxu0
        %v4287 = vadd.f32 %v2495, %v4286
        %4288 = vmatprep.mubr.bf16.mxu0 %v2187
        %4289 = vmatmul.mubr.bf16.gmra.mrb[0].mxu0 %v2186
        %v4290 = vpop.f32.mrb[0].mxu0
        %v4291 = vadd.f32 %v2491, %v4290
        %v4292 = vpop.f32.mrb[0].mxu0
        %v4293 = vadd.f32 %v2495, %v4292
        %v4294 = vpop.f32.mrb[0].mxu0
        %v4295 = vadd.f32 %v2491, %v4294
        %v4296 = vpop.f32.mrb[0].mxu0
        %v4297 = vadd.f32 %v2495, %v4296
        %4298 = vmatprep.mubr.bf16.mxu0 %v2191
        %4299 = vmatmul.mubr.bf16.gmra.mrb[0].mxu0 %v2190
        %v4300 = vpop.f32.mrb[0].mxu0
        %v4301 = vadd.f32 %v2491, %v4300
        %v4302 = vpop.f32.mrb[0].mxu0
        %v4303 = vadd.f32 %v2495, %v4302
        %v4304 = vpop.f32.mrb[0].mxu0
        %v4305 = vadd.f32 %v2491, %v4304
        %v4306 = vpop.f32.mrb[0].mxu0
        %v4307 = vadd.f32 %v2495, %v4306
        %4308 = vmatprep.mubr.bf16.mxu0 %v2195
        %4309 = vmatmul.mubr.bf16.gmra.mrb[0].mxu0 %v2194
        %v4310 = vpop.f32.mrb[0].mxu0
        %v4311 = vadd.f32 %v2491, %v4310
        %v4312 = vpop.f32.mrb[0].mxu0
        %v4313 = vadd.f32 %v2495, %v4312
        %v4314 = vpop.f32.mrb[0].mxu0
        %v4315 = vadd.f32 %v2491, %v4314
        %v4316 = vpop.f32.mrb[0].mxu0
        %v4317 = vadd.f32 %v2495, %v4316
        %4318 = vmatprep.mubr.bf16.mxu0 %v2199
        %4319 = vmatmul.mubr.bf16.gmra.mrb[0].mxu0 %v2198
        %v4320 = vpop.f32.mrb[0].mxu0
        %v4321 = vadd.f32 %v2491, %v4320
        %v4322 = vpop.f32.mrb[0].mxu0
        %v4323 = vadd.f32 %v2495, %v4322
        %v4324 = vpop.f32.mrb[0].mxu0
        %v4325 = vadd.f32 %v2491, %v4324
        %v4326 = vpop.f32.mrb[0].mxu0
        %v4327 = vadd.f32 %v2495, %v4326
        %4328 = vmatprep.mubr.bf16.mxu0 %v2203
        %4329 = vmatmul.mubr.bf16.gmra.mrb[0].mxu0 %v2202
        %v4330 = vpop.f32.mrb[0].mxu0
        %v4331 = vadd.f32 %v2491, %v4330
        %v4332 = vpop.f32.mrb[0].mxu0
        %v4333 = vadd.f32 %v2495, %v4332
        %v4334 = vpop.f32.mrb[0].mxu0
        %v4335 = vadd.f32 %v2491, %v4334
        %v4336 = vpop.f32.mrb[0].mxu0
        %v4337 = vadd.f32 %v2495, %v4336
        %4338 = vmatprep.mubr.bf16.mxu0 %v2207
        %4339 = vmatmul.mubr.bf16.gmra.mrb[0].mxu0 %v2206
        %v4340 = vpop.f32.mrb[0].mxu0
        %v4341 = vadd.f32 %v2491, %v4340
        %v4342 = vpop.f32.mrb[0].mxu0
        %v4343 = vadd.f32 %v2495, %v4342
        %v4344 = vpop.f32.mrb[0].mxu0
        %v4345 = vadd.f32 %v2491, %v4344
        %v4346 = vpop.f32.mrb[0].mxu0
        %v4347 = vadd.f32 %v2495, %v4346
        %4348 = vmatprep.mubr.bf16.mxu0 %v2211
        %4349 = vmatmul.mubr.bf16.gmra.mrb[0].mxu0 %v2210
        %v4350 = vpop.f32.mrb[0].mxu0
        %v4351 = vadd.f32 %v2491, %v4350
        %v4352 = vpop.f32.mrb[0].mxu0
        %v4353 = vadd.f32 %v2495, %v4352
        %v4354 = vpop.f32.mrb[0].mxu0
        %v4355 = vadd.f32 %v2491, %v4354
        %v4356 = vpop.f32.mrb[0].mxu0
        %v4357 = vadd.f32 %v2495, %v4356
        %4358 = vmatprep.mubr.bf16.mxu0 %v2215
        %4359 = vmatmul.mubr.bf16.gmra.mrb[0].mxu0 %v2214
        %v4360 = vpop.f32.mrb[0].mxu0
        %v4361 = vadd.f32 %v2491, %v4360
        %v4362 = vpop.f32.mrb[0].mxu0
        %v4363 = vadd.f32 %v2495, %v4362
        %v4364 = vpop.f32.mrb[0].mxu0
        %v4365 = vadd.f32 %v2491, %v4364
        %v4366 = vpop.f32.mrb[0].mxu0
        %v4367 = vadd.f32 %v2495, %v4366
        %4368 = vmatprep.mubr.bf16.mxu0 %v2219
        %4369 = vmatmul.mubr.bf16.gmra.mrb[0].mxu0 %v2218
        %v4370 = vpop.f32.mrb[0].mxu0
        %v4371 = vadd.f32 %v2491, %v4370
        %v4372 = vpop.f32.mrb[0].mxu0
        %v4373 = vadd.f32 %v2495, %v4372
        %v4374 = vpop.f32.mrb[0].mxu0
        %v4375 = vadd.f32 %v2491, %v4374
        %v4376 = vpop.f32.mrb[0].mxu0
        %v4377 = vadd.f32 %v2495, %v4376
        %4378 = vdwg.mxu0
        %4379 = vmatprep.subr.bf16.mxu0 %v3419
        %4380 = vmatpush1.bf16.msra.mxu0 %v3418
        %4381 = vmatprep.subr.bf16.mxu0 %v3427
        %4382 = vmatpush1.bf16.msra.mxu0 %v3426
        %4383 = vmatprep.subr.bf16.mxu0 %v3435
        %4384 = vmatpush1.bf16.msra.mxu0 %v3434
        %4385 = vmatprep.subr.bf16.mxu0 %v3443
        %4386 = vmatpush1.bf16.msra.mxu0 %v3442
        %4387 = vmatprep.subr.bf16.mxu0 %v3451
        %4388 = vmatpush1.bf16.msra.mxu0 %v3450
        %4389 = vmatprep.subr.bf16.mxu0 %v3459
        %4390 = vmatpush1.bf16.msra.mxu0 %v3458
        %4391 = vmatprep.subr.bf16.mxu0 %v3467
        %4392 = vmatpush1.bf16.msra.mxu0 %v3466
        %4393 = vmatprep.subr.bf16.mxu0 %v3475
        %4394 = vmatpush1.bf16.msra.mxu0 %v3474
        %4395 = vmatprep.subr.bf16.mxu0 %v3483
        %4396 = vmatpush1.bf16.msra.mxu0 %v3482
        %4397 = vmatprep.subr.bf16.mxu0 %v3491
        %4398 = vmatpush1.bf16.msra.mxu0 %v3490
        %4399 = vmatprep.subr.bf16.mxu0 %v3499
        %4400 = vmatpush1.bf16.msra.mxu0 %v3498
        %4401 = vmatprep.subr.bf16.mxu0 %v3507
        %4402 = vmatpush1.bf16.msra.mxu0 %v3506
        %4403 = vmatprep.subr.bf16.mxu0 %v3515
        %4404 = vmatpush1.bf16.msra.mxu0 %v3514
        %4405 = vmatprep.subr.bf16.mxu0 %v3523
        %4406 = vmatpush1.bf16.msra.mxu0 %v3522
        %4407 = vmatprep.subr.bf16.mxu0 %v3531
        %4408 = vmatpush1.bf16.msra.mxu0 %v3530
        %4409 = vmatprep.subr.bf16.mxu0 %v3539
        %4410 = vmatpush1.bf16.msra.mxu0 %v3538
        %4411 = vmatprep.mubr.bf16.mxu0 %v2161
        %4412 = vmatmul.mubr.bf16.gmra.mrb[0].mxu0 %v2160
        %v4413 = vpop.f32.mrb[0].mxu0
        %v4414 = vadd.f32 %v4221, %v4413
        %v4415 = vpop.f32.mrb[0].mxu0
        %v4416 = vadd.f32 %v4223, %v4415
        %v4417 = vpop.f32.mrb[0].mxu0
        %v4418 = vadd.f32 %v4225, %v4417
        %v4419 = vpop.f32.mrb[0].mxu0
        %v4420 = vadd.f32 %v4227, %v4419
        %4421 = vmatprep.mubr.bf16.mxu0 %v2165
        %4422 = vmatmul.mubr.bf16.gmra.mrb[0].mxu0 %v2164
        %v4423 = vpop.f32.mrb[0].mxu0
        %v4424 = vadd.f32 %v4231, %v4423
        %v4425 = vpop.f32.mrb[0].mxu0
        %v4426 = vadd.f32 %v4233, %v4425
        %v4427 = vpop.f32.mrb[0].mxu0
        %v4428 = vadd.f32 %v4235, %v4427
        %v4429 = vpop.f32.mrb[0].mxu0
        %v4430 = vadd.f32 %v4237, %v4429
        %4431 = vmatprep.mubr.bf16.mxu0 %v2169
        %4432 = vmatmul.mubr.bf16.gmra.mrb[0].mxu0 %v2168
        %v4433 = vpop.f32.mrb[0].mxu0
        %v4434 = vadd.f32 %v4241, %v4433
        %v4435 = vpop.f32.mrb[0].mxu0
        %v4436 = vadd.f32 %v4243, %v4435
        %v4437 = vpop.f32.mrb[0].mxu0
        %v4438 = vadd.f32 %v4245, %v4437
        %v4439 = vpop.f32.mrb[0].mxu0
        %v4440 = vadd.f32 %v4247, %v4439
        %4441 = vmatprep.mubr.bf16.mxu0 %v2173
        %4442 = vmatmul.mubr.bf16.gmra.mrb[0].mxu0 %v2172
        %v4443 = vpop.f32.mrb[0].mxu0
        %v4444 = vadd.f32 %v4251, %v4443
        %v4445 = vpop.f32.mrb[0].mxu0
        %v4446 = vadd.f32 %v4253, %v4445
        %v4447 = vpop.f32.mrb[0].mxu0
        %v4448 = vadd.f32 %v4255, %v4447
        %v4449 = vpop.f32.mrb[0].mxu0
        %v4450 = vadd.f32 %v4257, %v4449
        %4451 = vmatprep.mubr.bf16.mxu0 %v2177
        %4452 = vmatmul.mubr.bf16.gmra.mrb[0].mxu0 %v2176
        %v4453 = vpop.f32.mrb[0].mxu0
        %v4454 = vadd.f32 %v4261, %v4453
        %v4455 = vpop.f32.mrb[0].mxu0
        %v4456 = vadd.f32 %v4263, %v4455
        %v4457 = vpop.f32.mrb[0].mxu0
        %v4458 = vadd.f32 %v4265, %v4457
        %v4459 = vpop.f32.mrb[0].mxu0
        %v4460 = vadd.f32 %v4267, %v4459
        %4461 = vmatprep.mubr.bf16.mxu0 %v2181
        %4462 = vmatmul.mubr.bf16.gmra.mrb[0].mxu0 %v2180
        %v4463 = vpop.f32.mrb[0].mxu0
        %v4464 = vadd.f32 %v4271, %v4463
        %v4465 = vpop.f32.mrb[0].mxu0
        %v4466 = vadd.f32 %v4273, %v4465
        %v4467 = vpop.f32.mrb[0].mxu0
        %v4468 = vadd.f32 %v4275, %v4467
        %v4469 = vpop.f32.mrb[0].mxu0
        %v4470 = vadd.f32 %v4277, %v4469
        %4471 = vmatprep.mubr.bf16.mxu0 %v2185
        %4472 = vmatmul.mubr.bf16.gmra.mrb[0].mxu0 %v2184
        %v4473 = vpop.f32.mrb[0].mxu0
        %v4474 = vadd.f32 %v4281, %v4473
        %v4475 = vpop.f32.mrb[0].mxu0
        %v4476 = vadd.f32 %v4283, %v4475
        %v4477 = vpop.f32.mrb[0].mxu0
        %v4478 = vadd.f32 %v4285, %v4477
        %v4479 = vpop.f32.mrb[0].mxu0
        %v4480 = vadd.f32 %v4287, %v4479
        %4481 = vmatprep.mubr.bf16.mxu0 %v2189
        %4482 = vmatmul.mubr.bf16.gmra.mrb[0].mxu0 %v2188
        %v4483 = vpop.f32.mrb[0].mxu0
        %v4484 = vadd.f32 %v4291, %v4483
        %v4485 = vpop.f32.mrb[0].mxu0
        %v4486 = vadd.f32 %v4293, %v4485
        %v4487 = vpop.f32.mrb[0].mxu0
        %v4488 = vadd.f32 %v4295, %v4487
        %v4489 = vpop.f32.mrb[0].mxu0
        %v4490 = vadd.f32 %v4297, %v4489
        %4491 = vmatprep.mubr.bf16.mxu0 %v2193
        %4492 = vmatmul.mubr.bf16.gmra.mrb[0].mxu0 %v2192
        %v4493 = vpop.f32.mrb[0].mxu0
        %v4494 = vadd.f32 %v4301, %v4493
        %v4495 = vpop.f32.mrb[0].mxu0
        %v4496 = vadd.f32 %v4303, %v4495
        %v4497 = vpop.f32.mrb[0].mxu0
        %v4498 = vadd.f32 %v4305, %v4497
        %v4499 = vpop.f32.mrb[0].mxu0
        %v4500 = vadd.f32 %v4307, %v4499
        %4501 = vmatprep.mubr.bf16.mxu0 %v2197
        %4502 = vmatmul.mubr.bf16.gmra.mrb[0].mxu0 %v2196
        %v4503 = vpop.f32.mrb[0].mxu0
        %v4504 = vadd.f32 %v4311, %v4503
        %v4505 = vpop.f32.mrb[0].mxu0
        %v4506 = vadd.f32 %v4313, %v4505
        %v4507 = vpop.f32.mrb[0].mxu0
        %v4508 = vadd.f32 %v4315, %v4507
        %v4509 = vpop.f32.mrb[0].mxu0
        %v4510 = vadd.f32 %v4317, %v4509
        %4511 = vmatprep.mubr.bf16.mxu0 %v2201
        %4512 = vmatmul.mubr.bf16.gmra.mrb[0].mxu0 %v2200
        %v4513 = vpop.f32.mrb[0].mxu0
        %v4514 = vadd.f32 %v4321, %v4513
        %v4515 = vpop.f32.mrb[0].mxu0
        %v4516 = vadd.f32 %v4323, %v4515
        %v4517 = vpop.f32.mrb[0].mxu0
        %v4518 = vadd.f32 %v4325, %v4517
        %v4519 = vpop.f32.mrb[0].mxu0
        %v4520 = vadd.f32 %v4327, %v4519
        %4521 = vmatprep.mubr.bf16.mxu0 %v2205
        %4522 = vmatmul.mubr.bf16.gmra.mrb[0].mxu0 %v2204
        %v4523 = vpop.f32.mrb[0].mxu0
        %v4524 = vadd.f32 %v4331, %v4523
        %v4525 = vpop.f32.mrb[0].mxu0
        %v4526 = vadd.f32 %v4333, %v4525
        %v4527 = vpop.f32.mrb[0].mxu0
        %v4528 = vadd.f32 %v4335, %v4527
        %v4529 = vpop.f32.mrb[0].mxu0
        %v4530 = vadd.f32 %v4337, %v4529
        %4531 = vmatprep.mubr.bf16.mxu0 %v2209
        %4532 = vmatmul.mubr.bf16.gmra.mrb[0].mxu0 %v2208
        %v4533 = vpop.f32.mrb[0].mxu0
        %v4534 = vadd.f32 %v4341, %v4533
        %v4535 = vpop.f32.mrb[0].mxu0
        %v4536 = vadd.f32 %v4343, %v4535
        %v4537 = vpop.f32.mrb[0].mxu0
        %v4538 = vadd.f32 %v4345, %v4537
        %v4539 = vpop.f32.mrb[0].mxu0
        %v4540 = vadd.f32 %v4347, %v4539
        %4541 = vmatprep.mubr.bf16.mxu0 %v2213
        %4542 = vmatmul.mubr.bf16.gmra.mrb[0].mxu0 %v2212
        %v4543 = vpop.f32.mrb[0].mxu0
        %v4544 = vadd.f32 %v4351, %v4543
        %v4545 = vpop.f32.mrb[0].mxu0
        %v4546 = vadd.f32 %v4353, %v4545
        %v4547 = vpop.f32.mrb[0].mxu0
        %v4548 = vadd.f32 %v4355, %v4547
        %v4549 = vpop.f32.mrb[0].mxu0
        %v4550 = vadd.f32 %v4357, %v4549
        %4551 = vmatprep.mubr.bf16.mxu0 %v2217
        %4552 = vmatmul.mubr.bf16.gmra.mrb[0].mxu0 %v2216
        %v4553 = vpop.f32.mrb[0].mxu0
        %v4554 = vadd.f32 %v4361, %v4553
        %v4555 = vpop.f32.mrb[0].mxu0
        %v4556 = vadd.f32 %v4363, %v4555
        %v4557 = vpop.f32.mrb[0].mxu0
        %v4558 = vadd.f32 %v4365, %v4557
        %v4559 = vpop.f32.mrb[0].mxu0
        %v4560 = vadd.f32 %v4367, %v4559
        %4561 = vmatprep.mubr.bf16.mxu0 %v2221
        %4562 = vmatmul.mubr.bf16.gmra.mrb[0].mxu0 %v2220
        %v4563 = vpop.f32.mrb[0].mxu0
        %v4564 = vadd.f32 %v4371, %v4563
        %v4565 = vpop.f32.mrb[0].mxu0
        %v4566 = vadd.f32 %v4373, %v4565
        %v4567 = vpop.f32.mrb[0].mxu0
        %v4568 = vadd.f32 %v4375, %v4567
        %v4569 = vpop.f32.mrb[0].mxu0
        %v4570 = vadd.f32 %v4377, %v4569
        %4571 = vdwg.mxu0
        %4572 = vmatprep.subr.bf16.mxu0 %v3293
        %4573 = vmatpush1.bf16.msra.mxu0 %v3292
        %4574 = vmatprep.subr.bf16.mxu0 %v3301
        %4575 = vmatpush1.bf16.msra.mxu0 %v3300
        %4576 = vmatprep.subr.bf16.mxu0 %v3309
        %4577 = vmatpush1.bf16.msra.mxu0 %v3308
        %4578 = vmatprep.subr.bf16.mxu0 %v3317
        %4579 = vmatpush1.bf16.msra.mxu0 %v3316
        %4580 = vmatprep.subr.bf16.mxu0 %v3325
        %4581 = vmatpush1.bf16.msra.mxu0 %v3324
        %4582 = vmatprep.subr.bf16.mxu0 %v3333
        %4583 = vmatpush1.bf16.msra.mxu0 %v3332
        %4584 = vmatprep.subr.bf16.mxu0 %v3341
        %4585 = vmatpush1.bf16.msra.mxu0 %v3340
        %4586 = vmatprep.subr.bf16.mxu0 %v3349
        %4587 = vmatpush1.bf16.msra.mxu0 %v3348
        %4588 = vmatprep.subr.bf16.mxu0 %v3357
        %4589 = vmatpush1.bf16.msra.mxu0 %v3356
        %4590 = vmatprep.subr.bf16.mxu0 %v3365
        %4591 = vmatpush1.bf16.msra.mxu0 %v3364
        %4592 = vmatprep.subr.bf16.mxu0 %v3373
        %4593 = vmatpush1.bf16.msra.mxu0 %v3372
        %4594 = vmatprep.subr.bf16.mxu0 %v3381
        %4595 = vmatpush1.bf16.msra.mxu0 %v3380
        %4596 = vmatprep.subr.bf16.mxu0 %v3389
        %4597 = vmatpush1.bf16.msra.mxu0 %v3388
        %4598 = vmatprep.subr.bf16.mxu0 %v3397
        %4599 = vmatpush1.bf16.msra.mxu0 %v3396
        %4600 = vmatprep.subr.bf16.mxu0 %v3405
        %4601 = vmatpush1.bf16.msra.mxu0 %v3404
        %4602 = vmatprep.subr.bf16.mxu0 %v3413
        %4603 = vmatpush1.bf16.msra.mxu0 %v3412
        %4604 = vmatprep.mubr.bf16.mxu0 %v2159
        %4605 = vmatmul.mubr.bf16.gmra.mrb[0].mxu0 %v2158
        %v4606 = vpop.f32.mrb[0].mxu0
        %v4607 = vadd.f32 %v2499, %v4606
        %v4608 = vpop.f32.mrb[0].mxu0
        %v4609 = vadd.f32 %v2503, %v4608
        %v4610 = vpop.f32.mrb[0].mxu0
        %v4611 = vadd.f32 %v2499, %v4610
        %v4612 = vpop.f32.mrb[0].mxu0
        %v4613 = vadd.f32 %v2503, %v4612
        %4614 = vmatprep.mubr.bf16.mxu0 %v2163
        %4615 = vmatmul.mubr.bf16.gmra.mrb[0].mxu0 %v2162
        %v4616 = vpop.f32.mrb[0].mxu0
        %v4617 = vadd.f32 %v2499, %v4616
        %v4618 = vpop.f32.mrb[0].mxu0
        %v4619 = vadd.f32 %v2503, %v4618
        %v4620 = vpop.f32.mrb[0].mxu0
        %v4621 = vadd.f32 %v2499, %v4620
        %v4622 = vpop.f32.mrb[0].mxu0
        %v4623 = vadd.f32 %v2503, %v4622
        %4624 = vmatprep.mubr.bf16.mxu0 %v2167
        %4625 = vmatmul.mubr.bf16.gmra.mrb[0].mxu0 %v2166
        %v4626 = vpop.f32.mrb[0].mxu0
        %v4627 = vadd.f32 %v2499, %v4626
        %v4628 = vpop.f32.mrb[0].mxu0
        %v4629 = vadd.f32 %v2503, %v4628
        %v4630 = vpop.f32.mrb[0].mxu0
        %v4631 = vadd.f32 %v2499, %v4630
        %v4632 = vpop.f32.mrb[0].mxu0
        %v4633 = vadd.f32 %v2503, %v4632
        %4634 = vmatprep.mubr.bf16.mxu0 %v2171
        %4635 = vmatmul.mubr.bf16.gmra.mrb[0].mxu0 %v2170
        %v4636 = vpop.f32.mrb[0].mxu0
        %v4637 = vadd.f32 %v2499, %v4636
        %v4638 = vpop.f32.mrb[0].mxu0
        %v4639 = vadd.f32 %v2503, %v4638
        %v4640 = vpop.f32.mrb[0].mxu0
        %v4641 = vadd.f32 %v2499, %v4640
        %v4642 = vpop.f32.mrb[0].mxu0
        %v4643 = vadd.f32 %v2503, %v4642
        %4644 = vmatprep.mubr.bf16.mxu0 %v2175
        %4645 = vmatmul.mubr.bf16.gmra.mrb[0].mxu0 %v2174
        %v4646 = vpop.f32.mrb[0].mxu0
        %v4647 = vadd.f32 %v2499, %v4646
        %v4648 = vpop.f32.mrb[0].mxu0
        %v4649 = vadd.f32 %v2503, %v4648
        %v4650 = vpop.f32.mrb[0].mxu0
        %v4651 = vadd.f32 %v2499, %v4650
        %v4652 = vpop.f32.mrb[0].mxu0
        %v4653 = vadd.f32 %v2503, %v4652
        %4654 = vmatprep.mubr.bf16.mxu0 %v2179
        %4655 = vmatmul.mubr.bf16.gmra.mrb[0].mxu0 %v2178
        %v4656 = vpop.f32.mrb[0].mxu0
        %v4657 = vadd.f32 %v2499, %v4656
        %v4658 = vpop.f32.mrb[0].mxu0
        %v4659 = vadd.f32 %v2503, %v4658
        %v4660 = vpop.f32.mrb[0].mxu0
        %v4661 = vadd.f32 %v2499, %v4660
        %v4662 = vpop.f32.mrb[0].mxu0
        %v4663 = vadd.f32 %v2503, %v4662
        %4664 = vmatprep.mubr.bf16.mxu0 %v2183
        %4665 = vmatmul.mubr.bf16.gmra.mrb[0].mxu0 %v2182
        %v4666 = vpop.f32.mrb[0].mxu0
        %v4667 = vadd.f32 %v2499, %v4666
        %v4668 = vpop.f32.mrb[0].mxu0
        %v4669 = vadd.f32 %v2503, %v4668
        %v4670 = vpop.f32.mrb[0].mxu0
        %v4671 = vadd.f32 %v2499, %v4670
        %v4672 = vpop.f32.mrb[0].mxu0
        %v4673 = vadd.f32 %v2503, %v4672
        %4674 = vmatprep.mubr.bf16.mxu0 %v2187
        %4675 = vmatmul.mubr.bf16.gmra.mrb[0].mxu0 %v2186
        %v4676 = vpop.f32.mrb[0].mxu0
        %v4677 = vadd.f32 %v2499, %v4676
        %v4678 = vpop.f32.mrb[0].mxu0
        %v4679 = vadd.f32 %v2503, %v4678
        %v4680 = vpop.f32.mrb[0].mxu0
        %v4681 = vadd.f32 %v2499, %v4680
        %v4682 = vpop.f32.mrb[0].mxu0
        %v4683 = vadd.f32 %v2503, %v4682
        %4684 = vmatprep.mubr.bf16.mxu0 %v2191
        %4685 = vmatmul.mubr.bf16.gmra.mrb[0].mxu0 %v2190
        %v4686 = vpop.f32.mrb[0].mxu0
        %v4687 = vadd.f32 %v2499, %v4686
        %v4688 = vpop.f32.mrb[0].mxu0
        %v4689 = vadd.f32 %v2503, %v4688
        %v4690 = vpop.f32.mrb[0].mxu0
        %v4691 = vadd.f32 %v2499, %v4690
        %v4692 = vpop.f32.mrb[0].mxu0
        %v4693 = vadd.f32 %v2503, %v4692
        %4694 = vmatprep.mubr.bf16.mxu0 %v2195
        %4695 = vmatmul.mubr.bf16.gmra.mrb[0].mxu0 %v2194
        %v4696 = vpop.f32.mrb[0].mxu0
        %v4697 = vadd.f32 %v2499, %v4696
        %v4698 = vpop.f32.mrb[0].mxu0
        %v4699 = vadd.f32 %v2503, %v4698
        %v4700 = vpop.f32.mrb[0].mxu0
        %v4701 = vadd.f32 %v2499, %v4700
        %v4702 = vpop.f32.mrb[0].mxu0
        %v4703 = vadd.f32 %v2503, %v4702
        %4704 = vmatprep.mubr.bf16.mxu0 %v2199
        %4705 = vmatmul.mubr.bf16.gmra.mrb[0].mxu0 %v2198
        %v4706 = vpop.f32.mrb[0].mxu0
        %v4707 = vadd.f32 %v2499, %v4706
        %v4708 = vpop.f32.mrb[0].mxu0
        %v4709 = vadd.f32 %v2503, %v4708
        %v4710 = vpop.f32.mrb[0].mxu0
        %v4711 = vadd.f32 %v2499, %v4710
        %v4712 = vpop.f32.mrb[0].mxu0
        %v4713 = vadd.f32 %v2503, %v4712
        %4714 = vmatprep.mubr.bf16.mxu0 %v2203
        %4715 = vmatmul.mubr.bf16.gmra.mrb[0].mxu0 %v2202
        %v4716 = vpop.f32.mrb[0].mxu0
        %v4717 = vadd.f32 %v2499, %v4716
        %v4718 = vpop.f32.mrb[0].mxu0
        %v4719 = vadd.f32 %v2503, %v4718
        %v4720 = vpop.f32.mrb[0].mxu0
        %v4721 = vadd.f32 %v2499, %v4720
        %v4722 = vpop.f32.mrb[0].mxu0
        %v4723 = vadd.f32 %v2503, %v4722
        %4724 = vmatprep.mubr.bf16.mxu0 %v2207
        %4725 = vmatmul.mubr.bf16.gmra.mrb[0].mxu0 %v2206
        %v4726 = vpop.f32.mrb[0].mxu0
        %v4727 = vadd.f32 %v2499, %v4726
        %v4728 = vpop.f32.mrb[0].mxu0
        %v4729 = vadd.f32 %v2503, %v4728
        %v4730 = vpop.f32.mrb[0].mxu0
        %v4731 = vadd.f32 %v2499, %v4730
        %v4732 = vpop.f32.mrb[0].mxu0
        %v4733 = vadd.f32 %v2503, %v4732
        %4734 = vmatprep.mubr.bf16.mxu0 %v2211
        %4735 = vmatmul.mubr.bf16.gmra.mrb[0].mxu0 %v2210
        %v4736 = vpop.f32.mrb[0].mxu0
        %v4737 = vadd.f32 %v2499, %v4736
        %v4738 = vpop.f32.mrb[0].mxu0
        %v4739 = vadd.f32 %v2503, %v4738
        %v4740 = vpop.f32.mrb[0].mxu0
        %v4741 = vadd.f32 %v2499, %v4740
        %v4742 = vpop.f32.mrb[0].mxu0
        %v4743 = vadd.f32 %v2503, %v4742
        %4744 = vmatprep.mubr.bf16.mxu0 %v2215
        %4745 = vmatmul.mubr.bf16.gmra.mrb[0].mxu0 %v2214
        %v4746 = vpop.f32.mrb[0].mxu0
        %v4747 = vadd.f32 %v2499, %v4746
        %v4748 = vpop.f32.mrb[0].mxu0
        %v4749 = vadd.f32 %v2503, %v4748
        %v4750 = vpop.f32.mrb[0].mxu0
        %v4751 = vadd.f32 %v2499, %v4750
        %v4752 = vpop.f32.mrb[0].mxu0
        %v4753 = vadd.f32 %v2503, %v4752
        %4754 = vmatprep.mubr.bf16.mxu0 %v2219
        %4755 = vmatmul.mubr.bf16.gmra.mrb[0].mxu0 %v2218
        %v4756 = vpop.f32.mrb[0].mxu0
        %v4757 = vadd.f32 %v2499, %v4756
        %v4758 = vpop.f32.mrb[0].mxu0
        %v4759 = vadd.f32 %v2503, %v4758
        %v4760 = vpop.f32.mrb[0].mxu0
        %v4761 = vadd.f32 %v2499, %v4760
        %v4762 = vpop.f32.mrb[0].mxu0
        %v4763 = vadd.f32 %v2503, %v4762
        %4764 = vdwg.mxu0
        %4765 = vmatprep.subr.bf16.mxu0 %v3421
        %4766 = vmatpush1.bf16.msra.mxu0 %v3420
        %4767 = vmatprep.subr.bf16.mxu0 %v3429
        %4768 = vmatpush1.bf16.msra.mxu0 %v3428
        %4769 = vmatprep.subr.bf16.mxu0 %v3437
        %4770 = vmatpush1.bf16.msra.mxu0 %v3436
        %4771 = vmatprep.subr.bf16.mxu0 %v3445
        %4772 = vmatpush1.bf16.msra.mxu0 %v3444
        %4773 = vmatprep.subr.bf16.mxu0 %v3453
        %4774 = vmatpush1.bf16.msra.mxu0 %v3452
        %4775 = vmatprep.subr.bf16.mxu0 %v3461
        %4776 = vmatpush1.bf16.msra.mxu0 %v3460
        %4777 = vmatprep.subr.bf16.mxu0 %v3469
        %4778 = vmatpush1.bf16.msra.mxu0 %v3468
        %4779 = vmatprep.subr.bf16.mxu0 %v3477
        %4780 = vmatpush1.bf16.msra.mxu0 %v3476
        %4781 = vmatprep.subr.bf16.mxu0 %v3485
        %4782 = vmatpush1.bf16.msra.mxu0 %v3484
        %4783 = vmatprep.subr.bf16.mxu0 %v3493
        %4784 = vmatpush1.bf16.msra.mxu0 %v3492
        %4785 = vmatprep.subr.bf16.mxu0 %v3501
        %4786 = vmatpush1.bf16.msra.mxu0 %v3500
        %4787 = vmatprep.subr.bf16.mxu0 %v3509
        %4788 = vmatpush1.bf16.msra.mxu0 %v3508
        %4789 = vmatprep.subr.bf16.mxu0 %v3517
        %4790 = vmatpush1.bf16.msra.mxu0 %v3516
        %4791 = vmatprep.subr.bf16.mxu0 %v3525
        %4792 = vmatpush1.bf16.msra.mxu0 %v3524
        %4793 = vmatprep.subr.bf16.mxu0 %v3533
        %4794 = vmatpush1.bf16.msra.mxu0 %v3532
        %4795 = vmatprep.subr.bf16.mxu0 %v3541
        %4796 = vmatpush1.bf16.msra.mxu0 %v3540
        %4797 = vmatprep.mubr.bf16.mxu0 %v2161
        %4798 = vmatmul.mubr.bf16.gmra.mrb[0].mxu0 %v2160
        %v4799 = vpop.f32.mrb[0].mxu0
        %v4800 = vadd.f32 %v4607, %v4799
        %v4801 = vpop.f32.mrb[0].mxu0
        %v4802 = vadd.f32 %v4609, %v4801
        %v4803 = vpop.f32.mrb[0].mxu0
        %v4804 = vadd.f32 %v4611, %v4803
        %v4805 = vpop.f32.mrb[0].mxu0
        %v4806 = vadd.f32 %v4613, %v4805
        %4807 = vmatprep.mubr.bf16.mxu0 %v2165
        %4808 = vmatmul.mubr.bf16.gmra.mrb[0].mxu0 %v2164
        %v4809 = vpop.f32.mrb[0].mxu0
        %v4810 = vadd.f32 %v4617, %v4809
        %v4811 = vpop.f32.mrb[0].mxu0
        %v4812 = vadd.f32 %v4619, %v4811
        %v4813 = vpop.f32.mrb[0].mxu0
        %v4814 = vadd.f32 %v4621, %v4813
        %v4815 = vpop.f32.mrb[0].mxu0
        %v4816 = vadd.f32 %v4623, %v4815
        %4817 = vmatprep.mubr.bf16.mxu0 %v2169
        %4818 = vmatmul.mubr.bf16.gmra.mrb[0].mxu0 %v2168
        %v4819 = vpop.f32.mrb[0].mxu0
        %v4820 = vadd.f32 %v4627, %v4819
        %v4821 = vpop.f32.mrb[0].mxu0
        %v4822 = vadd.f32 %v4629, %v4821
        %v4823 = vpop.f32.mrb[0].mxu0
        %v4824 = vadd.f32 %v4631, %v4823
        %v4825 = vpop.f32.mrb[0].mxu0
        %v4826 = vadd.f32 %v4633, %v4825
        %4827 = vmatprep.mubr.bf16.mxu0 %v2173
        %4828 = vmatmul.mubr.bf16.gmra.mrb[0].mxu0 %v2172
        %v4829 = vpop.f32.mrb[0].mxu0
        %v4830 = vadd.f32 %v4637, %v4829
        %v4831 = vpop.f32.mrb[0].mxu0
        %v4832 = vadd.f32 %v4639, %v4831
        %v4833 = vpop.f32.mrb[0].mxu0
        %v4834 = vadd.f32 %v4641, %v4833
        %v4835 = vpop.f32.mrb[0].mxu0
        %v4836 = vadd.f32 %v4643, %v4835
        %4837 = vmatprep.mubr.bf16.mxu0 %v2177
        %4838 = vmatmul.mubr.bf16.gmra.mrb[0].mxu0 %v2176
        %v4839 = vpop.f32.mrb[0].mxu0
        %v4840 = vadd.f32 %v4647, %v4839
        %v4841 = vpop.f32.mrb[0].mxu0
        %v4842 = vadd.f32 %v4649, %v4841
        %v4843 = vpop.f32.mrb[0].mxu0
        %v4844 = vadd.f32 %v4651, %v4843
        %v4845 = vpop.f32.mrb[0].mxu0
        %v4846 = vadd.f32 %v4653, %v4845
        %4847 = vmatprep.mubr.bf16.mxu0 %v2181
        %4848 = vmatmul.mubr.bf16.gmra.mrb[0].mxu0 %v2180
        %v4849 = vpop.f32.mrb[0].mxu0
        %v4850 = vadd.f32 %v4657, %v4849
        %v4851 = vpop.f32.mrb[0].mxu0
        %v4852 = vadd.f32 %v4659, %v4851
        %v4853 = vpop.f32.mrb[0].mxu0
        %v4854 = vadd.f32 %v4661, %v4853
        %v4855 = vpop.f32.mrb[0].mxu0
        %v4856 = vadd.f32 %v4663, %v4855
        %4857 = vmatprep.mubr.bf16.mxu0 %v2185
        %4858 = vmatmul.mubr.bf16.gmra.mrb[0].mxu0 %v2184
        %v4859 = vpop.f32.mrb[0].mxu0
        %v4860 = vadd.f32 %v4667, %v4859
        %v4861 = vpop.f32.mrb[0].mxu0
        %v4862 = vadd.f32 %v4669, %v4861
        %v4863 = vpop.f32.mrb[0].mxu0
        %v4864 = vadd.f32 %v4671, %v4863
        %v4865 = vpop.f32.mrb[0].mxu0
        %v4866 = vadd.f32 %v4673, %v4865
        %4867 = vmatprep.mubr.bf16.mxu0 %v2189
        %4868 = vmatmul.mubr.bf16.gmra.mrb[0].mxu0 %v2188
        %v4869 = vpop.f32.mrb[0].mxu0
        %v4870 = vadd.f32 %v4677, %v4869
        %v4871 = vpop.f32.mrb[0].mxu0
        %v4872 = vadd.f32 %v4679, %v4871
        %v4873 = vpop.f32.mrb[0].mxu0
        %v4874 = vadd.f32 %v4681, %v4873
        %v4875 = vpop.f32.mrb[0].mxu0
        %v4876 = vadd.f32 %v4683, %v4875
        %4877 = vmatprep.mubr.bf16.mxu0 %v2193
        %4878 = vmatmul.mubr.bf16.gmra.mrb[0].mxu0 %v2192
        %v4879 = vpop.f32.mrb[0].mxu0
        %v4880 = vadd.f32 %v4687, %v4879
        %v4881 = vpop.f32.mrb[0].mxu0
        %v4882 = vadd.f32 %v4689, %v4881
        %v4883 = vpop.f32.mrb[0].mxu0
        %v4884 = vadd.f32 %v4691, %v4883
        %v4885 = vpop.f32.mrb[0].mxu0
        %v4886 = vadd.f32 %v4693, %v4885
        %4887 = vmatprep.mubr.bf16.mxu0 %v2197
        %4888 = vmatmul.mubr.bf16.gmra.mrb[0].mxu0 %v2196
        %v4889 = vpop.f32.mrb[0].mxu0
        %v4890 = vadd.f32 %v4697, %v4889
        %v4891 = vpop.f32.mrb[0].mxu0
        %v4892 = vadd.f32 %v4699, %v4891
        %v4893 = vpop.f32.mrb[0].mxu0
        %v4894 = vadd.f32 %v4701, %v4893
        %v4895 = vpop.f32.mrb[0].mxu0
        %v4896 = vadd.f32 %v4703, %v4895
        %4897 = vmatprep.mubr.bf16.mxu0 %v2201
        %4898 = vmatmul.mubr.bf16.gmra.mrb[0].mxu0 %v2200
        %v4899 = vpop.f32.mrb[0].mxu0
        %v4900 = vadd.f32 %v4707, %v4899
        %v4901 = vpop.f32.mrb[0].mxu0
        %v4902 = vadd.f32 %v4709, %v4901
        %v4903 = vpop.f32.mrb[0].mxu0
        %v4904 = vadd.f32 %v4711, %v4903
        %v4905 = vpop.f32.mrb[0].mxu0
        %v4906 = vadd.f32 %v4713, %v4905
        %4907 = vmatprep.mubr.bf16.mxu0 %v2205
        %4908 = vmatmul.mubr.bf16.gmra.mrb[0].mxu0 %v2204
        %v4909 = vpop.f32.mrb[0].mxu0
        %v4910 = vadd.f32 %v4717, %v4909
        %v4911 = vpop.f32.mrb[0].mxu0
        %v4912 = vadd.f32 %v4719, %v4911
        %v4913 = vpop.f32.mrb[0].mxu0
        %v4914 = vadd.f32 %v4721, %v4913
        %v4915 = vpop.f32.mrb[0].mxu0
        %v4916 = vadd.f32 %v4723, %v4915
        %4917 = vmatprep.mubr.bf16.mxu0 %v2209
        %4918 = vmatmul.mubr.bf16.gmra.mrb[0].mxu0 %v2208
        %v4919 = vpop.f32.mrb[0].mxu0
        %v4920 = vadd.f32 %v4727, %v4919
        %v4921 = vpop.f32.mrb[0].mxu0
        %v4922 = vadd.f32 %v4729, %v4921
        %v4923 = vpop.f32.mrb[0].mxu0
        %v4924 = vadd.f32 %v4731, %v4923
        %v4925 = vpop.f32.mrb[0].mxu0
        %v4926 = vadd.f32 %v4733, %v4925
        %4927 = vmatprep.mubr.bf16.mxu0 %v2213
        %4928 = vmatmul.mubr.bf16.gmra.mrb[0].mxu0 %v2212
        %v4929 = vpop.f32.mrb[0].mxu0
        %v4930 = vadd.f32 %v4737, %v4929
        %v4931 = vpop.f32.mrb[0].mxu0
        %v4932 = vadd.f32 %v4739, %v4931
        %v4933 = vpop.f32.mrb[0].mxu0
        %v4934 = vadd.f32 %v4741, %v4933
        %v4935 = vpop.f32.mrb[0].mxu0
        %v4936 = vadd.f32 %v4743, %v4935
        %4937 = vmatprep.mubr.bf16.mxu0 %v2217
        %4938 = vmatmul.mubr.bf16.gmra.mrb[0].mxu0 %v2216
        %v4939 = vpop.f32.mrb[0].mxu0
        %v4940 = vadd.f32 %v4747, %v4939
        %v4941 = vpop.f32.mrb[0].mxu0
        %v4942 = vadd.f32 %v4749, %v4941
        %v4943 = vpop.f32.mrb[0].mxu0
        %v4944 = vadd.f32 %v4751, %v4943
        %v4945 = vpop.f32.mrb[0].mxu0
        %v4946 = vadd.f32 %v4753, %v4945
        %4947 = vmatprep.mubr.bf16.mxu0 %v2221
        %4948 = vmatmul.mubr.bf16.gmra.mrb[0].mxu0 %v2220
        %v4949 = vpop.f32.mrb[0].mxu0
        %v4950 = vadd.f32 %v4757, %v4949
        %v4951 = vpop.f32.mrb[0].mxu0
        %v4952 = vadd.f32 %v4759, %v4951
        %v4953 = vpop.f32.mrb[0].mxu0
        %v4954 = vadd.f32 %v4761, %v4953
        %v4955 = vpop.f32.mrb[0].mxu0
        %v4956 = vadd.f32 %v4763, %v4955
        %4957 = vdwg.mxu0
        %4958 = vmatprep.subr.bf16.mxu0 %v3295
        %4959 = vmatpush1.bf16.msra.mxu0 %v3294
        %4960 = vmatprep.subr.bf16.mxu0 %v3303
        %4961 = vmatpush1.bf16.msra.mxu0 %v3302
        %4962 = vmatprep.subr.bf16.mxu0 %v3311
        %4963 = vmatpush1.bf16.msra.mxu0 %v3310
        %4964 = vmatprep.subr.bf16.mxu0 %v3319
        %4965 = vmatpush1.bf16.msra.mxu0 %v3318
        %4966 = vmatprep.subr.bf16.mxu0 %v3327
        %4967 = vmatpush1.bf16.msra.mxu0 %v3326
        %4968 = vmatprep.subr.bf16.mxu0 %v3335
        %4969 = vmatpush1.bf16.msra.mxu0 %v3334
        %4970 = vmatprep.subr.bf16.mxu0 %v3343
        %4971 = vmatpush1.bf16.msra.mxu0 %v3342
        %4972 = vmatprep.subr.bf16.mxu0 %v3351
        %4973 = vmatpush1.bf16.msra.mxu0 %v3350
        %4974 = vmatprep.subr.bf16.mxu0 %v3359
        %4975 = vmatpush1.bf16.msra.mxu0 %v3358
        %4976 = vmatprep.subr.bf16.mxu0 %v3367
        %4977 = vmatpush1.bf16.msra.mxu0 %v3366
        %4978 = vmatprep.subr.bf16.mxu0 %v3375
        %4979 = vmatpush1.bf16.msra.mxu0 %v3374
        %4980 = vmatprep.subr.bf16.mxu0 %v3383
        %4981 = vmatpush1.bf16.msra.mxu0 %v3382
        %4982 = vmatprep.subr.bf16.mxu0 %v3391
        %4983 = vmatpush1.bf16.msra.mxu0 %v3390
        %4984 = vmatprep.subr.bf16.mxu0 %v3399
        %4985 = vmatpush1.bf16.msra.mxu0 %v3398
        %4986 = vmatprep.subr.bf16.mxu0 %v3407
        %4987 = vmatpush1.bf16.msra.mxu0 %v3406
        %4988 = vmatprep.subr.bf16.mxu0 %v3415
        %4989 = vmatpush1.bf16.msra.mxu0 %v3414
        %4990 = vmatprep.mubr.bf16.mxu0 %v2159
        %4991 = vmatmul.mubr.bf16.gmra.mrb[0].mxu0 %v2158
        %v4992 = vpop.f32.mrb[0].mxu0
        %v4993 = vadd.f32 %v2507, %v4992
        %v4994 = vpop.f32.mrb[0].mxu0
        %v4995 = vadd.f32 %v2511, %v4994
        %v4996 = vpop.f32.mrb[0].mxu0
        %v4997 = vadd.f32 %v2507, %v4996
        %v4998 = vpop.f32.mrb[0].mxu0
        %v4999 = vadd.f32 %v2511, %v4998
        %5000 = vmatprep.mubr.bf16.mxu0 %v2163
        %5001 = vmatmul.mubr.bf16.gmra.mrb[0].mxu0 %v2162
        %v5002 = vpop.f32.mrb[0].mxu0
        %v5003 = vadd.f32 %v2507, %v5002
        %v5004 = vpop.f32.mrb[0].mxu0
        %v5005 = vadd.f32 %v2511, %v5004
        %v5006 = vpop.f32.mrb[0].mxu0
        %v5007 = vadd.f32 %v2507, %v5006
        %v5008 = vpop.f32.mrb[0].mxu0
        %v5009 = vadd.f32 %v2511, %v5008
        %5010 = vmatprep.mubr.bf16.mxu0 %v2167
        %5011 = vmatmul.mubr.bf16.gmra.mrb[0].mxu0 %v2166
        %v5012 = vpop.f32.mrb[0].mxu0
        %v5013 = vadd.f32 %v2507, %v5012
        %v5014 = vpop.f32.mrb[0].mxu0
        %v5015 = vadd.f32 %v2511, %v5014
        %v5016 = vpop.f32.mrb[0].mxu0
        %v5017 = vadd.f32 %v2507, %v5016
        %v5018 = vpop.f32.mrb[0].mxu0
        %v5019 = vadd.f32 %v2511, %v5018
        %5020 = vmatprep.mubr.bf16.mxu0 %v2171
        %5021 = vmatmul.mubr.bf16.gmra.mrb[0].mxu0 %v2170
        %v5022 = vpop.f32.mrb[0].mxu0
        %v5023 = vadd.f32 %v2507, %v5022
        %v5024 = vpop.f32.mrb[0].mxu0
        %v5025 = vadd.f32 %v2511, %v5024
        %v5026 = vpop.f32.mrb[0].mxu0
        %v5027 = vadd.f32 %v2507, %v5026
        %v5028 = vpop.f32.mrb[0].mxu0
        %v5029 = vadd.f32 %v2511, %v5028
        %5030 = vmatprep.mubr.bf16.mxu0 %v2175
        %5031 = vmatmul.mubr.bf16.gmra.mrb[0].mxu0 %v2174
        %v5032 = vpop.f32.mrb[0].mxu0
        %v5033 = vadd.f32 %v2507, %v5032
        %v5034 = vpop.f32.mrb[0].mxu0
        %v5035 = vadd.f32 %v2511, %v5034
        %v5036 = vpop.f32.mrb[0].mxu0
        %v5037 = vadd.f32 %v2507, %v5036
        %v5038 = vpop.f32.mrb[0].mxu0
        %v5039 = vadd.f32 %v2511, %v5038
        %5040 = vmatprep.mubr.bf16.mxu0 %v2179
        %5041 = vmatmul.mubr.bf16.gmra.mrb[0].mxu0 %v2178
        %v5042 = vpop.f32.mrb[0].mxu0
        %v5043 = vadd.f32 %v2507, %v5042
        %v5044 = vpop.f32.mrb[0].mxu0
        %v5045 = vadd.f32 %v2511, %v5044
        %v5046 = vpop.f32.mrb[0].mxu0
        %v5047 = vadd.f32 %v2507, %v5046
        %v5048 = vpop.f32.mrb[0].mxu0
        %v5049 = vadd.f32 %v2511, %v5048
        %5050 = vmatprep.mubr.bf16.mxu0 %v2183
        %5051 = vmatmul.mubr.bf16.gmra.mrb[0].mxu0 %v2182
        %v5052 = vpop.f32.mrb[0].mxu0
        %v5053 = vadd.f32 %v2507, %v5052
        %v5054 = vpop.f32.mrb[0].mxu0
        %v5055 = vadd.f32 %v2511, %v5054
        %v5056 = vpop.f32.mrb[0].mxu0
        %v5057 = vadd.f32 %v2507, %v5056
        %v5058 = vpop.f32.mrb[0].mxu0
        %v5059 = vadd.f32 %v2511, %v5058
        %5060 = vmatprep.mubr.bf16.mxu0 %v2187
        %5061 = vmatmul.mubr.bf16.gmra.mrb[0].mxu0 %v2186
        %v5062 = vpop.f32.mrb[0].mxu0
        %v5063 = vadd.f32 %v2507, %v5062
        %v5064 = vpop.f32.mrb[0].mxu0
        %v5065 = vadd.f32 %v2511, %v5064
        %v5066 = vpop.f32.mrb[0].mxu0
        %v5067 = vadd.f32 %v2507, %v5066
        %v5068 = vpop.f32.mrb[0].mxu0
        %v5069 = vadd.f32 %v2511, %v5068
        %5070 = vmatprep.mubr.bf16.mxu0 %v2191
        %5071 = vmatmul.mubr.bf16.gmra.mrb[0].mxu0 %v2190
        %v5072 = vpop.f32.mrb[0].mxu0
        %v5073 = vadd.f32 %v2507, %v5072
        %v5074 = vpop.f32.mrb[0].mxu0
        %v5075 = vadd.f32 %v2511, %v5074
        %v5076 = vpop.f32.mrb[0].mxu0
        %v5077 = vadd.f32 %v2507, %v5076
        %v5078 = vpop.f32.mrb[0].mxu0
        %v5079 = vadd.f32 %v2511, %v5078
        %5080 = vmatprep.mubr.bf16.mxu0 %v2195
        %5081 = vmatmul.mubr.bf16.gmra.mrb[0].mxu0 %v2194
        %v5082 = vpop.f32.mrb[0].mxu0
        %v5083 = vadd.f32 %v2507, %v5082
        %v5084 = vpop.f32.mrb[0].mxu0
        %v5085 = vadd.f32 %v2511, %v5084
        %v5086 = vpop.f32.mrb[0].mxu0
        %v5087 = vadd.f32 %v2507, %v5086
        %v5088 = vpop.f32.mrb[0].mxu0
        %v5089 = vadd.f32 %v2511, %v5088
        %5090 = vmatprep.mubr.bf16.mxu0 %v2199
        %5091 = vmatmul.mubr.bf16.gmra.mrb[0].mxu0 %v2198
        %v5092 = vpop.f32.mrb[0].mxu0
        %v5093 = vadd.f32 %v2507, %v5092
        %v5094 = vpop.f32.mrb[0].mxu0
        %v5095 = vadd.f32 %v2511, %v5094
        %v5096 = vpop.f32.mrb[0].mxu0
        %v5097 = vadd.f32 %v2507, %v5096
        %v5098 = vpop.f32.mrb[0].mxu0
        %v5099 = vadd.f32 %v2511, %v5098
        %5100 = vmatprep.mubr.bf16.mxu0 %v2203
        %5101 = vmatmul.mubr.bf16.gmra.mrb[0].mxu0 %v2202
        %v5102 = vpop.f32.mrb[0].mxu0
        %v5103 = vadd.f32 %v2507, %v5102
        %v5104 = vpop.f32.mrb[0].mxu0
        %v5105 = vadd.f32 %v2511, %v5104
        %v5106 = vpop.f32.mrb[0].mxu0
        %v5107 = vadd.f32 %v2507, %v5106
        %v5108 = vpop.f32.mrb[0].mxu0
        %v5109 = vadd.f32 %v2511, %v5108
        %5110 = vmatprep.mubr.bf16.mxu0 %v2207
        %5111 = vmatmul.mubr.bf16.gmra.mrb[0].mxu0 %v2206
        %v5112 = vpop.f32.mrb[0].mxu0
        %v5113 = vadd.f32 %v2507, %v5112
        %v5114 = vpop.f32.mrb[0].mxu0
        %v5115 = vadd.f32 %v2511, %v5114
        %v5116 = vpop.f32.mrb[0].mxu0
        %v5117 = vadd.f32 %v2507, %v5116
        %v5118 = vpop.f32.mrb[0].mxu0
        %v5119 = vadd.f32 %v2511, %v5118
        %5120 = vmatprep.mubr.bf16.mxu0 %v2211
        %5121 = vmatmul.mubr.bf16.gmra.mrb[0].mxu0 %v2210
        %v5122 = vpop.f32.mrb[0].mxu0
        %v5123 = vadd.f32 %v2507, %v5122
        %v5124 = vpop.f32.mrb[0].mxu0
        %v5125 = vadd.f32 %v2511, %v5124
        %v5126 = vpop.f32.mrb[0].mxu0
        %v5127 = vadd.f32 %v2507, %v5126
        %v5128 = vpop.f32.mrb[0].mxu0
        %v5129 = vadd.f32 %v2511, %v5128
        %5130 = vmatprep.mubr.bf16.mxu0 %v2215
        %5131 = vmatmul.mubr.bf16.gmra.mrb[0].mxu0 %v2214
        %v5132 = vpop.f32.mrb[0].mxu0
        %v5133 = vadd.f32 %v2507, %v5132
        %v5134 = vpop.f32.mrb[0].mxu0
        %v5135 = vadd.f32 %v2511, %v5134
        %v5136 = vpop.f32.mrb[0].mxu0
        %v5137 = vadd.f32 %v2507, %v5136
        %v5138 = vpop.f32.mrb[0].mxu0
        %v5139 = vadd.f32 %v2511, %v5138
        %5140 = vmatprep.mubr.bf16.mxu0 %v2219
        %5141 = vmatmul.mubr.bf16.gmra.mrb[0].mxu0 %v2218
        %v5142 = vpop.f32.mrb[0].mxu0
        %v5143 = vadd.f32 %v2507, %v5142
        %v5144 = vpop.f32.mrb[0].mxu0
        %v5145 = vadd.f32 %v2511, %v5144
        %v5146 = vpop.f32.mrb[0].mxu0
        %v5147 = vadd.f32 %v2507, %v5146
        %v5148 = vpop.f32.mrb[0].mxu0
        %v5149 = vadd.f32 %v2511, %v5148
        %5150 = vdwg.mxu0
        %5151 = vmatprep.subr.bf16.mxu0 %v3423
        %5152 = vmatpush1.bf16.msra.mxu0 %v3422
        %5153 = vmatprep.subr.bf16.mxu0 %v3431
        %5154 = vmatpush1.bf16.msra.mxu0 %v3430
        %5155 = vmatprep.subr.bf16.mxu0 %v3439
        %5156 = vmatpush1.bf16.msra.mxu0 %v3438
        %5157 = vmatprep.subr.bf16.mxu0 %v3447
        %5158 = vmatpush1.bf16.msra.mxu0 %v3446
        %5159 = vmatprep.subr.bf16.mxu0 %v3455
        %5160 = vmatpush1.bf16.msra.mxu0 %v3454
        %5161 = vmatprep.subr.bf16.mxu0 %v3463
        %5162 = vmatpush1.bf16.msra.mxu0 %v3462
        %5163 = vmatprep.subr.bf16.mxu0 %v3471
        %5164 = vmatpush1.bf16.msra.mxu0 %v3470
        %5165 = vmatprep.subr.bf16.mxu0 %v3479
        %5166 = vmatpush1.bf16.msra.mxu0 %v3478
        %5167 = vmatprep.subr.bf16.mxu0 %v3487
        %5168 = vmatpush1.bf16.msra.mxu0 %v3486
        %5169 = vmatprep.subr.bf16.mxu0 %v3495
        %5170 = vmatpush1.bf16.msra.mxu0 %v3494
        %5171 = vmatprep.subr.bf16.mxu0 %v3503
        %5172 = vmatpush1.bf16.msra.mxu0 %v3502
        %5173 = vmatprep.subr.bf16.mxu0 %v3511
        %5174 = vmatpush1.bf16.msra.mxu0 %v3510
        %5175 = vmatprep.subr.bf16.mxu0 %v3519
        %5176 = vmatpush1.bf16.msra.mxu0 %v3518
        %5177 = vmatprep.subr.bf16.mxu0 %v3527
        %5178 = vmatpush1.bf16.msra.mxu0 %v3526
        %5179 = vmatprep.subr.bf16.mxu0 %v3535
        %5180 = vmatpush1.bf16.msra.mxu0 %v3534
        %5181 = vmatprep.subr.bf16.mxu0 %v3543
        %5182 = vmatpush1.bf16.msra.mxu0 %v3542
        %5183 = vmatprep.mubr.bf16.mxu0 %v2161
        %5184 = vmatmul.mubr.bf16.gmra.mrb[0].mxu0 %v2160
        %v5185 = vpop.f32.mrb[0].mxu0
        %v5186 = vadd.f32 %v4993, %v5185
        %v5187 = vpop.f32.mrb[0].mxu0
        %v5188 = vadd.f32 %v4995, %v5187
        %v5189 = vpop.f32.mrb[0].mxu0
        %v5190 = vadd.f32 %v4997, %v5189
        %v5191 = vpop.f32.mrb[0].mxu0
        %v5192 = vadd.f32 %v4999, %v5191
        %5193 = vmatprep.mubr.bf16.mxu0 %v2165
        %5194 = vmatmul.mubr.bf16.gmra.mrb[0].mxu0 %v2164
        %v5195 = vpop.f32.mrb[0].mxu0
        %v5196 = vadd.f32 %v5003, %v5195
        %v5197 = vpop.f32.mrb[0].mxu0
        %v5198 = vadd.f32 %v5005, %v5197
        %v5199 = vpop.f32.mrb[0].mxu0
        %v5200 = vadd.f32 %v5007, %v5199
        %v5201 = vpop.f32.mrb[0].mxu0
        %v5202 = vadd.f32 %v5009, %v5201
        %5203 = vmatprep.mubr.bf16.mxu0 %v2169
        %5204 = vmatmul.mubr.bf16.gmra.mrb[0].mxu0 %v2168
        %v5205 = vpop.f32.mrb[0].mxu0
        %v5206 = vadd.f32 %v5013, %v5205
        %v5207 = vpop.f32.mrb[0].mxu0
        %v5208 = vadd.f32 %v5015, %v5207
        %v5209 = vpop.f32.mrb[0].mxu0
        %v5210 = vadd.f32 %v5017, %v5209
        %v5211 = vpop.f32.mrb[0].mxu0
        %v5212 = vadd.f32 %v5019, %v5211
        %5213 = vmatprep.mubr.bf16.mxu0 %v2173
        %5214 = vmatmul.mubr.bf16.gmra.mrb[0].mxu0 %v2172
        %v5215 = vpop.f32.mrb[0].mxu0
        %v5216 = vadd.f32 %v5023, %v5215
        %v5217 = vpop.f32.mrb[0].mxu0
        %v5218 = vadd.f32 %v5025, %v5217
        %v5219 = vpop.f32.mrb[0].mxu0
        %v5220 = vadd.f32 %v5027, %v5219
        %v5221 = vpop.f32.mrb[0].mxu0
        %v5222 = vadd.f32 %v5029, %v5221
        %5223 = vmatprep.mubr.bf16.mxu0 %v2177
        %5224 = vmatmul.mubr.bf16.gmra.mrb[0].mxu0 %v2176
        %v5225 = vpop.f32.mrb[0].mxu0
        %v5226 = vadd.f32 %v5033, %v5225
        %v5227 = vpop.f32.mrb[0].mxu0
        %v5228 = vadd.f32 %v5035, %v5227
        %v5229 = vpop.f32.mrb[0].mxu0
        %v5230 = vadd.f32 %v5037, %v5229
        %v5231 = vpop.f32.mrb[0].mxu0
        %v5232 = vadd.f32 %v5039, %v5231
        %5233 = vmatprep.mubr.bf16.mxu0 %v2181
        %5234 = vmatmul.mubr.bf16.gmra.mrb[0].mxu0 %v2180
        %v5235 = vpop.f32.mrb[0].mxu0
        %v5236 = vadd.f32 %v5043, %v5235
        %v5237 = vpop.f32.mrb[0].mxu0
        %v5238 = vadd.f32 %v5045, %v5237
        %v5239 = vpop.f32.mrb[0].mxu0
        %v5240 = vadd.f32 %v5047, %v5239
        %v5241 = vpop.f32.mrb[0].mxu0
        %v5242 = vadd.f32 %v5049, %v5241
        %5243 = vmatprep.mubr.bf16.mxu0 %v2185
        %5244 = vmatmul.mubr.bf16.gmra.mrb[0].mxu0 %v2184
        %v5245 = vpop.f32.mrb[0].mxu0
        %v5246 = vadd.f32 %v5053, %v5245
        %v5247 = vpop.f32.mrb[0].mxu0
        %v5248 = vadd.f32 %v5055, %v5247
        %v5249 = vpop.f32.mrb[0].mxu0
        %v5250 = vadd.f32 %v5057, %v5249
        %v5251 = vpop.f32.mrb[0].mxu0
        %v5252 = vadd.f32 %v5059, %v5251
        %5253 = vmatprep.mubr.bf16.mxu0 %v2189
        %5254 = vmatmul.mubr.bf16.gmra.mrb[0].mxu0 %v2188
        %v5255 = vpop.f32.mrb[0].mxu0
        %v5256 = vadd.f32 %v5063, %v5255
        %v5257 = vpop.f32.mrb[0].mxu0
        %v5258 = vadd.f32 %v5065, %v5257
        %v5259 = vpop.f32.mrb[0].mxu0
        %v5260 = vadd.f32 %v5067, %v5259
        %v5261 = vpop.f32.mrb[0].mxu0
        %v5262 = vadd.f32 %v5069, %v5261
        %5263 = vmatprep.mubr.bf16.mxu0 %v2193
        %5264 = vmatmul.mubr.bf16.gmra.mrb[0].mxu0 %v2192
        %v5265 = vpop.f32.mrb[0].mxu0
        %v5266 = vadd.f32 %v5073, %v5265
        %v5267 = vpop.f32.mrb[0].mxu0
        %v5268 = vadd.f32 %v5075, %v5267
        %v5269 = vpop.f32.mrb[0].mxu0
        %v5270 = vadd.f32 %v5077, %v5269
        %v5271 = vpop.f32.mrb[0].mxu0
        %v5272 = vadd.f32 %v5079, %v5271
        %5273 = vmatprep.mubr.bf16.mxu0 %v2197
        %5274 = vmatmul.mubr.bf16.gmra.mrb[0].mxu0 %v2196
        %v5275 = vpop.f32.mrb[0].mxu0
        %v5276 = vadd.f32 %v5083, %v5275
        %v5277 = vpop.f32.mrb[0].mxu0
        %v5278 = vadd.f32 %v5085, %v5277
        %v5279 = vpop.f32.mrb[0].mxu0
        %v5280 = vadd.f32 %v5087, %v5279
        %v5281 = vpop.f32.mrb[0].mxu0
        %v5282 = vadd.f32 %v5089, %v5281
        %5283 = vmatprep.mubr.bf16.mxu0 %v2201
        %5284 = vmatmul.mubr.bf16.gmra.mrb[0].mxu0 %v2200
        %v5285 = vpop.f32.mrb[0].mxu0
        %v5286 = vadd.f32 %v5093, %v5285
        %v5287 = vpop.f32.mrb[0].mxu0
        %v5288 = vadd.f32 %v5095, %v5287
        %v5289 = vpop.f32.mrb[0].mxu0
        %v5290 = vadd.f32 %v5097, %v5289
        %v5291 = vpop.f32.mrb[0].mxu0
        %v5292 = vadd.f32 %v5099, %v5291
        %5293 = vmatprep.mubr.bf16.mxu0 %v2205
        %5294 = vmatmul.mubr.bf16.gmra.mrb[0].mxu0 %v2204
        %v5295 = vpop.f32.mrb[0].mxu0
        %v5296 = vadd.f32 %v5103, %v5295
        %v5297 = vpop.f32.mrb[0].mxu0
        %v5298 = vadd.f32 %v5105, %v5297
        %v5299 = vpop.f32.mrb[0].mxu0
        %v5300 = vadd.f32 %v5107, %v5299
        %v5301 = vpop.f32.mrb[0].mxu0
        %v5302 = vadd.f32 %v5109, %v5301
        %5303 = vmatprep.mubr.bf16.mxu0 %v2209
        %5304 = vmatmul.mubr.bf16.gmra.mrb[0].mxu0 %v2208
        %v5305 = vpop.f32.mrb[0].mxu0
        %v5306 = vadd.f32 %v5113, %v5305
        %v5307 = vpop.f32.mrb[0].mxu0
        %v5308 = vadd.f32 %v5115, %v5307
        %v5309 = vpop.f32.mrb[0].mxu0
        %v5310 = vadd.f32 %v5117, %v5309
        %v5311 = vpop.f32.mrb[0].mxu0
        %v5312 = vadd.f32 %v5119, %v5311
        %5313 = vmatprep.mubr.bf16.mxu0 %v2213
        %5314 = vmatmul.mubr.bf16.gmra.mrb[0].mxu0 %v2212
        %v5315 = vpop.f32.mrb[0].mxu0
        %v5316 = vadd.f32 %v5123, %v5315
        %v5317 = vpop.f32.mrb[0].mxu0
        %v5318 = vadd.f32 %v5125, %v5317
        %v5319 = vpop.f32.mrb[0].mxu0
        %v5320 = vadd.f32 %v5127, %v5319
        %v5321 = vpop.f32.mrb[0].mxu0
        %v5322 = vadd.f32 %v5129, %v5321
        %5323 = vmatprep.mubr.bf16.mxu0 %v2217
        %5324 = vmatmul.mubr.bf16.gmra.mrb[0].mxu0 %v2216
        %v5325 = vpop.f32.mrb[0].mxu0
        %v5326 = vadd.f32 %v5133, %v5325
        %v5327 = vpop.f32.mrb[0].mxu0
        %v5328 = vadd.f32 %v5135, %v5327
        %v5329 = vpop.f32.mrb[0].mxu0
        %v5330 = vadd.f32 %v5137, %v5329
        %v5331 = vpop.f32.mrb[0].mxu0
        %v5332 = vadd.f32 %v5139, %v5331
        %5333 = vmatprep.mubr.bf16.mxu0 %v2221
        %5334 = vmatmul.mubr.bf16.gmra.mrb[0].mxu0 %v2220
        %v5335 = vpop.f32.mrb[0].mxu0
        %v5336 = vadd.f32 %v5143, %v5335
        %v5337 = vpop.f32.mrb[0].mxu0
        %v5338 = vadd.f32 %v5145, %v5337
        %v5339 = vpop.f32.mrb[0].mxu0
        %v5340 = vadd.f32 %v5147, %v5339
        %v5341 = vpop.f32.mrb[0].mxu0
        %v5342 = vadd.f32 %v5149, %v5341
        %5343 = vdwg.mxu0
        %vm5344 = vcmp.ge.f32.partialorder %v4028, 0.0
        %vm5345 = vcmp.ge.f32.partialorder %v4030, 0.0
        %vm5346 = vcmp.ge.f32.partialorder %v4414, 0.0
        %vm5347 = vcmp.ge.f32.partialorder %v4416, 0.0
        %vm5348 = vcmp.ge.f32.partialorder %v4800, 0.0
        %vm5349 = vcmp.ge.f32.partialorder %v4802, 0.0
        %vm5350 = vcmp.ge.f32.partialorder %v5186, 0.0
        %vm5351 = vcmp.ge.f32.partialorder %v5188, 0.0
        %vm5352 = vcmp.ge.f32.partialorder %v4032, 0.0
        %vm5353 = vcmp.ge.f32.partialorder %v4034, 0.0
        %vm5354 = vcmp.ge.f32.partialorder %v4418, 0.0
        %vm5355 = vcmp.ge.f32.partialorder %v4420, 0.0
        %vm5356 = vcmp.ge.f32.partialorder %v4804, 0.0
        %vm5357 = vcmp.ge.f32.partialorder %v4806, 0.0
        %vm5358 = vcmp.ge.f32.partialorder %v5190, 0.0
        %vm5359 = vcmp.ge.f32.partialorder %v5192, 0.0
        %vm5360 = vcmp.ge.f32.partialorder %v4038, 0.0
        %vm5361 = vcmp.ge.f32.partialorder %v4040, 0.0
        %vm5362 = vcmp.ge.f32.partialorder %v4424, 0.0
        %vm5363 = vcmp.ge.f32.partialorder %v4426, 0.0
        %vm5364 = vcmp.ge.f32.partialorder %v4810, 0.0
        %vm5365 = vcmp.ge.f32.partialorder %v4812, 0.0
        %vm5366 = vcmp.ge.f32.partialorder %v5196, 0.0
        %vm5367 = vcmp.ge.f32.partialorder %v5198, 0.0
        %vm5368 = vcmp.ge.f32.partialorder %v4042, 0.0
        %vm5369 = vcmp.ge.f32.partialorder %v4044, 0.0
        %vm5370 = vcmp.ge.f32.partialorder %v4428, 0.0
        %vm5371 = vcmp.ge.f32.partialorder %v4430, 0.0
        %vm5372 = vcmp.ge.f32.partialorder %v4814, 0.0
        %vm5373 = vcmp.ge.f32.partialorder %v4816, 0.0
        %vm5374 = vcmp.ge.f32.partialorder %v5200, 0.0
        %vm5375 = vcmp.ge.f32.partialorder %v5202, 0.0
        %vm5376 = vcmp.ge.f32.partialorder %v4048, 0.0
        %vm5377 = vcmp.ge.f32.partialorder %v4050, 0.0
        %vm5378 = vcmp.ge.f32.partialorder %v4434, 0.0
        %vm5379 = vcmp.ge.f32.partialorder %v4436, 0.0
        %vm5380 = vcmp.ge.f32.partialorder %v4820, 0.0
        %vm5381 = vcmp.ge.f32.partialorder %v4822, 0.0
        %vm5382 = vcmp.ge.f32.partialorder %v5206, 0.0
        %vm5383 = vcmp.ge.f32.partialorder %v5208, 0.0
        %vm5384 = vcmp.ge.f32.partialorder %v4052, 0.0
        %vm5385 = vcmp.ge.f32.partialorder %v4054, 0.0
        %vm5386 = vcmp.ge.f32.partialorder %v4438, 0.0
        %vm5387 = vcmp.ge.f32.partialorder %v4440, 0.0
        %vm5388 = vcmp.ge.f32.partialorder %v4824, 0.0
        %vm5389 = vcmp.ge.f32.partialorder %v4826, 0.0
        %vm5390 = vcmp.ge.f32.partialorder %v5210, 0.0
        %vm5391 = vcmp.ge.f32.partialorder %v5212, 0.0
        %vm5392 = vcmp.ge.f32.partialorder %v4058, 0.0
        %vm5393 = vcmp.ge.f32.partialorder %v4060, 0.0
        %vm5394 = vcmp.ge.f32.partialorder %v4444, 0.0
        %vm5395 = vcmp.ge.f32.partialorder %v4446, 0.0
        %vm5396 = vcmp.ge.f32.partialorder %v4830, 0.0
        %vm5397 = vcmp.ge.f32.partialorder %v4832, 0.0
        %vm5398 = vcmp.ge.f32.partialorder %v5216, 0.0
        %vm5399 = vcmp.ge.f32.partialorder %v5218, 0.0
        %vm5400 = vcmp.ge.f32.partialorder %v4062, 0.0
        %vm5401 = vcmp.ge.f32.partialorder %v4064, 0.0
        %vm5402 = vcmp.ge.f32.partialorder %v4448, 0.0
        %vm5403 = vcmp.ge.f32.partialorder %v4450, 0.0
        %vm5404 = vcmp.ge.f32.partialorder %v4834, 0.0
        %vm5405 = vcmp.ge.f32.partialorder %v4836, 0.0
        %vm5406 = vcmp.ge.f32.partialorder %v5220, 0.0
        %vm5407 = vcmp.ge.f32.partialorder %v5222, 0.0
        %vm5408 = vcmp.ge.f32.partialorder %v4068, 0.0
        %vm5409 = vcmp.ge.f32.partialorder %v4070, 0.0
        %vm5410 = vcmp.ge.f32.partialorder %v4454, 0.0
        %vm5411 = vcmp.ge.f32.partialorder %v4456, 0.0
        %vm5412 = vcmp.ge.f32.partialorder %v4840, 0.0
        %vm5413 = vcmp.ge.f32.partialorder %v4842, 0.0
        %vm5414 = vcmp.ge.f32.partialorder %v5226, 0.0
        %vm5415 = vcmp.ge.f32.partialorder %v5228, 0.0
        %vm5416 = vcmp.ge.f32.partialorder %v4072, 0.0
        %vm5417 = vcmp.ge.f32.partialorder %v4074, 0.0
        %vm5418 = vcmp.ge.f32.partialorder %v4458, 0.0
        %vm5419 = vcmp.ge.f32.partialorder %v4460, 0.0
        %vm5420 = vcmp.ge.f32.partialorder %v4844, 0.0
        %vm5421 = vcmp.ge.f32.partialorder %v4846, 0.0
        %vm5422 = vcmp.ge.f32.partialorder %v5230, 0.0
        %vm5423 = vcmp.ge.f32.partialorder %v5232, 0.0
        %vm5424 = vcmp.ge.f32.partialorder %v4078, 0.0
        %vm5425 = vcmp.ge.f32.partialorder %v4080, 0.0
        %vm5426 = vcmp.ge.f32.partialorder %v4464, 0.0
        %vm5427 = vcmp.ge.f32.partialorder %v4466, 0.0
        %vm5428 = vcmp.ge.f32.partialorder %v4850, 0.0
        %vm5429 = vcmp.ge.f32.partialorder %v4852, 0.0
        %vm5430 = vcmp.ge.f32.partialorder %v5236, 0.0
        %vm5431 = vcmp.ge.f32.partialorder %v5238, 0.0
        %vm5432 = vcmp.ge.f32.partialorder %v4082, 0.0
        %vm5433 = vcmp.ge.f32.partialorder %v4084, 0.0
        %vm5434 = vcmp.ge.f32.partialorder %v4468, 0.0
        %vm5435 = vcmp.ge.f32.partialorder %v4470, 0.0
        %vm5436 = vcmp.ge.f32.partialorder %v4854, 0.0
        %vm5437 = vcmp.ge.f32.partialorder %v4856, 0.0
        %vm5438 = vcmp.ge.f32.partialorder %v5240, 0.0
        %vm5439 = vcmp.ge.f32.partialorder %v5242, 0.0
        %vm5440 = vcmp.ge.f32.partialorder %v4088, 0.0
        %vm5441 = vcmp.ge.f32.partialorder %v4090, 0.0
        %vm5442 = vcmp.ge.f32.partialorder %v4474, 0.0
        %vm5443 = vcmp.ge.f32.partialorder %v4476, 0.0
        %vm5444 = vcmp.ge.f32.partialorder %v4860, 0.0
        %vm5445 = vcmp.ge.f32.partialorder %v4862, 0.0
        %vm5446 = vcmp.ge.f32.partialorder %v5246, 0.0
        %vm5447 = vcmp.ge.f32.partialorder %v5248, 0.0
        %vm5448 = vcmp.ge.f32.partialorder %v4092, 0.0
        %vm5449 = vcmp.ge.f32.partialorder %v4094, 0.0
        %vm5450 = vcmp.ge.f32.partialorder %v4478, 0.0
        %vm5451 = vcmp.ge.f32.partialorder %v4480, 0.0
        %vm5452 = vcmp.ge.f32.partialorder %v4864, 0.0
        %vm5453 = vcmp.ge.f32.partialorder %v4866, 0.0
        %vm5454 = vcmp.ge.f32.partialorder %v5250, 0.0
        %vm5455 = vcmp.ge.f32.partialorder %v5252, 0.0
        %vm5456 = vcmp.ge.f32.partialorder %v4098, 0.0
        %vm5457 = vcmp.ge.f32.partialorder %v4100, 0.0
        %vm5458 = vcmp.ge.f32.partialorder %v4484, 0.0
        %vm5459 = vcmp.ge.f32.partialorder %v4486, 0.0
        %vm5460 = vcmp.ge.f32.partialorder %v4870, 0.0
        %vm5461 = vcmp.ge.f32.partialorder %v4872, 0.0
        %vm5462 = vcmp.ge.f32.partialorder %v5256, 0.0
        %vm5463 = vcmp.ge.f32.partialorder %v5258, 0.0
        %vm5464 = vcmp.ge.f32.partialorder %v4102, 0.0
        %vm5465 = vcmp.ge.f32.partialorder %v4104, 0.0
        %vm5466 = vcmp.ge.f32.partialorder %v4488, 0.0
        %vm5467 = vcmp.ge.f32.partialorder %v4490, 0.0
        %vm5468 = vcmp.ge.f32.partialorder %v4874, 0.0
        %vm5469 = vcmp.ge.f32.partialorder %v4876, 0.0
        %vm5470 = vcmp.ge.f32.partialorder %v5260, 0.0
        %vm5471 = vcmp.ge.f32.partialorder %v5262, 0.0
        %vm5472 = vcmp.ge.f32.partialorder %v4108, 0.0
        %vm5473 = vcmp.ge.f32.partialorder %v4110, 0.0
        %vm5474 = vcmp.ge.f32.partialorder %v4494, 0.0
        %vm5475 = vcmp.ge.f32.partialorder %v4496, 0.0
        %vm5476 = vcmp.ge.f32.partialorder %v4880, 0.0
        %vm5477 = vcmp.ge.f32.partialorder %v4882, 0.0
        %vm5478 = vcmp.ge.f32.partialorder %v5266, 0.0
        %vm5479 = vcmp.ge.f32.partialorder %v5268, 0.0
        %vm5480 = vcmp.ge.f32.partialorder %v4112, 0.0
        %vm5481 = vcmp.ge.f32.partialorder %v4114, 0.0
        %vm5482 = vcmp.ge.f32.partialorder %v4498, 0.0
        %vm5483 = vcmp.ge.f32.partialorder %v4500, 0.0
        %vm5484 = vcmp.ge.f32.partialorder %v4884, 0.0
        %vm5485 = vcmp.ge.f32.partialorder %v4886, 0.0
        %vm5486 = vcmp.ge.f32.partialorder %v5270, 0.0
        %vm5487 = vcmp.ge.f32.partialorder %v5272, 0.0
        %vm5488 = vcmp.ge.f32.partialorder %v4118, 0.0
        %vm5489 = vcmp.ge.f32.partialorder %v4120, 0.0
        %vm5490 = vcmp.ge.f32.partialorder %v4504, 0.0
        %vm5491 = vcmp.ge.f32.partialorder %v4506, 0.0
        %vm5492 = vcmp.ge.f32.partialorder %v4890, 0.0
        %vm5493 = vcmp.ge.f32.partialorder %v4892, 0.0
        %vm5494 = vcmp.ge.f32.partialorder %v5276, 0.0
        %vm5495 = vcmp.ge.f32.partialorder %v5278, 0.0
        %vm5496 = vcmp.ge.f32.partialorder %v4122, 0.0
        %vm5497 = vcmp.ge.f32.partialorder %v4124, 0.0
        %vm5498 = vcmp.ge.f32.partialorder %v4508, 0.0
        %vm5499 = vcmp.ge.f32.partialorder %v4510, 0.0
        %vm5500 = vcmp.ge.f32.partialorder %v4894, 0.0
        %vm5501 = vcmp.ge.f32.partialorder %v4896, 0.0
        %vm5502 = vcmp.ge.f32.partialorder %v5280, 0.0
        %vm5503 = vcmp.ge.f32.partialorder %v5282, 0.0
        %vm5504 = vcmp.ge.f32.partialorder %v4128, 0.0
        %vm5505 = vcmp.ge.f32.partialorder %v4130, 0.0
        %vm5506 = vcmp.ge.f32.partialorder %v4514, 0.0
        %vm5507 = vcmp.ge.f32.partialorder %v4516, 0.0
        %vm5508 = vcmp.ge.f32.partialorder %v4900, 0.0
        %vm5509 = vcmp.ge.f32.partialorder %v4902, 0.0
        %vm5510 = vcmp.ge.f32.partialorder %v5286, 0.0
        %vm5511 = vcmp.ge.f32.partialorder %v5288, 0.0
        %vm5512 = vcmp.ge.f32.partialorder %v4132, 0.0
        %vm5513 = vcmp.ge.f32.partialorder %v4134, 0.0
        %vm5514 = vcmp.ge.f32.partialorder %v4518, 0.0
        %vm5515 = vcmp.ge.f32.partialorder %v4520, 0.0
        %vm5516 = vcmp.ge.f32.partialorder %v4904, 0.0
        %vm5517 = vcmp.ge.f32.partialorder %v4906, 0.0
        %vm5518 = vcmp.ge.f32.partialorder %v5290, 0.0
        %vm5519 = vcmp.ge.f32.partialorder %v5292, 0.0
        %vm5520 = vcmp.ge.f32.partialorder %v4138, 0.0
        %vm5521 = vcmp.ge.f32.partialorder %v4140, 0.0
        %vm5522 = vcmp.ge.f32.partialorder %v4524, 0.0
        %vm5523 = vcmp.ge.f32.partialorder %v4526, 0.0
        %vm5524 = vcmp.ge.f32.partialorder %v4910, 0.0
        %vm5525 = vcmp.ge.f32.partialorder %v4912, 0.0
        %vm5526 = vcmp.ge.f32.partialorder %v5296, 0.0
        %vm5527 = vcmp.ge.f32.partialorder %v5298, 0.0
        %vm5528 = vcmp.ge.f32.partialorder %v4142, 0.0
        %vm5529 = vcmp.ge.f32.partialorder %v4144, 0.0
        %vm5530 = vcmp.ge.f32.partialorder %v4528, 0.0
        %vm5531 = vcmp.ge.f32.partialorder %v4530, 0.0
        %vm5532 = vcmp.ge.f32.partialorder %v4914, 0.0
        %vm5533 = vcmp.ge.f32.partialorder %v4916, 0.0
        %vm5534 = vcmp.ge.f32.partialorder %v5300, 0.0
        %vm5535 = vcmp.ge.f32.partialorder %v5302, 0.0
        %vm5536 = vcmp.ge.f32.partialorder %v4148, 0.0
        %vm5537 = vcmp.ge.f32.partialorder %v4150, 0.0
        %vm5538 = vcmp.ge.f32.partialorder %v4534, 0.0
        %vm5539 = vcmp.ge.f32.partialorder %v4536, 0.0
        %vm5540 = vcmp.ge.f32.partialorder %v4920, 0.0
        %vm5541 = vcmp.ge.f32.partialorder %v4922, 0.0
        %vm5542 = vcmp.ge.f32.partialorder %v5306, 0.0
        %vm5543 = vcmp.ge.f32.partialorder %v5308, 0.0
        %vm5544 = vcmp.ge.f32.partialorder %v4152, 0.0
        %vm5545 = vcmp.ge.f32.partialorder %v4154, 0.0
        %vm5546 = vcmp.ge.f32.partialorder %v4538, 0.0
        %vm5547 = vcmp.ge.f32.partialorder %v4540, 0.0
        %vm5548 = vcmp.ge.f32.partialorder %v4924, 0.0
        %vm5549 = vcmp.ge.f32.partialorder %v4926, 0.0
        %vm5550 = vcmp.ge.f32.partialorder %v5310, 0.0
        %vm5551 = vcmp.ge.f32.partialorder %v5312, 0.0
        %vm5552 = vcmp.ge.f32.partialorder %v4158, 0.0
        %vm5553 = vcmp.ge.f32.partialorder %v4160, 0.0
        %vm5554 = vcmp.ge.f32.partialorder %v4544, 0.0
        %vm5555 = vcmp.ge.f32.partialorder %v4546, 0.0
        %vm5556 = vcmp.ge.f32.partialorder %v4930, 0.0
        %vm5557 = vcmp.ge.f32.partialorder %v4932, 0.0
        %vm5558 = vcmp.ge.f32.partialorder %v5316, 0.0
        %vm5559 = vcmp.ge.f32.partialorder %v5318, 0.0
        %vm5560 = vcmp.ge.f32.partialorder %v4162, 0.0
        %vm5561 = vcmp.ge.f32.partialorder %v4164, 0.0
        %vm5562 = vcmp.ge.f32.partialorder %v4548, 0.0
        %vm5563 = vcmp.ge.f32.partialorder %v4550, 0.0
        %vm5564 = vcmp.ge.f32.partialorder %v4934, 0.0
        %vm5565 = vcmp.ge.f32.partialorder %v4936, 0.0
        %vm5566 = vcmp.ge.f32.partialorder %v5320, 0.0
        %vm5567 = vcmp.ge.f32.partialorder %v5322, 0.0
        %vm5568 = vcmp.ge.f32.partialorder %v4168, 0.0
        %vm5569 = vcmp.ge.f32.partialorder %v4170, 0.0
        %vm5570 = vcmp.ge.f32.partialorder %v4554, 0.0
        %vm5571 = vcmp.ge.f32.partialorder %v4556, 0.0
        %vm5572 = vcmp.ge.f32.partialorder %v4940, 0.0
        %vm5573 = vcmp.ge.f32.partialorder %v4942, 0.0
        %vm5574 = vcmp.ge.f32.partialorder %v5326, 0.0
        %vm5575 = vcmp.ge.f32.partialorder %v5328, 0.0
        %vm5576 = vcmp.ge.f32.partialorder %v4172, 0.0
        %vm5577 = vcmp.ge.f32.partialorder %v4174, 0.0
        %vm5578 = vcmp.ge.f32.partialorder %v4558, 0.0
        %vm5579 = vcmp.ge.f32.partialorder %v4560, 0.0
        %vm5580 = vcmp.ge.f32.partialorder %v4944, 0.0
        %vm5581 = vcmp.ge.f32.partialorder %v4946, 0.0
        %vm5582 = vcmp.ge.f32.partialorder %v5330, 0.0
        %vm5583 = vcmp.ge.f32.partialorder %v5332, 0.0
        %vm5584 = vcmp.ge.f32.partialorder %v4178, 0.0
        %vm5585 = vcmp.ge.f32.partialorder %v4180, 0.0
        %vm5586 = vcmp.ge.f32.partialorder %v4564, 0.0
        %vm5587 = vcmp.ge.f32.partialorder %v4566, 0.0
        %vm5588 = vcmp.ge.f32.partialorder %v4950, 0.0
        %vm5589 = vcmp.ge.f32.partialorder %v4952, 0.0
        %vm5590 = vcmp.ge.f32.partialorder %v5336, 0.0
        %vm5591 = vcmp.ge.f32.partialorder %v5338, 0.0
        %vm5592 = vcmp.ge.f32.partialorder %v4182, 0.0
        %vm5593 = vcmp.ge.f32.partialorder %v4184, 0.0
        %vm5594 = vcmp.ge.f32.partialorder %v4568, 0.0
        %vm5595 = vcmp.ge.f32.partialorder %v4570, 0.0
        %vm5596 = vcmp.ge.f32.partialorder %v4954, 0.0
        %vm5597 = vcmp.ge.f32.partialorder %v4956, 0.0
        %vm5598 = vcmp.ge.f32.partialorder %v5340, 0.0
        %vm5599 = vcmp.ge.f32.partialorder %v5342, 0.0
        %v5600 = vmul.f32 %v4028, 0.2
        %v5601 = vmul.f32 %v4030, 0.2
        %v5602 = vmul.f32 %v4414, 0.2
        %v5603 = vmul.f32 %v4416, 0.2
        %v5604 = vmul.f32 %v4800, 0.2
        %v5605 = vmul.f32 %v4802, 0.2
        %v5606 = vmul.f32 %v5186, 0.2
        %v5607 = vmul.f32 %v5188, 0.2
        %v5608 = vmul.f32 %v4032, 0.2
        %v5609 = vmul.f32 %v4034, 0.2
        %v5610 = vmul.f32 %v4418, 0.2
        %v5611 = vmul.f32 %v4420, 0.2
        %v5612 = vmul.f32 %v4804, 0.2
        %v5613 = vmul.f32 %v4806, 0.2
        %v5614 = vmul.f32 %v5190, 0.2
        %v5615 = vmul.f32 %v5192, 0.2
        %v5616 = vmul.f32 %v4038, 0.2
        %v5617 = vmul.f32 %v4040, 0.2
        %v5618 = vmul.f32 %v4424, 0.2
        %v5619 = vmul.f32 %v4426, 0.2
        %v5620 = vmul.f32 %v4810, 0.2
        %v5621 = vmul.f32 %v4812, 0.2
        %v5622 = vmul.f32 %v5196, 0.2
        %v5623 = vmul.f32 %v5198, 0.2
        %v5624 = vmul.f32 %v4042, 0.2
        %v5625 = vmul.f32 %v4044, 0.2
        %v5626 = vmul.f32 %v4428, 0.2
        %v5627 = vmul.f32 %v4430, 0.2
        %v5628 = vmul.f32 %v4814, 0.2
        %v5629 = vmul.f32 %v4816, 0.2
        %v5630 = vmul.f32 %v5200, 0.2
        %v5631 = vmul.f32 %v5202, 0.2
        %v5632 = vmul.f32 %v4048, 0.2
        %v5633 = vmul.f32 %v4050, 0.2
        %v5634 = vmul.f32 %v4434, 0.2
        %v5635 = vmul.f32 %v4436, 0.2
        %v5636 = vmul.f32 %v4820, 0.2
        %v5637 = vmul.f32 %v4822, 0.2
        %v5638 = vmul.f32 %v5206, 0.2
        %v5639 = vmul.f32 %v5208, 0.2
        %v5640 = vmul.f32 %v4052, 0.2
        %v5641 = vmul.f32 %v4054, 0.2
        %v5642 = vmul.f32 %v4438, 0.2
        %v5643 = vmul.f32 %v4440, 0.2
        %v5644 = vmul.f32 %v4824, 0.2
        %v5645 = vmul.f32 %v4826, 0.2
        %v5646 = vmul.f32 %v5210, 0.2
        %v5647 = vmul.f32 %v5212, 0.2
        %v5648 = vmul.f32 %v4058, 0.2
        %v5649 = vmul.f32 %v4060, 0.2
        %v5650 = vmul.f32 %v4444, 0.2
        %v5651 = vmul.f32 %v4446, 0.2
        %v5652 = vmul.f32 %v4830, 0.2
        %v5653 = vmul.f32 %v4832, 0.2
        %v5654 = vmul.f32 %v5216, 0.2
        %v5655 = vmul.f32 %v5218, 0.2
        %v5656 = vmul.f32 %v4062, 0.2
        %v5657 = vmul.f32 %v4064, 0.2
        %v5658 = vmul.f32 %v4448, 0.2
        %v5659 = vmul.f32 %v4450, 0.2
        %v5660 = vmul.f32 %v4834, 0.2
        %v5661 = vmul.f32 %v4836, 0.2
        %v5662 = vmul.f32 %v5220, 0.2
        %v5663 = vmul.f32 %v5222, 0.2
        %v5664 = vmul.f32 %v4068, 0.2
        %v5665 = vmul.f32 %v4070, 0.2
        %v5666 = vmul.f32 %v4454, 0.2
        %v5667 = vmul.f32 %v4456, 0.2
        %v5668 = vmul.f32 %v4840, 0.2
        %v5669 = vmul.f32 %v4842, 0.2
        %v5670 = vmul.f32 %v5226, 0.2
        %v5671 = vmul.f32 %v5228, 0.2
        %v5672 = vmul.f32 %v4072, 0.2
        %v5673 = vmul.f32 %v4074, 0.2
        %v5674 = vmul.f32 %v4458, 0.2
        %v5675 = vmul.f32 %v4460, 0.2
        %v5676 = vmul.f32 %v4844, 0.2
        %v5677 = vmul.f32 %v4846, 0.2
        %v5678 = vmul.f32 %v5230, 0.2
        %v5679 = vmul.f32 %v5232, 0.2
        %v5680 = vmul.f32 %v4078, 0.2
        %v5681 = vmul.f32 %v4080, 0.2
        %v5682 = vmul.f32 %v4464, 0.2
        %v5683 = vmul.f32 %v4466, 0.2
        %v5684 = vmul.f32 %v4850, 0.2
        %v5685 = vmul.f32 %v4852, 0.2
        %v5686 = vmul.f32 %v5236, 0.2
        %v5687 = vmul.f32 %v5238, 0.2
        %v5688 = vmul.f32 %v4082, 0.2
        %v5689 = vmul.f32 %v4084, 0.2
        %v5690 = vmul.f32 %v4468, 0.2
        %v5691 = vmul.f32 %v4470, 0.2
        %v5692 = vmul.f32 %v4854, 0.2
        %v5693 = vmul.f32 %v4856, 0.2
        %v5694 = vmul.f32 %v5240, 0.2
        %v5695 = vmul.f32 %v5242, 0.2
        %v5696 = vmul.f32 %v4088, 0.2
        %v5697 = vmul.f32 %v4090, 0.2
        %v5698 = vmul.f32 %v4474, 0.2
        %v5699 = vmul.f32 %v4476, 0.2
        %v5700 = vmul.f32 %v4860, 0.2
        %v5701 = vmul.f32 %v4862, 0.2
        %v5702 = vmul.f32 %v5246, 0.2
        %v5703 = vmul.f32 %v5248, 0.2
        %v5704 = vmul.f32 %v4092, 0.2
        %v5705 = vmul.f32 %v4094, 0.2
        %v5706 = vmul.f32 %v4478, 0.2
        %v5707 = vmul.f32 %v4480, 0.2
        %v5708 = vmul.f32 %v4864, 0.2
        %v5709 = vmul.f32 %v4866, 0.2
        %v5710 = vmul.f32 %v5250, 0.2
        %v5711 = vmul.f32 %v5252, 0.2
        %v5712 = vmul.f32 %v4098, 0.2
        %v5713 = vmul.f32 %v4100, 0.2
        %v5714 = vmul.f32 %v4484, 0.2
        %v5715 = vmul.f32 %v4486, 0.2
        %v5716 = vmul.f32 %v4870, 0.2
        %v5717 = vmul.f32 %v4872, 0.2
        %v5718 = vmul.f32 %v5256, 0.2
        %v5719 = vmul.f32 %v5258, 0.2
        %v5720 = vmul.f32 %v4102, 0.2
        %v5721 = vmul.f32 %v4104, 0.2
        %v5722 = vmul.f32 %v4488, 0.2
        %v5723 = vmul.f32 %v4490, 0.2
        %v5724 = vmul.f32 %v4874, 0.2
        %v5725 = vmul.f32 %v4876, 0.2
        %v5726 = vmul.f32 %v5260, 0.2
        %v5727 = vmul.f32 %v5262, 0.2
        %v5728 = vmul.f32 %v4108, 0.2
        %v5729 = vmul.f32 %v4110, 0.2
        %v5730 = vmul.f32 %v4494, 0.2
        %v5731 = vmul.f32 %v4496, 0.2
        %v5732 = vmul.f32 %v4880, 0.2
        %v5733 = vmul.f32 %v4882, 0.2
        %v5734 = vmul.f32 %v5266, 0.2
        %v5735 = vmul.f32 %v5268, 0.2
        %v5736 = vmul.f32 %v4112, 0.2
        %v5737 = vmul.f32 %v4114, 0.2
        %v5738 = vmul.f32 %v4498, 0.2
        %v5739 = vmul.f32 %v4500, 0.2
        %v5740 = vmul.f32 %v4884, 0.2
        %v5741 = vmul.f32 %v4886, 0.2
        %v5742 = vmul.f32 %v5270, 0.2
        %v5743 = vmul.f32 %v5272, 0.2
        %v5744 = vmul.f32 %v4118, 0.2
        %v5745 = vmul.f32 %v4120, 0.2
        %v5746 = vmul.f32 %v4504, 0.2
        %v5747 = vmul.f32 %v4506, 0.2
        %v5748 = vmul.f32 %v4890, 0.2
        %v5749 = vmul.f32 %v4892, 0.2
        %v5750 = vmul.f32 %v5276, 0.2
        %v5751 = vmul.f32 %v5278, 0.2
        %v5752 = vmul.f32 %v4122, 0.2
        %v5753 = vmul.f32 %v4124, 0.2
        %v5754 = vmul.f32 %v4508, 0.2
        %v5755 = vmul.f32 %v4510, 0.2
        %v5756 = vmul.f32 %v4894, 0.2
        %v5757 = vmul.f32 %v4896, 0.2
        %v5758 = vmul.f32 %v5280, 0.2
        %v5759 = vmul.f32 %v5282, 0.2
        %v5760 = vmul.f32 %v4128, 0.2
        %v5761 = vmul.f32 %v4130, 0.2
        %v5762 = vmul.f32 %v4514, 0.2
        %v5763 = vmul.f32 %v4516, 0.2
        %v5764 = vmul.f32 %v4900, 0.2
        %v5765 = vmul.f32 %v4902, 0.2
        %v5766 = vmul.f32 %v5286, 0.2
        %v5767 = vmul.f32 %v5288, 0.2
        %v5768 = vmul.f32 %v4132, 0.2
        %v5769 = vmul.f32 %v4134, 0.2
        %v5770 = vmul.f32 %v4518, 0.2
        %v5771 = vmul.f32 %v4520, 0.2
        %v5772 = vmul.f32 %v4904, 0.2
        %v5773 = vmul.f32 %v4906, 0.2
        %v5774 = vmul.f32 %v5290, 0.2
        %v5775 = vmul.f32 %v5292, 0.2
        %v5776 = vmul.f32 %v4138, 0.2
        %v5777 = vmul.f32 %v4140, 0.2
        %v5778 = vmul.f32 %v4524, 0.2
        %v5779 = vmul.f32 %v4526, 0.2
        %v5780 = vmul.f32 %v4910, 0.2
        %v5781 = vmul.f32 %v4912, 0.2
        %v5782 = vmul.f32 %v5296, 0.2
        %v5783 = vmul.f32 %v5298, 0.2
        %v5784 = vmul.f32 %v4142, 0.2
        %v5785 = vmul.f32 %v4144, 0.2
        %v5786 = vmul.f32 %v4528, 0.2
        %v5787 = vmul.f32 %v4530, 0.2
        %v5788 = vmul.f32 %v4914, 0.2
        %v5789 = vmul.f32 %v4916, 0.2
        %v5790 = vmul.f32 %v5300, 0.2
        %v5791 = vmul.f32 %v5302, 0.2
        %v5792 = vmul.f32 %v4148, 0.2
        %v5793 = vmul.f32 %v4150, 0.2
        %v5794 = vmul.f32 %v4534, 0.2
        %v5795 = vmul.f32 %v4536, 0.2
        %v5796 = vmul.f32 %v4920, 0.2
        %v5797 = vmul.f32 %v4922, 0.2
        %v5798 = vmul.f32 %v5306, 0.2
        %v5799 = vmul.f32 %v5308, 0.2
        %v5800 = vmul.f32 %v4152, 0.2
        %v5801 = vmul.f32 %v4154, 0.2
        %v5802 = vmul.f32 %v4538, 0.2
        %v5803 = vmul.f32 %v4540, 0.2
        %v5804 = vmul.f32 %v4924, 0.2
        %v5805 = vmul.f32 %v4926, 0.2
        %v5806 = vmul.f32 %v5310, 0.2
        %v5807 = vmul.f32 %v5312, 0.2
        %v5808 = vmul.f32 %v4158, 0.2
        %v5809 = vmul.f32 %v4160, 0.2
        %v5810 = vmul.f32 %v4544, 0.2
        %v5811 = vmul.f32 %v4546, 0.2
        %v5812 = vmul.f32 %v4930, 0.2
        %v5813 = vmul.f32 %v4932, 0.2
        %v5814 = vmul.f32 %v5316, 0.2
        %v5815 = vmul.f32 %v5318, 0.2
        %v5816 = vmul.f32 %v4162, 0.2
        %v5817 = vmul.f32 %v4164, 0.2
        %v5818 = vmul.f32 %v4548, 0.2
        %v5819 = vmul.f32 %v4550, 0.2
        %v5820 = vmul.f32 %v4934, 0.2
        %v5821 = vmul.f32 %v4936, 0.2
        %v5822 = vmul.f32 %v5320, 0.2
        %v5823 = vmul.f32 %v5322, 0.2
        %v5824 = vmul.f32 %v4168, 0.2
        %v5825 = vmul.f32 %v4170, 0.2
        %v5826 = vmul.f32 %v4554, 0.2
        %v5827 = vmul.f32 %v4556, 0.2
        %v5828 = vmul.f32 %v4940, 0.2
        %v5829 = vmul.f32 %v4942, 0.2
        %v5830 = vmul.f32 %v5326, 0.2
        %v5831 = vmul.f32 %v5328, 0.2
        %v5832 = vmul.f32 %v4172, 0.2
        %v5833 = vmul.f32 %v4174, 0.2
        %v5834 = vmul.f32 %v4558, 0.2
        %v5835 = vmul.f32 %v4560, 0.2
        %v5836 = vmul.f32 %v4944, 0.2
        %v5837 = vmul.f32 %v4946, 0.2
        %v5838 = vmul.f32 %v5330, 0.2
        %v5839 = vmul.f32 %v5332, 0.2
        %v5840 = vmul.f32 %v4178, 0.2
        %v5841 = vmul.f32 %v4180, 0.2
        %v5842 = vmul.f32 %v4564, 0.2
        %v5843 = vmul.f32 %v4566, 0.2
        %v5844 = vmul.f32 %v4950, 0.2
        %v5845 = vmul.f32 %v4952, 0.2
        %v5846 = vmul.f32 %v5336, 0.2
        %v5847 = vmul.f32 %v5338, 0.2
        %v5848 = vmul.f32 %v4182, 0.2
        %v5849 = vmul.f32 %v4184, 0.2
        %v5850 = vmul.f32 %v4568, 0.2
        %v5851 = vmul.f32 %v4570, 0.2
        %v5852 = vmul.f32 %v4954, 0.2
        %v5853 = vmul.f32 %v4956, 0.2
        %v5854 = vmul.f32 %v5340, 0.2
        %v5855 = vmul.f32 %v5342, 0.2
        %v5856 = vsel %vm5344, %v4028, %v5600
        %v5857 = vsel %vm5345, %v4030, %v5601
        %v5858 = vsel %vm5346, %v4414, %v5602
        %v5859 = vsel %vm5347, %v4416, %v5603
        %v5860 = vsel %vm5348, %v4800, %v5604
        %v5861 = vsel %vm5349, %v4802, %v5605
        %v5862 = vsel %vm5350, %v5186, %v5606
        %v5863 = vsel %vm5351, %v5188, %v5607
        %v5864 = vsel %vm5352, %v4032, %v5608
        %v5865 = vsel %vm5353, %v4034, %v5609
        %v5866 = vsel %vm5354, %v4418, %v5610
        %v5867 = vsel %vm5355, %v4420, %v5611
        %v5868 = vsel %vm5356, %v4804, %v5612
        %v5869 = vsel %vm5357, %v4806, %v5613
        %v5870 = vsel %vm5358, %v5190, %v5614
        %v5871 = vsel %vm5359, %v5192, %v5615
        %v5872 = vsel %vm5360, %v4038, %v5616
        %v5873 = vsel %vm5361, %v4040, %v5617
        %v5874 = vsel %vm5362, %v4424, %v5618
        %v5875 = vsel %vm5363, %v4426, %v5619
        %v5876 = vsel %vm5364, %v4810, %v5620
        %v5877 = vsel %vm5365, %v4812, %v5621
        %v5878 = vsel %vm5366, %v5196, %v5622
        %v5879 = vsel %vm5367, %v5198, %v5623
        %v5880 = vsel %vm5368, %v4042, %v5624
        %v5881 = vsel %vm5369, %v4044, %v5625
        %v5882 = vsel %vm5370, %v4428, %v5626
        %v5883 = vsel %vm5371, %v4430, %v5627
        %v5884 = vsel %vm5372, %v4814, %v5628
        %v5885 = vsel %vm5373, %v4816, %v5629
        %v5886 = vsel %vm5374, %v5200, %v5630
        %v5887 = vsel %vm5375, %v5202, %v5631
        %v5888 = vsel %vm5376, %v4048, %v5632
        %v5889 = vsel %vm5377, %v4050, %v5633
        %v5890 = vsel %vm5378, %v4434, %v5634
        %v5891 = vsel %vm5379, %v4436, %v5635
        %v5892 = vsel %vm5380, %v4820, %v5636
        %v5893 = vsel %vm5381, %v4822, %v5637
        %v5894 = vsel %vm5382, %v5206, %v5638
        %v5895 = vsel %vm5383, %v5208, %v5639
        %v5896 = vsel %vm5384, %v4052, %v5640
        %v5897 = vsel %vm5385, %v4054, %v5641
        %v5898 = vsel %vm5386, %v4438, %v5642
        %v5899 = vsel %vm5387, %v4440, %v5643
        %v5900 = vsel %vm5388, %v4824, %v5644
        %v5901 = vsel %vm5389, %v4826, %v5645
        %v5902 = vsel %vm5390, %v5210, %v5646
        %v5903 = vsel %vm5391, %v5212, %v5647
        %v5904 = vsel %vm5392, %v4058, %v5648
        %v5905 = vsel %vm5393, %v4060, %v5649
        %v5906 = vsel %vm5394, %v4444, %v5650
        %v5907 = vsel %vm5395, %v4446, %v5651
        %v5908 = vsel %vm5396, %v4830, %v5652
        %v5909 = vsel %vm5397, %v4832, %v5653
        %v5910 = vsel %vm5398, %v5216, %v5654
        %v5911 = vsel %vm5399, %v5218, %v5655
        %v5912 = vsel %vm5400, %v4062, %v5656
        %v5913 = vsel %vm5401, %v4064, %v5657
        %v5914 = vsel %vm5402, %v4448, %v5658
        %v5915 = vsel %vm5403, %v4450, %v5659
        %v5916 = vsel %vm5404, %v4834, %v5660
        %v5917 = vsel %vm5405, %v4836, %v5661
        %v5918 = vsel %vm5406, %v5220, %v5662
        %v5919 = vsel %vm5407, %v5222, %v5663
        %v5920 = vsel %vm5408, %v4068, %v5664
        %v5921 = vsel %vm5409, %v4070, %v5665
        %v5922 = vsel %vm5410, %v4454, %v5666
        %v5923 = vsel %vm5411, %v4456, %v5667
        %v5924 = vsel %vm5412, %v4840, %v5668
        %v5925 = vsel %vm5413, %v4842, %v5669
        %v5926 = vsel %vm5414, %v5226, %v5670
        %v5927 = vsel %vm5415, %v5228, %v5671
        %v5928 = vsel %vm5416, %v4072, %v5672
        %v5929 = vsel %vm5417, %v4074, %v5673
        %v5930 = vsel %vm5418, %v4458, %v5674
        %v5931 = vsel %vm5419, %v4460, %v5675
        %v5932 = vsel %vm5420, %v4844, %v5676
        %v5933 = vsel %vm5421, %v4846, %v5677
        %v5934 = vsel %vm5422, %v5230, %v5678
        %v5935 = vsel %vm5423, %v5232, %v5679
        %v5936 = vsel %vm5424, %v4078, %v5680
        %v5937 = vsel %vm5425, %v4080, %v5681
        %v5938 = vsel %vm5426, %v4464, %v5682
        %v5939 = vsel %vm5427, %v4466, %v5683
        %v5940 = vsel %vm5428, %v4850, %v5684
        %v5941 = vsel %vm5429, %v4852, %v5685
        %v5942 = vsel %vm5430, %v5236, %v5686
        %v5943 = vsel %vm5431, %v5238, %v5687
        %v5944 = vsel %vm5432, %v4082, %v5688
        %v5945 = vsel %vm5433, %v4084, %v5689
        %v5946 = vsel %vm5434, %v4468, %v5690
        %v5947 = vsel %vm5435, %v4470, %v5691
        %v5948 = vsel %vm5436, %v4854, %v5692
        %v5949 = vsel %vm5437, %v4856, %v5693
        %v5950 = vsel %vm5438, %v5240, %v5694
        %v5951 = vsel %vm5439, %v5242, %v5695
        %v5952 = vsel %vm5440, %v4088, %v5696
        %v5953 = vsel %vm5441, %v4090, %v5697
        %v5954 = vsel %vm5442, %v4474, %v5698
        %v5955 = vsel %vm5443, %v4476, %v5699
        %v5956 = vsel %vm5444, %v4860, %v5700
        %v5957 = vsel %vm5445, %v4862, %v5701
        %v5958 = vsel %vm5446, %v5246, %v5702
        %v5959 = vsel %vm5447, %v5248, %v5703
        %v5960 = vsel %vm5448, %v4092, %v5704
        %v5961 = vsel %vm5449, %v4094, %v5705
        %v5962 = vsel %vm5450, %v4478, %v5706
        %v5963 = vsel %vm5451, %v4480, %v5707
        %v5964 = vsel %vm5452, %v4864, %v5708
        %v5965 = vsel %vm5453, %v4866, %v5709
        %v5966 = vsel %vm5454, %v5250, %v5710
        %v5967 = vsel %vm5455, %v5252, %v5711
        %v5968 = vsel %vm5456, %v4098, %v5712
        %v5969 = vsel %vm5457, %v4100, %v5713
        %v5970 = vsel %vm5458, %v4484, %v5714
        %v5971 = vsel %vm5459, %v4486, %v5715
        %v5972 = vsel %vm5460, %v4870, %v5716
        %v5973 = vsel %vm5461, %v4872, %v5717
        %v5974 = vsel %vm5462, %v5256, %v5718
        %v5975 = vsel %vm5463, %v5258, %v5719
        %v5976 = vsel %vm5464, %v4102, %v5720
        %v5977 = vsel %vm5465, %v4104, %v5721
        %v5978 = vsel %vm5466, %v4488, %v5722
        %v5979 = vsel %vm5467, %v4490, %v5723
        %v5980 = vsel %vm5468, %v4874, %v5724
        %v5981 = vsel %vm5469, %v4876, %v5725
        %v5982 = vsel %vm5470, %v5260, %v5726
        %v5983 = vsel %vm5471, %v5262, %v5727
        %v5984 = vsel %vm5472, %v4108, %v5728
        %v5985 = vsel %vm5473, %v4110, %v5729
        %v5986 = vsel %vm5474, %v4494, %v5730
        %v5987 = vsel %vm5475, %v4496, %v5731
        %v5988 = vsel %vm5476, %v4880, %v5732
        %v5989 = vsel %vm5477, %v4882, %v5733
        %v5990 = vsel %vm5478, %v5266, %v5734
        %v5991 = vsel %vm5479, %v5268, %v5735
        %v5992 = vsel %vm5480, %v4112, %v5736
        %v5993 = vsel %vm5481, %v4114, %v5737
        %v5994 = vsel %vm5482, %v4498, %v5738
        %v5995 = vsel %vm5483, %v4500, %v5739
        %v5996 = vsel %vm5484, %v4884, %v5740
        %v5997 = vsel %vm5485, %v4886, %v5741
        %v5998 = vsel %vm5486, %v5270, %v5742
        %v5999 = vsel %vm5487, %v5272, %v5743
        %v6000 = vsel %vm5488, %v4118, %v5744
        %v6001 = vsel %vm5489, %v4120, %v5745
        %v6002 = vsel %vm5490, %v4504, %v5746
        %v6003 = vsel %vm5491, %v4506, %v5747
        %v6004 = vsel %vm5492, %v4890, %v5748
        %v6005 = vsel %vm5493, %v4892, %v5749
        %v6006 = vsel %vm5494, %v5276, %v5750
        %v6007 = vsel %vm5495, %v5278, %v5751
        %v6008 = vsel %vm5496, %v4122, %v5752
        %v6009 = vsel %vm5497, %v4124, %v5753
        %v6010 = vsel %vm5498, %v4508, %v5754
        %v6011 = vsel %vm5499, %v4510, %v5755
        %v6012 = vsel %vm5500, %v4894, %v5756
        %v6013 = vsel %vm5501, %v4896, %v5757
        %v6014 = vsel %vm5502, %v5280, %v5758
        %v6015 = vsel %vm5503, %v5282, %v5759
        %v6016 = vsel %vm5504, %v4128, %v5760
        %v6017 = vsel %vm5505, %v4130, %v5761
        %v6018 = vsel %vm5506, %v4514, %v5762
        %v6019 = vsel %vm5507, %v4516, %v5763
        %v6020 = vsel %vm5508, %v4900, %v5764
        %v6021 = vsel %vm5509, %v4902, %v5765
        %v6022 = vsel %vm5510, %v5286, %v5766
        %v6023 = vsel %vm5511, %v5288, %v5767
        %v6024 = vsel %vm5512, %v4132, %v5768
        %v6025 = vsel %vm5513, %v4134, %v5769
        %v6026 = vsel %vm5514, %v4518, %v5770
        %v6027 = vsel %vm5515, %v4520, %v5771
        %v6028 = vsel %vm5516, %v4904, %v5772
        %v6029 = vsel %vm5517, %v4906, %v5773
        %v6030 = vsel %vm5518, %v5290, %v5774
        %v6031 = vsel %vm5519, %v5292, %v5775
        %v6032 = vsel %vm5520, %v4138, %v5776
        %v6033 = vsel %vm5521, %v4140, %v5777
        %v6034 = vsel %vm5522, %v4524, %v5778
        %v6035 = vsel %vm5523, %v4526, %v5779
        %v6036 = vsel %vm5524, %v4910, %v5780
        %v6037 = vsel %vm5525, %v4912, %v5781
        %v6038 = vsel %vm5526, %v5296, %v5782
        %v6039 = vsel %vm5527, %v5298, %v5783
        %v6040 = vsel %vm5528, %v4142, %v5784
        %v6041 = vsel %vm5529, %v4144, %v5785
        %v6042 = vsel %vm5530, %v4528, %v5786
        %v6043 = vsel %vm5531, %v4530, %v5787
        %v6044 = vsel %vm5532, %v4914, %v5788
        %v6045 = vsel %vm5533, %v4916, %v5789
        %v6046 = vsel %vm5534, %v5300, %v5790
        %v6047 = vsel %vm5535, %v5302, %v5791
        %v6048 = vsel %vm5536, %v4148, %v5792
        %v6049 = vsel %vm5537, %v4150, %v5793
        %v6050 = vsel %vm5538, %v4534, %v5794
        %v6051 = vsel %vm5539, %v4536, %v5795
        %v6052 = vsel %vm5540, %v4920, %v5796
        %v6053 = vsel %vm5541, %v4922, %v5797
        %v6054 = vsel %vm5542, %v5306, %v5798
        %v6055 = vsel %vm5543, %v5308, %v5799
        %v6056 = vsel %vm5544, %v4152, %v5800
        %v6057 = vsel %vm5545, %v4154, %v5801
        %v6058 = vsel %vm5546, %v4538, %v5802
        %v6059 = vsel %vm5547, %v4540, %v5803
        %v6060 = vsel %vm5548, %v4924, %v5804
        %v6061 = vsel %vm5549, %v4926, %v5805
        %v6062 = vsel %vm5550, %v5310, %v5806
        %v6063 = vsel %vm5551, %v5312, %v5807
        %v6064 = vsel %vm5552, %v4158, %v5808
        %v6065 = vsel %vm5553, %v4160, %v5809
        %v6066 = vsel %vm5554, %v4544, %v5810
        %v6067 = vsel %vm5555, %v4546, %v5811
        %v6068 = vsel %vm5556, %v4930, %v5812
        %v6069 = vsel %vm5557, %v4932, %v5813
        %v6070 = vsel %vm5558, %v5316, %v5814
        %v6071 = vsel %vm5559, %v5318, %v5815
        %v6072 = vsel %vm5560, %v4162, %v5816
        %v6073 = vsel %vm5561, %v4164, %v5817
        %v6074 = vsel %vm5562, %v4548, %v5818
        %v6075 = vsel %vm5563, %v4550, %v5819
        %v6076 = vsel %vm5564, %v4934, %v5820
        %v6077 = vsel %vm5565, %v4936, %v5821
        %v6078 = vsel %vm5566, %v5320, %v5822
        %v6079 = vsel %vm5567, %v5322, %v5823
        %v6080 = vsel %vm5568, %v4168, %v5824
        %v6081 = vsel %vm5569, %v4170, %v5825
        %v6082 = vsel %vm5570, %v4554, %v5826
        %v6083 = vsel %vm5571, %v4556, %v5827
        %v6084 = vsel %vm5572, %v4940, %v5828
        %v6085 = vsel %vm5573, %v4942, %v5829
        %v6086 = vsel %vm5574, %v5326, %v5830
        %v6087 = vsel %vm5575, %v5328, %v5831
        %v6088 = vsel %vm5576, %v4172, %v5832
        %v6089 = vsel %vm5577, %v4174, %v5833
        %v6090 = vsel %vm5578, %v4558, %v5834
        %v6091 = vsel %vm5579, %v4560, %v5835
        %v6092 = vsel %vm5580, %v4944, %v5836
        %v6093 = vsel %vm5581, %v4946, %v5837
        %v6094 = vsel %vm5582, %v5330, %v5838
        %v6095 = vsel %vm5583, %v5332, %v5839
        %v6096 = vsel %vm5584, %v4178, %v5840
        %v6097 = vsel %vm5585, %v4180, %v5841
        %v6098 = vsel %vm5586, %v4564, %v5842
        %v6099 = vsel %vm5587, %v4566, %v5843
        %v6100 = vsel %vm5588, %v4950, %v5844
        %v6101 = vsel %vm5589, %v4952, %v5845
        %v6102 = vsel %vm5590, %v5336, %v5846
        %v6103 = vsel %vm5591, %v5338, %v5847
        %v6104 = vsel %vm5592, %v4182, %v5848
        %v6105 = vsel %vm5593, %v4184, %v5849
        %v6106 = vsel %vm5594, %v4568, %v5850
        %v6107 = vsel %vm5595, %v4570, %v5851
        %v6108 = vsel %vm5596, %v4954, %v5852
        %v6109 = vsel %vm5597, %v4956, %v5853
        %v6110 = vsel %vm5598, %v5340, %v5854
        %v6111 = vsel %vm5599, %v5342, %v5855
        %v6112 = vpack.c.bf16 %v5864, %v5856
        %v6113 = vpack.c.bf16 %v5865, %v5857
        %v6114 = vpack.c.bf16 %v5866, %v5858
        %v6115 = vpack.c.bf16 %v5867, %v5859
        %v6116 = vpack.c.bf16 %v5868, %v5860
        %v6117 = vpack.c.bf16 %v5869, %v5861
        %v6118 = vpack.c.bf16 %v5870, %v5862
        %v6119 = vpack.c.bf16 %v5871, %v5863
        %v6120 = vpack.c.bf16 %v5880, %v5872
        %v6121 = vpack.c.bf16 %v5881, %v5873
        %v6122 = vpack.c.bf16 %v5882, %v5874
        %v6123 = vpack.c.bf16 %v5883, %v5875
        %v6124 = vpack.c.bf16 %v5884, %v5876
        %v6125 = vpack.c.bf16 %v5885, %v5877
        %v6126 = vpack.c.bf16 %v5886, %v5878
        %v6127 = vpack.c.bf16 %v5887, %v5879
        %v6128 = vpack.c.bf16 %v5896, %v5888
        %v6129 = vpack.c.bf16 %v5897, %v5889
        %v6130 = vpack.c.bf16 %v5898, %v5890
        %v6131 = vpack.c.bf16 %v5899, %v5891
        %v6132 = vpack.c.bf16 %v5900, %v5892
        %v6133 = vpack.c.bf16 %v5901, %v5893
        %v6134 = vpack.c.bf16 %v5902, %v5894
        %v6135 = vpack.c.bf16 %v5903, %v5895
        %v6136 = vpack.c.bf16 %v5912, %v5904
        %v6137 = vpack.c.bf16 %v5913, %v5905
        %v6138 = vpack.c.bf16 %v5914, %v5906
        %v6139 = vpack.c.bf16 %v5915, %v5907
        %v6140 = vpack.c.bf16 %v5916, %v5908
        %v6141 = vpack.c.bf16 %v5917, %v5909
        %v6142 = vpack.c.bf16 %v5918, %v5910
        %v6143 = vpack.c.bf16 %v5919, %v5911
        %v6144 = vpack.c.bf16 %v5928, %v5920
        %v6145 = vpack.c.bf16 %v5929, %v5921
        %v6146 = vpack.c.bf16 %v5930, %v5922
        %v6147 = vpack.c.bf16 %v5931, %v5923
        %v6148 = vpack.c.bf16 %v5932, %v5924
        %v6149 = vpack.c.bf16 %v5933, %v5925
        %v6150 = vpack.c.bf16 %v5934, %v5926
        %v6151 = vpack.c.bf16 %v5935, %v5927
        %v6152 = vpack.c.bf16 %v5944, %v5936
        %v6153 = vpack.c.bf16 %v5945, %v5937
        %v6154 = vpack.c.bf16 %v5946, %v5938
        %v6155 = vpack.c.bf16 %v5947, %v5939
        %v6156 = vpack.c.bf16 %v5948, %v5940
        %v6157 = vpack.c.bf16 %v5949, %v5941
        %v6158 = vpack.c.bf16 %v5950, %v5942
        %v6159 = vpack.c.bf16 %v5951, %v5943
        %v6160 = vpack.c.bf16 %v5960, %v5952
        %v6161 = vpack.c.bf16 %v5961, %v5953
        %v6162 = vpack.c.bf16 %v5962, %v5954
        %v6163 = vpack.c.bf16 %v5963, %v5955
        %v6164 = vpack.c.bf16 %v5964, %v5956
        %v6165 = vpack.c.bf16 %v5965, %v5957
        %v6166 = vpack.c.bf16 %v5966, %v5958
        %v6167 = vpack.c.bf16 %v5967, %v5959
        %v6168 = vpack.c.bf16 %v5976, %v5968
        %v6169 = vpack.c.bf16 %v5977, %v5969
        %v6170 = vpack.c.bf16 %v5978, %v5970
        %v6171 = vpack.c.bf16 %v5979, %v5971
        %v6172 = vpack.c.bf16 %v5980, %v5972
        %v6173 = vpack.c.bf16 %v5981, %v5973
        %v6174 = vpack.c.bf16 %v5982, %v5974
        %v6175 = vpack.c.bf16 %v5983, %v5975
        %v6176 = vpack.c.bf16 %v5992, %v5984
        %v6177 = vpack.c.bf16 %v5993, %v5985
        %v6178 = vpack.c.bf16 %v5994, %v5986
        %v6179 = vpack.c.bf16 %v5995, %v5987
        %v6180 = vpack.c.bf16 %v5996, %v5988
        %v6181 = vpack.c.bf16 %v5997, %v5989
        %v6182 = vpack.c.bf16 %v5998, %v5990
        %v6183 = vpack.c.bf16 %v5999, %v5991
        %v6184 = vpack.c.bf16 %v6008, %v6000
        %v6185 = vpack.c.bf16 %v6009, %v6001
        %v6186 = vpack.c.bf16 %v6010, %v6002
        %v6187 = vpack.c.bf16 %v6011, %v6003
        %v6188 = vpack.c.bf16 %v6012, %v6004
        %v6189 = vpack.c.bf16 %v6013, %v6005
        %v6190 = vpack.c.bf16 %v6014, %v6006
        %v6191 = vpack.c.bf16 %v6015, %v6007
        %v6192 = vpack.c.bf16 %v6024, %v6016
        %v6193 = vpack.c.bf16 %v6025, %v6017
        %v6194 = vpack.c.bf16 %v6026, %v6018
        %v6195 = vpack.c.bf16 %v6027, %v6019
        %v6196 = vpack.c.bf16 %v6028, %v6020
        %v6197 = vpack.c.bf16 %v6029, %v6021
        %v6198 = vpack.c.bf16 %v6030, %v6022
        %v6199 = vpack.c.bf16 %v6031, %v6023
        %v6200 = vpack.c.bf16 %v6040, %v6032
        %v6201 = vpack.c.bf16 %v6041, %v6033
        %v6202 = vpack.c.bf16 %v6042, %v6034
        %v6203 = vpack.c.bf16 %v6043, %v6035
        %v6204 = vpack.c.bf16 %v6044, %v6036
        %v6205 = vpack.c.bf16 %v6045, %v6037
        %v6206 = vpack.c.bf16 %v6046, %v6038
        %v6207 = vpack.c.bf16 %v6047, %v6039
        %v6208 = vpack.c.bf16 %v6056, %v6048
        %v6209 = vpack.c.bf16 %v6057, %v6049
        %v6210 = vpack.c.bf16 %v6058, %v6050
        %v6211 = vpack.c.bf16 %v6059, %v6051
        %v6212 = vpack.c.bf16 %v6060, %v6052
        %v6213 = vpack.c.bf16 %v6061, %v6053
        %v6214 = vpack.c.bf16 %v6062, %v6054
        %v6215 = vpack.c.bf16 %v6063, %v6055
        %v6216 = vpack.c.bf16 %v6072, %v6064
        %v6217 = vpack.c.bf16 %v6073, %v6065
        %v6218 = vpack.c.bf16 %v6074, %v6066
        %v6219 = vpack.c.bf16 %v6075, %v6067
        %v6220 = vpack.c.bf16 %v6076, %v6068
        %v6221 = vpack.c.bf16 %v6077, %v6069
        %v6222 = vpack.c.bf16 %v6078, %v6070
        %v6223 = vpack.c.bf16 %v6079, %v6071
        %v6224 = vpack.c.bf16 %v6088, %v6080
        %v6225 = vpack.c.bf16 %v6089, %v6081
        %v6226 = vpack.c.bf16 %v6090, %v6082
        %v6227 = vpack.c.bf16 %v6091, %v6083
        %v6228 = vpack.c.bf16 %v6092, %v6084
        %v6229 = vpack.c.bf16 %v6093, %v6085
        %v6230 = vpack.c.bf16 %v6094, %v6086
        %v6231 = vpack.c.bf16 %v6095, %v6087
        %v6232 = vpack.c.bf16 %v6104, %v6096
        %v6233 = vpack.c.bf16 %v6105, %v6097
        %v6234 = vpack.c.bf16 %v6106, %v6098
        %v6235 = vpack.c.bf16 %v6107, %v6099
        %v6236 = vpack.c.bf16 %v6108, %v6100
        %v6237 = vpack.c.bf16 %v6109, %v6101
        %v6238 = vpack.c.bf16 %v6110, %v6102
        %v6239 = vpack.c.bf16 %v6111, %v6103
        %v6368 = vunpack.c.l.b16 %v6112
        %v6369 = vunpack.c.l.b16 %v6113
        %v6370 = vunpack.c.l.b16 %v6114
        %v6371 = vunpack.c.l.b16 %v6115
        %v6372 = vunpack.c.l.b16 %v6116
        %v6373 = vunpack.c.l.b16 %v6117
        %v6374 = vunpack.c.l.b16 %v6118
        %v6375 = vunpack.c.l.b16 %v6119
        %v6376 = vunpack.c.h.b16 %v6112
        %v6377 = vunpack.c.h.b16 %v6113
        %v6378 = vunpack.c.h.b16 %v6114
        %v6379 = vunpack.c.h.b16 %v6115
        %v6380 = vunpack.c.h.b16 %v6116
        %v6381 = vunpack.c.h.b16 %v6117
        %v6382 = vunpack.c.h.b16 %v6118
        %v6383 = vunpack.c.h.b16 %v6119
        %v6384 = vunpack.c.l.b16 %v6120
        %v6385 = vunpack.c.l.b16 %v6121
        %v6386 = vunpack.c.l.b16 %v6122
        %v6387 = vunpack.c.l.b16 %v6123
        %v6388 = vunpack.c.l.b16 %v6124
        %v6389 = vunpack.c.l.b16 %v6125
        %v6390 = vunpack.c.l.b16 %v6126
        %v6391 = vunpack.c.l.b16 %v6127
        %v6392 = vunpack.c.h.b16 %v6120
        %v6393 = vunpack.c.h.b16 %v6121
        %v6394 = vunpack.c.h.b16 %v6122
        %v6395 = vunpack.c.h.b16 %v6123
        %v6396 = vunpack.c.h.b16 %v6124
        %v6397 = vunpack.c.h.b16 %v6125
        %v6398 = vunpack.c.h.b16 %v6126
        %v6399 = vunpack.c.h.b16 %v6127
        %v6400 = vunpack.c.l.b16 %v6128
        %v6401 = vunpack.c.l.b16 %v6129
        %v6402 = vunpack.c.l.b16 %v6130
        %v6403 = vunpack.c.l.b16 %v6131
        %v6404 = vunpack.c.l.b16 %v6132
        %v6405 = vunpack.c.l.b16 %v6133
        %v6406 = vunpack.c.l.b16 %v6134
        %v6407 = vunpack.c.l.b16 %v6135
        %v6408 = vunpack.c.h.b16 %v6128
        %v6409 = vunpack.c.h.b16 %v6129
        %v6410 = vunpack.c.h.b16 %v6130
        %v6411 = vunpack.c.h.b16 %v6131
        %v6412 = vunpack.c.h.b16 %v6132
        %v6413 = vunpack.c.h.b16 %v6133
        %v6414 = vunpack.c.h.b16 %v6134
        %v6415 = vunpack.c.h.b16 %v6135
        %v6416 = vunpack.c.l.b16 %v6136
        %v6417 = vunpack.c.l.b16 %v6137
        %v6418 = vunpack.c.l.b16 %v6138
        %v6419 = vunpack.c.l.b16 %v6139
        %v6420 = vunpack.c.l.b16 %v6140
        %v6421 = vunpack.c.l.b16 %v6141
        %v6422 = vunpack.c.l.b16 %v6142
        %v6423 = vunpack.c.l.b16 %v6143
        %v6424 = vunpack.c.h.b16 %v6136
        %v6425 = vunpack.c.h.b16 %v6137
        %v6426 = vunpack.c.h.b16 %v6138
        %v6427 = vunpack.c.h.b16 %v6139
        %v6428 = vunpack.c.h.b16 %v6140
        %v6429 = vunpack.c.h.b16 %v6141
        %v6430 = vunpack.c.h.b16 %v6142
        %v6431 = vunpack.c.h.b16 %v6143
        %v6432 = vunpack.c.l.b16 %v6144
        %v6433 = vunpack.c.l.b16 %v6145
        %v6434 = vunpack.c.l.b16 %v6146
        %v6435 = vunpack.c.l.b16 %v6147
        %v6436 = vunpack.c.l.b16 %v6148
        %v6437 = vunpack.c.l.b16 %v6149
        %v6438 = vunpack.c.l.b16 %v6150
        %v6439 = vunpack.c.l.b16 %v6151
        %v6440 = vunpack.c.h.b16 %v6144
        %v6441 = vunpack.c.h.b16 %v6145
        %v6442 = vunpack.c.h.b16 %v6146
        %v6443 = vunpack.c.h.b16 %v6147
        %v6444 = vunpack.c.h.b16 %v6148
        %v6445 = vunpack.c.h.b16 %v6149
        %v6446 = vunpack.c.h.b16 %v6150
        %v6447 = vunpack.c.h.b16 %v6151
        %v6448 = vunpack.c.l.b16 %v6152
        %v6449 = vunpack.c.l.b16 %v6153
        %v6450 = vunpack.c.l.b16 %v6154
        %v6451 = vunpack.c.l.b16 %v6155
        %v6452 = vunpack.c.l.b16 %v6156
        %v6453 = vunpack.c.l.b16 %v6157
        %v6454 = vunpack.c.l.b16 %v6158
        %v6455 = vunpack.c.l.b16 %v6159
        %v6456 = vunpack.c.h.b16 %v6152
        %v6457 = vunpack.c.h.b16 %v6153
        %v6458 = vunpack.c.h.b16 %v6154
        %v6459 = vunpack.c.h.b16 %v6155
        %v6460 = vunpack.c.h.b16 %v6156
        %v6461 = vunpack.c.h.b16 %v6157
        %v6462 = vunpack.c.h.b16 %v6158
        %v6463 = vunpack.c.h.b16 %v6159
        %v6464 = vunpack.c.l.b16 %v6160
        %v6465 = vunpack.c.l.b16 %v6161
        %v6466 = vunpack.c.l.b16 %v6162
        %v6467 = vunpack.c.l.b16 %v6163
        %v6468 = vunpack.c.l.b16 %v6164
        %v6469 = vunpack.c.l.b16 %v6165
        %v6470 = vunpack.c.l.b16 %v6166
        %v6471 = vunpack.c.l.b16 %v6167
        %v6472 = vunpack.c.h.b16 %v6160
        %v6473 = vunpack.c.h.b16 %v6161
        %v6474 = vunpack.c.h.b16 %v6162
        %v6475 = vunpack.c.h.b16 %v6163
        %v6476 = vunpack.c.h.b16 %v6164
        %v6477 = vunpack.c.h.b16 %v6165
        %v6478 = vunpack.c.h.b16 %v6166
        %v6479 = vunpack.c.h.b16 %v6167
        %v6480 = vunpack.c.l.b16 %v6168
        %v6481 = vunpack.c.l.b16 %v6169
        %v6482 = vunpack.c.l.b16 %v6170
        %v6483 = vunpack.c.l.b16 %v6171
        %v6484 = vunpack.c.l.b16 %v6172
        %v6485 = vunpack.c.l.b16 %v6173
        %v6486 = vunpack.c.l.b16 %v6174
        %v6487 = vunpack.c.l.b16 %v6175
        %v6488 = vunpack.c.h.b16 %v6168
        %v6489 = vunpack.c.h.b16 %v6169
        %v6490 = vunpack.c.h.b16 %v6170
        %v6491 = vunpack.c.h.b16 %v6171
        %v6492 = vunpack.c.h.b16 %v6172
        %v6493 = vunpack.c.h.b16 %v6173
        %v6494 = vunpack.c.h.b16 %v6174
        %v6495 = vunpack.c.h.b16 %v6175
        %v6496 = vunpack.c.l.b16 %v6176
        %v6497 = vunpack.c.l.b16 %v6177
        %v6498 = vunpack.c.l.b16 %v6178
        %v6499 = vunpack.c.l.b16 %v6179
        %v6500 = vunpack.c.l.b16 %v6180
        %v6501 = vunpack.c.l.b16 %v6181
        %v6502 = vunpack.c.l.b16 %v6182
        %v6503 = vunpack.c.l.b16 %v6183
        %v6504 = vunpack.c.h.b16 %v6176
        %v6505 = vunpack.c.h.b16 %v6177
        %v6506 = vunpack.c.h.b16 %v6178
        %v6507 = vunpack.c.h.b16 %v6179
        %v6508 = vunpack.c.h.b16 %v6180
        %v6509 = vunpack.c.h.b16 %v6181
        %v6510 = vunpack.c.h.b16 %v6182
        %v6511 = vunpack.c.h.b16 %v6183
        %v6512 = vunpack.c.l.b16 %v6184
        %v6513 = vunpack.c.l.b16 %v6185
        %v6514 = vunpack.c.l.b16 %v6186
        %v6515 = vunpack.c.l.b16 %v6187
        %v6516 = vunpack.c.l.b16 %v6188
        %v6517 = vunpack.c.l.b16 %v6189
        %v6518 = vunpack.c.l.b16 %v6190
        %v6519 = vunpack.c.l.b16 %v6191
        %v6520 = vunpack.c.h.b16 %v6184
        %v6521 = vunpack.c.h.b16 %v6185
        %v6522 = vunpack.c.h.b16 %v6186
        %v6523 = vunpack.c.h.b16 %v6187
        %v6524 = vunpack.c.h.b16 %v6188
        %v6525 = vunpack.c.h.b16 %v6189
        %v6526 = vunpack.c.h.b16 %v6190
        %v6527 = vunpack.c.h.b16 %v6191
        %v6528 = vunpack.c.l.b16 %v6192
        %v6529 = vunpack.c.l.b16 %v6193
        %v6530 = vunpack.c.l.b16 %v6194
        %v6531 = vunpack.c.l.b16 %v6195
        %v6532 = vunpack.c.l.b16 %v6196
        %v6533 = vunpack.c.l.b16 %v6197
        %v6534 = vunpack.c.l.b16 %v6198
        %v6535 = vunpack.c.l.b16 %v6199
        %v6536 = vunpack.c.h.b16 %v6192
        %v6537 = vunpack.c.h.b16 %v6193
        %v6538 = vunpack.c.h.b16 %v6194
        %v6539 = vunpack.c.h.b16 %v6195
        %v6540 = vunpack.c.h.b16 %v6196
        %v6541 = vunpack.c.h.b16 %v6197
        %v6542 = vunpack.c.h.b16 %v6198
        %v6543 = vunpack.c.h.b16 %v6199
        %v6544 = vunpack.c.l.b16 %v6200
        %v6545 = vunpack.c.l.b16 %v6201
        %v6546 = vunpack.c.l.b16 %v6202
        %v6547 = vunpack.c.l.b16 %v6203
        %v6548 = vunpack.c.l.b16 %v6204
        %v6549 = vunpack.c.l.b16 %v6205
        %v6550 = vunpack.c.l.b16 %v6206
        %v6551 = vunpack.c.l.b16 %v6207
        %v6552 = vunpack.c.h.b16 %v6200
        %v6553 = vunpack.c.h.b16 %v6201
        %v6554 = vunpack.c.h.b16 %v6202
        %v6555 = vunpack.c.h.b16 %v6203
        %v6556 = vunpack.c.h.b16 %v6204
        %v6557 = vunpack.c.h.b16 %v6205
        %v6558 = vunpack.c.h.b16 %v6206
        %v6559 = vunpack.c.h.b16 %v6207
        %v6560 = vunpack.c.l.b16 %v6208
        %v6561 = vunpack.c.l.b16 %v6209
        %v6562 = vunpack.c.l.b16 %v6210
        %v6563 = vunpack.c.l.b16 %v6211
        %v6564 = vunpack.c.l.b16 %v6212
        %v6565 = vunpack.c.l.b16 %v6213
        %v6566 = vunpack.c.l.b16 %v6214
        %v6567 = vunpack.c.l.b16 %v6215
        %v6568 = vunpack.c.h.b16 %v6208
        %v6569 = vunpack.c.h.b16 %v6209
        %v6570 = vunpack.c.h.b16 %v6210
        %v6571 = vunpack.c.h.b16 %v6211
        %v6572 = vunpack.c.h.b16 %v6212
        %v6573 = vunpack.c.h.b16 %v6213
        %v6574 = vunpack.c.h.b16 %v6214
        %v6575 = vunpack.c.h.b16 %v6215
        %v6576 = vunpack.c.l.b16 %v6216
        %v6577 = vunpack.c.l.b16 %v6217
        %v6578 = vunpack.c.l.b16 %v6218
        %v6579 = vunpack.c.l.b16 %v6219
        %v6580 = vunpack.c.l.b16 %v6220
        %v6581 = vunpack.c.l.b16 %v6221
        %v6582 = vunpack.c.l.b16 %v6222
        %v6583 = vunpack.c.l.b16 %v6223
        %v6584 = vunpack.c.h.b16 %v6216
        %v6585 = vunpack.c.h.b16 %v6217
        %v6586 = vunpack.c.h.b16 %v6218
        %v6587 = vunpack.c.h.b16 %v6219
        %v6588 = vunpack.c.h.b16 %v6220
        %v6589 = vunpack.c.h.b16 %v6221
        %v6590 = vunpack.c.h.b16 %v6222
        %v6591 = vunpack.c.h.b16 %v6223
        %v6592 = vunpack.c.l.b16 %v6224
        %v6593 = vunpack.c.l.b16 %v6225
        %v6594 = vunpack.c.l.b16 %v6226
        %v6595 = vunpack.c.l.b16 %v6227
        %v6596 = vunpack.c.l.b16 %v6228
        %v6597 = vunpack.c.l.b16 %v6229
        %v6598 = vunpack.c.l.b16 %v6230
        %v6599 = vunpack.c.l.b16 %v6231
        %v6600 = vunpack.c.h.b16 %v6224
        %v6601 = vunpack.c.h.b16 %v6225
        %v6602 = vunpack.c.h.b16 %v6226
        %v6603 = vunpack.c.h.b16 %v6227
        %v6604 = vunpack.c.h.b16 %v6228
        %v6605 = vunpack.c.h.b16 %v6229
        %v6606 = vunpack.c.h.b16 %v6230
        %v6607 = vunpack.c.h.b16 %v6231
        %v6608 = vunpack.c.l.b16 %v6232
        %v6609 = vunpack.c.l.b16 %v6233
        %v6610 = vunpack.c.l.b16 %v6234
        %v6611 = vunpack.c.l.b16 %v6235
        %v6612 = vunpack.c.l.b16 %v6236
        %v6613 = vunpack.c.l.b16 %v6237
        %v6614 = vunpack.c.l.b16 %v6238
        %v6615 = vunpack.c.l.b16 %v6239
        %v6616 = vunpack.c.h.b16 %v6232
        %v6617 = vunpack.c.h.b16 %v6233
        %v6618 = vunpack.c.h.b16 %v6234
        %v6619 = vunpack.c.h.b16 %v6235
        %v6620 = vunpack.c.h.b16 %v6236
        %v6621 = vunpack.c.h.b16 %v6237
        %v6622 = vunpack.c.h.b16 %v6238
        %v6623 = vunpack.c.h.b16 %v6239
        %v6624 = vpack.c.b16 %v6369, %v6368
        %v6625 = vpack.c.b16 %v6371, %v6370
        %v6626 = vpack.c.b16 %v6373, %v6372
        %v6627 = vpack.c.b16 %v6375, %v6374
        %v6628 = vpack.c.b16 %v6377, %v6376
        %v6629 = vpack.c.b16 %v6379, %v6378
        %v6630 = vpack.c.b16 %v6381, %v6380
        %v6631 = vpack.c.b16 %v6383, %v6382
        %v6632 = vpack.c.b16 %v6385, %v6384
        %v6633 = vpack.c.b16 %v6387, %v6386
        %v6634 = vpack.c.b16 %v6389, %v6388
        %v6635 = vpack.c.b16 %v6391, %v6390
        %v6636 = vpack.c.b16 %v6393, %v6392
        %v6637 = vpack.c.b16 %v6395, %v6394
        %v6638 = vpack.c.b16 %v6397, %v6396
        %v6639 = vpack.c.b16 %v6399, %v6398
        %v6640 = vpack.c.b16 %v6401, %v6400
        %v6641 = vpack.c.b16 %v6403, %v6402
        %v6642 = vpack.c.b16 %v6405, %v6404
        %v6643 = vpack.c.b16 %v6407, %v6406
        %v6644 = vpack.c.b16 %v6409, %v6408
        %v6645 = vpack.c.b16 %v6411, %v6410
        %v6646 = vpack.c.b16 %v6413, %v6412
        %v6647 = vpack.c.b16 %v6415, %v6414
        %v6648 = vpack.c.b16 %v6417, %v6416
        %v6649 = vpack.c.b16 %v6419, %v6418
        %v6650 = vpack.c.b16 %v6421, %v6420
        %v6651 = vpack.c.b16 %v6423, %v6422
        %v6652 = vpack.c.b16 %v6425, %v6424
        %v6653 = vpack.c.b16 %v6427, %v6426
        %v6654 = vpack.c.b16 %v6429, %v6428
        %v6655 = vpack.c.b16 %v6431, %v6430
        %v6656 = vpack.c.b16 %v6433, %v6432
        %v6657 = vpack.c.b16 %v6435, %v6434
        %v6658 = vpack.c.b16 %v6437, %v6436
        %v6659 = vpack.c.b16 %v6439, %v6438
        %v6660 = vpack.c.b16 %v6441, %v6440
        %v6661 = vpack.c.b16 %v6443, %v6442
        %v6662 = vpack.c.b16 %v6445, %v6444
        %v6663 = vpack.c.b16 %v6447, %v6446
        %v6664 = vpack.c.b16 %v6449, %v6448
        %v6665 = vpack.c.b16 %v6451, %v6450
        %v6666 = vpack.c.b16 %v6453, %v6452
        %v6667 = vpack.c.b16 %v6455, %v6454
        %v6668 = vpack.c.b16 %v6457, %v6456
        %v6669 = vpack.c.b16 %v6459, %v6458
        %v6670 = vpack.c.b16 %v6461, %v6460
        %v6671 = vpack.c.b16 %v6463, %v6462
        %v6672 = vpack.c.b16 %v6465, %v6464
        %v6673 = vpack.c.b16 %v6467, %v6466
        %v6674 = vpack.c.b16 %v6469, %v6468
        %v6675 = vpack.c.b16 %v6471, %v6470
        %v6676 = vpack.c.b16 %v6473, %v6472
        %v6677 = vpack.c.b16 %v6475, %v6474
        %v6678 = vpack.c.b16 %v6477, %v6476
        %v6679 = vpack.c.b16 %v6479, %v6478
        %v6680 = vpack.c.b16 %v6481, %v6480
        %v6681 = vpack.c.b16 %v6483, %v6482
        %v6682 = vpack.c.b16 %v6485, %v6484
        %v6683 = vpack.c.b16 %v6487, %v6486
        %v6684 = vpack.c.b16 %v6489, %v6488
        %v6685 = vpack.c.b16 %v6491, %v6490
        %v6686 = vpack.c.b16 %v6493, %v6492
        %v6687 = vpack.c.b16 %v6495, %v6494
        %v6688 = vpack.c.b16 %v6497, %v6496
        %v6689 = vpack.c.b16 %v6499, %v6498
        %v6690 = vpack.c.b16 %v6501, %v6500
        %v6691 = vpack.c.b16 %v6503, %v6502
        %v6692 = vpack.c.b16 %v6505, %v6504
        %v6693 = vpack.c.b16 %v6507, %v6506
        %v6694 = vpack.c.b16 %v6509, %v6508
        %v6695 = vpack.c.b16 %v6511, %v6510
        %v6696 = vpack.c.b16 %v6513, %v6512
        %v6697 = vpack.c.b16 %v6515, %v6514
        %v6698 = vpack.c.b16 %v6517, %v6516
        %v6699 = vpack.c.b16 %v6519, %v6518
        %v6700 = vpack.c.b16 %v6521, %v6520
        %v6701 = vpack.c.b16 %v6523, %v6522
        %v6702 = vpack.c.b16 %v6525, %v6524
        %v6703 = vpack.c.b16 %v6527, %v6526
        %v6704 = vpack.c.b16 %v6529, %v6528
        %v6705 = vpack.c.b16 %v6531, %v6530
        %v6706 = vpack.c.b16 %v6533, %v6532
        %v6707 = vpack.c.b16 %v6535, %v6534
        %v6708 = vpack.c.b16 %v6537, %v6536
        %v6709 = vpack.c.b16 %v6539, %v6538
        %v6710 = vpack.c.b16 %v6541, %v6540
        %v6711 = vpack.c.b16 %v6543, %v6542
        %v6712 = vpack.c.b16 %v6545, %v6544
        %v6713 = vpack.c.b16 %v6547, %v6546
        %v6714 = vpack.c.b16 %v6549, %v6548
        %v6715 = vpack.c.b16 %v6551, %v6550
        %v6716 = vpack.c.b16 %v6553, %v6552
        %v6717 = vpack.c.b16 %v6555, %v6554
        %v6718 = vpack.c.b16 %v6557, %v6556
        %v6719 = vpack.c.b16 %v6559, %v6558
        %v6720 = vpack.c.b16 %v6561, %v6560
        %v6721 = vpack.c.b16 %v6563, %v6562
        %v6722 = vpack.c.b16 %v6565, %v6564
        %v6723 = vpack.c.b16 %v6567, %v6566
        %v6724 = vpack.c.b16 %v6569, %v6568
        %v6725 = vpack.c.b16 %v6571, %v6570
        %v6726 = vpack.c.b16 %v6573, %v6572
        %v6727 = vpack.c.b16 %v6575, %v6574
        %v6728 = vpack.c.b16 %v6577, %v6576
        %v6729 = vpack.c.b16 %v6579, %v6578
        %v6730 = vpack.c.b16 %v6581, %v6580
        %v6731 = vpack.c.b16 %v6583, %v6582
        %v6732 = vpack.c.b16 %v6585, %v6584
        %v6733 = vpack.c.b16 %v6587, %v6586
        %v6734 = vpack.c.b16 %v6589, %v6588
        %v6735 = vpack.c.b16 %v6591, %v6590
        %v6736 = vpack.c.b16 %v6593, %v6592
        %v6737 = vpack.c.b16 %v6595, %v6594
        %v6738 = vpack.c.b16 %v6597, %v6596
        %v6739 = vpack.c.b16 %v6599, %v6598
        %v6740 = vpack.c.b16 %v6601, %v6600
        %v6741 = vpack.c.b16 %v6603, %v6602
        %v6742 = vpack.c.b16 %v6605, %v6604
        %v6743 = vpack.c.b16 %v6607, %v6606
        %v6744 = vpack.c.b16 %v6609, %v6608
        %v6745 = vpack.c.b16 %v6611, %v6610
        %v6746 = vpack.c.b16 %v6613, %v6612
        %v6747 = vpack.c.b16 %v6615, %v6614
        %v6748 = vpack.c.b16 %v6617, %v6616
        %v6749 = vpack.c.b16 %v6619, %v6618
        %v6750 = vpack.c.b16 %v6621, %v6620
        %v6751 = vpack.c.b16 %v6623, %v6622
        %6880 = vst [vmem:[%s302] sm:$0xff] %v6624
        %6881 = vst [vmem:[%s302 + $0x8] sm:$0xff] %v6625
        %6882 = vst [vmem:[%s302 + $0x10] sm:$0xff] %v6626
        %6883 = vst [vmem:[%s302 + $0x18] sm:$0xff] %v6627
        %6884 = vst [vmem:[%s302 + $0x20] sm:$0xff] %v6628
        %6885 = vst [vmem:[%s302 + $0x28] sm:$0xff] %v6629
        %6886 = vst [vmem:[%s302 + $0x30] sm:$0xff] %v6630
        %6887 = vst [vmem:[%s302 + $0x38] sm:$0xff] %v6631
        %6888 = vst [vmem:[%s302 + $0x40] sm:$0xff] %v6632
        %6889 = vst [vmem:[%s302 + $0x48] sm:$0xff] %v6633
        %6890 = vst [vmem:[%s302 + $0x50] sm:$0xff] %v6634
        %6891 = vst [vmem:[%s302 + $0x58] sm:$0xff] %v6635
        %6892 = vst [vmem:[%s302 + $0x60] sm:$0xff] %v6636
        %6893 = vst [vmem:[%s302 + $0x68] sm:$0xff] %v6637
        %6894 = vst [vmem:[%s302 + $0x70] sm:$0xff] %v6638
        %6895 = vst [vmem:[%s302 + $0x78] sm:$0xff] %v6639
        %6896 = vst [vmem:[%s302 + $0x80] sm:$0xff] %v6640
        %6897 = vst [vmem:[%s302 + $0x88] sm:$0xff] %v6641
        %6898 = vst [vmem:[%s302 + $0x90] sm:$0xff] %v6642
        %6899 = vst [vmem:[%s302 + $0x98] sm:$0xff] %v6643
        %6900 = vst [vmem:[%s302 + $0xa0] sm:$0xff] %v6644
        %6901 = vst [vmem:[%s302 + $0xa8] sm:$0xff] %v6645
        %6902 = vst [vmem:[%s302 + $0xb0] sm:$0xff] %v6646
        %6903 = vst [vmem:[%s302 + $0xb8] sm:$0xff] %v6647
        %6904 = vst [vmem:[%s302 + $0xc0] sm:$0xff] %v6648
        %6905 = vst [vmem:[%s302 + $0xc8] sm:$0xff] %v6649
        %6906 = vst [vmem:[%s302 + $0xd0] sm:$0xff] %v6650
        %6907 = vst [vmem:[%s302 + $0xd8] sm:$0xff] %v6651
        %6908 = vst [vmem:[%s302 + $0xe0] sm:$0xff] %v6652
        %6909 = vst [vmem:[%s302 + $0xe8] sm:$0xff] %v6653
        %6910 = vst [vmem:[%s302 + $0xf0] sm:$0xff] %v6654
        %6911 = vst [vmem:[%s302 + $0xf8] sm:$0xff] %v6655
        %6912 = vst [vmem:[%s302 + $0x100] sm:$0xff] %v6656
        %6913 = vst [vmem:[%s302 + $0x108] sm:$0xff] %v6657
        %6914 = vst [vmem:[%s302 + $0x110] sm:$0xff] %v6658
        %6915 = vst [vmem:[%s302 + $0x118] sm:$0xff] %v6659
        %6916 = vst [vmem:[%s302 + $0x120] sm:$0xff] %v6660
        %6917 = vst [vmem:[%s302 + $0x128] sm:$0xff] %v6661
        %6918 = vst [vmem:[%s302 + $0x130] sm:$0xff] %v6662
        %6919 = vst [vmem:[%s302 + $0x138] sm:$0xff] %v6663
        %6920 = vst [vmem:[%s302 + $0x140] sm:$0xff] %v6664
        %6921 = vst [vmem:[%s302 + $0x148] sm:$0xff] %v6665
        %6922 = vst [vmem:[%s302 + $0x150] sm:$0xff] %v6666
        %6923 = vst [vmem:[%s302 + $0x158] sm:$0xff] %v6667
        %6924 = vst [vmem:[%s302 + $0x160] sm:$0xff] %v6668
        %6925 = vst [vmem:[%s302 + $0x168] sm:$0xff] %v6669
        %6926 = vst [vmem:[%s302 + $0x170] sm:$0xff] %v6670
        %6927 = vst [vmem:[%s302 + $0x178] sm:$0xff] %v6671
        %6928 = vst [vmem:[%s302 + $0x180] sm:$0xff] %v6672
        %6929 = vst [vmem:[%s302 + $0x188] sm:$0xff] %v6673
        %6930 = vst [vmem:[%s302 + $0x190] sm:$0xff] %v6674
        %6931 = vst [vmem:[%s302 + $0x198] sm:$0xff] %v6675
        %6932 = vst [vmem:[%s302 + $0x1a0] sm:$0xff] %v6676
        %6933 = vst [vmem:[%s302 + $0x1a8] sm:$0xff] %v6677
        %6934 = vst [vmem:[%s302 + $0x1b0] sm:$0xff] %v6678
        %6935 = vst [vmem:[%s302 + $0x1b8] sm:$0xff] %v6679
        %6936 = vst [vmem:[%s302 + $0x1c0] sm:$0xff] %v6680
        %6937 = vst [vmem:[%s302 + $0x1c8] sm:$0xff] %v6681
        %6938 = vst [vmem:[%s302 + $0x1d0] sm:$0xff] %v6682
        %6939 = vst [vmem:[%s302 + $0x1d8] sm:$0xff] %v6683
        %6940 = vst [vmem:[%s302 + $0x1e0] sm:$0xff] %v6684
        %6941 = vst [vmem:[%s302 + $0x1e8] sm:$0xff] %v6685
        %6942 = vst [vmem:[%s302 + $0x1f0] sm:$0xff] %v6686
        %6943 = vst [vmem:[%s302 + $0x1f8] sm:$0xff] %v6687
        %6944 = vst [vmem:[%s302 + $0x200] sm:$0xff] %v6688
        %6945 = vst [vmem:[%s302 + $0x208] sm:$0xff] %v6689
        %6946 = vst [vmem:[%s302 + $0x210] sm:$0xff] %v6690
        %6947 = vst [vmem:[%s302 + $0x218] sm:$0xff] %v6691
        %6948 = vst [vmem:[%s302 + $0x220] sm:$0xff] %v6692
        %6949 = vst [vmem:[%s302 + $0x228] sm:$0xff] %v6693
        %6950 = vst [vmem:[%s302 + $0x230] sm:$0xff] %v6694
        %6951 = vst [vmem:[%s302 + $0x238] sm:$0xff] %v6695
        %6952 = vst [vmem:[%s302 + $0x240] sm:$0xff] %v6696
        %6953 = vst [vmem:[%s302 + $0x248] sm:$0xff] %v6697
        %6954 = vst [vmem:[%s302 + $0x250] sm:$0xff] %v6698
        %6955 = vst [vmem:[%s302 + $0x258] sm:$0xff] %v6699
        %6956 = vst [vmem:[%s302 + $0x260] sm:$0xff] %v6700
        %6957 = vst [vmem:[%s302 + $0x268] sm:$0xff] %v6701
        %6958 = vst [vmem:[%s302 + $0x270] sm:$0xff] %v6702
        %6959 = vst [vmem:[%s302 + $0x278] sm:$0xff] %v6703
        %6960 = vst [vmem:[%s302 + $0x280] sm:$0xff] %v6704
        %6961 = vst [vmem:[%s302 + $0x288] sm:$0xff] %v6705
        %6962 = vst [vmem:[%s302 + $0x290] sm:$0xff] %v6706
        %6963 = vst [vmem:[%s302 + $0x298] sm:$0xff] %v6707
        %6964 = vst [vmem:[%s302 + $0x2a0] sm:$0xff] %v6708
        %6965 = vst [vmem:[%s302 + $0x2a8] sm:$0xff] %v6709
        %6966 = vst [vmem:[%s302 + $0x2b0] sm:$0xff] %v6710
        %6967 = vst [vmem:[%s302 + $0x2b8] sm:$0xff] %v6711
        %6968 = vst [vmem:[%s302 + $0x2c0] sm:$0xff] %v6712
        %6969 = vst [vmem:[%s302 + $0x2c8] sm:$0xff] %v6713
        %6970 = vst [vmem:[%s302 + $0x2d0] sm:$0xff] %v6714
        %6971 = vst [vmem:[%s302 + $0x2d8] sm:$0xff] %v6715
        %6972 = vst [vmem:[%s302 + $0x2e0] sm:$0xff] %v6716
        %6973 = vst [vmem:[%s302 + $0x2e8] sm:$0xff] %v6717
        %6974 = vst [vmem:[%s302 + $0x2f0] sm:$0xff] %v6718
        %6975 = vst [vmem:[%s302 + $0x2f8] sm:$0xff] %v6719
        %6976 = vst [vmem:[%s302 + $0x300] sm:$0xff] %v6720
        %6977 = vst [vmem:[%s302 + $0x308] sm:$0xff] %v6721
        %6978 = vst [vmem:[%s302 + $0x310] sm:$0xff] %v6722
        %6979 = vst [vmem:[%s302 + $0x318] sm:$0xff] %v6723
        %6980 = vst [vmem:[%s302 + $0x320] sm:$0xff] %v6724
        %6981 = vst [vmem:[%s302 + $0x328] sm:$0xff] %v6725
        %6982 = vst [vmem:[%s302 + $0x330] sm:$0xff] %v6726
        %6983 = vst [vmem:[%s302 + $0x338] sm:$0xff] %v6727
        %6984 = vst [vmem:[%s302 + $0x340] sm:$0xff] %v6728
        %6985 = vst [vmem:[%s302 + $0x348] sm:$0xff] %v6729
        %6986 = vst [vmem:[%s302 + $0x350] sm:$0xff] %v6730
        %6987 = vst [vmem:[%s302 + $0x358] sm:$0xff] %v6731
        %6988 = vst [vmem:[%s302 + $0x360] sm:$0xff] %v6732
        %6989 = vst [vmem:[%s302 + $0x368] sm:$0xff] %v6733
        %6990 = vst [vmem:[%s302 + $0x370] sm:$0xff] %v6734
        %6991 = vst [vmem:[%s302 + $0x378] sm:$0xff] %v6735
        %6992 = vst [vmem:[%s302 + $0x380] sm:$0xff] %v6736
        %6993 = vst [vmem:[%s302 + $0x388] sm:$0xff] %v6737
        %6994 = vst [vmem:[%s302 + $0x390] sm:$0xff] %v6738
        %6995 = vst [vmem:[%s302 + $0x398] sm:$0xff] %v6739
        %6996 = vst [vmem:[%s302 + $0x3a0] sm:$0xff] %v6740
        %6997 = vst [vmem:[%s302 + $0x3a8] sm:$0xff] %v6741
        %6998 = vst [vmem:[%s302 + $0x3b0] sm:$0xff] %v6742
        %6999 = vst [vmem:[%s302 + $0x3b8] sm:$0xff] %v6743
        %7000 = vst [vmem:[%s302 + $0x3c0] sm:$0xff] %v6744
        %7001 = vst [vmem:[%s302 + $0x3c8] sm:$0xff] %v6745
        %7002 = vst [vmem:[%s302 + $0x3d0] sm:$0xff] %v6746
        %7003 = vst [vmem:[%s302 + $0x3d8] sm:$0xff] %v6747
        %7004 = vst [vmem:[%s302 + $0x3e0] sm:$0xff] %v6748
        %7005 = vst [vmem:[%s302 + $0x3e8] sm:$0xff] %v6749
        %7006 = vst [vmem:[%s302 + $0x3f0] sm:$0xff] %v6750
        %7007 = vst [vmem:[%s302 + $0x3f8] sm:$0xff] %v6751
        %s7008 = sand.u32 %s183, 1
        %s7009 = scalar_lea.sflag [#allocation4], %s7008
        %s7010 = sand.u32 %s183, 1
        %s7011 = smul.addr %s7010, 1024
        %s7012 = scalar_lea.vmem [#allocation7], %s7011
        // Predicated region
        $region57: #{tpu_custom_call.1} parent=47 // pred_check
          %p7013 = pneg %p193
        $region58: #{tpu_custom_call.1} parent=47 // pred_check_branch
          %7015 = sbr.rel (%p7013) target = $region60
        $region59: #{tpu_custom_call.1} parent=47 // pred_region
          %s7016 = smul.u32 32, %s23
          %s7018 = ssub.s32 16384, 16384
          %7019 = vsyncadd %s7009, %s7018
          %s7020 = smul.addr %s7016, 8
          %s7021 = smul.addr %s7020, 64
          %s7022 = scalar_lea.hbm %s7, %s7021
          %s7023 = sshll.u32 %s7012, 4
          %s7024 = int_to_ptr.vmem [resolvable:$true] %s7023
          %7029 = dma.vmem_to_hbm [thread:$0]  %s7024, 16384, %s7022, %s7009, 512, 512, 32
        $region60: #{tpu_custom_call.1} parent=47 // pred_fallthru
          _
      $region48: #{tpu_custom_call.1} parent=5 // pred_fallthru
        _
      %p7030 = scmp.le.s32.totalorder 2, %s18
      // Predicated region
      $region61: #{tpu_custom_call.1} parent=5 // pred_check
        %p7031 = pneg %p7030
      $region62: #{tpu_custom_call.1} parent=5 // pred_check_branch
        %7033 = sbr.rel (%p7031) target = $region64
      $region63: #{tpu_custom_call.1} parent=5 // pred_region
        %s7034 = ssub.s32 %s18, 2
        // Predicated region
        $region65: #{tpu_custom_call.1} parent=63 // pred_check
          %p7035 = pneg %p199
        $region66: #{tpu_custom_call.1} parent=63 // pred_check_branch
          %7037 = sbr.rel (%p7035) target = $region68
        $region67: #{tpu_custom_call.1} parent=63 // pred_region
          %s7038 = sand.u32 %s184, 1
          %s7039 = scalar_lea.sflag [#allocation4], %s7038
          %s7040 = sand.u32 %s184, 1
          %s7041 = smul.addr %s7040, 1024
          %s7042 = scalar_lea.vmem [#allocation7], %s7041
          %7043 = dma.done %s7039, 16384
        $region68: #{tpu_custom_call.1} parent=63 // pred_fallthru
          _
      $region64: #{tpu_custom_call.1} parent=5 // pred_fallthru
        _
    $region6: #{tpu_custom_call.1} parent=1 // loop_footer
      %s22 = sadd.s32 1, %s18
    $region7: #{tpu_custom_call.1} parent=1 // loop_footer_branch
      %17 = sbr.rel target = $region3
    $region8: #{tpu_custom_call.1} parent=1 // loop_exit
      _
    %7044 = vsyncpa [#allocation3], 1
    %s7045 = scalar_lea.sflag [#allocation3], 1
    %7046 = vsyncpa %s7045, 1
    %7047 = vsyncpa [#allocation6], 1
    %7048 = vsyncpa [#allocation4], 1
    %s7049 = scalar_lea.sflag [#allocation4], 1
    %7050 = vsyncpa %s7049, 1

</llo_original>
